<compile_context>
chip_gen: v6e
topology: v6e:2x2x1
jax: 0.10.0
libtpu: 0.0.40
codegen_flags: <defaults>
</compile_context>

<pallas_src>
import jax
import jax.numpy as jnp
from jax.experimental import pallas as pl
from jax.experimental.pallas import tpu as pltpu

LANES = 128  # lane-dense channel padding for every matmul operand
NP = 8       # batch rows padded to one sublane group for the epilogue


# ------------------------------ fused kernel --------------------------------

def make_fused_kernel(R, WP):
    """Fused InterpNets kernel for static (R, WP). R = N*HP*WP flattened rows."""
    # tap i = (dh, dw) row-major; flat row shift s_i = (dh-1)*WP + (dw-1)
    shifts = [(dh - 1) * WP + (dw - 1) for dh in range(3) for dw in range(3)]

    def kernel(z_ref, x_ref, w1_ref, bm1_ref, bm2_ref, mask_ref,
               w2_ref, b2_ref, pool_ref, w3_ref, b3_ref, out_ref):
        # ---- net1 conv3x3: ONE packed bf16 MXU matmul (taps pre-packed in K) ----
        acc = jnp.dot(x_ref[...], w1_ref[...],
                      preferred_element_type=jnp.float32)          # [R,128] f32

        # ---- conditional marks (b1 folded in) + interpolation (f32 VPU) ----
        z = z_ref[0, 0]
        g1 = jnp.maximum(acc + bm1_ref[...], 0.0)                  # net1(x, mark1)
        g2 = jnp.maximum(acc + bm2_ref[...], 0.0)                  # net1(x, mark2)
        # g2 + z*(g1-g2) == z*g1 + (1-z)*g2 ; mask zeroes the padding ring rows,
        # which implements conv2's zero padding.
        gen = (g2 + z * (g1 - g2)) * mask_ref[...]                 # [R,128] f32

        # ---- net2 conv3x3: taps via sublane rolls (XLU) + bf16 MXU matmuls ----
        # shifted_i[r] = gen[(r + s_i) mod R]; for every interior row this is the
        # exact spatial neighbour (no wrap); wrapped / cross-image rows are ring
        # rows only, which the pool matrix excludes.
        acc2 = None
        for i, s in enumerate(shifts):
            src = gen if s == 0 else pltpu.roll(gen, shift=(-s) % R, axis=0)
            part = jnp.dot(src.astype(jnp.bfloat16), w2_ref[i],
                           preferred_element_type=jnp.float32)
            acc2 = part if acc2 is None else acc2 + part
        feat = jnp.maximum(acc2 + b2_ref[...], 0.0)                # [R,128] f32

        # ---- global average pool (per-image mean matrix on MXU) + linear head ----
        pooled = jnp.dot(pool_ref[...], feat,
                         preferred_element_type=jnp.float32)       # [8,128]
        out_ref[...] = jnp.dot(pooled, w3_ref[...],
                               preferred_element_type=jnp.float32) + b3_ref[...]

    return kernel


# ------------------------------- wrapper -------------------------------------

def im2col_3x3(x_nhwc):
    """[N,H,W,C] -> [N,H,W,9*C]; tap order (dh,dw) row-major, lane = tap*C + c."""
    N, H, W, C = x_nhwc.shape
    xp = jnp.pad(x_nhwc, ((0, 0), (1, 1), (1, 1), (0, 0)))
    cols = [xp[:, dh:dh + H, dw:dw + W, :] for dh in range(3) for dw in range(3)]
    return jnp.concatenate(cols, axis=-1)


def interp_nets_forward(x_nchw, params):
    """Full InterpNets forward. x_nchw: [N, Cin, H, W] float32."""
    w1, b1, mark1, mark2, z, w2, b2, w3, b3 = params
    N, Cin, H, W = x_nchw.shape
    C1 = w1.shape[1]
    C2 = w2.shape[1]
    NC = w3.shape[1]

    assert 9 * Cin <= LANES and C1 <= LANES and C2 <= LANES and NC <= LANES
    assert N <= NP

    HP, WP = H + 2, W + 2
    R = N * HP * WP                      # flattened padded spatial rows

    # ---- conv1 im2col in the wrapper (tap-packed K), ring rows all-zero ----
    x_nhwc = jnp.transpose(x_nchw, (0, 2, 3, 1))
    x_cols = im2col_3x3(x_nhwc)                                     # [N,H,W,36]
    x_cols = jnp.pad(x_cols, ((0, 0), (1, 1), (1, 1), (0, LANES - 9 * Cin)))
    x_packed = x_cols.reshape(R, LANES).astype(jnp.bfloat16)        # [R,128] bf16

    # ---- weights: conv1 packed [128,128]; conv2 per-tap [9,128,128]; bf16 ----
    w1p = jnp.pad(w1, ((0, LANES - 9 * Cin), (0, LANES - C1))).astype(jnp.bfloat16)
    w2p = jnp.pad(w2.reshape(9, C1, C2),
                  ((0, 0), (0, LANES - C1), (0, LANES - C2))).astype(jnp.bfloat16)
    # b1 folded into the marks (one fewer [R,128] VPU add + one fewer input)
    bm1 = jnp.pad(b1 + mark1, ((0, 0), (0, LANES - C1)))             # [1,128] f32
    bm2 = jnp.pad(b1 + mark2, ((0, 0), (0, LANES - C1)))
    b2p = jnp.pad(b2, ((0, 0), (0, LANES - C2)))
    w3p = jnp.pad(w3, ((0, LANES - C2), (0, LANES - NC)))            # f32 (tiny)
    b3p = jnp.pad(b3, ((0, 0), (0, LANES - NC)))

    # ---- interior mask (pre-broadcast to full lane width) + mean-pool matrix ----
    pos = jnp.arange(R)
    img = pos // (HP * WP)
    q = pos % (HP * WP)
    hh = q // WP
    ww = q % WP
    interior = (hh >= 1) & (hh <= H) & (ww >= 1) & (ww <= W)
    mask = jnp.broadcast_to(interior.astype(jnp.float32)[:, None], (R, LANES))
    pool = jnp.where((img[None, :] == jnp.arange(NP)[:, None]) & interior[None, :],
                     1.0 / (H * W), 0.0).astype(jnp.float32)          # [8, R]

    z_arr = jnp.full((1, 1), z, dtype=jnp.float32)

    kernel = make_fused_kernel(R, WP)
    vmem = pl.BlockSpec(memory_space=pltpu.MemorySpace.VMEM)
    smem = pl.BlockSpec(memory_space=pltpu.MemorySpace.SMEM)

    out_pad = pl.pallas_call(
        kernel,
        out_shape=jax.ShapeDtypeStruct((NP, LANES), jnp.float32),
        in_specs=[smem] + [vmem] * 10,
        out_specs=vmem,
    )(z_arr, x_packed, w1p, bm1, bm2, mask, w2p, b2p, pool, w3p, b3p)

    return out_pad[:N, :NC]


# ----------------------- pure-JAX f32 reference (verification) ----------------

def reference_forward(x_nchw, params):
    w1, b1, mark1, mark2, z, w2, b2, w3, b3 = params
    N, Cin, H, W = x_nchw.shape
    x_nhwc = jnp.transpose(x_nchw, (0, 2, 3, 1))
    p1 = im2col_3x3(x_nhwc).reshape(N * H * W, 9 * Cin)
    conv1 = p1 @ w1 + b1
    g1 = jnp.maximum(conv1 + mark1, 0.0)
    g2 = jnp.maximum(conv1 + mark2, 0.0)
    gen = (z * g1 + (1.0 - z) * g2).reshape(N, H, W, -1)
    p2 = im2col_3x3(gen).reshape(N * H * W, -1)
    f = jnp.maximum(p2 @ w2 + b2, 0.0).reshape(N, H * W, -1)
    pooled = jnp.mean(f, axis=1)
    return pooled @ w3 + b3


# ----------------------------------- main ------------------------------------

if __name__ == "__main__":
    # Small shapes consistent with the module's forward.
    N, Cin, H, W = 2, 4, 16, 16
    C1, C2, NUM_CLASSES = 8, 8, 10
    K = 3

    key = jax.random.PRNGKey(0)
    ks = jax.random.split(key, 9)

    x = jax.random.normal(ks[0], (N, Cin, H, W), dtype=jnp.float32)

    # net1 parameters: conv weight stored as im2col matrix [9*Cin, C1]
    w1 = 0.1 * jax.random.normal(ks[1], (K * K * Cin, C1), dtype=jnp.float32)
    b1 = 0.05 * jax.random.normal(ks[2], (1, C1), dtype=jnp.float32)
    mark1 = 0.5 * jax.random.normal(ks[3], (1, C1), dtype=jnp.float32)
    mark2 = 0.5 * jax.random.normal(ks[4], (1, C1), dtype=jnp.float32)
    interp_z = 0.3  # self.interp_z

    # net2 parameters
    w2 = 0.1 * jax.random.normal(ks[5], (K * K * C1, C2), dtype=jnp.float32)
    b2 = 0.05 * jax.random.normal(ks[6], (1, C2), dtype=jnp.float32)
    w3 = 0.1 * jax.random.normal(ks[7], (C2, NUM_CLASSES), dtype=jnp.float32)
    b3 = 0.05 * jax.random.normal(ks[8], (1, NUM_CLASSES), dtype=jnp.float32)

    params = (w1, b1, mark1, mark2, interp_z, w2, b2, w3, b3)

    forward = jax.jit(interp_nets_forward)
    out = jax.block_until_ready(forward(x, params))

    ref = reference_forward(x, params)
    assert out.shape == (N, NUM_CLASSES)
    err = jnp.max(jnp.abs(out - ref))
    assert jnp.allclose(out, ref, atol=1e-2, rtol=1e-2), f"max abs err {err}"

    print("KERNEL_OK")
</pallas_src>

<mosaic_0001>
module attributes {stable_mosaic.version = 11 : i64} {
  func.func @kernel(%arg0: memref<1x1xf32, #tpu.memory_space<smem>>, %arg1: memref<648x128xbf16, #tpu.memory_space<vmem>>, %arg2: memref<128x128xbf16, #tpu.memory_space<vmem>>, %arg3: memref<1x128xf32, #tpu.memory_space<vmem>>, %arg4: memref<1x128xf32, #tpu.memory_space<vmem>>, %arg5: memref<648x128xf32, #tpu.memory_space<vmem>>, %arg6: memref<9x128x128xbf16, #tpu.memory_space<vmem>>, %arg7: memref<1x128xf32, #tpu.memory_space<vmem>>, %arg8: memref<8x648xf32, #tpu.memory_space<vmem>>, %arg9: memref<128x128xf32, #tpu.memory_space<vmem>>, %arg10: memref<1x128xf32, #tpu.memory_space<vmem>>, %arg11: memref<8x128xf32, #tpu.memory_space<vmem>>) attributes {dimension_semantics = [], scalar_prefetch = 0 : i64, scratch_operands = 0 : i64, tpu.core_type = #tpu.core_type<tc>} {
    %c0 = arith.constant 0 : index
    %c0_0 = arith.constant 0 : index
    %0 = vector.load %arg1[%c0, %c0_0] : memref<648x128xbf16, #tpu.memory_space<vmem>>, vector<648x128xbf16>
    %c0_1 = arith.constant 0 : index
    %c0_2 = arith.constant 0 : index
    %1 = vector.load %arg2[%c0_1, %c0_2] : memref<128x128xbf16, #tpu.memory_space<vmem>>, vector<128x128xbf16>
    %cst = arith.constant dense<0.000000e+00> : vector<648x128xf32>
    %2 = tpu.matmul %0, %1, %cst {dimension_numbers = #tpu.dot_dimension_numbers<[1], [0], [0], [1], [0, 0, 1, 1], [], []>} : vector<648x128xbf16>, vector<128x128xbf16>, vector<648x128xf32> -> vector<648x128xf32>
    %c0_3 = arith.constant 0 : index
    %c0_4 = arith.constant 0 : index
    %3 = memref.load %arg0[%c0_3, %c0_4] : memref<1x1xf32, #tpu.memory_space<smem>>
    %c0_5 = arith.constant 0 : index
    %c0_6 = arith.constant 0 : index
    %4 = vector.load %arg3[%c0_5, %c0_6] : memref<1x128xf32, #tpu.memory_space<vmem>>, vector<1x128xf32>
    %5 = vector.broadcast %4 : vector<1x128xf32> to vector<648x128xf32>
    %6 = arith.addf %2, %5 : vector<648x128xf32>
    %cst_7 = arith.constant 0.000000e+00 : f32
    %7 = vector.broadcast %cst_7 : f32 to vector<648x128xf32>
    %8 = arith.maximumf %6, %7 : vector<648x128xf32>
    %c0_8 = arith.constant 0 : index
    %c0_9 = arith.constant 0 : index
    %9 = vector.load %arg4[%c0_8, %c0_9] : memref<1x128xf32, #tpu.memory_space<vmem>>, vector<1x128xf32>
    %10 = vector.broadcast %9 : vector<1x128xf32> to vector<648x128xf32>
    %11 = arith.addf %2, %10 : vector<648x128xf32>
    %cst_10 = arith.constant 0.000000e+00 : f32
    %12 = vector.broadcast %cst_10 : f32 to vector<648x128xf32>
    %13 = arith.maximumf %11, %12 : vector<648x128xf32>
    %14 = arith.subf %8, %13 : vector<648x128xf32>
    %15 = vector.broadcast %3 : f32 to vector<648x128xf32>
    %16 = arith.mulf %15, %14 : vector<648x128xf32>
    %17 = arith.addf %13, %16 : vector<648x128xf32>
    %c0_11 = arith.constant 0 : index
    %c0_12 = arith.constant 0 : index
    %18 = vector.load %arg5[%c0_11, %c0_12] : memref<648x128xf32, #tpu.memory_space<vmem>>, vector<648x128xf32>
    %19 = arith.mulf %17, %18 : vector<648x128xf32>
    %c19_i32 = arith.constant 19 : i32
    %20 = tpu.dynamic_rotate %19 by %c19_i32 dim 0 : vector<648x128xf32>, i32 -> vector<648x128xf32>
    %21 = arith.truncf %20 : vector<648x128xf32> to vector<648x128xbf16>
    %c0_13 = arith.constant 0 : index
    %c0_14 = arith.constant 0 : index
    %c0_15 = arith.constant 0 : index
    %22 = vector.load %arg6[%c0_13, %c0_14, %c0_15] : memref<9x128x128xbf16, #tpu.memory_space<vmem>>, vector<1x128x128xbf16>
    %23 = vector.shape_cast %22 : vector<1x128x128xbf16> to vector<128x128xbf16>
    %cst_16 = arith.constant dense<0.000000e+00> : vector<648x128xf32>
    %24 = tpu.matmul %21, %23, %cst_16 {dimension_numbers = #tpu.dot_dimension_numbers<[1], [0], [0], [1], [0, 0, 1, 1], [], []>} : vector<648x128xbf16>, vector<128x128xbf16>, vector<648x128xf32> -> vector<648x128xf32>
    %c18_i32 = arith.constant 18 : i32
    %25 = tpu.dynamic_rotate %19 by %c18_i32 dim 0 : vector<648x128xf32>, i32 -> vector<648x128xf32>
    %26 = arith.truncf %25 : vector<648x128xf32> to vector<648x128xbf16>
    %c1 = arith.constant 1 : index
    %c0_17 = arith.constant 0 : index
    %c0_18 = arith.constant 0 : index
    %27 = vector.load %arg6[%c1, %c0_17, %c0_18] : memref<9x128x128xbf16, #tpu.memory_space<vmem>>, vector<1x128x128xbf16>
    %28 = vector.shape_cast %27 : vector<1x128x128xbf16> to vector<128x128xbf16>
    %cst_19 = arith.constant dense<0.000000e+00> : vector<648x128xf32>
    %29 = tpu.matmul %26, %28, %cst_19 {dimension_numbers = #tpu.dot_dimension_numbers<[1], [0], [0], [1], [0, 0, 1, 1], [], []>} : vector<648x128xbf16>, vector<128x128xbf16>, vector<648x128xf32> -> vector<648x128xf32>
    %30 = arith.addf %24, %29 : vector<648x128xf32>
    %c17_i32 = arith.constant 17 : i32
    %31 = tpu.dynamic_rotate %19 by %c17_i32 dim 0 : vector<648x128xf32>, i32 -> vector<648x128xf32>
    %32 = arith.truncf %31 : vector<648x128xf32> to vector<648x128xbf16>
    %c2 = arith.constant 2 : index
    %c0_20 = arith.constant 0 : index
    %c0_21 = arith.constant 0 : index
    %33 = vector.load %arg6[%c2, %c0_20, %c0_21] : memref<9x128x128xbf16, #tpu.memory_space<vmem>>, vector<1x128x128xbf16>
    %34 = vector.shape_cast %33 : vector<1x128x128xbf16> to vector<128x128xbf16>
    %cst_22 = arith.constant dense<0.000000e+00> : vector<648x128xf32>
    %35 = tpu.matmul %32, %34, %cst_22 {dimension_numbers = #tpu.dot_dimension_numbers<[1], [0], [0], [1], [0, 0, 1, 1], [], []>} : vector<648x128xbf16>, vector<128x128xbf16>, vector<648x128xf32> -> vector<648x128xf32>
    %36 = arith.addf %30, %35 : vector<648x128xf32>
    %c1_i32 = arith.constant 1 : i32
    %37 = tpu.dynamic_rotate %19 by %c1_i32 dim 0 : vector<648x128xf32>, i32 -> vector<648x128xf32>
    %38 = arith.truncf %37 : vector<648x128xf32> to vector<648x128xbf16>
    %c3 = arith.constant 3 : index
    %c0_23 = arith.constant 0 : index
    %c0_24 = arith.constant 0 : index
    %39 = vector.load %arg6[%c3, %c0_23, %c0_24] : memref<9x128x128xbf16, #tpu.memory_space<vmem>>, vector<1x128x128xbf16>
    %40 = vector.shape_cast %39 : vector<1x128x128xbf16> to vector<128x128xbf16>
    %cst_25 = arith.constant dense<0.000000e+00> : vector<648x128xf32>
    %41 = tpu.matmul %38, %40, %cst_25 {dimension_numbers = #tpu.dot_dimension_numbers<[1], [0], [0], [1], [0, 0, 1, 1], [], []>} : vector<648x128xbf16>, vector<128x128xbf16>, vector<648x128xf32> -> vector<648x128xf32>
    %42 = arith.addf %36, %41 : vector<648x128xf32>
    %43 = arith.truncf %19 : vector<648x128xf32> to vector<648x128xbf16>
    %c4 = arith.constant 4 : index
    %c0_26 = arith.constant 0 : index
    %c0_27 = arith.constant 0 : index
    %44 = vector.load %arg6[%c4, %c0_26, %c0_27] : memref<9x128x128xbf16, #tpu.memory_space<vmem>>, vector<1x128x128xbf16>
    %45 = vector.shape_cast %44 : vector<1x128x128xbf16> to vector<128x128xbf16>
    %cst_28 = arith.constant dense<0.000000e+00> : vector<648x128xf32>
    %46 = tpu.matmul %43, %45, %cst_28 {dimension_numbers = #tpu.dot_dimension_numbers<[1], [0], [0], [1], [0, 0, 1, 1], [], []>} : vector<648x128xbf16>, vector<128x128xbf16>, vector<648x128xf32> -> vector<648x128xf32>
    %47 = arith.addf %42, %46 : vector<648x128xf32>
    %c647_i32 = arith.constant 647 : i32
    %48 = tpu.dynamic_rotate %19 by %c647_i32 dim 0 : vector<648x128xf32>, i32 -> vector<648x128xf32>
    %49 = arith.truncf %48 : vector<648x128xf32> to vector<648x128xbf16>
    %c5 = arith.constant 5 : index
    %c0_29 = arith.constant 0 : index
    %c0_30 = arith.constant 0 : index
    %50 = vector.load %arg6[%c5, %c0_29, %c0_30] : memref<9x128x128xbf16, #tpu.memory_space<vmem>>, vector<1x128x128xbf16>
    %51 = vector.shape_cast %50 : vector<1x128x128xbf16> to vector<128x128xbf16>
    %cst_31 = arith.constant dense<0.000000e+00> : vector<648x128xf32>
    %52 = tpu.matmul %49, %51, %cst_31 {dimension_numbers = #tpu.dot_dimension_numbers<[1], [0], [0], [1], [0, 0, 1, 1], [], []>} : vector<648x128xbf16>, vector<128x128xbf16>, vector<648x128xf32> -> vector<648x128xf32>
    %53 = arith.addf %47, %52 : vector<648x128xf32>
    %c631_i32 = arith.constant 631 : i32
    %54 = tpu.dynamic_rotate %19 by %c631_i32 dim 0 : vector<648x128xf32>, i32 -> vector<648x128xf32>
    %55 = arith.truncf %54 : vector<648x128xf32> to vector<648x128xbf16>
    %c6 = arith.constant 6 : index
    %c0_32 = arith.constant 0 : index
    %c0_33 = arith.constant 0 : index
    %56 = vector.load %arg6[%c6, %c0_32, %c0_33] : memref<9x128x128xbf16, #tpu.memory_space<vmem>>, vector<1x128x128xbf16>
    %57 = vector.shape_cast %56 : vector<1x128x128xbf16> to vector<128x128xbf16>
    %cst_34 = arith.constant dense<0.000000e+00> : vector<648x128xf32>
    %58 = tpu.matmul %55, %57, %cst_34 {dimension_numbers = #tpu.dot_dimension_numbers<[1], [0], [0], [1], [0, 0, 1, 1], [], []>} : vector<648x128xbf16>, vector<128x128xbf16>, vector<648x128xf32> -> vector<648x128xf32>
    %59 = arith.addf %53, %58 : vector<648x128xf32>
    %c630_i32 = arith.constant 630 : i32
    %60 = tpu.dynamic_rotate %19 by %c630_i32 dim 0 : vector<648x128xf32>, i32 -> vector<648x128xf32>
    %61 = arith.truncf %60 : vector<648x128xf32> to vector<648x128xbf16>
    %c7 = arith.constant 7 : index
    %c0_35 = arith.constant 0 : index
    %c0_36 = arith.constant 0 : index
    %62 = vector.load %arg6[%c7, %c0_35, %c0_36] : memref<9x128x128xbf16, #tpu.memory_space<vmem>>, vector<1x128x128xbf16>
    %63 = vector.shape_cast %62 : vector<1x128x128xbf16> to vector<128x128xbf16>
    %cst_37 = arith.constant dense<0.000000e+00> : vector<648x128xf32>
    %64 = tpu.matmul %61, %63, %cst_37 {dimension_numbers = #tpu.dot_dimension_numbers<[1], [0], [0], [1], [0, 0, 1, 1], [], []>} : vector<648x128xbf16>, vector<128x128xbf16>, vector<648x128xf32> -> vector<648x128xf32>
    %65 = arith.addf %59, %64 : vector<648x128xf32>
    %c629_i32 = arith.constant 629 : i32
    %66 = tpu.dynamic_rotate %19 by %c629_i32 dim 0 : vector<648x128xf32>, i32 -> vector<648x128xf32>
    %67 = arith.truncf %66 : vector<648x128xf32> to vector<648x128xbf16>
    %c8 = arith.constant 8 : index
    %c0_38 = arith.constant 0 : index
    %c0_39 = arith.constant 0 : index
    %68 = vector.load %arg6[%c8, %c0_38, %c0_39] : memref<9x128x128xbf16, #tpu.memory_space<vmem>>, vector<1x128x128xbf16>
    %69 = vector.shape_cast %68 : vector<1x128x128xbf16> to vector<128x128xbf16>
    %cst_40 = arith.constant dense<0.000000e+00> : vector<648x128xf32>
    %70 = tpu.matmul %67, %69, %cst_40 {dimension_numbers = #tpu.dot_dimension_numbers<[1], [0], [0], [1], [0, 0, 1, 1], [], []>} : vector<648x128xbf16>, vector<128x128xbf16>, vector<648x128xf32> -> vector<648x128xf32>
    %71 = arith.addf %65, %70 : vector<648x128xf32>
    %c0_41 = arith.constant 0 : index
    %c0_42 = arith.constant 0 : index
    %72 = vector.load %arg7[%c0_41, %c0_42] : memref<1x128xf32, #tpu.memory_space<vmem>>, vector<1x128xf32>
    %73 = vector.broadcast %72 : vector<1x128xf32> to vector<648x128xf32>
    %74 = arith.addf %71, %73 : vector<648x128xf32>
    %cst_43 = arith.constant 0.000000e+00 : f32
    %75 = vector.broadcast %cst_43 : f32 to vector<648x128xf32>
    %76 = arith.maximumf %74, %75 : vector<648x128xf32>
    %c0_44 = arith.constant 0 : index
    %c0_45 = arith.constant 0 : index
    %77 = vector.load %arg8[%c0_44, %c0_45] : memref<8x648xf32, #tpu.memory_space<vmem>>, vector<8x648xf32>
    %cst_46 = arith.constant dense<0.000000e+00> : vector<8x128xf32>
    %78 = tpu.matmul %77, %76, %cst_46 {dimension_numbers = #tpu.dot_dimension_numbers<[1], [0], [0], [1], [0, 0, 1, 1], [], []>} : vector<8x648xf32>, vector<648x128xf32>, vector<8x128xf32> -> vector<8x128xf32>
    %c0_47 = arith.constant 0 : index
    %c0_48 = arith.constant 0 : index
    %79 = vector.load %arg9[%c0_47, %c0_48] : memref<128x128xf32, #tpu.memory_space<vmem>>, vector<128x128xf32>
    %cst_49 = arith.constant dense<0.000000e+00> : vector<8x128xf32>
    %80 = tpu.matmul %78, %79, %cst_49 {dimension_numbers = #tpu.dot_dimension_numbers<[1], [0], [0], [1], [0, 0, 1, 1], [], []>} : vector<8x128xf32>, vector<128x128xf32>, vector<8x128xf32> -> vector<8x128xf32>
    %c0_50 = arith.constant 0 : index
    %c0_51 = arith.constant 0 : index
    %81 = vector.load %arg10[%c0_50, %c0_51] : memref<1x128xf32, #tpu.memory_space<vmem>>, vector<1x128xf32>
    %82 = vector.broadcast %81 : vector<1x128xf32> to vector<8x128xf32>
    %83 = arith.addf %80, %82 : vector<8x128xf32>
    %c0_52 = arith.constant 0 : index
    %c0_53 = arith.constant 0 : index
    %84 = vector.load %arg11[%c0_52, %c0_53] : memref<8x128xf32, #tpu.memory_space<vmem>>, vector<8x128xf32>
    tpu.vector_store %arg11[%c0_52, %c0_53], %83 {strides = array<i32>} : memref<8x128xf32, #tpu.memory_space<vmem>>, vector<8x128xf32>,
    return
  }
}

</mosaic_0001>

<llo_original>
// kernel: interp_nets_forward.1
$region0: #{interp_nets_forward.1}
  #allocation0 [shape = 'u32[]', space=smem, size = 0x4, offset = 0x4, fixed_abs, tag = 'smem constant byte address 0x4 - core index']
  #allocation1 [shape = 'u32[144,128]{1,0:T(1,128)}', space=vmem, size = 0x12000, scoped, tag = 'internal scratch']
  #allocation2 [shape = 'f32[1,1]{1,0:T(1,128)S(6)}', space=smem, size = 0x200, scoped, tag = 'scoped memory for interp_nets_forward.1']
  %s0 = inlined_call_operand.<no memory space> [shape: f32[1,1], index: 0, kind: input, shape index: {}]
  %s1 = inlined_call_operand.vmem [shape: bf16[648,128], index: 1, kind: input, shape index: {}]
  %s2 = inlined_call_operand.vmem [shape: bf16[128,128], index: 2, kind: input, shape index: {}]
  %s3 = inlined_call_operand.vmem [shape: f32[1,128], index: 3, kind: input, shape index: {}]
  %s4 = inlined_call_operand.vmem [shape: f32[1,128], index: 4, kind: input, shape index: {}]
  %s5 = inlined_call_operand.vmem [shape: f32[648,128], index: 5, kind: input, shape index: {}]
  %s6 = inlined_call_operand.vmem [shape: bf16[9,128,128], index: 6, kind: input, shape index: {}]
  %s7 = inlined_call_operand.vmem [shape: f32[1,128], index: 7, kind: input, shape index: {}]
  %s8 = inlined_call_operand.vmem [shape: f32[8,648], index: 8, kind: input, shape index: {}]
  %s9 = inlined_call_operand.vmem [shape: f32[128,128], index: 9, kind: input, shape index: {}]
  %s10 = inlined_call_operand.vmem [shape: f32[1,128], index: 10, kind: input, shape index: {}]
  %s11 = inlined_call_operand.vmem [shape: f32[8,128], index: 11, kind: output, shape index: {}]
  %s12 = sld [smem:[#allocation0]]
  $region54: #{interp_nets_forward.1} parent=0
    _
  %s14 = ssub.s32 1, %s12
  %s15 = scalar_select 0, %s14, %s12
  %16 = sst [smem:[#allocation2]] %s0
  // Predicated region
  $region2: #{interp_nets_forward.1} parent=0 // pred_check
    _
  $region3: #{interp_nets_forward.1} parent=0 // pred_check_branch
    %18 = sbr.rel (0) target = $region5
  $region4: #{interp_nets_forward.1} parent=0 // pred_region
    _
  $region5: #{interp_nets_forward.1} parent=0 // pred_fallthru
    _
  // Predicated region
  $region6: #{interp_nets_forward.1} parent=0 // pred_check
    _
  $region7: #{interp_nets_forward.1} parent=0 // pred_check_branch
    %20 = sbr.rel (0) target = $region9
  $region8: #{interp_nets_forward.1} parent=0 // pred_region
    _
  $region9: #{interp_nets_forward.1} parent=0 // pred_fallthru
    _
  // Predicated region
  $region10: #{interp_nets_forward.1} parent=0 // pred_check
    _
  $region11: #{interp_nets_forward.1} parent=0 // pred_check_branch
    %22 = sbr.rel (0) target = $region13
  $region12: #{interp_nets_forward.1} parent=0 // pred_region
    _
  $region13: #{interp_nets_forward.1} parent=0 // pred_fallthru
    _
  // Predicated region
  $region14: #{interp_nets_forward.1} parent=0 // pred_check
    _
  $region15: #{interp_nets_forward.1} parent=0 // pred_check_branch
    %24 = sbr.rel (0) target = $region17
  $region16: #{interp_nets_forward.1} parent=0 // pred_region
    _
  $region17: #{interp_nets_forward.1} parent=0 // pred_fallthru
    _
  // Predicated region
  $region18: #{interp_nets_forward.1} parent=0 // pred_check
    _
  $region19: #{interp_nets_forward.1} parent=0 // pred_check_branch
    %26 = sbr.rel (0) target = $region21
  $region20: #{interp_nets_forward.1} parent=0 // pred_region
    _
  $region21: #{interp_nets_forward.1} parent=0 // pred_fallthru
    _
  // Predicated region
  $region22: #{interp_nets_forward.1} parent=0 // pred_check
    _
  $region23: #{interp_nets_forward.1} parent=0 // pred_check_branch
    %28 = sbr.rel (0) target = $region25
  $region24: #{interp_nets_forward.1} parent=0 // pred_region
    _
  $region25: #{interp_nets_forward.1} parent=0 // pred_fallthru
    _
  // Predicated region
  $region26: #{interp_nets_forward.1} parent=0 // pred_check
    _
  $region27: #{interp_nets_forward.1} parent=0 // pred_check_branch
    %30 = sbr.rel (0) target = $region29
  $region28: #{interp_nets_forward.1} parent=0 // pred_region
    _
  $region29: #{interp_nets_forward.1} parent=0 // pred_fallthru
    _
  // Predicated region
  $region30: #{interp_nets_forward.1} parent=0 // pred_check
    _
  $region31: #{interp_nets_forward.1} parent=0 // pred_check_branch
    %32 = sbr.rel (0) target = $region33
  $region32: #{interp_nets_forward.1} parent=0 // pred_region
    _
  $region33: #{interp_nets_forward.1} parent=0 // pred_fallthru
    _
  // Predicated region
  $region34: #{interp_nets_forward.1} parent=0 // pred_check
    _
  $region35: #{interp_nets_forward.1} parent=0 // pred_check_branch
    %34 = sbr.rel (0) target = $region37
  $region36: #{interp_nets_forward.1} parent=0 // pred_region
    _
  $region37: #{interp_nets_forward.1} parent=0 // pred_fallthru
    _
  // Predicated region
  $region38: #{interp_nets_forward.1} parent=0 // pred_check
    _
  $region39: #{interp_nets_forward.1} parent=0 // pred_check_branch
    %36 = sbr.rel (0) target = $region41
  $region40: #{interp_nets_forward.1} parent=0 // pred_region
    _
  $region41: #{interp_nets_forward.1} parent=0 // pred_fallthru
    _
  // Predicated region
  $region42: #{interp_nets_forward.1} parent=0 // pred_check
    _
  $region43: #{interp_nets_forward.1} parent=0 // pred_check_branch
    %38 = sbr.rel (0) target = $region45
  $region44: #{interp_nets_forward.1} parent=0 // pred_region
    _
  $region45: #{interp_nets_forward.1} parent=0 // pred_fallthru
    _
  %v40 = vld [vmem:[%s1] sm:$0xf]
  %v41 = vld [vmem:[%s1 + $0x4] sm:$0xf]
  %v42 = vld [vmem:[%s1 + $0x8] sm:$0xf]
  %v43 = vld [vmem:[%s1 + $0xc] sm:$0xf]
  %v44 = vld [vmem:[%s1 + $0x10] sm:$0xf]
  %v45 = vld [vmem:[%s1 + $0x14] sm:$0xf]
  %v46 = vld [vmem:[%s1 + $0x18] sm:$0xf]
  %v47 = vld [vmem:[%s1 + $0x1c] sm:$0xf]
  %v48 = vld [vmem:[%s1 + $0x20] sm:$0xf]
  %v49 = vld [vmem:[%s1 + $0x24] sm:$0xf]
  %v50 = vld [vmem:[%s1 + $0x28] sm:$0xf]
  %v51 = vld [vmem:[%s1 + $0x2c] sm:$0xf]
  %v52 = vld [vmem:[%s1 + $0x30] sm:$0xf]
  %v53 = vld [vmem:[%s1 + $0x34] sm:$0xf]
  %v54 = vld [vmem:[%s1 + $0x38] sm:$0xf]
  %v55 = vld [vmem:[%s1 + $0x3c] sm:$0xf]
  %v56 = vld [vmem:[%s1 + $0x40] sm:$0xf]
  %v57 = vld [vmem:[%s1 + $0x44] sm:$0xf]
  %v58 = vld [vmem:[%s1 + $0x48] sm:$0xf]
  %v59 = vld [vmem:[%s1 + $0x4c] sm:$0xf]
  %v60 = vld [vmem:[%s1 + $0x50] sm:$0xf]
  %v61 = vld [vmem:[%s1 + $0x54] sm:$0xf]
  %v62 = vld [vmem:[%s1 + $0x58] sm:$0xf]
  %v63 = vld [vmem:[%s1 + $0x5c] sm:$0xf]
  %v64 = vld [vmem:[%s1 + $0x60] sm:$0xf]
  %v65 = vld [vmem:[%s1 + $0x64] sm:$0xf]
  %v66 = vld [vmem:[%s1 + $0x68] sm:$0xf]
  %v67 = vld [vmem:[%s1 + $0x6c] sm:$0xf]
  %v68 = vld [vmem:[%s1 + $0x70] sm:$0xf]
  %v69 = vld [vmem:[%s1 + $0x74] sm:$0xf]
  %v70 = vld [vmem:[%s1 + $0x78] sm:$0xf]
  %v71 = vld [vmem:[%s1 + $0x7c] sm:$0xf]
  %v72 = vld [vmem:[%s1 + $0x80] sm:$0xf]
  %v73 = vld [vmem:[%s1 + $0x84] sm:$0xf]
  %v74 = vld [vmem:[%s1 + $0x88] sm:$0xf]
  %v75 = vld [vmem:[%s1 + $0x8c] sm:$0xf]
  %v76 = vld [vmem:[%s1 + $0x90] sm:$0xf]
  %v77 = vld [vmem:[%s1 + $0x94] sm:$0xf]
  %v78 = vld [vmem:[%s1 + $0x98] sm:$0xf]
  %v79 = vld [vmem:[%s1 + $0x9c] sm:$0xf]
  %v80 = vld [vmem:[%s1 + $0xa0] sm:$0xf]
  %v81 = vld [vmem:[%s1 + $0xa4] sm:$0xf]
  %v82 = vld [vmem:[%s1 + $0xa8] sm:$0xf]
  %v83 = vld [vmem:[%s1 + $0xac] sm:$0xf]
  %v84 = vld [vmem:[%s1 + $0xb0] sm:$0xf]
  %v85 = vld [vmem:[%s1 + $0xb4] sm:$0xf]
  %v86 = vld [vmem:[%s1 + $0xb8] sm:$0xf]
  %v87 = vld [vmem:[%s1 + $0xbc] sm:$0xf]
  %v88 = vld [vmem:[%s1 + $0xc0] sm:$0xf]
  %v89 = vld [vmem:[%s1 + $0xc4] sm:$0xf]
  %v90 = vld [vmem:[%s1 + $0xc8] sm:$0xf]
  %v91 = vld [vmem:[%s1 + $0xcc] sm:$0xf]
  %v92 = vld [vmem:[%s1 + $0xd0] sm:$0xf]
  %v93 = vld [vmem:[%s1 + $0xd4] sm:$0xf]
  %v94 = vld [vmem:[%s1 + $0xd8] sm:$0xf]
  %v95 = vld [vmem:[%s1 + $0xdc] sm:$0xf]
  %v96 = vld [vmem:[%s1 + $0xe0] sm:$0xf]
  %v97 = vld [vmem:[%s1 + $0xe4] sm:$0xf]
  %v98 = vld [vmem:[%s1 + $0xe8] sm:$0xf]
  %v99 = vld [vmem:[%s1 + $0xec] sm:$0xf]
  %v100 = vld [vmem:[%s1 + $0xf0] sm:$0xf]
  %v101 = vld [vmem:[%s1 + $0xf4] sm:$0xf]
  %v102 = vld [vmem:[%s1 + $0xf8] sm:$0xf]
  %v103 = vld [vmem:[%s1 + $0xfc] sm:$0xf]
  %v104 = vld [vmem:[%s1 + $0x100] sm:$0xf]
  %v105 = vld [vmem:[%s1 + $0x104] sm:$0xf]
  %v106 = vld [vmem:[%s1 + $0x108] sm:$0xf]
  %v107 = vld [vmem:[%s1 + $0x10c] sm:$0xf]
  %v108 = vld [vmem:[%s1 + $0x110] sm:$0xf]
  %v109 = vld [vmem:[%s1 + $0x114] sm:$0xf]
  %v110 = vld [vmem:[%s1 + $0x118] sm:$0xf]
  %v111 = vld [vmem:[%s1 + $0x11c] sm:$0xf]
  %v112 = vld [vmem:[%s1 + $0x120] sm:$0xf]
  %v113 = vld [vmem:[%s1 + $0x124] sm:$0xf]
  %v114 = vld [vmem:[%s1 + $0x128] sm:$0xf]
  %v115 = vld [vmem:[%s1 + $0x12c] sm:$0xf]
  %v116 = vld [vmem:[%s1 + $0x130] sm:$0xf]
  %v117 = vld [vmem:[%s1 + $0x134] sm:$0xf]
  %v118 = vld [vmem:[%s1 + $0x138] sm:$0xf]
  %v119 = vld [vmem:[%s1 + $0x13c] sm:$0xf]
  %v120 = vld [vmem:[%s1 + $0x140] sm:$0xf]
  %v121 = vld [vmem:[%s2] sm:$0xf]
  %v122 = vld [vmem:[%s2 + $0x4] sm:$0xf]
  %v123 = vld [vmem:[%s2 + $0x8] sm:$0xf]
  %v124 = vld [vmem:[%s2 + $0xc] sm:$0xf]
  %v125 = vld [vmem:[%s2 + $0x10] sm:$0xf]
  %v126 = vld [vmem:[%s2 + $0x14] sm:$0xf]
  %v127 = vld [vmem:[%s2 + $0x18] sm:$0xf]
  %v128 = vld [vmem:[%s2 + $0x1c] sm:$0xf]
  %v129 = vld [vmem:[%s2 + $0x20] sm:$0xf]
  %v130 = vld [vmem:[%s2 + $0x24] sm:$0xf]
  %v131 = vld [vmem:[%s2 + $0x28] sm:$0xf]
  %v132 = vld [vmem:[%s2 + $0x2c] sm:$0xf]
  %v133 = vld [vmem:[%s2 + $0x30] sm:$0xf]
  %v134 = vld [vmem:[%s2 + $0x34] sm:$0xf]
  %v135 = vld [vmem:[%s2 + $0x38] sm:$0xf]
  %v136 = vld [vmem:[%s2 + $0x3c] sm:$0xf]
  %v218 = vunpack.c.l.b16 %v40
  %v219 = vunpack.c.l.b16 %v41
  %v220 = vunpack.c.l.b16 %v42
  %v221 = vunpack.c.l.b16 %v43
  %v222 = vunpack.c.l.b16 %v44
  %v223 = vunpack.c.l.b16 %v45
  %v224 = vunpack.c.l.b16 %v46
  %v225 = vunpack.c.l.b16 %v47
  %v226 = vunpack.c.l.b16 %v48
  %v227 = vunpack.c.l.b16 %v49
  %v228 = vunpack.c.l.b16 %v50
  %v229 = vunpack.c.l.b16 %v51
  %v230 = vunpack.c.l.b16 %v52
  %v231 = vunpack.c.l.b16 %v53
  %v232 = vunpack.c.l.b16 %v54
  %v233 = vunpack.c.l.b16 %v55
  %v234 = vunpack.c.l.b16 %v56
  %v235 = vunpack.c.l.b16 %v57
  %v236 = vunpack.c.l.b16 %v58
  %v237 = vunpack.c.l.b16 %v59
  %v238 = vunpack.c.l.b16 %v60
  %v239 = vunpack.c.l.b16 %v61
  %v240 = vunpack.c.l.b16 %v62
  %v241 = vunpack.c.l.b16 %v63
  %v242 = vunpack.c.l.b16 %v64
  %v243 = vunpack.c.l.b16 %v65
  %v244 = vunpack.c.l.b16 %v66
  %v245 = vunpack.c.l.b16 %v67
  %v246 = vunpack.c.l.b16 %v68
  %v247 = vunpack.c.l.b16 %v69
  %v248 = vunpack.c.l.b16 %v70
  %v249 = vunpack.c.l.b16 %v71
  %v250 = vunpack.c.l.b16 %v72
  %v251 = vunpack.c.l.b16 %v73
  %v252 = vunpack.c.l.b16 %v74
  %v253 = vunpack.c.l.b16 %v75
  %v254 = vunpack.c.l.b16 %v76
  %v255 = vunpack.c.l.b16 %v77
  %v256 = vunpack.c.l.b16 %v78
  %v257 = vunpack.c.l.b16 %v79
  %v258 = vunpack.c.l.b16 %v80
  %v259 = vunpack.c.l.b16 %v81
  %v260 = vunpack.c.l.b16 %v82
  %v261 = vunpack.c.l.b16 %v83
  %v262 = vunpack.c.l.b16 %v84
  %v263 = vunpack.c.l.b16 %v85
  %v264 = vunpack.c.l.b16 %v86
  %v265 = vunpack.c.l.b16 %v87
  %v266 = vunpack.c.l.b16 %v88
  %v267 = vunpack.c.l.b16 %v89
  %v268 = vunpack.c.l.b16 %v90
  %v269 = vunpack.c.l.b16 %v91
  %v270 = vunpack.c.l.b16 %v92
  %v271 = vunpack.c.l.b16 %v93
  %v272 = vunpack.c.l.b16 %v94
  %v273 = vunpack.c.l.b16 %v95
  %v274 = vunpack.c.l.b16 %v96
  %v275 = vunpack.c.l.b16 %v97
  %v276 = vunpack.c.l.b16 %v98
  %v277 = vunpack.c.l.b16 %v99
  %v278 = vunpack.c.l.b16 %v100
  %v279 = vunpack.c.l.b16 %v101
  %v280 = vunpack.c.l.b16 %v102
  %v281 = vunpack.c.l.b16 %v103
  %v282 = vunpack.c.l.b16 %v104
  %v283 = vunpack.c.l.b16 %v105
  %v284 = vunpack.c.l.b16 %v106
  %v285 = vunpack.c.l.b16 %v107
  %v286 = vunpack.c.l.b16 %v108
  %v287 = vunpack.c.l.b16 %v109
  %v288 = vunpack.c.l.b16 %v110
  %v289 = vunpack.c.l.b16 %v111
  %v290 = vunpack.c.l.b16 %v112
  %v291 = vunpack.c.l.b16 %v113
  %v292 = vunpack.c.l.b16 %v114
  %v293 = vunpack.c.l.b16 %v115
  %v294 = vunpack.c.l.b16 %v116
  %v295 = vunpack.c.l.b16 %v117
  %v296 = vunpack.c.l.b16 %v118
  %v297 = vunpack.c.l.b16 %v119
  %v298 = vunpack.c.l.b16 %v120
  %v299 = vpack.c.b16 %v219, %v218
  %v300 = vpack.c.b16 %v221, %v220
  %v301 = vpack.c.b16 %v223, %v222
  %v302 = vpack.c.b16 %v225, %v224
  %v303 = vpack.c.b16 %v227, %v226
  %v304 = vpack.c.b16 %v229, %v228
  %v305 = vpack.c.b16 %v231, %v230
  %v306 = vpack.c.b16 %v233, %v232
  %v307 = vpack.c.b16 %v235, %v234
  %v308 = vpack.c.b16 %v237, %v236
  %v309 = vpack.c.b16 %v239, %v238
  %v310 = vpack.c.b16 %v241, %v240
  %v311 = vpack.c.b16 %v243, %v242
  %v312 = vpack.c.b16 %v245, %v244
  %v313 = vpack.c.b16 %v247, %v246
  %v314 = vpack.c.b16 %v249, %v248
  %v315 = vpack.c.b16 %v251, %v250
  %v316 = vpack.c.b16 %v253, %v252
  %v317 = vpack.c.b16 %v255, %v254
  %v318 = vpack.c.b16 %v257, %v256
  %v319 = vpack.c.b16 %v259, %v258
  %v320 = vpack.c.b16 %v261, %v260
  %v321 = vpack.c.b16 %v263, %v262
  %v322 = vpack.c.b16 %v265, %v264
  %v323 = vpack.c.b16 %v267, %v266
  %v324 = vpack.c.b16 %v269, %v268
  %v325 = vpack.c.b16 %v271, %v270
  %v326 = vpack.c.b16 %v273, %v272
  %v327 = vpack.c.b16 %v275, %v274
  %v328 = vpack.c.b16 %v277, %v276
  %v329 = vpack.c.b16 %v279, %v278
  %v330 = vpack.c.b16 %v281, %v280
  %v331 = vpack.c.b16 %v283, %v282
  %v332 = vpack.c.b16 %v285, %v284
  %v333 = vpack.c.b16 %v287, %v286
  %v334 = vpack.c.b16 %v289, %v288
  %v335 = vpack.c.b16 %v291, %v290
  %v336 = vpack.c.b16 %v293, %v292
  %v337 = vpack.c.b16 %v295, %v294
  %v338 = vpack.c.b16 %v297, %v296
  %v339 = vpack.c.b16 %v298, %v298
  %v397 = vunpack.c.l.b16 %v121
  %v398 = vunpack.c.l.b16 %v122
  %v399 = vunpack.c.l.b16 %v123
  %v400 = vunpack.c.l.b16 %v124
  %v401 = vunpack.c.l.b16 %v125
  %v402 = vunpack.c.l.b16 %v126
  %v403 = vunpack.c.l.b16 %v127
  %v404 = vunpack.c.l.b16 %v128
  %v405 = vunpack.c.l.b16 %v129
  %v406 = vunpack.c.l.b16 %v130
  %v407 = vunpack.c.l.b16 %v131
  %v408 = vunpack.c.l.b16 %v132
  %v409 = vunpack.c.l.b16 %v133
  %v410 = vunpack.c.l.b16 %v134
  %v411 = vunpack.c.l.b16 %v135
  %v412 = vunpack.c.l.b16 %v136
  %v413 = vpack.c.b16 %v398, %v397
  %v414 = vpack.c.b16 %v400, %v399
  %v415 = vpack.c.b16 %v402, %v401
  %v416 = vpack.c.b16 %v404, %v403
  %v417 = vpack.c.b16 %v406, %v405
  %v418 = vpack.c.b16 %v408, %v407
  %v419 = vpack.c.b16 %v410, %v409
  %v420 = vpack.c.b16 %v412, %v411
  %429 = vmatprep.subr.bf16.mxu0 0
  %430 = vmatpush1.bf16.msra.mxu0 %v420
  %431 = vmatprep.subr.bf16.mxu0 0
  %432 = vmatpush1.bf16.msra.mxu0 %v419
  %433 = vmatprep.subr.bf16.mxu0 0
  %434 = vmatpush1.bf16.msra.mxu0 %v418
  %435 = vmatprep.subr.bf16.mxu0 0
  %436 = vmatpush1.bf16.msra.mxu0 %v417
  %437 = vmatprep.subr.bf16.mxu0 0
  %438 = vmatpush1.bf16.msra.mxu0 %v416
  %439 = vmatprep.subr.bf16.mxu0 0
  %440 = vmatpush1.bf16.msra.mxu0 %v415
  %441 = vmatprep.subr.bf16.mxu0 0
  %442 = vmatpush1.bf16.msra.mxu0 %v414
  %443 = vmatprep.subr.bf16.mxu0 0
  %444 = vmatpush1.bf16.msra.mxu0 %v413
  %445 = vmatprep.subr.bf16.mxu0 0
  %446 = vmatpush2.bf16.msra.mxu0 0
  %447 = vmatprep.subr.bf16.mxu0 0
  %448 = vmatpush2.bf16.msra.mxu0 0
  %449 = vmatprep.subr.bf16.mxu0 0
  %450 = vmatpush2.bf16.msra.mxu0 0
  %451 = vmatprep.subr.bf16.mxu0 0
  %452 = vmatpush2.bf16.msra.mxu0 0
  %453 = vmatprep.subr.bf16.mxu0 0
  %454 = vmatpush2.bf16.msra.mxu0 0
  %455 = vmatprep.subr.bf16.mxu0 0
  %456 = vmatpush2.bf16.msra.mxu0 0
  %457 = vmatprep.subr.bf16.mxu0 0
  %458 = vmatpush2.bf16.msra.mxu0 0
  %459 = vmatprep.subr.bf16.mxu0 0
  %460 = vmatpush2.bf16.msra.mxu0 0
  %461 = vmatprep.mubr.bf16.mxu0 0
  %462 = vmatmul.mubr.bf16.gmra.mxu0 %v299
  %v463 = vpop.f32.mrf.mxu0
  %v464 = vadd.f32 0.0, %v463
  %v465 = vpop.f32.mrf.mxu0
  %v466 = vpop.f32.mrf.mxu0
  %v467 = vadd.f32 0.0, %v466
  %v468 = vpop.f32.mrf.mxu0
  %469 = vmatprep.mubr.bf16.mxu0 0
  %470 = vmatmul.mubr.bf16.gmra.mxu0 %v300
  %v471 = vpop.f32.mrf.mxu0
  %v472 = vadd.f32 0.0, %v471
  %v473 = vpop.f32.mrf.mxu0
  %v474 = vpop.f32.mrf.mxu0
  %v475 = vadd.f32 0.0, %v474
  %v476 = vpop.f32.mrf.mxu0
  %477 = vmatprep.mubr.bf16.mxu0 0
  %478 = vmatmul.mubr.bf16.gmra.mxu0 %v301
  %v479 = vpop.f32.mrf.mxu0
  %v480 = vadd.f32 0.0, %v479
  %v481 = vpop.f32.mrf.mxu0
  %v482 = vpop.f32.mrf.mxu0
  %v483 = vadd.f32 0.0, %v482
  %v484 = vpop.f32.mrf.mxu0
  %485 = vmatprep.mubr.bf16.mxu0 0
  %486 = vmatmul.mubr.bf16.gmra.mxu0 %v302
  %v487 = vpop.f32.mrf.mxu0
  %v488 = vadd.f32 0.0, %v487
  %v489 = vpop.f32.mrf.mxu0
  %v490 = vpop.f32.mrf.mxu0
  %v491 = vadd.f32 0.0, %v490
  %v492 = vpop.f32.mrf.mxu0
  %493 = vmatprep.mubr.bf16.mxu0 0
  %494 = vmatmul.mubr.bf16.gmra.mxu0 %v303
  %v495 = vpop.f32.mrf.mxu0
  %v496 = vadd.f32 0.0, %v495
  %v497 = vpop.f32.mrf.mxu0
  %v498 = vpop.f32.mrf.mxu0
  %v499 = vadd.f32 0.0, %v498
  %v500 = vpop.f32.mrf.mxu0
  %501 = vmatprep.mubr.bf16.mxu0 0
  %502 = vmatmul.mubr.bf16.gmra.mxu0 %v304
  %v503 = vpop.f32.mrf.mxu0
  %v504 = vadd.f32 0.0, %v503
  %v505 = vpop.f32.mrf.mxu0
  %v506 = vpop.f32.mrf.mxu0
  %v507 = vadd.f32 0.0, %v506
  %v508 = vpop.f32.mrf.mxu0
  %509 = vmatprep.mubr.bf16.mxu0 0
  %510 = vmatmul.mubr.bf16.gmra.mxu0 %v305
  %v511 = vpop.f32.mrf.mxu0
  %v512 = vadd.f32 0.0, %v511
  %v513 = vpop.f32.mrf.mxu0
  %v514 = vpop.f32.mrf.mxu0
  %v515 = vadd.f32 0.0, %v514
  %v516 = vpop.f32.mrf.mxu0
  %517 = vmatprep.mubr.bf16.mxu0 0
  %518 = vmatmul.mubr.bf16.gmra.mxu0 %v306
  %v519 = vpop.f32.mrf.mxu0
  %v520 = vadd.f32 0.0, %v519
  %v521 = vpop.f32.mrf.mxu0
  %v522 = vpop.f32.mrf.mxu0
  %v523 = vadd.f32 0.0, %v522
  %v524 = vpop.f32.mrf.mxu0
  %525 = vmatprep.mubr.bf16.mxu0 0
  %526 = vmatmul.mubr.bf16.gmra.mxu0 %v307
  %v527 = vpop.f32.mrf.mxu0
  %v528 = vadd.f32 0.0, %v527
  %v529 = vpop.f32.mrf.mxu0
  %v530 = vpop.f32.mrf.mxu0
  %v531 = vadd.f32 0.0, %v530
  %v532 = vpop.f32.mrf.mxu0
  %533 = vmatprep.mubr.bf16.mxu0 0
  %534 = vmatmul.mubr.bf16.gmra.mxu0 %v308
  %v535 = vpop.f32.mrf.mxu0
  %v536 = vadd.f32 0.0, %v535
  %v537 = vpop.f32.mrf.mxu0
  %v538 = vpop.f32.mrf.mxu0
  %v539 = vadd.f32 0.0, %v538
  %v540 = vpop.f32.mrf.mxu0
  %541 = vmatprep.mubr.bf16.mxu0 0
  %542 = vmatmul.mubr.bf16.gmra.mxu0 %v309
  %v543 = vpop.f32.mrf.mxu0
  %v544 = vadd.f32 0.0, %v543
  %v545 = vpop.f32.mrf.mxu0
  %v546 = vpop.f32.mrf.mxu0
  %v547 = vadd.f32 0.0, %v546
  %v548 = vpop.f32.mrf.mxu0
  %549 = vmatprep.mubr.bf16.mxu0 0
  %550 = vmatmul.mubr.bf16.gmra.mxu0 %v310
  %v551 = vpop.f32.mrf.mxu0
  %v552 = vadd.f32 0.0, %v551
  %v553 = vpop.f32.mrf.mxu0
  %v554 = vpop.f32.mrf.mxu0
  %v555 = vadd.f32 0.0, %v554
  %v556 = vpop.f32.mrf.mxu0
  %557 = vmatprep.mubr.bf16.mxu0 0
  %558 = vmatmul.mubr.bf16.gmra.mxu0 %v311
  %v559 = vpop.f32.mrf.mxu0
  %v560 = vadd.f32 0.0, %v559
  %v561 = vpop.f32.mrf.mxu0
  %v562 = vpop.f32.mrf.mxu0
  %v563 = vadd.f32 0.0, %v562
  %v564 = vpop.f32.mrf.mxu0
  %565 = vmatprep.mubr.bf16.mxu0 0
  %566 = vmatmul.mubr.bf16.gmra.mxu0 %v312
  %v567 = vpop.f32.mrf.mxu0
  %v568 = vadd.f32 0.0, %v567
  %v569 = vpop.f32.mrf.mxu0
  %v570 = vpop.f32.mrf.mxu0
  %v571 = vadd.f32 0.0, %v570
  %v572 = vpop.f32.mrf.mxu0
  %573 = vmatprep.mubr.bf16.mxu0 0
  %574 = vmatmul.mubr.bf16.gmra.mxu0 %v313
  %v575 = vpop.f32.mrf.mxu0
  %v576 = vadd.f32 0.0, %v575
  %v577 = vpop.f32.mrf.mxu0
  %v578 = vpop.f32.mrf.mxu0
  %v579 = vadd.f32 0.0, %v578
  %v580 = vpop.f32.mrf.mxu0
  %581 = vmatprep.mubr.bf16.mxu0 0
  %582 = vmatmul.mubr.bf16.gmra.mxu0 %v314
  %v583 = vpop.f32.mrf.mxu0
  %v584 = vadd.f32 0.0, %v583
  %v585 = vpop.f32.mrf.mxu0
  %v586 = vpop.f32.mrf.mxu0
  %v587 = vadd.f32 0.0, %v586
  %v588 = vpop.f32.mrf.mxu0
  %589 = vmatprep.mubr.bf16.mxu0 0
  %590 = vmatmul.mubr.bf16.gmra.mxu0 %v315
  %v591 = vpop.f32.mrf.mxu0
  %v592 = vadd.f32 0.0, %v591
  %v593 = vpop.f32.mrf.mxu0
  %v594 = vpop.f32.mrf.mxu0
  %v595 = vadd.f32 0.0, %v594
  %v596 = vpop.f32.mrf.mxu0
  %597 = vmatprep.mubr.bf16.mxu0 0
  %598 = vmatmul.mubr.bf16.gmra.mxu0 %v316
  %v599 = vpop.f32.mrf.mxu0
  %v600 = vadd.f32 0.0, %v599
  %v601 = vpop.f32.mrf.mxu0
  %v602 = vpop.f32.mrf.mxu0
  %v603 = vadd.f32 0.0, %v602
  %v604 = vpop.f32.mrf.mxu0
  %605 = vmatprep.mubr.bf16.mxu0 0
  %606 = vmatmul.mubr.bf16.gmra.mxu0 %v317
  %v607 = vpop.f32.mrf.mxu0
  %v608 = vadd.f32 0.0, %v607
  %v609 = vpop.f32.mrf.mxu0
  %v610 = vpop.f32.mrf.mxu0
  %v611 = vadd.f32 0.0, %v610
  %v612 = vpop.f32.mrf.mxu0
  %613 = vmatprep.mubr.bf16.mxu0 0
  %614 = vmatmul.mubr.bf16.gmra.mxu0 %v318
  %v615 = vpop.f32.mrf.mxu0
  %v616 = vadd.f32 0.0, %v615
  %v617 = vpop.f32.mrf.mxu0
  %v618 = vpop.f32.mrf.mxu0
  %v619 = vadd.f32 0.0, %v618
  %v620 = vpop.f32.mrf.mxu0
  %621 = vmatprep.mubr.bf16.mxu0 0
  %622 = vmatmul.mubr.bf16.gmra.mxu0 %v319
  %v623 = vpop.f32.mrf.mxu0
  %v624 = vadd.f32 0.0, %v623
  %v625 = vpop.f32.mrf.mxu0
  %v626 = vpop.f32.mrf.mxu0
  %v627 = vadd.f32 0.0, %v626
  %v628 = vpop.f32.mrf.mxu0
  %629 = vmatprep.mubr.bf16.mxu0 0
  %630 = vmatmul.mubr.bf16.gmra.mxu0 %v320
  %v631 = vpop.f32.mrf.mxu0
  %v632 = vadd.f32 0.0, %v631
  %v633 = vpop.f32.mrf.mxu0
  %v634 = vpop.f32.mrf.mxu0
  %v635 = vadd.f32 0.0, %v634
  %v636 = vpop.f32.mrf.mxu0
  %637 = vmatprep.mubr.bf16.mxu0 0
  %638 = vmatmul.mubr.bf16.gmra.mxu0 %v321
  %v639 = vpop.f32.mrf.mxu0
  %v640 = vadd.f32 0.0, %v639
  %v641 = vpop.f32.mrf.mxu0
  %v642 = vpop.f32.mrf.mxu0
  %v643 = vadd.f32 0.0, %v642
  %v644 = vpop.f32.mrf.mxu0
  %645 = vmatprep.mubr.bf16.mxu0 0
  %646 = vmatmul.mubr.bf16.gmra.mxu0 %v322
  %v647 = vpop.f32.mrf.mxu0
  %v648 = vadd.f32 0.0, %v647
  %v649 = vpop.f32.mrf.mxu0
  %v650 = vpop.f32.mrf.mxu0
  %v651 = vadd.f32 0.0, %v650
  %v652 = vpop.f32.mrf.mxu0
  %653 = vmatprep.mubr.bf16.mxu0 0
  %654 = vmatmul.mubr.bf16.gmra.mxu0 %v323
  %v655 = vpop.f32.mrf.mxu0
  %v656 = vadd.f32 0.0, %v655
  %v657 = vpop.f32.mrf.mxu0
  %v658 = vpop.f32.mrf.mxu0
  %v659 = vadd.f32 0.0, %v658
  %v660 = vpop.f32.mrf.mxu0
  %661 = vmatprep.mubr.bf16.mxu0 0
  %662 = vmatmul.mubr.bf16.gmra.mxu0 %v324
  %v663 = vpop.f32.mrf.mxu0
  %v664 = vadd.f32 0.0, %v663
  %v665 = vpop.f32.mrf.mxu0
  %v666 = vpop.f32.mrf.mxu0
  %v667 = vadd.f32 0.0, %v666
  %v668 = vpop.f32.mrf.mxu0
  %669 = vmatprep.mubr.bf16.mxu0 0
  %670 = vmatmul.mubr.bf16.gmra.mxu0 %v325
  %v671 = vpop.f32.mrf.mxu0
  %v672 = vadd.f32 0.0, %v671
  %v673 = vpop.f32.mrf.mxu0
  %v674 = vpop.f32.mrf.mxu0
  %v675 = vadd.f32 0.0, %v674
  %v676 = vpop.f32.mrf.mxu0
  %677 = vmatprep.mubr.bf16.mxu0 0
  %678 = vmatmul.mubr.bf16.gmra.mxu0 %v326
  %v679 = vpop.f32.mrf.mxu0
  %v680 = vadd.f32 0.0, %v679
  %v681 = vpop.f32.mrf.mxu0
  %v682 = vpop.f32.mrf.mxu0
  %v683 = vadd.f32 0.0, %v682
  %v684 = vpop.f32.mrf.mxu0
  %685 = vmatprep.mubr.bf16.mxu0 0
  %686 = vmatmul.mubr.bf16.gmra.mxu0 %v327
  %v687 = vpop.f32.mrf.mxu0
  %v688 = vadd.f32 0.0, %v687
  %v689 = vpop.f32.mrf.mxu0
  %v690 = vpop.f32.mrf.mxu0
  %v691 = vadd.f32 0.0, %v690
  %v692 = vpop.f32.mrf.mxu0
  %693 = vmatprep.mubr.bf16.mxu0 0
  %694 = vmatmul.mubr.bf16.gmra.mxu0 %v328
  %v695 = vpop.f32.mrf.mxu0
  %v696 = vadd.f32 0.0, %v695
  %v697 = vpop.f32.mrf.mxu0
  %v698 = vpop.f32.mrf.mxu0
  %v699 = vadd.f32 0.0, %v698
  %v700 = vpop.f32.mrf.mxu0
  %701 = vmatprep.mubr.bf16.mxu0 0
  %702 = vmatmul.mubr.bf16.gmra.mxu0 %v329
  %v703 = vpop.f32.mrf.mxu0
  %v704 = vadd.f32 0.0, %v703
  %v705 = vpop.f32.mrf.mxu0
  %v706 = vpop.f32.mrf.mxu0
  %v707 = vadd.f32 0.0, %v706
  %v708 = vpop.f32.mrf.mxu0
  %709 = vmatprep.mubr.bf16.mxu0 0
  %710 = vmatmul.mubr.bf16.gmra.mxu0 %v330
  %v711 = vpop.f32.mrf.mxu0
  %v712 = vadd.f32 0.0, %v711
  %v713 = vpop.f32.mrf.mxu0
  %v714 = vpop.f32.mrf.mxu0
  %v715 = vadd.f32 0.0, %v714
  %v716 = vpop.f32.mrf.mxu0
  %717 = vmatprep.mubr.bf16.mxu0 0
  %718 = vmatmul.mubr.bf16.gmra.mxu0 %v331
  %v719 = vpop.f32.mrf.mxu0
  %v720 = vadd.f32 0.0, %v719
  %v721 = vpop.f32.mrf.mxu0
  %v722 = vpop.f32.mrf.mxu0
  %v723 = vadd.f32 0.0, %v722
  %v724 = vpop.f32.mrf.mxu0
  %725 = vmatprep.mubr.bf16.mxu0 0
  %726 = vmatmul.mubr.bf16.gmra.mxu0 %v332
  %v727 = vpop.f32.mrf.mxu0
  %v728 = vadd.f32 0.0, %v727
  %v729 = vpop.f32.mrf.mxu0
  %v730 = vpop.f32.mrf.mxu0
  %v731 = vadd.f32 0.0, %v730
  %v732 = vpop.f32.mrf.mxu0
  %733 = vmatprep.mubr.bf16.mxu0 0
  %734 = vmatmul.mubr.bf16.gmra.mxu0 %v333
  %v735 = vpop.f32.mrf.mxu0
  %v736 = vadd.f32 0.0, %v735
  %v737 = vpop.f32.mrf.mxu0
  %v738 = vpop.f32.mrf.mxu0
  %v739 = vadd.f32 0.0, %v738
  %v740 = vpop.f32.mrf.mxu0
  %741 = vmatprep.mubr.bf16.mxu0 0
  %742 = vmatmul.mubr.bf16.gmra.mxu0 %v334
  %v743 = vpop.f32.mrf.mxu0
  %v744 = vadd.f32 0.0, %v743
  %v745 = vpop.f32.mrf.mxu0
  %v746 = vpop.f32.mrf.mxu0
  %v747 = vadd.f32 0.0, %v746
  %v748 = vpop.f32.mrf.mxu0
  %749 = vmatprep.mubr.bf16.mxu0 0
  %750 = vmatmul.mubr.bf16.gmra.mxu0 %v335
  %v751 = vpop.f32.mrf.mxu0
  %v752 = vadd.f32 0.0, %v751
  %v753 = vpop.f32.mrf.mxu0
  %v754 = vpop.f32.mrf.mxu0
  %v755 = vadd.f32 0.0, %v754
  %v756 = vpop.f32.mrf.mxu0
  %757 = vmatprep.mubr.bf16.mxu0 0
  %758 = vmatmul.mubr.bf16.gmra.mxu0 %v336
  %v759 = vpop.f32.mrf.mxu0
  %v760 = vadd.f32 0.0, %v759
  %v761 = vpop.f32.mrf.mxu0
  %v762 = vpop.f32.mrf.mxu0
  %v763 = vadd.f32 0.0, %v762
  %v764 = vpop.f32.mrf.mxu0
  %765 = vmatprep.mubr.bf16.mxu0 0
  %766 = vmatmul.mubr.bf16.gmra.mxu0 %v337
  %v767 = vpop.f32.mrf.mxu0
  %v768 = vadd.f32 0.0, %v767
  %v769 = vpop.f32.mrf.mxu0
  %v770 = vpop.f32.mrf.mxu0
  %v771 = vadd.f32 0.0, %v770
  %v772 = vpop.f32.mrf.mxu0
  %773 = vmatprep.mubr.bf16.mxu0 0
  %774 = vmatmul.mubr.bf16.gmra.mxu0 %v338
  %v775 = vpop.f32.mrf.mxu0
  %v776 = vadd.f32 0.0, %v775
  %v777 = vpop.f32.mrf.mxu0
  %v778 = vpop.f32.mrf.mxu0
  %v779 = vadd.f32 0.0, %v778
  %v780 = vpop.f32.mrf.mxu0
  %781 = vmatprep.mubr.bf16.mxu0 0
  %782 = vmatmul.mubr.bf16.gmra.mxu0 %v339
  %v783 = vpop.f32.mrf.mxu0
  %v784 = vadd.f32 0.0, %v783
  %v785 = vpop.f32.mrf.mxu0
  %v786 = vpop.f32.mrf.mxu0
  %v787 = vpop.f32.mrf.mxu0
  %788 = vdwg.mxu0
  %s789 = sld [smem:[#allocation2]]
  %v790 = vld [vmem:[%s3] sm:$0x1]
  %v792 = vlaneseq
  %v793 = vshrl.u32 %v792, 7
  %v794 = vsub.s32 0, %v793
  %v795 = vrot.slane %v790, %v794
  %v797 = vadd.f32 %v464, %v795
  %v798 = vadd.f32 %v467, %v795
  %v799 = vadd.f32 %v472, %v795
  %v800 = vadd.f32 %v475, %v795
  %v801 = vadd.f32 %v480, %v795
  %v802 = vadd.f32 %v483, %v795
  %v803 = vadd.f32 %v488, %v795
  %v804 = vadd.f32 %v491, %v795
  %v805 = vadd.f32 %v496, %v795
  %v806 = vadd.f32 %v499, %v795
  %v807 = vadd.f32 %v504, %v795
  %v808 = vadd.f32 %v507, %v795
  %v809 = vadd.f32 %v512, %v795
  %v810 = vadd.f32 %v515, %v795
  %v811 = vadd.f32 %v520, %v795
  %v812 = vadd.f32 %v523, %v795
  %v813 = vadd.f32 %v528, %v795
  %v814 = vadd.f32 %v531, %v795
  %v815 = vadd.f32 %v536, %v795
  %v816 = vadd.f32 %v539, %v795
  %v817 = vadd.f32 %v544, %v795
  %v818 = vadd.f32 %v547, %v795
  %v819 = vadd.f32 %v552, %v795
  %v820 = vadd.f32 %v555, %v795
  %v821 = vadd.f32 %v560, %v795
  %v822 = vadd.f32 %v563, %v795
  %v823 = vadd.f32 %v568, %v795
  %v824 = vadd.f32 %v571, %v795
  %v825 = vadd.f32 %v576, %v795
  %v826 = vadd.f32 %v579, %v795
  %v827 = vadd.f32 %v584, %v795
  %v828 = vadd.f32 %v587, %v795
  %v829 = vadd.f32 %v592, %v795
  %v830 = vadd.f32 %v595, %v795
  %v831 = vadd.f32 %v600, %v795
  %v832 = vadd.f32 %v603, %v795
  %v833 = vadd.f32 %v608, %v795
  %v834 = vadd.f32 %v611, %v795
  %v835 = vadd.f32 %v616, %v795
  %v836 = vadd.f32 %v619, %v795
  %v837 = vadd.f32 %v624, %v795
  %v838 = vadd.f32 %v627, %v795
  %v839 = vadd.f32 %v632, %v795
  %v840 = vadd.f32 %v635, %v795
  %v841 = vadd.f32 %v640, %v795
  %v842 = vadd.f32 %v643, %v795
  %v843 = vadd.f32 %v648, %v795
  %v844 = vadd.f32 %v651, %v795
  %v845 = vadd.f32 %v656, %v795
  %v846 = vadd.f32 %v659, %v795
  %v847 = vadd.f32 %v664, %v795
  %v848 = vadd.f32 %v667, %v795
  %v849 = vadd.f32 %v672, %v795
  %v850 = vadd.f32 %v675, %v795
  %v851 = vadd.f32 %v680, %v795
  %v852 = vadd.f32 %v683, %v795
  %v853 = vadd.f32 %v688, %v795
  %v854 = vadd.f32 %v691, %v795
  %v855 = vadd.f32 %v696, %v795
  %v856 = vadd.f32 %v699, %v795
  %v857 = vadd.f32 %v704, %v795
  %v858 = vadd.f32 %v707, %v795
  %v859 = vadd.f32 %v712, %v795
  %v860 = vadd.f32 %v715, %v795
  %v861 = vadd.f32 %v720, %v795
  %v862 = vadd.f32 %v723, %v795
  %v863 = vadd.f32 %v728, %v795
  %v864 = vadd.f32 %v731, %v795
  %v865 = vadd.f32 %v736, %v795
  %v866 = vadd.f32 %v739, %v795
  %v867 = vadd.f32 %v744, %v795
  %v868 = vadd.f32 %v747, %v795
  %v869 = vadd.f32 %v752, %v795
  %v870 = vadd.f32 %v755, %v795
  %v871 = vadd.f32 %v760, %v795
  %v872 = vadd.f32 %v763, %v795
  %v873 = vadd.f32 %v768, %v795
  %v874 = vadd.f32 %v771, %v795
  %v875 = vadd.f32 %v776, %v795
  %v876 = vadd.f32 %v779, %v795
  %v877 = vadd.f32 %v784, %v795
  %v878 = vmax.f32 %v797, 0.0
  %v879 = vmax.f32 %v798, 0.0
  %v880 = vmax.f32 %v799, 0.0
  %v881 = vmax.f32 %v800, 0.0
  %v882 = vmax.f32 %v801, 0.0
  %v883 = vmax.f32 %v802, 0.0
  %v884 = vmax.f32 %v803, 0.0
  %v885 = vmax.f32 %v804, 0.0
  %v886 = vmax.f32 %v805, 0.0
  %v887 = vmax.f32 %v806, 0.0
  %v888 = vmax.f32 %v807, 0.0
  %v889 = vmax.f32 %v808, 0.0
  %v890 = vmax.f32 %v809, 0.0
  %v891 = vmax.f32 %v810, 0.0
  %v892 = vmax.f32 %v811, 0.0
  %v893 = vmax.f32 %v812, 0.0
  %v894 = vmax.f32 %v813, 0.0
  %v895 = vmax.f32 %v814, 0.0
  %v896 = vmax.f32 %v815, 0.0
  %v897 = vmax.f32 %v816, 0.0
  %v898 = vmax.f32 %v817, 0.0
  %v899 = vmax.f32 %v818, 0.0
  %v900 = vmax.f32 %v819, 0.0
  %v901 = vmax.f32 %v820, 0.0
  %v902 = vmax.f32 %v821, 0.0
  %v903 = vmax.f32 %v822, 0.0
  %v904 = vmax.f32 %v823, 0.0
  %v905 = vmax.f32 %v824, 0.0
  %v906 = vmax.f32 %v825, 0.0
  %v907 = vmax.f32 %v826, 0.0
  %v908 = vmax.f32 %v827, 0.0
  %v909 = vmax.f32 %v828, 0.0
  %v910 = vmax.f32 %v829, 0.0
  %v911 = vmax.f32 %v830, 0.0
  %v912 = vmax.f32 %v831, 0.0
  %v913 = vmax.f32 %v832, 0.0
  %v914 = vmax.f32 %v833, 0.0
  %v915 = vmax.f32 %v834, 0.0
  %v916 = vmax.f32 %v835, 0.0
  %v917 = vmax.f32 %v836, 0.0
  %v918 = vmax.f32 %v837, 0.0
  %v919 = vmax.f32 %v838, 0.0
  %v920 = vmax.f32 %v839, 0.0
  %v921 = vmax.f32 %v840, 0.0
  %v922 = vmax.f32 %v841, 0.0
  %v923 = vmax.f32 %v842, 0.0
  %v924 = vmax.f32 %v843, 0.0
  %v925 = vmax.f32 %v844, 0.0
  %v926 = vmax.f32 %v845, 0.0
  %v927 = vmax.f32 %v846, 0.0
  %v928 = vmax.f32 %v847, 0.0
  %v929 = vmax.f32 %v848, 0.0
  %v930 = vmax.f32 %v849, 0.0
  %v931 = vmax.f32 %v850, 0.0
  %v932 = vmax.f32 %v851, 0.0
  %v933 = vmax.f32 %v852, 0.0
  %v934 = vmax.f32 %v853, 0.0
  %v935 = vmax.f32 %v854, 0.0
  %v936 = vmax.f32 %v855, 0.0
  %v937 = vmax.f32 %v856, 0.0
  %v938 = vmax.f32 %v857, 0.0
  %v939 = vmax.f32 %v858, 0.0
  %v940 = vmax.f32 %v859, 0.0
  %v941 = vmax.f32 %v860, 0.0
  %v942 = vmax.f32 %v861, 0.0
  %v943 = vmax.f32 %v862, 0.0
  %v944 = vmax.f32 %v863, 0.0
  %v945 = vmax.f32 %v864, 0.0
  %v946 = vmax.f32 %v865, 0.0
  %v947 = vmax.f32 %v866, 0.0
  %v948 = vmax.f32 %v867, 0.0
  %v949 = vmax.f32 %v868, 0.0
  %v950 = vmax.f32 %v869, 0.0
  %v951 = vmax.f32 %v870, 0.0
  %v952 = vmax.f32 %v871, 0.0
  %v953 = vmax.f32 %v872, 0.0
  %v954 = vmax.f32 %v873, 0.0
  %v955 = vmax.f32 %v874, 0.0
  %v956 = vmax.f32 %v875, 0.0
  %v957 = vmax.f32 %v876, 0.0
  %v958 = vmax.f32 %v877, 0.0
  %v959 = vld [vmem:[%s4] sm:$0x1]
  %v961 = vlaneseq
  %v962 = vshrl.u32 %v961, 7
  %v963 = vsub.s32 0, %v962
  %v964 = vrot.slane %v959, %v963
  %v966 = vadd.f32 %v464, %v964
  %v967 = vadd.f32 %v467, %v964
  %v968 = vadd.f32 %v472, %v964
  %v969 = vadd.f32 %v475, %v964
  %v970 = vadd.f32 %v480, %v964
  %v971 = vadd.f32 %v483, %v964
  %v972 = vadd.f32 %v488, %v964
  %v973 = vadd.f32 %v491, %v964
  %v974 = vadd.f32 %v496, %v964
  %v975 = vadd.f32 %v499, %v964
  %v976 = vadd.f32 %v504, %v964
  %v977 = vadd.f32 %v507, %v964
  %v978 = vadd.f32 %v512, %v964
  %v979 = vadd.f32 %v515, %v964
  %v980 = vadd.f32 %v520, %v964
  %v981 = vadd.f32 %v523, %v964
  %v982 = vadd.f32 %v528, %v964
  %v983 = vadd.f32 %v531, %v964
  %v984 = vadd.f32 %v536, %v964
  %v985 = vadd.f32 %v539, %v964
  %v986 = vadd.f32 %v544, %v964
  %v987 = vadd.f32 %v547, %v964
  %v988 = vadd.f32 %v552, %v964
  %v989 = vadd.f32 %v555, %v964
  %v990 = vadd.f32 %v560, %v964
  %v991 = vadd.f32 %v563, %v964
  %v992 = vadd.f32 %v568, %v964
  %v993 = vadd.f32 %v571, %v964
  %v994 = vadd.f32 %v576, %v964
  %v995 = vadd.f32 %v579, %v964
  %v996 = vadd.f32 %v584, %v964
  %v997 = vadd.f32 %v587, %v964
  %v998 = vadd.f32 %v592, %v964
  %v999 = vadd.f32 %v595, %v964
  %v1000 = vadd.f32 %v600, %v964
  %v1001 = vadd.f32 %v603, %v964
  %v1002 = vadd.f32 %v608, %v964
  %v1003 = vadd.f32 %v611, %v964
  %v1004 = vadd.f32 %v616, %v964
  %v1005 = vadd.f32 %v619, %v964
  %v1006 = vadd.f32 %v624, %v964
  %v1007 = vadd.f32 %v627, %v964
  %v1008 = vadd.f32 %v632, %v964
  %v1009 = vadd.f32 %v635, %v964
  %v1010 = vadd.f32 %v640, %v964
  %v1011 = vadd.f32 %v643, %v964
  %v1012 = vadd.f32 %v648, %v964
  %v1013 = vadd.f32 %v651, %v964
  %v1014 = vadd.f32 %v656, %v964
  %v1015 = vadd.f32 %v659, %v964
  %v1016 = vadd.f32 %v664, %v964
  %v1017 = vadd.f32 %v667, %v964
  %v1018 = vadd.f32 %v672, %v964
  %v1019 = vadd.f32 %v675, %v964
  %v1020 = vadd.f32 %v680, %v964
  %v1021 = vadd.f32 %v683, %v964
  %v1022 = vadd.f32 %v688, %v964
  %v1023 = vadd.f32 %v691, %v964
  %v1024 = vadd.f32 %v696, %v964
  %v1025 = vadd.f32 %v699, %v964
  %v1026 = vadd.f32 %v704, %v964
  %v1027 = vadd.f32 %v707, %v964
  %v1028 = vadd.f32 %v712, %v964
  %v1029 = vadd.f32 %v715, %v964
  %v1030 = vadd.f32 %v720, %v964
  %v1031 = vadd.f32 %v723, %v964
  %v1032 = vadd.f32 %v728, %v964
  %v1033 = vadd.f32 %v731, %v964
  %v1034 = vadd.f32 %v736, %v964
  %v1035 = vadd.f32 %v739, %v964
  %v1036 = vadd.f32 %v744, %v964
  %v1037 = vadd.f32 %v747, %v964
  %v1038 = vadd.f32 %v752, %v964
  %v1039 = vadd.f32 %v755, %v964
  %v1040 = vadd.f32 %v760, %v964
  %v1041 = vadd.f32 %v763, %v964
  %v1042 = vadd.f32 %v768, %v964
  %v1043 = vadd.f32 %v771, %v964
  %v1044 = vadd.f32 %v776, %v964
  %v1045 = vadd.f32 %v779, %v964
  %v1046 = vadd.f32 %v784, %v964
  %v1047 = vmax.f32 %v966, 0.0
  %v1048 = vmax.f32 %v967, 0.0
  %v1049 = vmax.f32 %v968, 0.0
  %v1050 = vmax.f32 %v969, 0.0
  %v1051 = vmax.f32 %v970, 0.0
  %v1052 = vmax.f32 %v971, 0.0
  %v1053 = vmax.f32 %v972, 0.0
  %v1054 = vmax.f32 %v973, 0.0
  %v1055 = vmax.f32 %v974, 0.0
  %v1056 = vmax.f32 %v975, 0.0
  %v1057 = vmax.f32 %v976, 0.0
  %v1058 = vmax.f32 %v977, 0.0
  %v1059 = vmax.f32 %v978, 0.0
  %v1060 = vmax.f32 %v979, 0.0
  %v1061 = vmax.f32 %v980, 0.0
  %v1062 = vmax.f32 %v981, 0.0
  %v1063 = vmax.f32 %v982, 0.0
  %v1064 = vmax.f32 %v983, 0.0
  %v1065 = vmax.f32 %v984, 0.0
  %v1066 = vmax.f32 %v985, 0.0
  %v1067 = vmax.f32 %v986, 0.0
  %v1068 = vmax.f32 %v987, 0.0
  %v1069 = vmax.f32 %v988, 0.0
  %v1070 = vmax.f32 %v989, 0.0
  %v1071 = vmax.f32 %v990, 0.0
  %v1072 = vmax.f32 %v991, 0.0
  %v1073 = vmax.f32 %v992, 0.0
  %v1074 = vmax.f32 %v993, 0.0
  %v1075 = vmax.f32 %v994, 0.0
  %v1076 = vmax.f32 %v995, 0.0
  %v1077 = vmax.f32 %v996, 0.0
  %v1078 = vmax.f32 %v997, 0.0
  %v1079 = vmax.f32 %v998, 0.0
  %v1080 = vmax.f32 %v999, 0.0
  %v1081 = vmax.f32 %v1000, 0.0
  %v1082 = vmax.f32 %v1001, 0.0
  %v1083 = vmax.f32 %v1002, 0.0
  %v1084 = vmax.f32 %v1003, 0.0
  %v1085 = vmax.f32 %v1004, 0.0
  %v1086 = vmax.f32 %v1005, 0.0
  %v1087 = vmax.f32 %v1006, 0.0
  %v1088 = vmax.f32 %v1007, 0.0
  %v1089 = vmax.f32 %v1008, 0.0
  %v1090 = vmax.f32 %v1009, 0.0
  %v1091 = vmax.f32 %v1010, 0.0
  %v1092 = vmax.f32 %v1011, 0.0
  %v1093 = vmax.f32 %v1012, 0.0
  %v1094 = vmax.f32 %v1013, 0.0
  %v1095 = vmax.f32 %v1014, 0.0
  %v1096 = vmax.f32 %v1015, 0.0
  %v1097 = vmax.f32 %v1016, 0.0
  %v1098 = vmax.f32 %v1017, 0.0
  %v1099 = vmax.f32 %v1018, 0.0
  %v1100 = vmax.f32 %v1019, 0.0
  %v1101 = vmax.f32 %v1020, 0.0
  %v1102 = vmax.f32 %v1021, 0.0
  %v1103 = vmax.f32 %v1022, 0.0
  %v1104 = vmax.f32 %v1023, 0.0
  %v1105 = vmax.f32 %v1024, 0.0
  %v1106 = vmax.f32 %v1025, 0.0
  %v1107 = vmax.f32 %v1026, 0.0
  %v1108 = vmax.f32 %v1027, 0.0
  %v1109 = vmax.f32 %v1028, 0.0
  %v1110 = vmax.f32 %v1029, 0.0
  %v1111 = vmax.f32 %v1030, 0.0
  %v1112 = vmax.f32 %v1031, 0.0
  %v1113 = vmax.f32 %v1032, 0.0
  %v1114 = vmax.f32 %v1033, 0.0
  %v1115 = vmax.f32 %v1034, 0.0
  %v1116 = vmax.f32 %v1035, 0.0
  %v1117 = vmax.f32 %v1036, 0.0
  %v1118 = vmax.f32 %v1037, 0.0
  %v1119 = vmax.f32 %v1038, 0.0
  %v1120 = vmax.f32 %v1039, 0.0
  %v1121 = vmax.f32 %v1040, 0.0
  %v1122 = vmax.f32 %v1041, 0.0
  %v1123 = vmax.f32 %v1042, 0.0
  %v1124 = vmax.f32 %v1043, 0.0
  %v1125 = vmax.f32 %v1044, 0.0
  %v1126 = vmax.f32 %v1045, 0.0
  %v1127 = vmax.f32 %v1046, 0.0
  %v1128 = vsub.f32 %v878, %v1047
  %v1129 = vsub.f32 %v879, %v1048
  %v1130 = vsub.f32 %v880, %v1049
  %v1131 = vsub.f32 %v881, %v1050
  %v1132 = vsub.f32 %v882, %v1051
  %v1133 = vsub.f32 %v883, %v1052
  %v1134 = vsub.f32 %v884, %v1053
  %v1135 = vsub.f32 %v885, %v1054
  %v1136 = vsub.f32 %v886, %v1055
  %v1137 = vsub.f32 %v887, %v1056
  %v1138 = vsub.f32 %v888, %v1057
  %v1139 = vsub.f32 %v889, %v1058
  %v1140 = vsub.f32 %v890, %v1059
  %v1141 = vsub.f32 %v891, %v1060
  %v1142 = vsub.f32 %v892, %v1061
  %v1143 = vsub.f32 %v893, %v1062
  %v1144 = vsub.f32 %v894, %v1063
  %v1145 = vsub.f32 %v895, %v1064
  %v1146 = vsub.f32 %v896, %v1065
  %v1147 = vsub.f32 %v897, %v1066
  %v1148 = vsub.f32 %v898, %v1067
  %v1149 = vsub.f32 %v899, %v1068
  %v1150 = vsub.f32 %v900, %v1069
  %v1151 = vsub.f32 %v901, %v1070
  %v1152 = vsub.f32 %v902, %v1071
  %v1153 = vsub.f32 %v903, %v1072
  %v1154 = vsub.f32 %v904, %v1073
  %v1155 = vsub.f32 %v905, %v1074
  %v1156 = vsub.f32 %v906, %v1075
  %v1157 = vsub.f32 %v907, %v1076
  %v1158 = vsub.f32 %v908, %v1077
  %v1159 = vsub.f32 %v909, %v1078
  %v1160 = vsub.f32 %v910, %v1079
  %v1161 = vsub.f32 %v911, %v1080
  %v1162 = vsub.f32 %v912, %v1081
  %v1163 = vsub.f32 %v913, %v1082
  %v1164 = vsub.f32 %v914, %v1083
  %v1165 = vsub.f32 %v915, %v1084
  %v1166 = vsub.f32 %v916, %v1085
  %v1167 = vsub.f32 %v917, %v1086
  %v1168 = vsub.f32 %v918, %v1087
  %v1169 = vsub.f32 %v919, %v1088
  %v1170 = vsub.f32 %v920, %v1089
  %v1171 = vsub.f32 %v921, %v1090
  %v1172 = vsub.f32 %v922, %v1091
  %v1173 = vsub.f32 %v923, %v1092
  %v1174 = vsub.f32 %v924, %v1093
  %v1175 = vsub.f32 %v925, %v1094
  %v1176 = vsub.f32 %v926, %v1095
  %v1177 = vsub.f32 %v927, %v1096
  %v1178 = vsub.f32 %v928, %v1097
  %v1179 = vsub.f32 %v929, %v1098
  %v1180 = vsub.f32 %v930, %v1099
  %v1181 = vsub.f32 %v931, %v1100
  %v1182 = vsub.f32 %v932, %v1101
  %v1183 = vsub.f32 %v933, %v1102
  %v1184 = vsub.f32 %v934, %v1103
  %v1185 = vsub.f32 %v935, %v1104
  %v1186 = vsub.f32 %v936, %v1105
  %v1187 = vsub.f32 %v937, %v1106
  %v1188 = vsub.f32 %v938, %v1107
  %v1189 = vsub.f32 %v939, %v1108
  %v1190 = vsub.f32 %v940, %v1109
  %v1191 = vsub.f32 %v941, %v1110
  %v1192 = vsub.f32 %v942, %v1111
  %v1193 = vsub.f32 %v943, %v1112
  %v1194 = vsub.f32 %v944, %v1113
  %v1195 = vsub.f32 %v945, %v1114
  %v1196 = vsub.f32 %v946, %v1115
  %v1197 = vsub.f32 %v947, %v1116
  %v1198 = vsub.f32 %v948, %v1117
  %v1199 = vsub.f32 %v949, %v1118
  %v1200 = vsub.f32 %v950, %v1119
  %v1201 = vsub.f32 %v951, %v1120
  %v1202 = vsub.f32 %v952, %v1121
  %v1203 = vsub.f32 %v953, %v1122
  %v1204 = vsub.f32 %v954, %v1123
  %v1205 = vsub.f32 %v955, %v1124
  %v1206 = vsub.f32 %v956, %v1125
  %v1207 = vsub.f32 %v957, %v1126
  %v1208 = vsub.f32 %v958, %v1127
  %v1209 = vstv %s789
  %v1210 = vmul.f32 %v1209, %v1128
  %v1211 = vmul.f32 %v1209, %v1129
  %v1212 = vmul.f32 %v1209, %v1130
  %v1213 = vmul.f32 %v1209, %v1131
  %v1214 = vmul.f32 %v1209, %v1132
  %v1215 = vmul.f32 %v1209, %v1133
  %v1216 = vmul.f32 %v1209, %v1134
  %v1217 = vmul.f32 %v1209, %v1135
  %v1218 = vmul.f32 %v1209, %v1136
  %v1219 = vmul.f32 %v1209, %v1137
  %v1220 = vmul.f32 %v1209, %v1138
  %v1221 = vmul.f32 %v1209, %v1139
  %v1222 = vmul.f32 %v1209, %v1140
  %v1223 = vmul.f32 %v1209, %v1141
  %v1224 = vmul.f32 %v1209, %v1142
  %v1225 = vmul.f32 %v1209, %v1143
  %v1226 = vmul.f32 %v1209, %v1144
  %v1227 = vmul.f32 %v1209, %v1145
  %v1228 = vmul.f32 %v1209, %v1146
  %v1229 = vmul.f32 %v1209, %v1147
  %v1230 = vmul.f32 %v1209, %v1148
  %v1231 = vmul.f32 %v1209, %v1149
  %v1232 = vmul.f32 %v1209, %v1150
  %v1233 = vmul.f32 %v1209, %v1151
  %v1234 = vmul.f32 %v1209, %v1152
  %v1235 = vmul.f32 %v1209, %v1153
  %v1236 = vmul.f32 %v1209, %v1154
  %v1237 = vmul.f32 %v1209, %v1155
  %v1238 = vmul.f32 %v1209, %v1156
  %v1239 = vmul.f32 %v1209, %v1157
  %v1240 = vmul.f32 %v1209, %v1158
  %v1241 = vmul.f32 %v1209, %v1159
  %v1242 = vmul.f32 %v1209, %v1160
  %v1243 = vmul.f32 %v1209, %v1161
  %v1244 = vmul.f32 %v1209, %v1162
  %v1245 = vmul.f32 %v1209, %v1163
  %v1246 = vmul.f32 %v1209, %v1164
  %v1247 = vmul.f32 %v1209, %v1165
  %v1248 = vmul.f32 %v1209, %v1166
  %v1249 = vmul.f32 %v1209, %v1167
  %v1250 = vmul.f32 %v1209, %v1168
  %v1251 = vmul.f32 %v1209, %v1169
  %v1252 = vmul.f32 %v1209, %v1170
  %v1253 = vmul.f32 %v1209, %v1171
  %v1254 = vmul.f32 %v1209, %v1172
  %v1255 = vmul.f32 %v1209, %v1173
  %v1256 = vmul.f32 %v1209, %v1174
  %v1257 = vmul.f32 %v1209, %v1175
  %v1258 = vmul.f32 %v1209, %v1176
  %v1259 = vmul.f32 %v1209, %v1177
  %v1260 = vmul.f32 %v1209, %v1178
  %v1261 = vmul.f32 %v1209, %v1179
  %v1262 = vmul.f32 %v1209, %v1180
  %v1263 = vmul.f32 %v1209, %v1181
  %v1264 = vmul.f32 %v1209, %v1182
  %v1265 = vmul.f32 %v1209, %v1183
  %v1266 = vmul.f32 %v1209, %v1184
  %v1267 = vmul.f32 %v1209, %v1185
  %v1268 = vmul.f32 %v1209, %v1186
  %v1269 = vmul.f32 %v1209, %v1187
  %v1270 = vmul.f32 %v1209, %v1188
  %v1271 = vmul.f32 %v1209, %v1189
  %v1272 = vmul.f32 %v1209, %v1190
  %v1273 = vmul.f32 %v1209, %v1191
  %v1274 = vmul.f32 %v1209, %v1192
  %v1275 = vmul.f32 %v1209, %v1193
  %v1276 = vmul.f32 %v1209, %v1194
  %v1277 = vmul.f32 %v1209, %v1195
  %v1278 = vmul.f32 %v1209, %v1196
  %v1279 = vmul.f32 %v1209, %v1197
  %v1280 = vmul.f32 %v1209, %v1198
  %v1281 = vmul.f32 %v1209, %v1199
  %v1282 = vmul.f32 %v1209, %v1200
  %v1283 = vmul.f32 %v1209, %v1201
  %v1284 = vmul.f32 %v1209, %v1202
  %v1285 = vmul.f32 %v1209, %v1203
  %v1286 = vmul.f32 %v1209, %v1204
  %v1287 = vmul.f32 %v1209, %v1205
  %v1288 = vmul.f32 %v1209, %v1206
  %v1289 = vmul.f32 %v1209, %v1207
  %v1290 = vmul.f32 %v1209, %v1208
  %v1291 = vadd.f32 %v1047, %v1210
  %v1292 = vadd.f32 %v1048, %v1211
  %v1293 = vadd.f32 %v1049, %v1212
  %v1294 = vadd.f32 %v1050, %v1213
  %v1295 = vadd.f32 %v1051, %v1214
  %v1296 = vadd.f32 %v1052, %v1215
  %v1297 = vadd.f32 %v1053, %v1216
  %v1298 = vadd.f32 %v1054, %v1217
  %v1299 = vadd.f32 %v1055, %v1218
  %v1300 = vadd.f32 %v1056, %v1219
  %v1301 = vadd.f32 %v1057, %v1220
  %v1302 = vadd.f32 %v1058, %v1221
  %v1303 = vadd.f32 %v1059, %v1222
  %v1304 = vadd.f32 %v1060, %v1223
  %v1305 = vadd.f32 %v1061, %v1224
  %v1306 = vadd.f32 %v1062, %v1225
  %v1307 = vadd.f32 %v1063, %v1226
  %v1308 = vadd.f32 %v1064, %v1227
  %v1309 = vadd.f32 %v1065, %v1228
  %v1310 = vadd.f32 %v1066, %v1229
  %v1311 = vadd.f32 %v1067, %v1230
  %v1312 = vadd.f32 %v1068, %v1231
  %v1313 = vadd.f32 %v1069, %v1232
  %v1314 = vadd.f32 %v1070, %v1233
  %v1315 = vadd.f32 %v1071, %v1234
  %v1316 = vadd.f32 %v1072, %v1235
  %v1317 = vadd.f32 %v1073, %v1236
  %v1318 = vadd.f32 %v1074, %v1237
  %v1319 = vadd.f32 %v1075, %v1238
  %v1320 = vadd.f32 %v1076, %v1239
  %v1321 = vadd.f32 %v1077, %v1240
  %v1322 = vadd.f32 %v1078, %v1241
  %v1323 = vadd.f32 %v1079, %v1242
  %v1324 = vadd.f32 %v1080, %v1243
  %v1325 = vadd.f32 %v1081, %v1244
  %v1326 = vadd.f32 %v1082, %v1245
  %v1327 = vadd.f32 %v1083, %v1246
  %v1328 = vadd.f32 %v1084, %v1247
  %v1329 = vadd.f32 %v1085, %v1248
  %v1330 = vadd.f32 %v1086, %v1249
  %v1331 = vadd.f32 %v1087, %v1250
  %v1332 = vadd.f32 %v1088, %v1251
  %v1333 = vadd.f32 %v1089, %v1252
  %v1334 = vadd.f32 %v1090, %v1253
  %v1335 = vadd.f32 %v1091, %v1254
  %v1336 = vadd.f32 %v1092, %v1255
  %v1337 = vadd.f32 %v1093, %v1256
  %v1338 = vadd.f32 %v1094, %v1257
  %v1339 = vadd.f32 %v1095, %v1258
  %v1340 = vadd.f32 %v1096, %v1259
  %v1341 = vadd.f32 %v1097, %v1260
  %v1342 = vadd.f32 %v1098, %v1261
  %v1343 = vadd.f32 %v1099, %v1262
  %v1344 = vadd.f32 %v1100, %v1263
  %v1345 = vadd.f32 %v1101, %v1264
  %v1346 = vadd.f32 %v1102, %v1265
  %v1347 = vadd.f32 %v1103, %v1266
  %v1348 = vadd.f32 %v1104, %v1267
  %v1349 = vadd.f32 %v1105, %v1268
  %v1350 = vadd.f32 %v1106, %v1269
  %v1351 = vadd.f32 %v1107, %v1270
  %v1352 = vadd.f32 %v1108, %v1271
  %v1353 = vadd.f32 %v1109, %v1272
  %v1354 = vadd.f32 %v1110, %v1273
  %v1355 = vadd.f32 %v1111, %v1274
  %v1356 = vadd.f32 %v1112, %v1275
  %v1357 = vadd.f32 %v1113, %v1276
  %v1358 = vadd.f32 %v1114, %v1277
  %v1359 = vadd.f32 %v1115, %v1278
  %v1360 = vadd.f32 %v1116, %v1279
  %v1361 = vadd.f32 %v1117, %v1280
  %v1362 = vadd.f32 %v1118, %v1281
  %v1363 = vadd.f32 %v1119, %v1282
  %v1364 = vadd.f32 %v1120, %v1283
  %v1365 = vadd.f32 %v1121, %v1284
  %v1366 = vadd.f32 %v1122, %v1285
  %v1367 = vadd.f32 %v1123, %v1286
  %v1368 = vadd.f32 %v1124, %v1287
  %v1369 = vadd.f32 %v1125, %v1288
  %v1370 = vadd.f32 %v1126, %v1289
  %v1371 = vadd.f32 %v1127, %v1290
  %v1372 = vld [vmem:[%s5] sm:$0xff]
  %v1373 = vld [vmem:[%s5 + $0x8] sm:$0xff]
  %v1374 = vld [vmem:[%s5 + $0x10] sm:$0xff]
  %v1375 = vld [vmem:[%s5 + $0x18] sm:$0xff]
  %v1376 = vld [vmem:[%s5 + $0x20] sm:$0xff]
  %v1377 = vld [vmem:[%s5 + $0x28] sm:$0xff]
  %v1378 = vld [vmem:[%s5 + $0x30] sm:$0xff]
  %v1379 = vld [vmem:[%s5 + $0x38] sm:$0xff]
  %v1380 = vld [vmem:[%s5 + $0x40] sm:$0xff]
  %v1381 = vld [vmem:[%s5 + $0x48] sm:$0xff]
  %v1382 = vld [vmem:[%s5 + $0x50] sm:$0xff]
  %v1383 = vld [vmem:[%s5 + $0x58] sm:$0xff]
  %v1384 = vld [vmem:[%s5 + $0x60] sm:$0xff]
  %v1385 = vld [vmem:[%s5 + $0x68] sm:$0xff]
  %v1386 = vld [vmem:[%s5 + $0x70] sm:$0xff]
  %v1387 = vld [vmem:[%s5 + $0x78] sm:$0xff]
  %v1388 = vld [vmem:[%s5 + $0x80] sm:$0xff]
  %v1389 = vld [vmem:[%s5 + $0x88] sm:$0xff]
  %v1390 = vld [vmem:[%s5 + $0x90] sm:$0xff]
  %v1391 = vld [vmem:[%s5 + $0x98] sm:$0xff]
  %v1392 = vld [vmem:[%s5 + $0xa0] sm:$0xff]
  %v1393 = vld [vmem:[%s5 + $0xa8] sm:$0xff]
  %v1394 = vld [vmem:[%s5 + $0xb0] sm:$0xff]
  %v1395 = vld [vmem:[%s5 + $0xb8] sm:$0xff]
  %v1396 = vld [vmem:[%s5 + $0xc0] sm:$0xff]
  %v1397 = vld [vmem:[%s5 + $0xc8] sm:$0xff]
  %v1398 = vld [vmem:[%s5 + $0xd0] sm:$0xff]
  %v1399 = vld [vmem:[%s5 + $0xd8] sm:$0xff]
  %v1400 = vld [vmem:[%s5 + $0xe0] sm:$0xff]
  %v1401 = vld [vmem:[%s5 + $0xe8] sm:$0xff]
  %v1402 = vld [vmem:[%s5 + $0xf0] sm:$0xff]
  %v1403 = vld [vmem:[%s5 + $0xf8] sm:$0xff]
  %v1404 = vld [vmem:[%s5 + $0x100] sm:$0xff]
  %v1405 = vld [vmem:[%s5 + $0x108] sm:$0xff]
  %v1406 = vld [vmem:[%s5 + $0x110] sm:$0xff]
  %v1407 = vld [vmem:[%s5 + $0x118] sm:$0xff]
  %v1408 = vld [vmem:[%s5 + $0x120] sm:$0xff]
  %v1409 = vld [vmem:[%s5 + $0x128] sm:$0xff]
  %v1410 = vld [vmem:[%s5 + $0x130] sm:$0xff]
  %v1411 = vld [vmem:[%s5 + $0x138] sm:$0xff]
  %v1412 = vld [vmem:[%s5 + $0x140] sm:$0xff]
  %v1413 = vld [vmem:[%s5 + $0x148] sm:$0xff]
  %v1414 = vld [vmem:[%s5 + $0x150] sm:$0xff]
  %v1415 = vld [vmem:[%s5 + $0x158] sm:$0xff]
  %v1416 = vld [vmem:[%s5 + $0x160] sm:$0xff]
  %v1417 = vld [vmem:[%s5 + $0x168] sm:$0xff]
  %v1418 = vld [vmem:[%s5 + $0x170] sm:$0xff]
  %v1419 = vld [vmem:[%s5 + $0x178] sm:$0xff]
  %v1420 = vld [vmem:[%s5 + $0x180] sm:$0xff]
  %v1421 = vld [vmem:[%s5 + $0x188] sm:$0xff]
  %v1422 = vld [vmem:[%s5 + $0x190] sm:$0xff]
  %v1423 = vld [vmem:[%s5 + $0x198] sm:$0xff]
  %v1424 = vld [vmem:[%s5 + $0x1a0] sm:$0xff]
  %v1425 = vld [vmem:[%s5 + $0x1a8] sm:$0xff]
  %v1426 = vld [vmem:[%s5 + $0x1b0] sm:$0xff]
  %v1427 = vld [vmem:[%s5 + $0x1b8] sm:$0xff]
  %v1428 = vld [vmem:[%s5 + $0x1c0] sm:$0xff]
  %v1429 = vld [vmem:[%s5 + $0x1c8] sm:$0xff]
  %v1430 = vld [vmem:[%s5 + $0x1d0] sm:$0xff]
  %v1431 = vld [vmem:[%s5 + $0x1d8] sm:$0xff]
  %v1432 = vld [vmem:[%s5 + $0x1e0] sm:$0xff]
  %v1433 = vld [vmem:[%s5 + $0x1e8] sm:$0xff]
  %v1434 = vld [vmem:[%s5 + $0x1f0] sm:$0xff]
  %v1435 = vld [vmem:[%s5 + $0x1f8] sm:$0xff]
  %v1436 = vld [vmem:[%s5 + $0x200] sm:$0xff]
  %v1437 = vld [vmem:[%s5 + $0x208] sm:$0xff]
  %v1438 = vld [vmem:[%s5 + $0x210] sm:$0xff]
  %v1439 = vld [vmem:[%s5 + $0x218] sm:$0xff]
  %v1440 = vld [vmem:[%s5 + $0x220] sm:$0xff]
  %v1441 = vld [vmem:[%s5 + $0x228] sm:$0xff]
  %v1442 = vld [vmem:[%s5 + $0x230] sm:$0xff]
  %v1443 = vld [vmem:[%s5 + $0x238] sm:$0xff]
  %v1444 = vld [vmem:[%s5 + $0x240] sm:$0xff]
  %v1445 = vld [vmem:[%s5 + $0x248] sm:$0xff]
  %v1446 = vld [vmem:[%s5 + $0x250] sm:$0xff]
  %v1447 = vld [vmem:[%s5 + $0x258] sm:$0xff]
  %v1448 = vld [vmem:[%s5 + $0x260] sm:$0xff]
  %v1449 = vld [vmem:[%s5 + $0x268] sm:$0xff]
  %v1450 = vld [vmem:[%s5 + $0x270] sm:$0xff]
  %v1451 = vld [vmem:[%s5 + $0x278] sm:$0xff]
  %v1452 = vld [vmem:[%s5 + $0x280] sm:$0xff]
  %v1453 = vmul.f32 %v1291, %v1372
  %v1454 = vmul.f32 %v1292, %v1373
  %v1455 = vmul.f32 %v1293, %v1374
  %v1456 = vmul.f32 %v1294, %v1375
  %v1457 = vmul.f32 %v1295, %v1376
  %v1458 = vmul.f32 %v1296, %v1377
  %v1459 = vmul.f32 %v1297, %v1378
  %v1460 = vmul.f32 %v1298, %v1379
  %v1461 = vmul.f32 %v1299, %v1380
  %v1462 = vmul.f32 %v1300, %v1381
  %v1463 = vmul.f32 %v1301, %v1382
  %v1464 = vmul.f32 %v1302, %v1383
  %v1465 = vmul.f32 %v1303, %v1384
  %v1466 = vmul.f32 %v1304, %v1385
  %v1467 = vmul.f32 %v1305, %v1386
  %v1468 = vmul.f32 %v1306, %v1387
  %v1469 = vmul.f32 %v1307, %v1388
  %v1470 = vmul.f32 %v1308, %v1389
  %v1471 = vmul.f32 %v1309, %v1390
  %v1472 = vmul.f32 %v1310, %v1391
  %v1473 = vmul.f32 %v1311, %v1392
  %v1474 = vmul.f32 %v1312, %v1393
  %v1475 = vmul.f32 %v1313, %v1394
  %v1476 = vmul.f32 %v1314, %v1395
  %v1477 = vmul.f32 %v1315, %v1396
  %v1478 = vmul.f32 %v1316, %v1397
  %v1479 = vmul.f32 %v1317, %v1398
  %v1480 = vmul.f32 %v1318, %v1399
  %v1481 = vmul.f32 %v1319, %v1400
  %v1482 = vmul.f32 %v1320, %v1401
  %v1483 = vmul.f32 %v1321, %v1402
  %v1484 = vmul.f32 %v1322, %v1403
  %v1485 = vmul.f32 %v1323, %v1404
  %v1486 = vmul.f32 %v1324, %v1405
  %v1487 = vmul.f32 %v1325, %v1406
  %v1488 = vmul.f32 %v1326, %v1407
  %v1489 = vmul.f32 %v1327, %v1408
  %v1490 = vmul.f32 %v1328, %v1409
  %v1491 = vmul.f32 %v1329, %v1410
  %v1492 = vmul.f32 %v1330, %v1411
  %v1493 = vmul.f32 %v1331, %v1412
  %v1494 = vmul.f32 %v1332, %v1413
  %v1495 = vmul.f32 %v1333, %v1414
  %v1496 = vmul.f32 %v1334, %v1415
  %v1497 = vmul.f32 %v1335, %v1416
  %v1498 = vmul.f32 %v1336, %v1417
  %v1499 = vmul.f32 %v1337, %v1418
  %v1500 = vmul.f32 %v1338, %v1419
  %v1501 = vmul.f32 %v1339, %v1420
  %v1502 = vmul.f32 %v1340, %v1421
  %v1503 = vmul.f32 %v1341, %v1422
  %v1504 = vmul.f32 %v1342, %v1423
  %v1505 = vmul.f32 %v1343, %v1424
  %v1506 = vmul.f32 %v1344, %v1425
  %v1507 = vmul.f32 %v1345, %v1426
  %v1508 = vmul.f32 %v1346, %v1427
  %v1509 = vmul.f32 %v1347, %v1428
  %v1510 = vmul.f32 %v1348, %v1429
  %v1511 = vmul.f32 %v1349, %v1430
  %v1512 = vmul.f32 %v1350, %v1431
  %v1513 = vmul.f32 %v1351, %v1432
  %v1514 = vmul.f32 %v1352, %v1433
  %v1515 = vmul.f32 %v1353, %v1434
  %v1516 = vmul.f32 %v1354, %v1435
  %v1517 = vmul.f32 %v1355, %v1436
  %v1518 = vmul.f32 %v1356, %v1437
  %v1519 = vmul.f32 %v1357, %v1438
  %v1520 = vmul.f32 %v1358, %v1439
  %v1521 = vmul.f32 %v1359, %v1440
  %v1522 = vmul.f32 %v1360, %v1441
  %v1523 = vmul.f32 %v1361, %v1442
  %v1524 = vmul.f32 %v1362, %v1443
  %v1525 = vmul.f32 %v1363, %v1444
  %v1526 = vmul.f32 %v1364, %v1445
  %v1527 = vmul.f32 %v1365, %v1446
  %v1528 = vmul.f32 %v1366, %v1447
  %v1529 = vmul.f32 %v1367, %v1448
  %v1530 = vmul.f32 %v1368, %v1449
  %v1531 = vmul.f32 %v1369, %v1450
  %v1532 = vmul.f32 %v1370, %v1451
  %v1533 = vmul.f32 %v1371, %v1452
  %v1534 = vrot.slane %v1453, 5
  %v1535 = vrot.slane %v1454, 5
  %v1536 = vrot.slane %v1455, 5
  %v1537 = vrot.slane %v1456, 5
  %v1538 = vrot.slane %v1457, 5
  %v1539 = vrot.slane %v1458, 5
  %v1540 = vrot.slane %v1459, 5
  %v1541 = vrot.slane %v1460, 5
  %v1542 = vrot.slane %v1461, 5
  %v1543 = vrot.slane %v1462, 5
  %v1544 = vrot.slane %v1463, 5
  %v1545 = vrot.slane %v1464, 5
  %v1546 = vrot.slane %v1465, 5
  %v1547 = vrot.slane %v1466, 5
  %v1548 = vrot.slane %v1467, 5
  %v1549 = vrot.slane %v1468, 5
  %v1550 = vrot.slane %v1469, 5
  %v1551 = vrot.slane %v1470, 5
  %v1552 = vrot.slane %v1471, 5
  %v1553 = vrot.slane %v1472, 5
  %v1554 = vrot.slane %v1473, 5
  %v1555 = vrot.slane %v1474, 5
  %v1556 = vrot.slane %v1475, 5
  %v1557 = vrot.slane %v1476, 5
  %v1558 = vrot.slane %v1477, 5
  %v1559 = vrot.slane %v1478, 5
  %v1560 = vrot.slane %v1479, 5
  %v1561 = vrot.slane %v1480, 5
  %v1562 = vrot.slane %v1481, 5
  %v1563 = vrot.slane %v1482, 5
  %v1564 = vrot.slane %v1483, 5
  %v1565 = vrot.slane %v1484, 5
  %v1566 = vrot.slane %v1485, 5
  %v1567 = vrot.slane %v1486, 5
  %v1568 = vrot.slane %v1487, 5
  %v1569 = vrot.slane %v1488, 5
  %v1570 = vrot.slane %v1489, 5
  %v1571 = vrot.slane %v1490, 5
  %v1572 = vrot.slane %v1491, 5
  %v1573 = vrot.slane %v1492, 5
  %v1574 = vrot.slane %v1493, 5
  %v1575 = vrot.slane %v1494, 5
  %v1576 = vrot.slane %v1495, 5
  %v1577 = vrot.slane %v1496, 5
  %v1578 = vrot.slane %v1497, 5
  %v1579 = vrot.slane %v1498, 5
  %v1580 = vrot.slane %v1499, 5
  %v1581 = vrot.slane %v1500, 5
  %v1582 = vrot.slane %v1501, 5
  %v1583 = vrot.slane %v1502, 5
  %v1584 = vrot.slane %v1503, 5
  %v1585 = vrot.slane %v1504, 5
  %v1586 = vrot.slane %v1505, 5
  %v1587 = vrot.slane %v1506, 5
  %v1588 = vrot.slane %v1507, 5
  %v1589 = vrot.slane %v1508, 5
  %v1590 = vrot.slane %v1509, 5
  %v1591 = vrot.slane %v1510, 5
  %v1592 = vrot.slane %v1511, 5
  %v1593 = vrot.slane %v1512, 5
  %v1594 = vrot.slane %v1513, 5
  %v1595 = vrot.slane %v1514, 5
  %v1596 = vrot.slane %v1515, 5
  %v1597 = vrot.slane %v1516, 5
  %v1598 = vrot.slane %v1517, 5
  %v1599 = vrot.slane %v1518, 5
  %v1600 = vrot.slane %v1519, 5
  %v1601 = vrot.slane %v1520, 5
  %v1602 = vrot.slane %v1521, 5
  %v1603 = vrot.slane %v1522, 5
  %v1604 = vrot.slane %v1523, 5
  %v1605 = vrot.slane %v1524, 5
  %v1606 = vrot.slane %v1525, 5
  %v1607 = vrot.slane %v1526, 5
  %v1608 = vrot.slane %v1527, 5
  %v1609 = vrot.slane %v1528, 5
  %v1610 = vrot.slane %v1529, 5
  %v1611 = vrot.slane %v1530, 5
  %v1612 = vrot.slane %v1531, 5
  %v1613 = vrot.slane %v1532, 5
  %v1614 = vrot.slane %v1533, 5
  %v1615 = vlaneseq
  %v1616 = vshrl.u32 %v1615, 7
  %vm1617 = vcmp.lt.s32.totalorder %v1616, 3
  %v1618 = vsel %vm1617, %v1613, %v1614
  %v1619 = vsel %vm1617, %v1612, %v1613
  %v1620 = vsel %vm1617, %v1611, %v1612
  %v1621 = vsel %vm1617, %v1610, %v1611
  %v1622 = vsel %vm1617, %v1609, %v1610
  %v1623 = vsel %vm1617, %v1608, %v1609
  %v1624 = vsel %vm1617, %v1607, %v1608
  %v1625 = vsel %vm1617, %v1606, %v1607
  %v1626 = vsel %vm1617, %v1605, %v1606
  %v1627 = vsel %vm1617, %v1604, %v1605
  %v1628 = vsel %vm1617, %v1603, %v1604
  %v1629 = vsel %vm1617, %v1602, %v1603
  %v1630 = vsel %vm1617, %v1601, %v1602
  %v1631 = vsel %vm1617, %v1600, %v1601
  %v1632 = vsel %vm1617, %v1599, %v1600
  %v1633 = vsel %vm1617, %v1598, %v1599
  %v1634 = vsel %vm1617, %v1597, %v1598
  %v1635 = vsel %vm1617, %v1596, %v1597
  %v1636 = vsel %vm1617, %v1595, %v1596
  %v1637 = vsel %vm1617, %v1594, %v1595
  %v1638 = vsel %vm1617, %v1593, %v1594
  %v1639 = vsel %vm1617, %v1592, %v1593
  %v1640 = vsel %vm1617, %v1591, %v1592
  %v1641 = vsel %vm1617, %v1590, %v1591
  %v1642 = vsel %vm1617, %v1589, %v1590
  %v1643 = vsel %vm1617, %v1588, %v1589
  %v1644 = vsel %vm1617, %v1587, %v1588
  %v1645 = vsel %vm1617, %v1586, %v1587
  %v1646 = vsel %vm1617, %v1585, %v1586
  %v1647 = vsel %vm1617, %v1584, %v1585
  %v1648 = vsel %vm1617, %v1583, %v1584
  %v1649 = vsel %vm1617, %v1582, %v1583
  %v1650 = vsel %vm1617, %v1581, %v1582
  %v1651 = vsel %vm1617, %v1580, %v1581
  %v1652 = vsel %vm1617, %v1579, %v1580
  %v1653 = vsel %vm1617, %v1578, %v1579
  %v1654 = vsel %vm1617, %v1577, %v1578
  %v1655 = vsel %vm1617, %v1576, %v1577
  %v1656 = vsel %vm1617, %v1575, %v1576
  %v1657 = vsel %vm1617, %v1574, %v1575
  %v1658 = vsel %vm1617, %v1573, %v1574
  %v1659 = vsel %vm1617, %v1572, %v1573
  %v1660 = vsel %vm1617, %v1571, %v1572
  %v1661 = vsel %vm1617, %v1570, %v1571
  %v1662 = vsel %vm1617, %v1569, %v1570
  %v1663 = vsel %vm1617, %v1568, %v1569
  %v1664 = vsel %vm1617, %v1567, %v1568
  %v1665 = vsel %vm1617, %v1566, %v1567
  %v1666 = vsel %vm1617, %v1565, %v1566
  %v1667 = vsel %vm1617, %v1564, %v1565
  %v1668 = vsel %vm1617, %v1563, %v1564
  %v1669 = vsel %vm1617, %v1562, %v1563
  %v1670 = vsel %vm1617, %v1561, %v1562
  %v1671 = vsel %vm1617, %v1560, %v1561
  %v1672 = vsel %vm1617, %v1559, %v1560
  %v1673 = vsel %vm1617, %v1558, %v1559
  %v1674 = vsel %vm1617, %v1557, %v1558
  %v1675 = vsel %vm1617, %v1556, %v1557
  %v1676 = vsel %vm1617, %v1555, %v1556
  %v1677 = vsel %vm1617, %v1554, %v1555
  %v1678 = vsel %vm1617, %v1553, %v1554
  %v1679 = vsel %vm1617, %v1552, %v1553
  %v1680 = vsel %vm1617, %v1551, %v1552
  %v1681 = vsel %vm1617, %v1550, %v1551
  %v1682 = vsel %vm1617, %v1549, %v1550
  %v1683 = vsel %vm1617, %v1548, %v1549
  %v1684 = vsel %vm1617, %v1547, %v1548
  %v1685 = vsel %vm1617, %v1546, %v1547
  %v1686 = vsel %vm1617, %v1545, %v1546
  %v1687 = vsel %vm1617, %v1544, %v1545
  %v1688 = vsel %vm1617, %v1543, %v1544
  %v1689 = vsel %vm1617, %v1542, %v1543
  %v1690 = vsel %vm1617, %v1541, %v1542
  %v1691 = vsel %vm1617, %v1540, %v1541
  %v1692 = vsel %vm1617, %v1539, %v1540
  %v1693 = vsel %vm1617, %v1538, %v1539
  %v1694 = vsel %vm1617, %v1537, %v1538
  %v1695 = vsel %vm1617, %v1536, %v1537
  %v1696 = vsel %vm1617, %v1535, %v1536
  %v1697 = vsel %vm1617, %v1534, %v1535
  %v1698 = vsel %vm1617, %v1614, %v1534
  %v1699 = vpack.c.bf16 %v1618, %v1619
  %v1700 = vpack.c.bf16 %v1697, %v1698
  %v1701 = vpack.c.bf16 %v1695, %v1696
  %v1702 = vpack.c.bf16 %v1693, %v1694
  %v1703 = vpack.c.bf16 %v1691, %v1692
  %v1704 = vpack.c.bf16 %v1689, %v1690
  %v1705 = vpack.c.bf16 %v1687, %v1688
  %v1706 = vpack.c.bf16 %v1685, %v1686
  %v1707 = vpack.c.bf16 %v1683, %v1684
  %v1708 = vpack.c.bf16 %v1681, %v1682
  %v1709 = vpack.c.bf16 %v1679, %v1680
  %v1710 = vpack.c.bf16 %v1677, %v1678
  %v1711 = vpack.c.bf16 %v1675, %v1676
  %v1712 = vpack.c.bf16 %v1673, %v1674
  %v1713 = vpack.c.bf16 %v1671, %v1672
  %v1714 = vpack.c.bf16 %v1669, %v1670
  %v1715 = vpack.c.bf16 %v1667, %v1668
  %v1716 = vpack.c.bf16 %v1665, %v1666
  %v1717 = vpack.c.bf16 %v1663, %v1664
  %v1718 = vpack.c.bf16 %v1661, %v1662
  %v1719 = vpack.c.bf16 %v1659, %v1660
  %v1720 = vpack.c.bf16 %v1657, %v1658
  %v1721 = vpack.c.bf16 %v1655, %v1656
  %v1722 = vpack.c.bf16 %v1653, %v1654
  %v1723 = vpack.c.bf16 %v1651, %v1652
  %v1724 = vpack.c.bf16 %v1649, %v1650
  %v1725 = vpack.c.bf16 %v1647, %v1648
  %v1726 = vpack.c.bf16 %v1645, %v1646
  %v1727 = vpack.c.bf16 %v1643, %v1644
  %v1728 = vpack.c.bf16 %v1641, %v1642
  %v1729 = vpack.c.bf16 %v1639, %v1640
  %v1730 = vpack.c.bf16 %v1637, %v1638
  %v1731 = vpack.c.bf16 %v1635, %v1636
  %v1732 = vpack.c.bf16 %v1633, %v1634
  %v1733 = vpack.c.bf16 %v1631, %v1632
  %v1734 = vpack.c.bf16 %v1629, %v1630
  %v1735 = vpack.c.bf16 %v1627, %v1628
  %v1736 = vpack.c.bf16 %v1625, %v1626
  %v1737 = vpack.c.bf16 %v1623, %v1624
  %v1738 = vpack.c.bf16 %v1621, %v1622
  %v1739 = vpack.c.bf16 %v1620, %v1620
  %v1740 = vld [vmem:[%s6] sm:$0xf]
  %v1741 = vld [vmem:[%s6 + $0x4] sm:$0xf]
  %v1742 = vld [vmem:[%s6 + $0x8] sm:$0xf]
  %v1743 = vld [vmem:[%s6 + $0xc] sm:$0xf]
  %v1744 = vld [vmem:[%s6 + $0x10] sm:$0xf]
  %v1745 = vld [vmem:[%s6 + $0x14] sm:$0xf]
  %v1746 = vld [vmem:[%s6 + $0x18] sm:$0xf]
  %v1747 = vld [vmem:[%s6 + $0x1c] sm:$0xf]
  %v1748 = vld [vmem:[%s6 + $0x20] sm:$0xf]
  %v1749 = vld [vmem:[%s6 + $0x24] sm:$0xf]
  %v1750 = vld [vmem:[%s6 + $0x28] sm:$0xf]
  %v1751 = vld [vmem:[%s6 + $0x2c] sm:$0xf]
  %v1752 = vld [vmem:[%s6 + $0x30] sm:$0xf]
  %v1753 = vld [vmem:[%s6 + $0x34] sm:$0xf]
  %v1754 = vld [vmem:[%s6 + $0x38] sm:$0xf]
  %v1755 = vld [vmem:[%s6 + $0x3c] sm:$0xf]
  %v1756 = vrot.slane %v1453, 6
  %v1757 = vrot.slane %v1454, 6
  %v1758 = vrot.slane %v1455, 6
  %v1759 = vrot.slane %v1456, 6
  %v1760 = vrot.slane %v1457, 6
  %v1761 = vrot.slane %v1458, 6
  %v1762 = vrot.slane %v1459, 6
  %v1763 = vrot.slane %v1460, 6
  %v1764 = vrot.slane %v1461, 6
  %v1765 = vrot.slane %v1462, 6
  %v1766 = vrot.slane %v1463, 6
  %v1767 = vrot.slane %v1464, 6
  %v1768 = vrot.slane %v1465, 6
  %v1769 = vrot.slane %v1466, 6
  %v1770 = vrot.slane %v1467, 6
  %v1771 = vrot.slane %v1468, 6
  %v1772 = vrot.slane %v1469, 6
  %v1773 = vrot.slane %v1470, 6
  %v1774 = vrot.slane %v1471, 6
  %v1775 = vrot.slane %v1472, 6
  %v1776 = vrot.slane %v1473, 6
  %v1777 = vrot.slane %v1474, 6
  %v1778 = vrot.slane %v1475, 6
  %v1779 = vrot.slane %v1476, 6
  %v1780 = vrot.slane %v1477, 6
  %v1781 = vrot.slane %v1478, 6
  %v1782 = vrot.slane %v1479, 6
  %v1783 = vrot.slane %v1480, 6
  %v1784 = vrot.slane %v1481, 6
  %v1785 = vrot.slane %v1482, 6
  %v1786 = vrot.slane %v1483, 6
  %v1787 = vrot.slane %v1484, 6
  %v1788 = vrot.slane %v1485, 6
  %v1789 = vrot.slane %v1486, 6
  %v1790 = vrot.slane %v1487, 6
  %v1791 = vrot.slane %v1488, 6
  %v1792 = vrot.slane %v1489, 6
  %v1793 = vrot.slane %v1490, 6
  %v1794 = vrot.slane %v1491, 6
  %v1795 = vrot.slane %v1492, 6
  %v1796 = vrot.slane %v1493, 6
  %v1797 = vrot.slane %v1494, 6
  %v1798 = vrot.slane %v1495, 6
  %v1799 = vrot.slane %v1496, 6
  %v1800 = vrot.slane %v1497, 6
  %v1801 = vrot.slane %v1498, 6
  %v1802 = vrot.slane %v1499, 6
  %v1803 = vrot.slane %v1500, 6
  %v1804 = vrot.slane %v1501, 6
  %v1805 = vrot.slane %v1502, 6
  %v1806 = vrot.slane %v1503, 6
  %v1807 = vrot.slane %v1504, 6
  %v1808 = vrot.slane %v1505, 6
  %v1809 = vrot.slane %v1506, 6
  %v1810 = vrot.slane %v1507, 6
  %v1811 = vrot.slane %v1508, 6
  %v1812 = vrot.slane %v1509, 6
  %v1813 = vrot.slane %v1510, 6
  %v1814 = vrot.slane %v1511, 6
  %v1815 = vrot.slane %v1512, 6
  %v1816 = vrot.slane %v1513, 6
  %v1817 = vrot.slane %v1514, 6
  %v1818 = vrot.slane %v1515, 6
  %v1819 = vrot.slane %v1516, 6
  %v1820 = vrot.slane %v1517, 6
  %v1821 = vrot.slane %v1518, 6
  %v1822 = vrot.slane %v1519, 6
  %v1823 = vrot.slane %v1520, 6
  %v1824 = vrot.slane %v1521, 6
  %v1825 = vrot.slane %v1522, 6
  %v1826 = vrot.slane %v1523, 6
  %v1827 = vrot.slane %v1524, 6
  %v1828 = vrot.slane %v1525, 6
  %v1829 = vrot.slane %v1526, 6
  %v1830 = vrot.slane %v1527, 6
  %v1831 = vrot.slane %v1528, 6
  %v1832 = vrot.slane %v1529, 6
  %v1833 = vrot.slane %v1530, 6
  %v1834 = vrot.slane %v1531, 6
  %v1835 = vrot.slane %v1532, 6
  %v1836 = vrot.slane %v1533, 6
  %vm1837 = vcmp.lt.s32.totalorder %v1616, 2
  %v1838 = vsel %vm1837, %v1835, %v1836
  %v1839 = vsel %vm1837, %v1834, %v1835
  %v1840 = vsel %vm1837, %v1833, %v1834
  %v1841 = vsel %vm1837, %v1832, %v1833
  %v1842 = vsel %vm1837, %v1831, %v1832
  %v1843 = vsel %vm1837, %v1830, %v1831
  %v1844 = vsel %vm1837, %v1829, %v1830
  %v1845 = vsel %vm1837, %v1828, %v1829
  %v1846 = vsel %vm1837, %v1827, %v1828
  %v1847 = vsel %vm1837, %v1826, %v1827
  %v1848 = vsel %vm1837, %v1825, %v1826
  %v1849 = vsel %vm1837, %v1824, %v1825
  %v1850 = vsel %vm1837, %v1823, %v1824
  %v1851 = vsel %vm1837, %v1822, %v1823
  %v1852 = vsel %vm1837, %v1821, %v1822
  %v1853 = vsel %vm1837, %v1820, %v1821
  %v1854 = vsel %vm1837, %v1819, %v1820
  %v1855 = vsel %vm1837, %v1818, %v1819
  %v1856 = vsel %vm1837, %v1817, %v1818
  %v1857 = vsel %vm1837, %v1816, %v1817
  %v1858 = vsel %vm1837, %v1815, %v1816
  %v1859 = vsel %vm1837, %v1814, %v1815
  %v1860 = vsel %vm1837, %v1813, %v1814
  %v1861 = vsel %vm1837, %v1812, %v1813
  %v1862 = vsel %vm1837, %v1811, %v1812
  %v1863 = vsel %vm1837, %v1810, %v1811
  %v1864 = vsel %vm1837, %v1809, %v1810
  %v1865 = vsel %vm1837, %v1808, %v1809
  %v1866 = vsel %vm1837, %v1807, %v1808
  %v1867 = vsel %vm1837, %v1806, %v1807
  %v1868 = vsel %vm1837, %v1805, %v1806
  %v1869 = vsel %vm1837, %v1804, %v1805
  %v1870 = vsel %vm1837, %v1803, %v1804
  %v1871 = vsel %vm1837, %v1802, %v1803
  %v1872 = vsel %vm1837, %v1801, %v1802
  %v1873 = vsel %vm1837, %v1800, %v1801
  %v1874 = vsel %vm1837, %v1799, %v1800
  %v1875 = vsel %vm1837, %v1798, %v1799
  %v1876 = vsel %vm1837, %v1797, %v1798
  %v1877 = vsel %vm1837, %v1796, %v1797
  %v1878 = vsel %vm1837, %v1795, %v1796
  %v1879 = vsel %vm1837, %v1794, %v1795
  %v1880 = vsel %vm1837, %v1793, %v1794
  %v1881 = vsel %vm1837, %v1792, %v1793
  %v1882 = vsel %vm1837, %v1791, %v1792
  %v1883 = vsel %vm1837, %v1790, %v1791
  %v1884 = vsel %vm1837, %v1789, %v1790
  %v1885 = vsel %vm1837, %v1788, %v1789
  %v1886 = vsel %vm1837, %v1787, %v1788
  %v1887 = vsel %vm1837, %v1786, %v1787
  %v1888 = vsel %vm1837, %v1785, %v1786
  %v1889 = vsel %vm1837, %v1784, %v1785
  %v1890 = vsel %vm1837, %v1783, %v1784
  %v1891 = vsel %vm1837, %v1782, %v1783
  %v1892 = vsel %vm1837, %v1781, %v1782
  %v1893 = vsel %vm1837, %v1780, %v1781
  %v1894 = vsel %vm1837, %v1779, %v1780
  %v1895 = vsel %vm1837, %v1778, %v1779
  %v1896 = vsel %vm1837, %v1777, %v1778
  %v1897 = vsel %vm1837, %v1776, %v1777
  %v1898 = vsel %vm1837, %v1775, %v1776
  %v1899 = vsel %vm1837, %v1774, %v1775
  %v1900 = vsel %vm1837, %v1773, %v1774
  %v1901 = vsel %vm1837, %v1772, %v1773
  %v1902 = vsel %vm1837, %v1771, %v1772
  %v1903 = vsel %vm1837, %v1770, %v1771
  %v1904 = vsel %vm1837, %v1769, %v1770
  %v1905 = vsel %vm1837, %v1768, %v1769
  %v1906 = vsel %vm1837, %v1767, %v1768
  %v1907 = vsel %vm1837, %v1766, %v1767
  %v1908 = vsel %vm1837, %v1765, %v1766
  %v1909 = vsel %vm1837, %v1764, %v1765
  %v1910 = vsel %vm1837, %v1763, %v1764
  %v1911 = vsel %vm1837, %v1762, %v1763
  %v1912 = vsel %vm1837, %v1761, %v1762
  %v1913 = vsel %vm1837, %v1760, %v1761
  %v1914 = vsel %vm1837, %v1759, %v1760
  %v1915 = vsel %vm1837, %v1758, %v1759
  %v1916 = vsel %vm1837, %v1757, %v1758
  %v1917 = vsel %vm1837, %v1756, %v1757
  %v1918 = vsel %vm1837, %v1836, %v1756
  %v1919 = vpack.c.bf16 %v1838, %v1839
  %v1920 = vpack.c.bf16 %v1917, %v1918
  %v1921 = vpack.c.bf16 %v1915, %v1916
  %v1922 = vpack.c.bf16 %v1913, %v1914
  %v1923 = vpack.c.bf16 %v1911, %v1912
  %v1924 = vpack.c.bf16 %v1909, %v1910
  %v1925 = vpack.c.bf16 %v1907, %v1908
  %v1926 = vpack.c.bf16 %v1905, %v1906
  %v1927 = vpack.c.bf16 %v1903, %v1904
  %v1928 = vpack.c.bf16 %v1901, %v1902
  %v1929 = vpack.c.bf16 %v1899, %v1900
  %v1930 = vpack.c.bf16 %v1897, %v1898
  %v1931 = vpack.c.bf16 %v1895, %v1896
  %v1932 = vpack.c.bf16 %v1893, %v1894
  %v1933 = vpack.c.bf16 %v1891, %v1892
  %v1934 = vpack.c.bf16 %v1889, %v1890
  %v1935 = vpack.c.bf16 %v1887, %v1888
  %v1936 = vpack.c.bf16 %v1885, %v1886
  %v1937 = vpack.c.bf16 %v1883, %v1884
  %v1938 = vpack.c.bf16 %v1881, %v1882
  %v1939 = vpack.c.bf16 %v1879, %v1880
  %v1940 = vpack.c.bf16 %v1877, %v1878
  %v1941 = vpack.c.bf16 %v1875, %v1876
  %v1942 = vpack.c.bf16 %v1873, %v1874
  %v1943 = vpack.c.bf16 %v1871, %v1872
  %v1944 = vpack.c.bf16 %v1869, %v1870
  %v1945 = vpack.c.bf16 %v1867, %v1868
  %v1946 = vpack.c.bf16 %v1865, %v1866
  %v1947 = vpack.c.bf16 %v1863, %v1864
  %v1948 = vpack.c.bf16 %v1861, %v1862
  %v1949 = vpack.c.bf16 %v1859, %v1860
  %v1950 = vpack.c.bf16 %v1857, %v1858
  %v1951 = vpack.c.bf16 %v1855, %v1856
  %v1952 = vpack.c.bf16 %v1853, %v1854
  %v1953 = vpack.c.bf16 %v1851, %v1852
  %v1954 = vpack.c.bf16 %v1849, %v1850
  %v1955 = vpack.c.bf16 %v1847, %v1848
  %v1956 = vpack.c.bf16 %v1845, %v1846
  %v1957 = vpack.c.bf16 %v1843, %v1844
  %v1958 = vpack.c.bf16 %v1841, %v1842
  %v1959 = vpack.c.bf16 %v1840, %v1840
  %s1960 = scalar_lea.vmem %s6, 64
  %v1961 = vld [vmem:[%s1960] sm:$0xf]
  %v1962 = vld [vmem:[%s1960 + $0x4] sm:$0xf]
  %v1963 = vld [vmem:[%s1960 + $0x8] sm:$0xf]
  %v1964 = vld [vmem:[%s1960 + $0xc] sm:$0xf]
  %v1965 = vld [vmem:[%s1960 + $0x10] sm:$0xf]
  %v1966 = vld [vmem:[%s1960 + $0x14] sm:$0xf]
  %v1967 = vld [vmem:[%s1960 + $0x18] sm:$0xf]
  %v1968 = vld [vmem:[%s1960 + $0x1c] sm:$0xf]
  %v1969 = vld [vmem:[%s1960 + $0x20] sm:$0xf]
  %v1970 = vld [vmem:[%s1960 + $0x24] sm:$0xf]
  %v1971 = vld [vmem:[%s1960 + $0x28] sm:$0xf]
  %v1972 = vld [vmem:[%s1960 + $0x2c] sm:$0xf]
  %v1973 = vld [vmem:[%s1960 + $0x30] sm:$0xf]
  %v1974 = vld [vmem:[%s1960 + $0x34] sm:$0xf]
  %v1975 = vld [vmem:[%s1960 + $0x38] sm:$0xf]
  %v1976 = vld [vmem:[%s1960 + $0x3c] sm:$0xf]
  %v1993 = vunpack.c.l.b16 %v1961
  %v1994 = vunpack.c.l.b16 %v1962
  %v1995 = vunpack.c.l.b16 %v1963
  %v1996 = vunpack.c.l.b16 %v1964
  %v1997 = vunpack.c.l.b16 %v1965
  %v1998 = vunpack.c.l.b16 %v1966
  %v1999 = vunpack.c.l.b16 %v1967
  %v2000 = vunpack.c.l.b16 %v1968
  %v2001 = vunpack.c.l.b16 %v1969
  %v2002 = vunpack.c.l.b16 %v1970
  %v2003 = vunpack.c.l.b16 %v1971
  %v2004 = vunpack.c.l.b16 %v1972
  %v2005 = vunpack.c.l.b16 %v1973
  %v2006 = vunpack.c.l.b16 %v1974
  %v2007 = vunpack.c.l.b16 %v1975
  %v2008 = vunpack.c.l.b16 %v1976
  %v2009 = vpack.c.b16 %v1994, %v1993
  %v2010 = vpack.c.b16 %v1996, %v1995
  %v2011 = vpack.c.b16 %v1998, %v1997
  %v2012 = vpack.c.b16 %v2000, %v1999
  %v2013 = vpack.c.b16 %v2002, %v2001
  %v2014 = vpack.c.b16 %v2004, %v2003
  %v2015 = vpack.c.b16 %v2006, %v2005
  %v2016 = vpack.c.b16 %v2008, %v2007
  %2025 = vmatprep.subr.bf16.mxu0 0
  %2026 = vmatpush1.bf16.msra.mxu0 %v2016
  %2027 = vmatprep.subr.bf16.mxu0 0
  %2028 = vmatpush1.bf16.msra.mxu0 %v2015
  %2029 = vmatprep.subr.bf16.mxu0 0
  %2030 = vmatpush1.bf16.msra.mxu0 %v2014
  %2031 = vmatprep.subr.bf16.mxu0 0
  %2032 = vmatpush1.bf16.msra.mxu0 %v2013
  %2033 = vmatprep.subr.bf16.mxu0 0
  %2034 = vmatpush1.bf16.msra.mxu0 %v2012
  %2035 = vmatprep.subr.bf16.mxu0 0
  %2036 = vmatpush1.bf16.msra.mxu0 %v2011
  %2037 = vmatprep.subr.bf16.mxu0 0
  %2038 = vmatpush1.bf16.msra.mxu0 %v2010
  %2039 = vmatprep.subr.bf16.mxu0 0
  %2040 = vmatpush1.bf16.msra.mxu0 %v2009
  %2041 = vmatprep.subr.bf16.mxu0 0
  %2042 = vmatpush2.bf16.msra.mxu0 0
  %2043 = vmatprep.subr.bf16.mxu0 0
  %2044 = vmatpush2.bf16.msra.mxu0 0
  %2045 = vmatprep.subr.bf16.mxu0 0
  %2046 = vmatpush2.bf16.msra.mxu0 0
  %2047 = vmatprep.subr.bf16.mxu0 0
  %2048 = vmatpush2.bf16.msra.mxu0 0
  %2049 = vmatprep.subr.bf16.mxu0 0
  %2050 = vmatpush2.bf16.msra.mxu0 0
  %2051 = vmatprep.subr.bf16.mxu0 0
  %2052 = vmatpush2.bf16.msra.mxu0 0
  %2053 = vmatprep.subr.bf16.mxu0 0
  %2054 = vmatpush2.bf16.msra.mxu0 0
  %2055 = vmatprep.subr.bf16.mxu0 0
  %2056 = vmatpush2.bf16.msra.mxu0 0
  %2057 = vmatprep.mubr.bf16.mxu0 0
  %2058 = vmatmul.mubr.bf16.gmra.mxu0 %v1919
  %v2059 = vpop.f32.mrf.mxu0
  %v2060 = vadd.f32 0.0, %v2059
  %v2061 = vpop.f32.mrf.mxu0
  %v2062 = vpop.f32.mrf.mxu0
  %v2063 = vadd.f32 0.0, %v2062
  %v2064 = vpop.f32.mrf.mxu0
  %2065 = vmatprep.mubr.bf16.mxu0 0
  %2066 = vmatmul.mubr.bf16.gmra.mxu0 %v1920
  %v2067 = vpop.f32.mrf.mxu0
  %v2068 = vadd.f32 0.0, %v2067
  %v2069 = vpop.f32.mrf.mxu0
  %v2070 = vpop.f32.mrf.mxu0
  %v2071 = vadd.f32 0.0, %v2070
  %v2072 = vpop.f32.mrf.mxu0
  %2073 = vmatprep.mubr.bf16.mxu0 0
  %2074 = vmatmul.mubr.bf16.gmra.mxu0 %v1921
  %v2075 = vpop.f32.mrf.mxu0
  %v2076 = vadd.f32 0.0, %v2075
  %v2077 = vpop.f32.mrf.mxu0
  %v2078 = vpop.f32.mrf.mxu0
  %v2079 = vadd.f32 0.0, %v2078
  %v2080 = vpop.f32.mrf.mxu0
  %2081 = vmatprep.mubr.bf16.mxu0 0
  %2082 = vmatmul.mubr.bf16.gmra.mxu0 %v1922
  %v2083 = vpop.f32.mrf.mxu0
  %v2084 = vadd.f32 0.0, %v2083
  %v2085 = vpop.f32.mrf.mxu0
  %v2086 = vpop.f32.mrf.mxu0
  %v2087 = vadd.f32 0.0, %v2086
  %v2088 = vpop.f32.mrf.mxu0
  %2089 = vmatprep.mubr.bf16.mxu0 0
  %2090 = vmatmul.mubr.bf16.gmra.mxu0 %v1923
  %v2091 = vpop.f32.mrf.mxu0
  %v2092 = vadd.f32 0.0, %v2091
  %v2093 = vpop.f32.mrf.mxu0
  %v2094 = vpop.f32.mrf.mxu0
  %v2095 = vadd.f32 0.0, %v2094
  %v2096 = vpop.f32.mrf.mxu0
  %2097 = vmatprep.mubr.bf16.mxu0 0
  %2098 = vmatmul.mubr.bf16.gmra.mxu0 %v1924
  %v2099 = vpop.f32.mrf.mxu0
  %v2100 = vadd.f32 0.0, %v2099
  %v2101 = vpop.f32.mrf.mxu0
  %v2102 = vpop.f32.mrf.mxu0
  %v2103 = vadd.f32 0.0, %v2102
  %v2104 = vpop.f32.mrf.mxu0
  %2105 = vmatprep.mubr.bf16.mxu0 0
  %2106 = vmatmul.mubr.bf16.gmra.mxu0 %v1925
  %v2107 = vpop.f32.mrf.mxu0
  %v2108 = vadd.f32 0.0, %v2107
  %v2109 = vpop.f32.mrf.mxu0
  %v2110 = vpop.f32.mrf.mxu0
  %v2111 = vadd.f32 0.0, %v2110
  %v2112 = vpop.f32.mrf.mxu0
  %2113 = vmatprep.mubr.bf16.mxu0 0
  %2114 = vmatmul.mubr.bf16.gmra.mxu0 %v1926
  %v2115 = vpop.f32.mrf.mxu0
  %v2116 = vadd.f32 0.0, %v2115
  %v2117 = vpop.f32.mrf.mxu0
  %v2118 = vpop.f32.mrf.mxu0
  %v2119 = vadd.f32 0.0, %v2118
  %v2120 = vpop.f32.mrf.mxu0
  %2121 = vmatprep.mubr.bf16.mxu0 0
  %2122 = vmatmul.mubr.bf16.gmra.mxu0 %v1927
  %v2123 = vpop.f32.mrf.mxu0
  %v2124 = vadd.f32 0.0, %v2123
  %v2125 = vpop.f32.mrf.mxu0
  %v2126 = vpop.f32.mrf.mxu0
  %v2127 = vadd.f32 0.0, %v2126
  %v2128 = vpop.f32.mrf.mxu0
  %2129 = vmatprep.mubr.bf16.mxu0 0
  %2130 = vmatmul.mubr.bf16.gmra.mxu0 %v1928
  %v2131 = vpop.f32.mrf.mxu0
  %v2132 = vadd.f32 0.0, %v2131
  %v2133 = vpop.f32.mrf.mxu0
  %v2134 = vpop.f32.mrf.mxu0
  %v2135 = vadd.f32 0.0, %v2134
  %v2136 = vpop.f32.mrf.mxu0
  %2137 = vmatprep.mubr.bf16.mxu0 0
  %2138 = vmatmul.mubr.bf16.gmra.mxu0 %v1929
  %v2139 = vpop.f32.mrf.mxu0
  %v2140 = vadd.f32 0.0, %v2139
  %v2141 = vpop.f32.mrf.mxu0
  %v2142 = vpop.f32.mrf.mxu0
  %v2143 = vadd.f32 0.0, %v2142
  %v2144 = vpop.f32.mrf.mxu0
  %2145 = vmatprep.mubr.bf16.mxu0 0
  %2146 = vmatmul.mubr.bf16.gmra.mxu0 %v1930
  %v2147 = vpop.f32.mrf.mxu0
  %v2148 = vadd.f32 0.0, %v2147
  %v2149 = vpop.f32.mrf.mxu0
  %v2150 = vpop.f32.mrf.mxu0
  %v2151 = vadd.f32 0.0, %v2150
  %v2152 = vpop.f32.mrf.mxu0
  %2153 = vmatprep.mubr.bf16.mxu0 0
  %2154 = vmatmul.mubr.bf16.gmra.mxu0 %v1931
  %v2155 = vpop.f32.mrf.mxu0
  %v2156 = vadd.f32 0.0, %v2155
  %v2157 = vpop.f32.mrf.mxu0
  %v2158 = vpop.f32.mrf.mxu0
  %v2159 = vadd.f32 0.0, %v2158
  %v2160 = vpop.f32.mrf.mxu0
  %2161 = vmatprep.mubr.bf16.mxu0 0
  %2162 = vmatmul.mubr.bf16.gmra.mxu0 %v1932
  %v2163 = vpop.f32.mrf.mxu0
  %v2164 = vadd.f32 0.0, %v2163
  %v2165 = vpop.f32.mrf.mxu0
  %v2166 = vpop.f32.mrf.mxu0
  %v2167 = vadd.f32 0.0, %v2166
  %v2168 = vpop.f32.mrf.mxu0
  %2169 = vmatprep.mubr.bf16.mxu0 0
  %2170 = vmatmul.mubr.bf16.gmra.mxu0 %v1933
  %v2171 = vpop.f32.mrf.mxu0
  %v2172 = vadd.f32 0.0, %v2171
  %v2173 = vpop.f32.mrf.mxu0
  %v2174 = vpop.f32.mrf.mxu0
  %v2175 = vadd.f32 0.0, %v2174
  %v2176 = vpop.f32.mrf.mxu0
  %2177 = vmatprep.mubr.bf16.mxu0 0
  %2178 = vmatmul.mubr.bf16.gmra.mxu0 %v1934
  %v2179 = vpop.f32.mrf.mxu0
  %v2180 = vadd.f32 0.0, %v2179
  %v2181 = vpop.f32.mrf.mxu0
  %v2182 = vpop.f32.mrf.mxu0
  %v2183 = vadd.f32 0.0, %v2182
  %v2184 = vpop.f32.mrf.mxu0
  %2185 = vmatprep.mubr.bf16.mxu0 0
  %2186 = vmatmul.mubr.bf16.gmra.mxu0 %v1935
  %v2187 = vpop.f32.mrf.mxu0
  %v2188 = vadd.f32 0.0, %v2187
  %v2189 = vpop.f32.mrf.mxu0
  %v2190 = vpop.f32.mrf.mxu0
  %v2191 = vadd.f32 0.0, %v2190
  %v2192 = vpop.f32.mrf.mxu0
  %2193 = vmatprep.mubr.bf16.mxu0 0
  %2194 = vmatmul.mubr.bf16.gmra.mxu0 %v1936
  %v2195 = vpop.f32.mrf.mxu0
  %v2196 = vadd.f32 0.0, %v2195
  %v2197 = vpop.f32.mrf.mxu0
  %v2198 = vpop.f32.mrf.mxu0
  %v2199 = vadd.f32 0.0, %v2198
  %v2200 = vpop.f32.mrf.mxu0
  %2201 = vmatprep.mubr.bf16.mxu0 0
  %2202 = vmatmul.mubr.bf16.gmra.mxu0 %v1937
  %v2203 = vpop.f32.mrf.mxu0
  %v2204 = vadd.f32 0.0, %v2203
  %v2205 = vpop.f32.mrf.mxu0
  %v2206 = vpop.f32.mrf.mxu0
  %v2207 = vadd.f32 0.0, %v2206
  %v2208 = vpop.f32.mrf.mxu0
  %2209 = vmatprep.mubr.bf16.mxu0 0
  %2210 = vmatmul.mubr.bf16.gmra.mxu0 %v1938
  %v2211 = vpop.f32.mrf.mxu0
  %v2212 = vadd.f32 0.0, %v2211
  %v2213 = vpop.f32.mrf.mxu0
  %v2214 = vpop.f32.mrf.mxu0
  %v2215 = vadd.f32 0.0, %v2214
  %v2216 = vpop.f32.mrf.mxu0
  %2217 = vmatprep.mubr.bf16.mxu0 0
  %2218 = vmatmul.mubr.bf16.gmra.mxu0 %v1939
  %v2219 = vpop.f32.mrf.mxu0
  %v2220 = vadd.f32 0.0, %v2219
  %v2221 = vpop.f32.mrf.mxu0
  %v2222 = vpop.f32.mrf.mxu0
  %v2223 = vadd.f32 0.0, %v2222
  %v2224 = vpop.f32.mrf.mxu0
  %2225 = vmatprep.mubr.bf16.mxu0 0
  %2226 = vmatmul.mubr.bf16.gmra.mxu0 %v1940
  %v2227 = vpop.f32.mrf.mxu0
  %v2228 = vadd.f32 0.0, %v2227
  %v2229 = vpop.f32.mrf.mxu0
  %v2230 = vpop.f32.mrf.mxu0
  %v2231 = vadd.f32 0.0, %v2230
  %v2232 = vpop.f32.mrf.mxu0
  %2233 = vmatprep.mubr.bf16.mxu0 0
  %2234 = vmatmul.mubr.bf16.gmra.mxu0 %v1941
  %v2235 = vpop.f32.mrf.mxu0
  %v2236 = vadd.f32 0.0, %v2235
  %v2237 = vpop.f32.mrf.mxu0
  %v2238 = vpop.f32.mrf.mxu0
  %v2239 = vadd.f32 0.0, %v2238
  %v2240 = vpop.f32.mrf.mxu0
  %2241 = vmatprep.mubr.bf16.mxu0 0
  %2242 = vmatmul.mubr.bf16.gmra.mxu0 %v1942
  %v2243 = vpop.f32.mrf.mxu0
  %v2244 = vadd.f32 0.0, %v2243
  %v2245 = vpop.f32.mrf.mxu0
  %v2246 = vpop.f32.mrf.mxu0
  %v2247 = vadd.f32 0.0, %v2246
  %v2248 = vpop.f32.mrf.mxu0
  %2249 = vmatprep.mubr.bf16.mxu0 0
  %2250 = vmatmul.mubr.bf16.gmra.mxu0 %v1943
  %v2251 = vpop.f32.mrf.mxu0
  %v2252 = vadd.f32 0.0, %v2251
  %v2253 = vpop.f32.mrf.mxu0
  %v2254 = vpop.f32.mrf.mxu0
  %v2255 = vadd.f32 0.0, %v2254
  %v2256 = vpop.f32.mrf.mxu0
  %2257 = vmatprep.mubr.bf16.mxu0 0
  %2258 = vmatmul.mubr.bf16.gmra.mxu0 %v1944
  %v2259 = vpop.f32.mrf.mxu0
  %v2260 = vadd.f32 0.0, %v2259
  %v2261 = vpop.f32.mrf.mxu0
  %v2262 = vpop.f32.mrf.mxu0
  %v2263 = vadd.f32 0.0, %v2262
  %v2264 = vpop.f32.mrf.mxu0
  %2265 = vmatprep.mubr.bf16.mxu0 0
  %2266 = vmatmul.mubr.bf16.gmra.mxu0 %v1945
  %v2267 = vpop.f32.mrf.mxu0
  %v2268 = vadd.f32 0.0, %v2267
  %v2269 = vpop.f32.mrf.mxu0
  %v2270 = vpop.f32.mrf.mxu0
  %v2271 = vadd.f32 0.0, %v2270
  %v2272 = vpop.f32.mrf.mxu0
  %2273 = vmatprep.mubr.bf16.mxu0 0
  %2274 = vmatmul.mubr.bf16.gmra.mxu0 %v1946
  %v2275 = vpop.f32.mrf.mxu0
  %v2276 = vadd.f32 0.0, %v2275
  %v2277 = vpop.f32.mrf.mxu0
  %v2278 = vpop.f32.mrf.mxu0
  %v2279 = vadd.f32 0.0, %v2278
  %v2280 = vpop.f32.mrf.mxu0
  %2281 = vmatprep.mubr.bf16.mxu0 0
  %2282 = vmatmul.mubr.bf16.gmra.mxu0 %v1947
  %v2283 = vpop.f32.mrf.mxu0
  %v2284 = vadd.f32 0.0, %v2283
  %v2285 = vpop.f32.mrf.mxu0
  %v2286 = vpop.f32.mrf.mxu0
  %v2287 = vadd.f32 0.0, %v2286
  %v2288 = vpop.f32.mrf.mxu0
  %2289 = vmatprep.mubr.bf16.mxu0 0
  %2290 = vmatmul.mubr.bf16.gmra.mxu0 %v1948
  %v2291 = vpop.f32.mrf.mxu0
  %v2292 = vadd.f32 0.0, %v2291
  %v2293 = vpop.f32.mrf.mxu0
  %v2294 = vpop.f32.mrf.mxu0
  %v2295 = vadd.f32 0.0, %v2294
  %v2296 = vpop.f32.mrf.mxu0
  %2297 = vmatprep.mubr.bf16.mxu0 0
  %2298 = vmatmul.mubr.bf16.gmra.mxu0 %v1949
  %v2299 = vpop.f32.mrf.mxu0
  %v2300 = vadd.f32 0.0, %v2299
  %v2301 = vpop.f32.mrf.mxu0
  %v2302 = vpop.f32.mrf.mxu0
  %v2303 = vadd.f32 0.0, %v2302
  %v2304 = vpop.f32.mrf.mxu0
  %2305 = vmatprep.mubr.bf16.mxu0 0
  %2306 = vmatmul.mubr.bf16.gmra.mxu0 %v1950
  %v2307 = vpop.f32.mrf.mxu0
  %v2308 = vadd.f32 0.0, %v2307
  %v2309 = vpop.f32.mrf.mxu0
  %v2310 = vpop.f32.mrf.mxu0
  %v2311 = vadd.f32 0.0, %v2310
  %v2312 = vpop.f32.mrf.mxu0
  %2313 = vmatprep.mubr.bf16.mxu0 0
  %2314 = vmatmul.mubr.bf16.gmra.mxu0 %v1951
  %v2315 = vpop.f32.mrf.mxu0
  %v2316 = vadd.f32 0.0, %v2315
  %v2317 = vpop.f32.mrf.mxu0
  %v2318 = vpop.f32.mrf.mxu0
  %v2319 = vadd.f32 0.0, %v2318
  %v2320 = vpop.f32.mrf.mxu0
  %2321 = vmatprep.mubr.bf16.mxu0 0
  %2322 = vmatmul.mubr.bf16.gmra.mxu0 %v1952
  %v2323 = vpop.f32.mrf.mxu0
  %v2324 = vadd.f32 0.0, %v2323
  %v2325 = vpop.f32.mrf.mxu0
  %v2326 = vpop.f32.mrf.mxu0
  %v2327 = vadd.f32 0.0, %v2326
  %v2328 = vpop.f32.mrf.mxu0
  %2329 = vmatprep.mubr.bf16.mxu0 0
  %2330 = vmatmul.mubr.bf16.gmra.mxu0 %v1953
  %v2331 = vpop.f32.mrf.mxu0
  %v2332 = vadd.f32 0.0, %v2331
  %v2333 = vpop.f32.mrf.mxu0
  %v2334 = vpop.f32.mrf.mxu0
  %v2335 = vadd.f32 0.0, %v2334
  %v2336 = vpop.f32.mrf.mxu0
  %2337 = vmatprep.mubr.bf16.mxu0 0
  %2338 = vmatmul.mubr.bf16.gmra.mxu0 %v1954
  %v2339 = vpop.f32.mrf.mxu0
  %v2340 = vadd.f32 0.0, %v2339
  %v2341 = vpop.f32.mrf.mxu0
  %v2342 = vpop.f32.mrf.mxu0
  %v2343 = vadd.f32 0.0, %v2342
  %v2344 = vpop.f32.mrf.mxu0
  %2345 = vmatprep.mubr.bf16.mxu0 0
  %2346 = vmatmul.mubr.bf16.gmra.mxu0 %v1955
  %v2347 = vpop.f32.mrf.mxu0
  %v2348 = vadd.f32 0.0, %v2347
  %v2349 = vpop.f32.mrf.mxu0
  %v2350 = vpop.f32.mrf.mxu0
  %v2351 = vadd.f32 0.0, %v2350
  %v2352 = vpop.f32.mrf.mxu0
  %2353 = vmatprep.mubr.bf16.mxu0 0
  %2354 = vmatmul.mubr.bf16.gmra.mxu0 %v1956
  %v2355 = vpop.f32.mrf.mxu0
  %v2356 = vadd.f32 0.0, %v2355
  %v2357 = vpop.f32.mrf.mxu0
  %v2358 = vpop.f32.mrf.mxu0
  %v2359 = vadd.f32 0.0, %v2358
  %v2360 = vpop.f32.mrf.mxu0
  %2361 = vmatprep.mubr.bf16.mxu0 0
  %2362 = vmatmul.mubr.bf16.gmra.mxu0 %v1957
  %v2363 = vpop.f32.mrf.mxu0
  %v2364 = vadd.f32 0.0, %v2363
  %v2365 = vpop.f32.mrf.mxu0
  %v2366 = vpop.f32.mrf.mxu0
  %v2367 = vadd.f32 0.0, %v2366
  %v2368 = vpop.f32.mrf.mxu0
  %2369 = vmatprep.mubr.bf16.mxu0 0
  %2370 = vmatmul.mubr.bf16.gmra.mxu0 %v1958
  %v2371 = vpop.f32.mrf.mxu0
  %v2372 = vadd.f32 0.0, %v2371
  %v2373 = vpop.f32.mrf.mxu0
  %v2374 = vpop.f32.mrf.mxu0
  %v2375 = vadd.f32 0.0, %v2374
  %v2376 = vpop.f32.mrf.mxu0
  %2377 = vmatprep.mubr.bf16.mxu0 0
  %2378 = vmatmul.mubr.bf16.gmra.mxu0 %v1959
  %v2379 = vpop.f32.mrf.mxu0
  %v2380 = vadd.f32 0.0, %v2379
  %v2381 = vpop.f32.mrf.mxu0
  %v2382 = vpop.f32.mrf.mxu0
  %v2383 = vpop.f32.mrf.mxu0
  %2384 = vdwg.mxu0
  %v2401 = vunpack.c.l.b16 %v1740
  %v2402 = vunpack.c.l.b16 %v1741
  %v2403 = vunpack.c.l.b16 %v1742
  %v2404 = vunpack.c.l.b16 %v1743
  %v2405 = vunpack.c.l.b16 %v1744
  %v2406 = vunpack.c.l.b16 %v1745
  %v2407 = vunpack.c.l.b16 %v1746
  %v2408 = vunpack.c.l.b16 %v1747
  %v2409 = vunpack.c.l.b16 %v1748
  %v2410 = vunpack.c.l.b16 %v1749
  %v2411 = vunpack.c.l.b16 %v1750
  %v2412 = vunpack.c.l.b16 %v1751
  %v2413 = vunpack.c.l.b16 %v1752
  %v2414 = vunpack.c.l.b16 %v1753
  %v2415 = vunpack.c.l.b16 %v1754
  %v2416 = vunpack.c.l.b16 %v1755
  %v2417 = vpack.c.b16 %v2402, %v2401
  %v2418 = vpack.c.b16 %v2404, %v2403
  %v2419 = vpack.c.b16 %v2406, %v2405
  %v2420 = vpack.c.b16 %v2408, %v2407
  %v2421 = vpack.c.b16 %v2410, %v2409
  %v2422 = vpack.c.b16 %v2412, %v2411
  %v2423 = vpack.c.b16 %v2414, %v2413
  %v2424 = vpack.c.b16 %v2416, %v2415
  %2433 = vmatprep.subr.bf16.mxu0 0
  %2434 = vmatpush1.bf16.msra.mxu0 %v2424
  %2435 = vmatprep.subr.bf16.mxu0 0
  %2436 = vmatpush1.bf16.msra.mxu0 %v2423
  %2437 = vmatprep.subr.bf16.mxu0 0
  %2438 = vmatpush1.bf16.msra.mxu0 %v2422
  %2439 = vmatprep.subr.bf16.mxu0 0
  %2440 = vmatpush1.bf16.msra.mxu0 %v2421
  %2441 = vmatprep.subr.bf16.mxu0 0
  %2442 = vmatpush1.bf16.msra.mxu0 %v2420
  %2443 = vmatprep.subr.bf16.mxu0 0
  %2444 = vmatpush1.bf16.msra.mxu0 %v2419
  %2445 = vmatprep.subr.bf16.mxu0 0
  %2446 = vmatpush1.bf16.msra.mxu0 %v2418
  %2447 = vmatprep.subr.bf16.mxu0 0
  %2448 = vmatpush1.bf16.msra.mxu0 %v2417
  %2449 = vmatprep.subr.bf16.mxu0 0
  %2450 = vmatpush2.bf16.msra.mxu0 0
  %2451 = vmatprep.subr.bf16.mxu0 0
  %2452 = vmatpush2.bf16.msra.mxu0 0
  %2453 = vmatprep.subr.bf16.mxu0 0
  %2454 = vmatpush2.bf16.msra.mxu0 0
  %2455 = vmatprep.subr.bf16.mxu0 0
  %2456 = vmatpush2.bf16.msra.mxu0 0
  %2457 = vmatprep.subr.bf16.mxu0 0
  %2458 = vmatpush2.bf16.msra.mxu0 0
  %2459 = vmatprep.subr.bf16.mxu0 0
  %2460 = vmatpush2.bf16.msra.mxu0 0
  %2461 = vmatprep.subr.bf16.mxu0 0
  %2462 = vmatpush2.bf16.msra.mxu0 0
  %2463 = vmatprep.subr.bf16.mxu0 0
  %2464 = vmatpush2.bf16.msra.mxu0 0
  %2465 = vmatprep.mubr.bf16.mxu0 0
  %2466 = vmatmul.mubr.bf16.gmra.mxu0 %v1699
  %v2467 = vpop.f32.mrf.mxu0
  %v2468 = vadd.f32 %v2060, %v2467
  %v2469 = vpop.f32.mrf.mxu0
  %v2470 = vpop.f32.mrf.mxu0
  %v2471 = vadd.f32 %v2063, %v2470
  %v2472 = vpop.f32.mrf.mxu0
  %2473 = vmatprep.mubr.bf16.mxu0 0
  %2474 = vmatmul.mubr.bf16.gmra.mxu0 %v1700
  %v2475 = vpop.f32.mrf.mxu0
  %v2476 = vadd.f32 %v2068, %v2475
  %v2477 = vpop.f32.mrf.mxu0
  %v2478 = vpop.f32.mrf.mxu0
  %v2479 = vadd.f32 %v2071, %v2478
  %v2480 = vpop.f32.mrf.mxu0
  %2481 = vmatprep.mubr.bf16.mxu0 0
  %2482 = vmatmul.mubr.bf16.gmra.mxu0 %v1701
  %v2483 = vpop.f32.mrf.mxu0
  %v2484 = vadd.f32 %v2076, %v2483
  %v2485 = vpop.f32.mrf.mxu0
  %v2486 = vpop.f32.mrf.mxu0
  %v2487 = vadd.f32 %v2079, %v2486
  %v2488 = vpop.f32.mrf.mxu0
  %2489 = vmatprep.mubr.bf16.mxu0 0
  %2490 = vmatmul.mubr.bf16.gmra.mxu0 %v1702
  %v2491 = vpop.f32.mrf.mxu0
  %v2492 = vadd.f32 %v2084, %v2491
  %v2493 = vpop.f32.mrf.mxu0
  %v2494 = vpop.f32.mrf.mxu0
  %v2495 = vadd.f32 %v2087, %v2494
  %v2496 = vpop.f32.mrf.mxu0
  %2497 = vmatprep.mubr.bf16.mxu0 0
  %2498 = vmatmul.mubr.bf16.gmra.mxu0 %v1703
  %v2499 = vpop.f32.mrf.mxu0
  %v2500 = vadd.f32 %v2092, %v2499
  %v2501 = vpop.f32.mrf.mxu0
  %v2502 = vpop.f32.mrf.mxu0
  %v2503 = vadd.f32 %v2095, %v2502
  %v2504 = vpop.f32.mrf.mxu0
  %2505 = vmatprep.mubr.bf16.mxu0 0
  %2506 = vmatmul.mubr.bf16.gmra.mxu0 %v1704
  %v2507 = vpop.f32.mrf.mxu0
  %v2508 = vadd.f32 %v2100, %v2507
  %v2509 = vpop.f32.mrf.mxu0
  %v2510 = vpop.f32.mrf.mxu0
  %v2511 = vadd.f32 %v2103, %v2510
  %v2512 = vpop.f32.mrf.mxu0
  %2513 = vmatprep.mubr.bf16.mxu0 0
  %2514 = vmatmul.mubr.bf16.gmra.mxu0 %v1705
  %v2515 = vpop.f32.mrf.mxu0
  %v2516 = vadd.f32 %v2108, %v2515
  %v2517 = vpop.f32.mrf.mxu0
  %v2518 = vpop.f32.mrf.mxu0
  %v2519 = vadd.f32 %v2111, %v2518
  %v2520 = vpop.f32.mrf.mxu0
  %2521 = vmatprep.mubr.bf16.mxu0 0
  %2522 = vmatmul.mubr.bf16.gmra.mxu0 %v1706
  %v2523 = vpop.f32.mrf.mxu0
  %v2524 = vadd.f32 %v2116, %v2523
  %v2525 = vpop.f32.mrf.mxu0
  %v2526 = vpop.f32.mrf.mxu0
  %v2527 = vadd.f32 %v2119, %v2526
  %v2528 = vpop.f32.mrf.mxu0
  %2529 = vmatprep.mubr.bf16.mxu0 0
  %2530 = vmatmul.mubr.bf16.gmra.mxu0 %v1707
  %v2531 = vpop.f32.mrf.mxu0
  %v2532 = vadd.f32 %v2124, %v2531
  %v2533 = vpop.f32.mrf.mxu0
  %v2534 = vpop.f32.mrf.mxu0
  %v2535 = vadd.f32 %v2127, %v2534
  %v2536 = vpop.f32.mrf.mxu0
  %2537 = vmatprep.mubr.bf16.mxu0 0
  %2538 = vmatmul.mubr.bf16.gmra.mxu0 %v1708
  %v2539 = vpop.f32.mrf.mxu0
  %v2540 = vadd.f32 %v2132, %v2539
  %v2541 = vpop.f32.mrf.mxu0
  %v2542 = vpop.f32.mrf.mxu0
  %v2543 = vadd.f32 %v2135, %v2542
  %v2544 = vpop.f32.mrf.mxu0
  %2545 = vmatprep.mubr.bf16.mxu0 0
  %2546 = vmatmul.mubr.bf16.gmra.mxu0 %v1709
  %v2547 = vpop.f32.mrf.mxu0
  %v2548 = vadd.f32 %v2140, %v2547
  %v2549 = vpop.f32.mrf.mxu0
  %v2550 = vpop.f32.mrf.mxu0
  %v2551 = vadd.f32 %v2143, %v2550
  %v2552 = vpop.f32.mrf.mxu0
  %2553 = vmatprep.mubr.bf16.mxu0 0
  %2554 = vmatmul.mubr.bf16.gmra.mxu0 %v1710
  %v2555 = vpop.f32.mrf.mxu0
  %v2556 = vadd.f32 %v2148, %v2555
  %v2557 = vpop.f32.mrf.mxu0
  %v2558 = vpop.f32.mrf.mxu0
  %v2559 = vadd.f32 %v2151, %v2558
  %v2560 = vpop.f32.mrf.mxu0
  %2561 = vmatprep.mubr.bf16.mxu0 0
  %2562 = vmatmul.mubr.bf16.gmra.mxu0 %v1711
  %v2563 = vpop.f32.mrf.mxu0
  %v2564 = vadd.f32 %v2156, %v2563
  %v2565 = vpop.f32.mrf.mxu0
  %v2566 = vpop.f32.mrf.mxu0
  %v2567 = vadd.f32 %v2159, %v2566
  %v2568 = vpop.f32.mrf.mxu0
  %2569 = vmatprep.mubr.bf16.mxu0 0
  %2570 = vmatmul.mubr.bf16.gmra.mxu0 %v1712
  %v2571 = vpop.f32.mrf.mxu0
  %v2572 = vadd.f32 %v2164, %v2571
  %v2573 = vpop.f32.mrf.mxu0
  %v2574 = vpop.f32.mrf.mxu0
  %v2575 = vadd.f32 %v2167, %v2574
  %v2576 = vpop.f32.mrf.mxu0
  %2577 = vmatprep.mubr.bf16.mxu0 0
  %2578 = vmatmul.mubr.bf16.gmra.mxu0 %v1713
  %v2579 = vpop.f32.mrf.mxu0
  %v2580 = vadd.f32 %v2172, %v2579
  %v2581 = vpop.f32.mrf.mxu0
  %v2582 = vpop.f32.mrf.mxu0
  %v2583 = vadd.f32 %v2175, %v2582
  %v2584 = vpop.f32.mrf.mxu0
  %2585 = vmatprep.mubr.bf16.mxu0 0
  %2586 = vmatmul.mubr.bf16.gmra.mxu0 %v1714
  %v2587 = vpop.f32.mrf.mxu0
  %v2588 = vadd.f32 %v2180, %v2587
  %v2589 = vpop.f32.mrf.mxu0
  %v2590 = vpop.f32.mrf.mxu0
  %v2591 = vadd.f32 %v2183, %v2590
  %v2592 = vpop.f32.mrf.mxu0
  %2593 = vmatprep.mubr.bf16.mxu0 0
  %2594 = vmatmul.mubr.bf16.gmra.mxu0 %v1715
  %v2595 = vpop.f32.mrf.mxu0
  %v2596 = vadd.f32 %v2188, %v2595
  %v2597 = vpop.f32.mrf.mxu0
  %v2598 = vpop.f32.mrf.mxu0
  %v2599 = vadd.f32 %v2191, %v2598
  %v2600 = vpop.f32.mrf.mxu0
  %2601 = vmatprep.mubr.bf16.mxu0 0
  %2602 = vmatmul.mubr.bf16.gmra.mxu0 %v1716
  %v2603 = vpop.f32.mrf.mxu0
  %v2604 = vadd.f32 %v2196, %v2603
  %v2605 = vpop.f32.mrf.mxu0
  %v2606 = vpop.f32.mrf.mxu0
  %v2607 = vadd.f32 %v2199, %v2606
  %v2608 = vpop.f32.mrf.mxu0
  %2609 = vmatprep.mubr.bf16.mxu0 0
  %2610 = vmatmul.mubr.bf16.gmra.mxu0 %v1717
  %v2611 = vpop.f32.mrf.mxu0
  %v2612 = vadd.f32 %v2204, %v2611
  %v2613 = vpop.f32.mrf.mxu0
  %v2614 = vpop.f32.mrf.mxu0
  %v2615 = vadd.f32 %v2207, %v2614
  %v2616 = vpop.f32.mrf.mxu0
  %2617 = vmatprep.mubr.bf16.mxu0 0
  %2618 = vmatmul.mubr.bf16.gmra.mxu0 %v1718
  %v2619 = vpop.f32.mrf.mxu0
  %v2620 = vadd.f32 %v2212, %v2619
  %v2621 = vpop.f32.mrf.mxu0
  %v2622 = vpop.f32.mrf.mxu0
  %v2623 = vadd.f32 %v2215, %v2622
  %v2624 = vpop.f32.mrf.mxu0
  %2625 = vmatprep.mubr.bf16.mxu0 0
  %2626 = vmatmul.mubr.bf16.gmra.mxu0 %v1719
  %v2627 = vpop.f32.mrf.mxu0
  %v2628 = vadd.f32 %v2220, %v2627
  %v2629 = vpop.f32.mrf.mxu0
  %v2630 = vpop.f32.mrf.mxu0
  %v2631 = vadd.f32 %v2223, %v2630
  %v2632 = vpop.f32.mrf.mxu0
  %2633 = vmatprep.mubr.bf16.mxu0 0
  %2634 = vmatmul.mubr.bf16.gmra.mxu0 %v1720
  %v2635 = vpop.f32.mrf.mxu0
  %v2636 = vadd.f32 %v2228, %v2635
  %v2637 = vpop.f32.mrf.mxu0
  %v2638 = vpop.f32.mrf.mxu0
  %v2639 = vadd.f32 %v2231, %v2638
  %v2640 = vpop.f32.mrf.mxu0
  %2641 = vmatprep.mubr.bf16.mxu0 0
  %2642 = vmatmul.mubr.bf16.gmra.mxu0 %v1721
  %v2643 = vpop.f32.mrf.mxu0
  %v2644 = vadd.f32 %v2236, %v2643
  %v2645 = vpop.f32.mrf.mxu0
  %v2646 = vpop.f32.mrf.mxu0
  %v2647 = vadd.f32 %v2239, %v2646
  %v2648 = vpop.f32.mrf.mxu0
  %2649 = vmatprep.mubr.bf16.mxu0 0
  %2650 = vmatmul.mubr.bf16.gmra.mxu0 %v1722
  %v2651 = vpop.f32.mrf.mxu0
  %v2652 = vadd.f32 %v2244, %v2651
  %v2653 = vpop.f32.mrf.mxu0
  %v2654 = vpop.f32.mrf.mxu0
  %v2655 = vadd.f32 %v2247, %v2654
  %v2656 = vpop.f32.mrf.mxu0
  %2657 = vmatprep.mubr.bf16.mxu0 0
  %2658 = vmatmul.mubr.bf16.gmra.mxu0 %v1723
  %v2659 = vpop.f32.mrf.mxu0
  %v2660 = vadd.f32 %v2252, %v2659
  %v2661 = vpop.f32.mrf.mxu0
  %v2662 = vpop.f32.mrf.mxu0
  %v2663 = vadd.f32 %v2255, %v2662
  %v2664 = vpop.f32.mrf.mxu0
  %2665 = vmatprep.mubr.bf16.mxu0 0
  %2666 = vmatmul.mubr.bf16.gmra.mxu0 %v1724
  %v2667 = vpop.f32.mrf.mxu0
  %v2668 = vadd.f32 %v2260, %v2667
  %v2669 = vpop.f32.mrf.mxu0
  %v2670 = vpop.f32.mrf.mxu0
  %v2671 = vadd.f32 %v2263, %v2670
  %v2672 = vpop.f32.mrf.mxu0
  %2673 = vmatprep.mubr.bf16.mxu0 0
  %2674 = vmatmul.mubr.bf16.gmra.mxu0 %v1725
  %v2675 = vpop.f32.mrf.mxu0
  %v2676 = vadd.f32 %v2268, %v2675
  %v2677 = vpop.f32.mrf.mxu0
  %v2678 = vpop.f32.mrf.mxu0
  %v2679 = vadd.f32 %v2271, %v2678
  %v2680 = vpop.f32.mrf.mxu0
  %2681 = vmatprep.mubr.bf16.mxu0 0
  %2682 = vmatmul.mubr.bf16.gmra.mxu0 %v1726
  %v2683 = vpop.f32.mrf.mxu0
  %v2684 = vadd.f32 %v2276, %v2683
  %v2685 = vpop.f32.mrf.mxu0
  %v2686 = vpop.f32.mrf.mxu0
  %v2687 = vadd.f32 %v2279, %v2686
  %v2688 = vpop.f32.mrf.mxu0
  %2689 = vmatprep.mubr.bf16.mxu0 0
  %2690 = vmatmul.mubr.bf16.gmra.mxu0 %v1727
  %v2691 = vpop.f32.mrf.mxu0
  %v2692 = vadd.f32 %v2284, %v2691
  %v2693 = vpop.f32.mrf.mxu0
  %v2694 = vpop.f32.mrf.mxu0
  %v2695 = vadd.f32 %v2287, %v2694
  %v2696 = vpop.f32.mrf.mxu0
  %2697 = vmatprep.mubr.bf16.mxu0 0
  %2698 = vmatmul.mubr.bf16.gmra.mxu0 %v1728
  %v2699 = vpop.f32.mrf.mxu0
  %v2700 = vadd.f32 %v2292, %v2699
  %v2701 = vpop.f32.mrf.mxu0
  %v2702 = vpop.f32.mrf.mxu0
  %v2703 = vadd.f32 %v2295, %v2702
  %v2704 = vpop.f32.mrf.mxu0
  %2705 = vmatprep.mubr.bf16.mxu0 0
  %2706 = vmatmul.mubr.bf16.gmra.mxu0 %v1729
  %v2707 = vpop.f32.mrf.mxu0
  %v2708 = vadd.f32 %v2300, %v2707
  %v2709 = vpop.f32.mrf.mxu0
  %v2710 = vpop.f32.mrf.mxu0
  %v2711 = vadd.f32 %v2303, %v2710
  %v2712 = vpop.f32.mrf.mxu0
  %2713 = vmatprep.mubr.bf16.mxu0 0
  %2714 = vmatmul.mubr.bf16.gmra.mxu0 %v1730
  %v2715 = vpop.f32.mrf.mxu0
  %v2716 = vadd.f32 %v2308, %v2715
  %v2717 = vpop.f32.mrf.mxu0
  %v2718 = vpop.f32.mrf.mxu0
  %v2719 = vadd.f32 %v2311, %v2718
  %v2720 = vpop.f32.mrf.mxu0
  %2721 = vmatprep.mubr.bf16.mxu0 0
  %2722 = vmatmul.mubr.bf16.gmra.mxu0 %v1731
  %v2723 = vpop.f32.mrf.mxu0
  %v2724 = vadd.f32 %v2316, %v2723
  %v2725 = vpop.f32.mrf.mxu0
  %v2726 = vpop.f32.mrf.mxu0
  %v2727 = vadd.f32 %v2319, %v2726
  %v2728 = vpop.f32.mrf.mxu0
  %2729 = vmatprep.mubr.bf16.mxu0 0
  %2730 = vmatmul.mubr.bf16.gmra.mxu0 %v1732
  %v2731 = vpop.f32.mrf.mxu0
  %v2732 = vadd.f32 %v2324, %v2731
  %v2733 = vpop.f32.mrf.mxu0
  %v2734 = vpop.f32.mrf.mxu0
  %v2735 = vadd.f32 %v2327, %v2734
  %v2736 = vpop.f32.mrf.mxu0
  %2737 = vmatprep.mubr.bf16.mxu0 0
  %2738 = vmatmul.mubr.bf16.gmra.mxu0 %v1733
  %v2739 = vpop.f32.mrf.mxu0
  %v2740 = vadd.f32 %v2332, %v2739
  %v2741 = vpop.f32.mrf.mxu0
  %v2742 = vpop.f32.mrf.mxu0
  %v2743 = vadd.f32 %v2335, %v2742
  %v2744 = vpop.f32.mrf.mxu0
  %2745 = vmatprep.mubr.bf16.mxu0 0
  %2746 = vmatmul.mubr.bf16.gmra.mxu0 %v1734
  %v2747 = vpop.f32.mrf.mxu0
  %v2748 = vadd.f32 %v2340, %v2747
  %v2749 = vpop.f32.mrf.mxu0
  %v2750 = vpop.f32.mrf.mxu0
  %v2751 = vadd.f32 %v2343, %v2750
  %v2752 = vpop.f32.mrf.mxu0
  %2753 = vmatprep.mubr.bf16.mxu0 0
  %2754 = vmatmul.mubr.bf16.gmra.mxu0 %v1735
  %v2755 = vpop.f32.mrf.mxu0
  %v2756 = vadd.f32 %v2348, %v2755
  %v2757 = vpop.f32.mrf.mxu0
  %v2758 = vpop.f32.mrf.mxu0
  %v2759 = vadd.f32 %v2351, %v2758
  %v2760 = vpop.f32.mrf.mxu0
  %2761 = vmatprep.mubr.bf16.mxu0 0
  %2762 = vmatmul.mubr.bf16.gmra.mxu0 %v1736
  %v2763 = vpop.f32.mrf.mxu0
  %v2764 = vadd.f32 %v2356, %v2763
  %v2765 = vpop.f32.mrf.mxu0
  %v2766 = vpop.f32.mrf.mxu0
  %v2767 = vadd.f32 %v2359, %v2766
  %v2768 = vpop.f32.mrf.mxu0
  %2769 = vmatprep.mubr.bf16.mxu0 0
  %2770 = vmatmul.mubr.bf16.gmra.mxu0 %v1737
  %v2771 = vpop.f32.mrf.mxu0
  %v2772 = vadd.f32 %v2364, %v2771
  %v2773 = vpop.f32.mrf.mxu0
  %v2774 = vpop.f32.mrf.mxu0
  %v2775 = vadd.f32 %v2367, %v2774
  %v2776 = vpop.f32.mrf.mxu0
  %2777 = vmatprep.mubr.bf16.mxu0 0
  %2778 = vmatmul.mubr.bf16.gmra.mxu0 %v1738
  %v2779 = vpop.f32.mrf.mxu0
  %v2780 = vadd.f32 %v2372, %v2779
  %v2781 = vpop.f32.mrf.mxu0
  %v2782 = vpop.f32.mrf.mxu0
  %v2783 = vadd.f32 %v2375, %v2782
  %v2784 = vpop.f32.mrf.mxu0
  %2785 = vmatprep.mubr.bf16.mxu0 0
  %2786 = vmatmul.mubr.bf16.gmra.mxu0 %v1739
  %v2787 = vpop.f32.mrf.mxu0
  %v2788 = vadd.f32 %v2380, %v2787
  %v2789 = vpop.f32.mrf.mxu0
  %v2790 = vpop.f32.mrf.mxu0
  %v2791 = vpop.f32.mrf.mxu0
  %2792 = vdwg.mxu0
  %v2793 = vrot.slane %v1453, 7
  %v2794 = vrot.slane %v1454, 7
  %v2795 = vrot.slane %v1455, 7
  %v2796 = vrot.slane %v1456, 7
  %v2797 = vrot.slane %v1457, 7
  %v2798 = vrot.slane %v1458, 7
  %v2799 = vrot.slane %v1459, 7
  %v2800 = vrot.slane %v1460, 7
  %v2801 = vrot.slane %v1461, 7
  %v2802 = vrot.slane %v1462, 7
  %v2803 = vrot.slane %v1463, 7
  %v2804 = vrot.slane %v1464, 7
  %v2805 = vrot.slane %v1465, 7
  %v2806 = vrot.slane %v1466, 7
  %v2807 = vrot.slane %v1467, 7
  %v2808 = vrot.slane %v1468, 7
  %v2809 = vrot.slane %v1469, 7
  %v2810 = vrot.slane %v1470, 7
  %v2811 = vrot.slane %v1471, 7
  %v2812 = vrot.slane %v1472, 7
  %v2813 = vrot.slane %v1473, 7
  %v2814 = vrot.slane %v1474, 7
  %v2815 = vrot.slane %v1475, 7
  %v2816 = vrot.slane %v1476, 7
  %v2817 = vrot.slane %v1477, 7
  %v2818 = vrot.slane %v1478, 7
  %v2819 = vrot.slane %v1479, 7
  %v2820 = vrot.slane %v1480, 7
  %v2821 = vrot.slane %v1481, 7
  %v2822 = vrot.slane %v1482, 7
  %v2823 = vrot.slane %v1483, 7
  %v2824 = vrot.slane %v1484, 7
  %v2825 = vrot.slane %v1485, 7
  %v2826 = vrot.slane %v1486, 7
  %v2827 = vrot.slane %v1487, 7
  %v2828 = vrot.slane %v1488, 7
  %v2829 = vrot.slane %v1489, 7
  %v2830 = vrot.slane %v1490, 7
  %v2831 = vrot.slane %v1491, 7
  %v2832 = vrot.slane %v1492, 7
  %v2833 = vrot.slane %v1493, 7
  %v2834 = vrot.slane %v1494, 7
  %v2835 = vrot.slane %v1495, 7
  %v2836 = vrot.slane %v1496, 7
  %v2837 = vrot.slane %v1497, 7
  %v2838 = vrot.slane %v1498, 7
  %v2839 = vrot.slane %v1499, 7
  %v2840 = vrot.slane %v1500, 7
  %v2841 = vrot.slane %v1501, 7
  %v2842 = vrot.slane %v1502, 7
  %v2843 = vrot.slane %v1503, 7
  %v2844 = vrot.slane %v1504, 7
  %v2845 = vrot.slane %v1505, 7
  %v2846 = vrot.slane %v1506, 7
  %v2847 = vrot.slane %v1507, 7
  %v2848 = vrot.slane %v1508, 7
  %v2849 = vrot.slane %v1509, 7
  %v2850 = vrot.slane %v1510, 7
  %v2851 = vrot.slane %v1511, 7
  %v2852 = vrot.slane %v1512, 7
  %v2853 = vrot.slane %v1513, 7
  %v2854 = vrot.slane %v1514, 7
  %v2855 = vrot.slane %v1515, 7
  %v2856 = vrot.slane %v1516, 7
  %v2857 = vrot.slane %v1517, 7
  %v2858 = vrot.slane %v1518, 7
  %v2859 = vrot.slane %v1519, 7
  %v2860 = vrot.slane %v1520, 7
  %v2861 = vrot.slane %v1521, 7
  %v2862 = vrot.slane %v1522, 7
  %v2863 = vrot.slane %v1523, 7
  %v2864 = vrot.slane %v1524, 7
  %v2865 = vrot.slane %v1525, 7
  %v2866 = vrot.slane %v1526, 7
  %v2867 = vrot.slane %v1527, 7
  %v2868 = vrot.slane %v1528, 7
  %v2869 = vrot.slane %v1529, 7
  %v2870 = vrot.slane %v1530, 7
  %v2871 = vrot.slane %v1531, 7
  %v2872 = vrot.slane %v1532, 7
  %v2873 = vrot.slane %v1533, 7
  %vm2874 = vcmp.lt.s32.totalorder %v1616, 1
  %v2875 = vsel %vm2874, %v2872, %v2873
  %v2876 = vsel %vm2874, %v2871, %v2872
  %v2877 = vsel %vm2874, %v2870, %v2871
  %v2878 = vsel %vm2874, %v2869, %v2870
  %v2879 = vsel %vm2874, %v2868, %v2869
  %v2880 = vsel %vm2874, %v2867, %v2868
  %v2881 = vsel %vm2874, %v2866, %v2867
  %v2882 = vsel %vm2874, %v2865, %v2866
  %v2883 = vsel %vm2874, %v2864, %v2865
  %v2884 = vsel %vm2874, %v2863, %v2864
  %v2885 = vsel %vm2874, %v2862, %v2863
  %v2886 = vsel %vm2874, %v2861, %v2862
  %v2887 = vsel %vm2874, %v2860, %v2861
  %v2888 = vsel %vm2874, %v2859, %v2860
  %v2889 = vsel %vm2874, %v2858, %v2859
  %v2890 = vsel %vm2874, %v2857, %v2858
  %v2891 = vsel %vm2874, %v2856, %v2857
  %v2892 = vsel %vm2874, %v2855, %v2856
  %v2893 = vsel %vm2874, %v2854, %v2855
  %v2894 = vsel %vm2874, %v2853, %v2854
  %v2895 = vsel %vm2874, %v2852, %v2853
  %v2896 = vsel %vm2874, %v2851, %v2852
  %v2897 = vsel %vm2874, %v2850, %v2851
  %v2898 = vsel %vm2874, %v2849, %v2850
  %v2899 = vsel %vm2874, %v2848, %v2849
  %v2900 = vsel %vm2874, %v2847, %v2848
  %v2901 = vsel %vm2874, %v2846, %v2847
  %v2902 = vsel %vm2874, %v2845, %v2846
  %v2903 = vsel %vm2874, %v2844, %v2845
  %v2904 = vsel %vm2874, %v2843, %v2844
  %v2905 = vsel %vm2874, %v2842, %v2843
  %v2906 = vsel %vm2874, %v2841, %v2842
  %v2907 = vsel %vm2874, %v2840, %v2841
  %v2908 = vsel %vm2874, %v2839, %v2840
  %v2909 = vsel %vm2874, %v2838, %v2839
  %v2910 = vsel %vm2874, %v2837, %v2838
  %v2911 = vsel %vm2874, %v2836, %v2837
  %v2912 = vsel %vm2874, %v2835, %v2836
  %v2913 = vsel %vm2874, %v2834, %v2835
  %v2914 = vsel %vm2874, %v2833, %v2834
  %v2915 = vsel %vm2874, %v2832, %v2833
  %v2916 = vsel %vm2874, %v2831, %v2832
  %v2917 = vsel %vm2874, %v2830, %v2831
  %v2918 = vsel %vm2874, %v2829, %v2830
  %v2919 = vsel %vm2874, %v2828, %v2829
  %v2920 = vsel %vm2874, %v2827, %v2828
  %v2921 = vsel %vm2874, %v2826, %v2827
  %v2922 = vsel %vm2874, %v2825, %v2826
  %v2923 = vsel %vm2874, %v2824, %v2825
  %v2924 = vsel %vm2874, %v2823, %v2824
  %v2925 = vsel %vm2874, %v2822, %v2823
  %v2926 = vsel %vm2874, %v2821, %v2822
  %v2927 = vsel %vm2874, %v2820, %v2821
  %v2928 = vsel %vm2874, %v2819, %v2820
  %v2929 = vsel %vm2874, %v2818, %v2819
  %v2930 = vsel %vm2874, %v2817, %v2818
  %v2931 = vsel %vm2874, %v2816, %v2817
  %v2932 = vsel %vm2874, %v2815, %v2816
  %v2933 = vsel %vm2874, %v2814, %v2815
  %v2934 = vsel %vm2874, %v2813, %v2814
  %v2935 = vsel %vm2874, %v2812, %v2813
  %v2936 = vsel %vm2874, %v2811, %v2812
  %v2937 = vsel %vm2874, %v2810, %v2811
  %v2938 = vsel %vm2874, %v2809, %v2810
  %v2939 = vsel %vm2874, %v2808, %v2809
  %v2940 = vsel %vm2874, %v2807, %v2808
  %v2941 = vsel %vm2874, %v2806, %v2807
  %v2942 = vsel %vm2874, %v2805, %v2806
  %v2943 = vsel %vm2874, %v2804, %v2805
  %v2944 = vsel %vm2874, %v2803, %v2804
  %v2945 = vsel %vm2874, %v2802, %v2803
  %v2946 = vsel %vm2874, %v2801, %v2802
  %v2947 = vsel %vm2874, %v2800, %v2801
  %v2948 = vsel %vm2874, %v2799, %v2800
  %v2949 = vsel %vm2874, %v2798, %v2799
  %v2950 = vsel %vm2874, %v2797, %v2798
  %v2951 = vsel %vm2874, %v2796, %v2797
  %v2952 = vsel %vm2874, %v2795, %v2796
  %v2953 = vsel %vm2874, %v2794, %v2795
  %v2954 = vsel %vm2874, %v2793, %v2794
  %v2955 = vsel %vm2874, %v2873, %v2793
  %v2956 = vpack.c.bf16 %v2875, %v2876
  %v2957 = vpack.c.bf16 %v2954, %v2955
  %v2958 = vpack.c.bf16 %v2952, %v2953
  %v2959 = vpack.c.bf16 %v2950, %v2951
  %v2960 = vpack.c.bf16 %v2948, %v2949
  %v2961 = vpack.c.bf16 %v2946, %v2947
  %v2962 = vpack.c.bf16 %v2944, %v2945
  %v2963 = vpack.c.bf16 %v2942, %v2943
  %v2964 = vpack.c.bf16 %v2940, %v2941
  %v2965 = vpack.c.bf16 %v2938, %v2939
  %v2966 = vpack.c.bf16 %v2936, %v2937
  %v2967 = vpack.c.bf16 %v2934, %v2935
  %v2968 = vpack.c.bf16 %v2932, %v2933
  %v2969 = vpack.c.bf16 %v2930, %v2931
  %v2970 = vpack.c.bf16 %v2928, %v2929
  %v2971 = vpack.c.bf16 %v2926, %v2927
  %v2972 = vpack.c.bf16 %v2924, %v2925
  %v2973 = vpack.c.bf16 %v2922, %v2923
  %v2974 = vpack.c.bf16 %v2920, %v2921
  %v2975 = vpack.c.bf16 %v2918, %v2919
  %v2976 = vpack.c.bf16 %v2916, %v2917
  %v2977 = vpack.c.bf16 %v2914, %v2915
  %v2978 = vpack.c.bf16 %v2912, %v2913
  %v2979 = vpack.c.bf16 %v2910, %v2911
  %v2980 = vpack.c.bf16 %v2908, %v2909
  %v2981 = vpack.c.bf16 %v2906, %v2907
  %v2982 = vpack.c.bf16 %v2904, %v2905
  %v2983 = vpack.c.bf16 %v2902, %v2903
  %v2984 = vpack.c.bf16 %v2900, %v2901
  %v2985 = vpack.c.bf16 %v2898, %v2899
  %v2986 = vpack.c.bf16 %v2896, %v2897
  %v2987 = vpack.c.bf16 %v2894, %v2895
  %v2988 = vpack.c.bf16 %v2892, %v2893
  %v2989 = vpack.c.bf16 %v2890, %v2891
  %v2990 = vpack.c.bf16 %v2888, %v2889
  %v2991 = vpack.c.bf16 %v2886, %v2887
  %v2992 = vpack.c.bf16 %v2884, %v2885
  %v2993 = vpack.c.bf16 %v2882, %v2883
  %v2994 = vpack.c.bf16 %v2880, %v2881
  %v2995 = vpack.c.bf16 %v2878, %v2879
  %v2996 = vpack.c.bf16 %v2877, %v2877
  %s2997 = scalar_lea.vmem %s6, 128
  %v2998 = vld [vmem:[%s2997] sm:$0xf]
  %v2999 = vld [vmem:[%s2997 + $0x4] sm:$0xf]
  %v3000 = vld [vmem:[%s2997 + $0x8] sm:$0xf]
  %v3001 = vld [vmem:[%s2997 + $0xc] sm:$0xf]
  %v3002 = vld [vmem:[%s2997 + $0x10] sm:$0xf]
  %v3003 = vld [vmem:[%s2997 + $0x14] sm:$0xf]
  %v3004 = vld [vmem:[%s2997 + $0x18] sm:$0xf]
  %v3005 = vld [vmem:[%s2997 + $0x1c] sm:$0xf]
  %v3006 = vld [vmem:[%s2997 + $0x20] sm:$0xf]
  %v3007 = vld [vmem:[%s2997 + $0x24] sm:$0xf]
  %v3008 = vld [vmem:[%s2997 + $0x28] sm:$0xf]
  %v3009 = vld [vmem:[%s2997 + $0x2c] sm:$0xf]
  %v3010 = vld [vmem:[%s2997 + $0x30] sm:$0xf]
  %v3011 = vld [vmem:[%s2997 + $0x34] sm:$0xf]
  %v3012 = vld [vmem:[%s2997 + $0x38] sm:$0xf]
  %v3013 = vld [vmem:[%s2997 + $0x3c] sm:$0xf]
  %v3030 = vunpack.c.l.b16 %v2998
  %v3031 = vunpack.c.l.b16 %v2999
  %v3032 = vunpack.c.l.b16 %v3000
  %v3033 = vunpack.c.l.b16 %v3001
  %v3034 = vunpack.c.l.b16 %v3002
  %v3035 = vunpack.c.l.b16 %v3003
  %v3036 = vunpack.c.l.b16 %v3004
  %v3037 = vunpack.c.l.b16 %v3005
  %v3038 = vunpack.c.l.b16 %v3006
  %v3039 = vunpack.c.l.b16 %v3007
  %v3040 = vunpack.c.l.b16 %v3008
  %v3041 = vunpack.c.l.b16 %v3009
  %v3042 = vunpack.c.l.b16 %v3010
  %v3043 = vunpack.c.l.b16 %v3011
  %v3044 = vunpack.c.l.b16 %v3012
  %v3045 = vunpack.c.l.b16 %v3013
  %v3046 = vpack.c.b16 %v3031, %v3030
  %v3047 = vpack.c.b16 %v3033, %v3032
  %v3048 = vpack.c.b16 %v3035, %v3034
  %v3049 = vpack.c.b16 %v3037, %v3036
  %v3050 = vpack.c.b16 %v3039, %v3038
  %v3051 = vpack.c.b16 %v3041, %v3040
  %v3052 = vpack.c.b16 %v3043, %v3042
  %v3053 = vpack.c.b16 %v3045, %v3044
  %3062 = vmatprep.subr.bf16.mxu0 0
  %3063 = vmatpush1.bf16.msra.mxu0 %v3053
  %3064 = vmatprep.subr.bf16.mxu0 0
  %3065 = vmatpush1.bf16.msra.mxu0 %v3052
  %3066 = vmatprep.subr.bf16.mxu0 0
  %3067 = vmatpush1.bf16.msra.mxu0 %v3051
  %3068 = vmatprep.subr.bf16.mxu0 0
  %3069 = vmatpush1.bf16.msra.mxu0 %v3050
  %3070 = vmatprep.subr.bf16.mxu0 0
  %3071 = vmatpush1.bf16.msra.mxu0 %v3049
  %3072 = vmatprep.subr.bf16.mxu0 0
  %3073 = vmatpush1.bf16.msra.mxu0 %v3048
  %3074 = vmatprep.subr.bf16.mxu0 0
  %3075 = vmatpush1.bf16.msra.mxu0 %v3047
  %3076 = vmatprep.subr.bf16.mxu0 0
  %3077 = vmatpush1.bf16.msra.mxu0 %v3046
  %3078 = vmatprep.subr.bf16.mxu0 0
  %3079 = vmatpush2.bf16.msra.mxu0 0
  %3080 = vmatprep.subr.bf16.mxu0 0
  %3081 = vmatpush2.bf16.msra.mxu0 0
  %3082 = vmatprep.subr.bf16.mxu0 0
  %3083 = vmatpush2.bf16.msra.mxu0 0
  %3084 = vmatprep.subr.bf16.mxu0 0
  %3085 = vmatpush2.bf16.msra.mxu0 0
  %3086 = vmatprep.subr.bf16.mxu0 0
  %3087 = vmatpush2.bf16.msra.mxu0 0
  %3088 = vmatprep.subr.bf16.mxu0 0
  %3089 = vmatpush2.bf16.msra.mxu0 0
  %3090 = vmatprep.subr.bf16.mxu0 0
  %3091 = vmatpush2.bf16.msra.mxu0 0
  %3092 = vmatprep.subr.bf16.mxu0 0
  %3093 = vmatpush2.bf16.msra.mxu0 0
  %3094 = vmatprep.mubr.bf16.mxu0 0
  %3095 = vmatmul.mubr.bf16.gmra.mxu0 %v2956
  %v3096 = vpop.f32.mrf.mxu0
  %v3097 = vadd.f32 0.0, %v3096
  %v3098 = vpop.f32.mrf.mxu0
  %v3099 = vpop.f32.mrf.mxu0
  %v3100 = vadd.f32 0.0, %v3099
  %v3101 = vpop.f32.mrf.mxu0
  %3102 = vmatprep.mubr.bf16.mxu0 0
  %3103 = vmatmul.mubr.bf16.gmra.mxu0 %v2957
  %v3104 = vpop.f32.mrf.mxu0
  %v3105 = vadd.f32 0.0, %v3104
  %v3106 = vpop.f32.mrf.mxu0
  %v3107 = vpop.f32.mrf.mxu0
  %v3108 = vadd.f32 0.0, %v3107
  %v3109 = vpop.f32.mrf.mxu0
  %3110 = vmatprep.mubr.bf16.mxu0 0
  %3111 = vmatmul.mubr.bf16.gmra.mxu0 %v2958
  %v3112 = vpop.f32.mrf.mxu0
  %v3113 = vadd.f32 0.0, %v3112
  %v3114 = vpop.f32.mrf.mxu0
  %v3115 = vpop.f32.mrf.mxu0
  %v3116 = vadd.f32 0.0, %v3115
  %v3117 = vpop.f32.mrf.mxu0
  %3118 = vmatprep.mubr.bf16.mxu0 0
  %3119 = vmatmul.mubr.bf16.gmra.mxu0 %v2959
  %v3120 = vpop.f32.mrf.mxu0
  %v3121 = vadd.f32 0.0, %v3120
  %v3122 = vpop.f32.mrf.mxu0
  %v3123 = vpop.f32.mrf.mxu0
  %v3124 = vadd.f32 0.0, %v3123
  %v3125 = vpop.f32.mrf.mxu0
  %3126 = vmatprep.mubr.bf16.mxu0 0
  %3127 = vmatmul.mubr.bf16.gmra.mxu0 %v2960
  %v3128 = vpop.f32.mrf.mxu0
  %v3129 = vadd.f32 0.0, %v3128
  %v3130 = vpop.f32.mrf.mxu0
  %v3131 = vpop.f32.mrf.mxu0
  %v3132 = vadd.f32 0.0, %v3131
  %v3133 = vpop.f32.mrf.mxu0
  %3134 = vmatprep.mubr.bf16.mxu0 0
  %3135 = vmatmul.mubr.bf16.gmra.mxu0 %v2961
  %v3136 = vpop.f32.mrf.mxu0
  %v3137 = vadd.f32 0.0, %v3136
  %v3138 = vpop.f32.mrf.mxu0
  %v3139 = vpop.f32.mrf.mxu0
  %v3140 = vadd.f32 0.0, %v3139
  %v3141 = vpop.f32.mrf.mxu0
  %3142 = vmatprep.mubr.bf16.mxu0 0
  %3143 = vmatmul.mubr.bf16.gmra.mxu0 %v2962
  %v3144 = vpop.f32.mrf.mxu0
  %v3145 = vadd.f32 0.0, %v3144
  %v3146 = vpop.f32.mrf.mxu0
  %v3147 = vpop.f32.mrf.mxu0
  %v3148 = vadd.f32 0.0, %v3147
  %v3149 = vpop.f32.mrf.mxu0
  %3150 = vmatprep.mubr.bf16.mxu0 0
  %3151 = vmatmul.mubr.bf16.gmra.mxu0 %v2963
  %v3152 = vpop.f32.mrf.mxu0
  %v3153 = vadd.f32 0.0, %v3152
  %v3154 = vpop.f32.mrf.mxu0
  %v3155 = vpop.f32.mrf.mxu0
  %v3156 = vadd.f32 0.0, %v3155
  %v3157 = vpop.f32.mrf.mxu0
  %3158 = vmatprep.mubr.bf16.mxu0 0
  %3159 = vmatmul.mubr.bf16.gmra.mxu0 %v2964
  %v3160 = vpop.f32.mrf.mxu0
  %v3161 = vadd.f32 0.0, %v3160
  %v3162 = vpop.f32.mrf.mxu0
  %v3163 = vpop.f32.mrf.mxu0
  %v3164 = vadd.f32 0.0, %v3163
  %v3165 = vpop.f32.mrf.mxu0
  %3166 = vmatprep.mubr.bf16.mxu0 0
  %3167 = vmatmul.mubr.bf16.gmra.mxu0 %v2965
  %v3168 = vpop.f32.mrf.mxu0
  %v3169 = vadd.f32 0.0, %v3168
  %v3170 = vpop.f32.mrf.mxu0
  %v3171 = vpop.f32.mrf.mxu0
  %v3172 = vadd.f32 0.0, %v3171
  %v3173 = vpop.f32.mrf.mxu0
  %3174 = vmatprep.mubr.bf16.mxu0 0
  %3175 = vmatmul.mubr.bf16.gmra.mxu0 %v2966
  %v3176 = vpop.f32.mrf.mxu0
  %v3177 = vadd.f32 0.0, %v3176
  %v3178 = vpop.f32.mrf.mxu0
  %v3179 = vpop.f32.mrf.mxu0
  %v3180 = vadd.f32 0.0, %v3179
  %v3181 = vpop.f32.mrf.mxu0
  %3182 = vmatprep.mubr.bf16.mxu0 0
  %3183 = vmatmul.mubr.bf16.gmra.mxu0 %v2967
  %v3184 = vpop.f32.mrf.mxu0
  %v3185 = vadd.f32 0.0, %v3184
  %v3186 = vpop.f32.mrf.mxu0
  %v3187 = vpop.f32.mrf.mxu0
  %v3188 = vadd.f32 0.0, %v3187
  %v3189 = vpop.f32.mrf.mxu0
  %3190 = vmatprep.mubr.bf16.mxu0 0
  %3191 = vmatmul.mubr.bf16.gmra.mxu0 %v2968
  %v3192 = vpop.f32.mrf.mxu0
  %v3193 = vadd.f32 0.0, %v3192
  %v3194 = vpop.f32.mrf.mxu0
  %v3195 = vpop.f32.mrf.mxu0
  %v3196 = vadd.f32 0.0, %v3195
  %v3197 = vpop.f32.mrf.mxu0
  %3198 = vmatprep.mubr.bf16.mxu0 0
  %3199 = vmatmul.mubr.bf16.gmra.mxu0 %v2969
  %v3200 = vpop.f32.mrf.mxu0
  %v3201 = vadd.f32 0.0, %v3200
  %v3202 = vpop.f32.mrf.mxu0
  %v3203 = vpop.f32.mrf.mxu0
  %v3204 = vadd.f32 0.0, %v3203
  %v3205 = vpop.f32.mrf.mxu0
  %3206 = vmatprep.mubr.bf16.mxu0 0
  %3207 = vmatmul.mubr.bf16.gmra.mxu0 %v2970
  %v3208 = vpop.f32.mrf.mxu0
  %v3209 = vadd.f32 0.0, %v3208
  %v3210 = vpop.f32.mrf.mxu0
  %v3211 = vpop.f32.mrf.mxu0
  %v3212 = vadd.f32 0.0, %v3211
  %v3213 = vpop.f32.mrf.mxu0
  %3214 = vmatprep.mubr.bf16.mxu0 0
  %3215 = vmatmul.mubr.bf16.gmra.mxu0 %v2971
  %v3216 = vpop.f32.mrf.mxu0
  %v3217 = vadd.f32 0.0, %v3216
  %v3218 = vpop.f32.mrf.mxu0
  %v3219 = vpop.f32.mrf.mxu0
  %v3220 = vadd.f32 0.0, %v3219
  %v3221 = vpop.f32.mrf.mxu0
  %3222 = vmatprep.mubr.bf16.mxu0 0
  %3223 = vmatmul.mubr.bf16.gmra.mxu0 %v2972
  %v3224 = vpop.f32.mrf.mxu0
  %v3225 = vadd.f32 0.0, %v3224
  %v3226 = vpop.f32.mrf.mxu0
  %v3227 = vpop.f32.mrf.mxu0
  %v3228 = vadd.f32 0.0, %v3227
  %v3229 = vpop.f32.mrf.mxu0
  %3230 = vmatprep.mubr.bf16.mxu0 0
  %3231 = vmatmul.mubr.bf16.gmra.mxu0 %v2973
  %v3232 = vpop.f32.mrf.mxu0
  %v3233 = vadd.f32 0.0, %v3232
  %v3234 = vpop.f32.mrf.mxu0
  %v3235 = vpop.f32.mrf.mxu0
  %v3236 = vadd.f32 0.0, %v3235
  %v3237 = vpop.f32.mrf.mxu0
  %3238 = vmatprep.mubr.bf16.mxu0 0
  %3239 = vmatmul.mubr.bf16.gmra.mxu0 %v2974
  %v3240 = vpop.f32.mrf.mxu0
  %v3241 = vadd.f32 0.0, %v3240
  %v3242 = vpop.f32.mrf.mxu0
  %v3243 = vpop.f32.mrf.mxu0
  %v3244 = vadd.f32 0.0, %v3243
  %v3245 = vpop.f32.mrf.mxu0
  %3246 = vmatprep.mubr.bf16.mxu0 0
  %3247 = vmatmul.mubr.bf16.gmra.mxu0 %v2975
  %v3248 = vpop.f32.mrf.mxu0
  %v3249 = vadd.f32 0.0, %v3248
  %v3250 = vpop.f32.mrf.mxu0
  %v3251 = vpop.f32.mrf.mxu0
  %v3252 = vadd.f32 0.0, %v3251
  %v3253 = vpop.f32.mrf.mxu0
  %3254 = vmatprep.mubr.bf16.mxu0 0
  %3255 = vmatmul.mubr.bf16.gmra.mxu0 %v2976
  %v3256 = vpop.f32.mrf.mxu0
  %v3257 = vadd.f32 0.0, %v3256
  %v3258 = vpop.f32.mrf.mxu0
  %v3259 = vpop.f32.mrf.mxu0
  %v3260 = vadd.f32 0.0, %v3259
  %v3261 = vpop.f32.mrf.mxu0
  %3262 = vmatprep.mubr.bf16.mxu0 0
  %3263 = vmatmul.mubr.bf16.gmra.mxu0 %v2977
  %v3264 = vpop.f32.mrf.mxu0
  %v3265 = vadd.f32 0.0, %v3264
  %v3266 = vpop.f32.mrf.mxu0
  %v3267 = vpop.f32.mrf.mxu0
  %v3268 = vadd.f32 0.0, %v3267
  %v3269 = vpop.f32.mrf.mxu0
  %3270 = vmatprep.mubr.bf16.mxu0 0
  %3271 = vmatmul.mubr.bf16.gmra.mxu0 %v2978
  %v3272 = vpop.f32.mrf.mxu0
  %v3273 = vadd.f32 0.0, %v3272
  %v3274 = vpop.f32.mrf.mxu0
  %v3275 = vpop.f32.mrf.mxu0
  %v3276 = vadd.f32 0.0, %v3275
  %v3277 = vpop.f32.mrf.mxu0
  %3278 = vmatprep.mubr.bf16.mxu0 0
  %3279 = vmatmul.mubr.bf16.gmra.mxu0 %v2979
  %v3280 = vpop.f32.mrf.mxu0
  %v3281 = vadd.f32 0.0, %v3280
  %v3282 = vpop.f32.mrf.mxu0
  %v3283 = vpop.f32.mrf.mxu0
  %v3284 = vadd.f32 0.0, %v3283
  %v3285 = vpop.f32.mrf.mxu0
  %3286 = vmatprep.mubr.bf16.mxu0 0
  %3287 = vmatmul.mubr.bf16.gmra.mxu0 %v2980
  %v3288 = vpop.f32.mrf.mxu0
  %v3289 = vadd.f32 0.0, %v3288
  %v3290 = vpop.f32.mrf.mxu0
  %v3291 = vpop.f32.mrf.mxu0
  %v3292 = vadd.f32 0.0, %v3291
  %v3293 = vpop.f32.mrf.mxu0
  %3294 = vmatprep.mubr.bf16.mxu0 0
  %3295 = vmatmul.mubr.bf16.gmra.mxu0 %v2981
  %v3296 = vpop.f32.mrf.mxu0
  %v3297 = vadd.f32 0.0, %v3296
  %v3298 = vpop.f32.mrf.mxu0
  %v3299 = vpop.f32.mrf.mxu0
  %v3300 = vadd.f32 0.0, %v3299
  %v3301 = vpop.f32.mrf.mxu0
  %3302 = vmatprep.mubr.bf16.mxu0 0
  %3303 = vmatmul.mubr.bf16.gmra.mxu0 %v2982
  %v3304 = vpop.f32.mrf.mxu0
  %v3305 = vadd.f32 0.0, %v3304
  %v3306 = vpop.f32.mrf.mxu0
  %v3307 = vpop.f32.mrf.mxu0
  %v3308 = vadd.f32 0.0, %v3307
  %v3309 = vpop.f32.mrf.mxu0
  %3310 = vmatprep.mubr.bf16.mxu0 0
  %3311 = vmatmul.mubr.bf16.gmra.mxu0 %v2983
  %v3312 = vpop.f32.mrf.mxu0
  %v3313 = vadd.f32 0.0, %v3312
  %v3314 = vpop.f32.mrf.mxu0
  %v3315 = vpop.f32.mrf.mxu0
  %v3316 = vadd.f32 0.0, %v3315
  %v3317 = vpop.f32.mrf.mxu0
  %3318 = vmatprep.mubr.bf16.mxu0 0
  %3319 = vmatmul.mubr.bf16.gmra.mxu0 %v2984
  %v3320 = vpop.f32.mrf.mxu0
  %v3321 = vadd.f32 0.0, %v3320
  %v3322 = vpop.f32.mrf.mxu0
  %v3323 = vpop.f32.mrf.mxu0
  %v3324 = vadd.f32 0.0, %v3323
  %v3325 = vpop.f32.mrf.mxu0
  %3326 = vmatprep.mubr.bf16.mxu0 0
  %3327 = vmatmul.mubr.bf16.gmra.mxu0 %v2985
  %v3328 = vpop.f32.mrf.mxu0
  %v3329 = vadd.f32 0.0, %v3328
  %v3330 = vpop.f32.mrf.mxu0
  %v3331 = vpop.f32.mrf.mxu0
  %v3332 = vadd.f32 0.0, %v3331
  %v3333 = vpop.f32.mrf.mxu0
  %3334 = vmatprep.mubr.bf16.mxu0 0
  %3335 = vmatmul.mubr.bf16.gmra.mxu0 %v2986
  %v3336 = vpop.f32.mrf.mxu0
  %v3337 = vadd.f32 0.0, %v3336
  %v3338 = vpop.f32.mrf.mxu0
  %v3339 = vpop.f32.mrf.mxu0
  %v3340 = vadd.f32 0.0, %v3339
  %v3341 = vpop.f32.mrf.mxu0
  %3342 = vmatprep.mubr.bf16.mxu0 0
  %3343 = vmatmul.mubr.bf16.gmra.mxu0 %v2987
  %v3344 = vpop.f32.mrf.mxu0
  %v3345 = vadd.f32 0.0, %v3344
  %v3346 = vpop.f32.mrf.mxu0
  %v3347 = vpop.f32.mrf.mxu0
  %v3348 = vadd.f32 0.0, %v3347
  %v3349 = vpop.f32.mrf.mxu0
  %3350 = vmatprep.mubr.bf16.mxu0 0
  %3351 = vmatmul.mubr.bf16.gmra.mxu0 %v2988
  %v3352 = vpop.f32.mrf.mxu0
  %v3353 = vadd.f32 0.0, %v3352
  %v3354 = vpop.f32.mrf.mxu0
  %v3355 = vpop.f32.mrf.mxu0
  %v3356 = vadd.f32 0.0, %v3355
  %v3357 = vpop.f32.mrf.mxu0
  %3358 = vmatprep.mubr.bf16.mxu0 0
  %3359 = vmatmul.mubr.bf16.gmra.mxu0 %v2989
  %v3360 = vpop.f32.mrf.mxu0
  %v3361 = vadd.f32 0.0, %v3360
  %v3362 = vpop.f32.mrf.mxu0
  %v3363 = vpop.f32.mrf.mxu0
  %v3364 = vadd.f32 0.0, %v3363
  %v3365 = vpop.f32.mrf.mxu0
  %3366 = vmatprep.mubr.bf16.mxu0 0
  %3367 = vmatmul.mubr.bf16.gmra.mxu0 %v2990
  %v3368 = vpop.f32.mrf.mxu0
  %v3369 = vadd.f32 0.0, %v3368
  %v3370 = vpop.f32.mrf.mxu0
  %v3371 = vpop.f32.mrf.mxu0
  %v3372 = vadd.f32 0.0, %v3371
  %v3373 = vpop.f32.mrf.mxu0
  %3374 = vmatprep.mubr.bf16.mxu0 0
  %3375 = vmatmul.mubr.bf16.gmra.mxu0 %v2991
  %v3376 = vpop.f32.mrf.mxu0
  %v3377 = vadd.f32 0.0, %v3376
  %v3378 = vpop.f32.mrf.mxu0
  %v3379 = vpop.f32.mrf.mxu0
  %v3380 = vadd.f32 0.0, %v3379
  %v3381 = vpop.f32.mrf.mxu0
  %3382 = vmatprep.mubr.bf16.mxu0 0
  %3383 = vmatmul.mubr.bf16.gmra.mxu0 %v2992
  %v3384 = vpop.f32.mrf.mxu0
  %v3385 = vadd.f32 0.0, %v3384
  %v3386 = vpop.f32.mrf.mxu0
  %v3387 = vpop.f32.mrf.mxu0
  %v3388 = vadd.f32 0.0, %v3387
  %v3389 = vpop.f32.mrf.mxu0
  %3390 = vmatprep.mubr.bf16.mxu0 0
  %3391 = vmatmul.mubr.bf16.gmra.mxu0 %v2993
  %v3392 = vpop.f32.mrf.mxu0
  %v3393 = vadd.f32 0.0, %v3392
  %v3394 = vpop.f32.mrf.mxu0
  %v3395 = vpop.f32.mrf.mxu0
  %v3396 = vadd.f32 0.0, %v3395
  %v3397 = vpop.f32.mrf.mxu0
  %3398 = vmatprep.mubr.bf16.mxu0 0
  %3399 = vmatmul.mubr.bf16.gmra.mxu0 %v2994
  %v3400 = vpop.f32.mrf.mxu0
  %v3401 = vadd.f32 0.0, %v3400
  %v3402 = vpop.f32.mrf.mxu0
  %v3403 = vpop.f32.mrf.mxu0
  %v3404 = vadd.f32 0.0, %v3403
  %v3405 = vpop.f32.mrf.mxu0
  %3406 = vmatprep.mubr.bf16.mxu0 0
  %3407 = vmatmul.mubr.bf16.gmra.mxu0 %v2995
  %v3408 = vpop.f32.mrf.mxu0
  %v3409 = vadd.f32 0.0, %v3408
  %v3410 = vpop.f32.mrf.mxu0
  %v3411 = vpop.f32.mrf.mxu0
  %v3412 = vadd.f32 0.0, %v3411
  %v3413 = vpop.f32.mrf.mxu0
  %3414 = vmatprep.mubr.bf16.mxu0 0
  %3415 = vmatmul.mubr.bf16.gmra.mxu0 %v2996
  %v3416 = vpop.f32.mrf.mxu0
  %v3417 = vadd.f32 0.0, %v3416
  %v3418 = vpop.f32.mrf.mxu0
  %v3419 = vpop.f32.mrf.mxu0
  %v3420 = vpop.f32.mrf.mxu0
  %3421 = vdwg.mxu0
  %v3422 = vadd.f32 %v2468, %v3097
  %v3423 = vadd.f32 %v2471, %v3100
  %v3424 = vadd.f32 %v2476, %v3105
  %v3425 = vadd.f32 %v2479, %v3108
  %v3426 = vadd.f32 %v2484, %v3113
  %v3427 = vadd.f32 %v2487, %v3116
  %v3428 = vadd.f32 %v2492, %v3121
  %v3429 = vadd.f32 %v2495, %v3124
  %v3430 = vadd.f32 %v2500, %v3129
  %v3431 = vadd.f32 %v2503, %v3132
  %v3432 = vadd.f32 %v2508, %v3137
  %v3433 = vadd.f32 %v2511, %v3140
  %v3434 = vadd.f32 %v2516, %v3145
  %v3435 = vadd.f32 %v2519, %v3148
  %v3436 = vadd.f32 %v2524, %v3153
  %v3437 = vadd.f32 %v2527, %v3156
  %v3438 = vadd.f32 %v2532, %v3161
  %v3439 = vadd.f32 %v2535, %v3164
  %v3440 = vadd.f32 %v2540, %v3169
  %v3441 = vadd.f32 %v2543, %v3172
  %v3442 = vadd.f32 %v2548, %v3177
  %v3443 = vadd.f32 %v2551, %v3180
  %v3444 = vadd.f32 %v2556, %v3185
  %v3445 = vadd.f32 %v2559, %v3188
  %v3446 = vadd.f32 %v2564, %v3193
  %v3447 = vadd.f32 %v2567, %v3196
  %v3448 = vadd.f32 %v2572, %v3201
  %v3449 = vadd.f32 %v2575, %v3204
  %v3450 = vadd.f32 %v2580, %v3209
  %v3451 = vadd.f32 %v2583, %v3212
  %v3452 = vadd.f32 %v2588, %v3217
  %v3453 = vadd.f32 %v2591, %v3220
  %v3454 = vadd.f32 %v2596, %v3225
  %v3455 = vadd.f32 %v2599, %v3228
  %v3456 = vadd.f32 %v2604, %v3233
  %v3457 = vadd.f32 %v2607, %v3236
  %v3458 = vadd.f32 %v2612, %v3241
  %v3459 = vadd.f32 %v2615, %v3244
  %v3460 = vadd.f32 %v2620, %v3249
  %v3461 = vadd.f32 %v2623, %v3252
  %v3462 = vadd.f32 %v2628, %v3257
  %v3463 = vadd.f32 %v2631, %v3260
  %v3464 = vadd.f32 %v2636, %v3265
  %v3465 = vadd.f32 %v2639, %v3268
  %v3466 = vadd.f32 %v2644, %v3273
  %v3467 = vadd.f32 %v2647, %v3276
  %v3468 = vadd.f32 %v2652, %v3281
  %v3469 = vadd.f32 %v2655, %v3284
  %v3470 = vadd.f32 %v2660, %v3289
  %v3471 = vadd.f32 %v2663, %v3292
  %v3472 = vadd.f32 %v2668, %v3297
  %v3473 = vadd.f32 %v2671, %v3300
  %v3474 = vadd.f32 %v2676, %v3305
  %v3475 = vadd.f32 %v2679, %v3308
  %v3476 = vadd.f32 %v2684, %v3313
  %v3477 = vadd.f32 %v2687, %v3316
  %v3478 = vadd.f32 %v2692, %v3321
  %v3479 = vadd.f32 %v2695, %v3324
  %v3480 = vadd.f32 %v2700, %v3329
  %v3481 = vadd.f32 %v2703, %v3332
  %v3482 = vadd.f32 %v2708, %v3337
  %v3483 = vadd.f32 %v2711, %v3340
  %v3484 = vadd.f32 %v2716, %v3345
  %v3485 = vadd.f32 %v2719, %v3348
  %v3486 = vadd.f32 %v2724, %v3353
  %v3487 = vadd.f32 %v2727, %v3356
  %v3488 = vadd.f32 %v2732, %v3361
  %v3489 = vadd.f32 %v2735, %v3364
  %v3490 = vadd.f32 %v2740, %v3369
  %v3491 = vadd.f32 %v2743, %v3372
  %v3492 = vadd.f32 %v2748, %v3377
  %v3493 = vadd.f32 %v2751, %v3380
  %v3494 = vadd.f32 %v2756, %v3385
  %v3495 = vadd.f32 %v2759, %v3388
  %v3496 = vadd.f32 %v2764, %v3393
  %v3497 = vadd.f32 %v2767, %v3396
  %v3498 = vadd.f32 %v2772, %v3401
  %v3499 = vadd.f32 %v2775, %v3404
  %v3500 = vadd.f32 %v2780, %v3409
  %v3501 = vadd.f32 %v2783, %v3412
  %v3502 = vadd.f32 %v2788, %v3417
  %v3503 = vpack.c.bf16 %v2876, %v2877
  %v3504 = vpack.c.bf16 %v2875, %v2875
  %s3505 = scalar_lea.vmem %s6, 192
  %v3506 = vld [vmem:[%s3505] sm:$0xf]
  %v3507 = vld [vmem:[%s3505 + $0x4] sm:$0xf]
  %v3508 = vld [vmem:[%s3505 + $0x8] sm:$0xf]
  %v3509 = vld [vmem:[%s3505 + $0xc] sm:$0xf]
  %v3510 = vld [vmem:[%s3505 + $0x10] sm:$0xf]
  %v3511 = vld [vmem:[%s3505 + $0x14] sm:$0xf]
  %v3512 = vld [vmem:[%s3505 + $0x18] sm:$0xf]
  %v3513 = vld [vmem:[%s3505 + $0x1c] sm:$0xf]
  %v3514 = vld [vmem:[%s3505 + $0x20] sm:$0xf]
  %v3515 = vld [vmem:[%s3505 + $0x24] sm:$0xf]
  %v3516 = vld [vmem:[%s3505 + $0x28] sm:$0xf]
  %v3517 = vld [vmem:[%s3505 + $0x2c] sm:$0xf]
  %v3518 = vld [vmem:[%s3505 + $0x30] sm:$0xf]
  %v3519 = vld [vmem:[%s3505 + $0x34] sm:$0xf]
  %v3520 = vld [vmem:[%s3505 + $0x38] sm:$0xf]
  %v3521 = vld [vmem:[%s3505 + $0x3c] sm:$0xf]
  %v3538 = vunpack.c.l.b16 %v3506
  %v3539 = vunpack.c.l.b16 %v3507
  %v3540 = vunpack.c.l.b16 %v3508
  %v3541 = vunpack.c.l.b16 %v3509
  %v3542 = vunpack.c.l.b16 %v3510
  %v3543 = vunpack.c.l.b16 %v3511
  %v3544 = vunpack.c.l.b16 %v3512
  %v3545 = vunpack.c.l.b16 %v3513
  %v3546 = vunpack.c.l.b16 %v3514
  %v3547 = vunpack.c.l.b16 %v3515
  %v3548 = vunpack.c.l.b16 %v3516
  %v3549 = vunpack.c.l.b16 %v3517
  %v3550 = vunpack.c.l.b16 %v3518
  %v3551 = vunpack.c.l.b16 %v3519
  %v3552 = vunpack.c.l.b16 %v3520
  %v3553 = vunpack.c.l.b16 %v3521
  %v3554 = vpack.c.b16 %v3539, %v3538
  %v3555 = vpack.c.b16 %v3541, %v3540
  %v3556 = vpack.c.b16 %v3543, %v3542
  %v3557 = vpack.c.b16 %v3545, %v3544
  %v3558 = vpack.c.b16 %v3547, %v3546
  %v3559 = vpack.c.b16 %v3549, %v3548
  %v3560 = vpack.c.b16 %v3551, %v3550
  %v3561 = vpack.c.b16 %v3553, %v3552
  %3570 = vmatprep.subr.bf16.mxu0 0
  %3571 = vmatpush1.bf16.msra.mxu0 %v3561
  %3572 = vmatprep.subr.bf16.mxu0 0
  %3573 = vmatpush1.bf16.msra.mxu0 %v3560
  %3574 = vmatprep.subr.bf16.mxu0 0
  %3575 = vmatpush1.bf16.msra.mxu0 %v3559
  %3576 = vmatprep.subr.bf16.mxu0 0
  %3577 = vmatpush1.bf16.msra.mxu0 %v3558
  %3578 = vmatprep.subr.bf16.mxu0 0
  %3579 = vmatpush1.bf16.msra.mxu0 %v3557
  %3580 = vmatprep.subr.bf16.mxu0 0
  %3581 = vmatpush1.bf16.msra.mxu0 %v3556
  %3582 = vmatprep.subr.bf16.mxu0 0
  %3583 = vmatpush1.bf16.msra.mxu0 %v3555
  %3584 = vmatprep.subr.bf16.mxu0 0
  %3585 = vmatpush1.bf16.msra.mxu0 %v3554
  %3586 = vmatprep.subr.bf16.mxu0 0
  %3587 = vmatpush2.bf16.msra.mxu0 0
  %3588 = vmatprep.subr.bf16.mxu0 0
  %3589 = vmatpush2.bf16.msra.mxu0 0
  %3590 = vmatprep.subr.bf16.mxu0 0
  %3591 = vmatpush2.bf16.msra.mxu0 0
  %3592 = vmatprep.subr.bf16.mxu0 0
  %3593 = vmatpush2.bf16.msra.mxu0 0
  %3594 = vmatprep.subr.bf16.mxu0 0
  %3595 = vmatpush2.bf16.msra.mxu0 0
  %3596 = vmatprep.subr.bf16.mxu0 0
  %3597 = vmatpush2.bf16.msra.mxu0 0
  %3598 = vmatprep.subr.bf16.mxu0 0
  %3599 = vmatpush2.bf16.msra.mxu0 0
  %3600 = vmatprep.subr.bf16.mxu0 0
  %3601 = vmatpush2.bf16.msra.mxu0 0
  %3602 = vmatprep.mubr.bf16.mxu0 0
  %3603 = vmatmul.mubr.bf16.gmra.mxu0 %v2957
  %v3604 = vpop.f32.mrf.mxu0
  %v3605 = vadd.f32 0.0, %v3604
  %v3606 = vpop.f32.mrf.mxu0
  %v3607 = vpop.f32.mrf.mxu0
  %v3608 = vadd.f32 0.0, %v3607
  %v3609 = vpop.f32.mrf.mxu0
  %3610 = vmatprep.mubr.bf16.mxu0 0
  %3611 = vmatmul.mubr.bf16.gmra.mxu0 %v2958
  %v3612 = vpop.f32.mrf.mxu0
  %v3613 = vadd.f32 0.0, %v3612
  %v3614 = vpop.f32.mrf.mxu0
  %v3615 = vpop.f32.mrf.mxu0
  %v3616 = vadd.f32 0.0, %v3615
  %v3617 = vpop.f32.mrf.mxu0
  %3618 = vmatprep.mubr.bf16.mxu0 0
  %3619 = vmatmul.mubr.bf16.gmra.mxu0 %v2959
  %v3620 = vpop.f32.mrf.mxu0
  %v3621 = vadd.f32 0.0, %v3620
  %v3622 = vpop.f32.mrf.mxu0
  %v3623 = vpop.f32.mrf.mxu0
  %v3624 = vadd.f32 0.0, %v3623
  %v3625 = vpop.f32.mrf.mxu0
  %3626 = vmatprep.mubr.bf16.mxu0 0
  %3627 = vmatmul.mubr.bf16.gmra.mxu0 %v2960
  %v3628 = vpop.f32.mrf.mxu0
  %v3629 = vadd.f32 0.0, %v3628
  %v3630 = vpop.f32.mrf.mxu0
  %v3631 = vpop.f32.mrf.mxu0
  %v3632 = vadd.f32 0.0, %v3631
  %v3633 = vpop.f32.mrf.mxu0
  %3634 = vmatprep.mubr.bf16.mxu0 0
  %3635 = vmatmul.mubr.bf16.gmra.mxu0 %v2961
  %v3636 = vpop.f32.mrf.mxu0
  %v3637 = vadd.f32 0.0, %v3636
  %v3638 = vpop.f32.mrf.mxu0
  %v3639 = vpop.f32.mrf.mxu0
  %v3640 = vadd.f32 0.0, %v3639
  %v3641 = vpop.f32.mrf.mxu0
  %3642 = vmatprep.mubr.bf16.mxu0 0
  %3643 = vmatmul.mubr.bf16.gmra.mxu0 %v2962
  %v3644 = vpop.f32.mrf.mxu0
  %v3645 = vadd.f32 0.0, %v3644
  %v3646 = vpop.f32.mrf.mxu0
  %v3647 = vpop.f32.mrf.mxu0
  %v3648 = vadd.f32 0.0, %v3647
  %v3649 = vpop.f32.mrf.mxu0
  %3650 = vmatprep.mubr.bf16.mxu0 0
  %3651 = vmatmul.mubr.bf16.gmra.mxu0 %v2963
  %v3652 = vpop.f32.mrf.mxu0
  %v3653 = vadd.f32 0.0, %v3652
  %v3654 = vpop.f32.mrf.mxu0
  %v3655 = vpop.f32.mrf.mxu0
  %v3656 = vadd.f32 0.0, %v3655
  %v3657 = vpop.f32.mrf.mxu0
  %3658 = vmatprep.mubr.bf16.mxu0 0
  %3659 = vmatmul.mubr.bf16.gmra.mxu0 %v2964
  %v3660 = vpop.f32.mrf.mxu0
  %v3661 = vadd.f32 0.0, %v3660
  %v3662 = vpop.f32.mrf.mxu0
  %v3663 = vpop.f32.mrf.mxu0
  %v3664 = vadd.f32 0.0, %v3663
  %v3665 = vpop.f32.mrf.mxu0
  %3666 = vmatprep.mubr.bf16.mxu0 0
  %3667 = vmatmul.mubr.bf16.gmra.mxu0 %v2965
  %v3668 = vpop.f32.mrf.mxu0
  %v3669 = vadd.f32 0.0, %v3668
  %v3670 = vpop.f32.mrf.mxu0
  %v3671 = vpop.f32.mrf.mxu0
  %v3672 = vadd.f32 0.0, %v3671
  %v3673 = vpop.f32.mrf.mxu0
  %3674 = vmatprep.mubr.bf16.mxu0 0
  %3675 = vmatmul.mubr.bf16.gmra.mxu0 %v2966
  %v3676 = vpop.f32.mrf.mxu0
  %v3677 = vadd.f32 0.0, %v3676
  %v3678 = vpop.f32.mrf.mxu0
  %v3679 = vpop.f32.mrf.mxu0
  %v3680 = vadd.f32 0.0, %v3679
  %v3681 = vpop.f32.mrf.mxu0
  %3682 = vmatprep.mubr.bf16.mxu0 0
  %3683 = vmatmul.mubr.bf16.gmra.mxu0 %v2967
  %v3684 = vpop.f32.mrf.mxu0
  %v3685 = vadd.f32 0.0, %v3684
  %v3686 = vpop.f32.mrf.mxu0
  %v3687 = vpop.f32.mrf.mxu0
  %v3688 = vadd.f32 0.0, %v3687
  %v3689 = vpop.f32.mrf.mxu0
  %3690 = vmatprep.mubr.bf16.mxu0 0
  %3691 = vmatmul.mubr.bf16.gmra.mxu0 %v2968
  %v3692 = vpop.f32.mrf.mxu0
  %v3693 = vadd.f32 0.0, %v3692
  %v3694 = vpop.f32.mrf.mxu0
  %v3695 = vpop.f32.mrf.mxu0
  %v3696 = vadd.f32 0.0, %v3695
  %v3697 = vpop.f32.mrf.mxu0
  %3698 = vmatprep.mubr.bf16.mxu0 0
  %3699 = vmatmul.mubr.bf16.gmra.mxu0 %v2969
  %v3700 = vpop.f32.mrf.mxu0
  %v3701 = vadd.f32 0.0, %v3700
  %v3702 = vpop.f32.mrf.mxu0
  %v3703 = vpop.f32.mrf.mxu0
  %v3704 = vadd.f32 0.0, %v3703
  %v3705 = vpop.f32.mrf.mxu0
  %3706 = vmatprep.mubr.bf16.mxu0 0
  %3707 = vmatmul.mubr.bf16.gmra.mxu0 %v2970
  %v3708 = vpop.f32.mrf.mxu0
  %v3709 = vadd.f32 0.0, %v3708
  %v3710 = vpop.f32.mrf.mxu0
  %v3711 = vpop.f32.mrf.mxu0
  %v3712 = vadd.f32 0.0, %v3711
  %v3713 = vpop.f32.mrf.mxu0
  %3714 = vmatprep.mubr.bf16.mxu0 0
  %3715 = vmatmul.mubr.bf16.gmra.mxu0 %v2971
  %v3716 = vpop.f32.mrf.mxu0
  %v3717 = vadd.f32 0.0, %v3716
  %v3718 = vpop.f32.mrf.mxu0
  %v3719 = vpop.f32.mrf.mxu0
  %v3720 = vadd.f32 0.0, %v3719
  %v3721 = vpop.f32.mrf.mxu0
  %3722 = vmatprep.mubr.bf16.mxu0 0
  %3723 = vmatmul.mubr.bf16.gmra.mxu0 %v2972
  %v3724 = vpop.f32.mrf.mxu0
  %v3725 = vadd.f32 0.0, %v3724
  %v3726 = vpop.f32.mrf.mxu0
  %v3727 = vpop.f32.mrf.mxu0
  %v3728 = vadd.f32 0.0, %v3727
  %v3729 = vpop.f32.mrf.mxu0
  %3730 = vmatprep.mubr.bf16.mxu0 0
  %3731 = vmatmul.mubr.bf16.gmra.mxu0 %v2973
  %v3732 = vpop.f32.mrf.mxu0
  %v3733 = vadd.f32 0.0, %v3732
  %v3734 = vpop.f32.mrf.mxu0
  %v3735 = vpop.f32.mrf.mxu0
  %v3736 = vadd.f32 0.0, %v3735
  %v3737 = vpop.f32.mrf.mxu0
  %3738 = vmatprep.mubr.bf16.mxu0 0
  %3739 = vmatmul.mubr.bf16.gmra.mxu0 %v2974
  %v3740 = vpop.f32.mrf.mxu0
  %v3741 = vadd.f32 0.0, %v3740
  %v3742 = vpop.f32.mrf.mxu0
  %v3743 = vpop.f32.mrf.mxu0
  %v3744 = vadd.f32 0.0, %v3743
  %v3745 = vpop.f32.mrf.mxu0
  %3746 = vmatprep.mubr.bf16.mxu0 0
  %3747 = vmatmul.mubr.bf16.gmra.mxu0 %v2975
  %v3748 = vpop.f32.mrf.mxu0
  %v3749 = vadd.f32 0.0, %v3748
  %v3750 = vpop.f32.mrf.mxu0
  %v3751 = vpop.f32.mrf.mxu0
  %v3752 = vadd.f32 0.0, %v3751
  %v3753 = vpop.f32.mrf.mxu0
  %3754 = vmatprep.mubr.bf16.mxu0 0
  %3755 = vmatmul.mubr.bf16.gmra.mxu0 %v2976
  %v3756 = vpop.f32.mrf.mxu0
  %v3757 = vadd.f32 0.0, %v3756
  %v3758 = vpop.f32.mrf.mxu0
  %v3759 = vpop.f32.mrf.mxu0
  %v3760 = vadd.f32 0.0, %v3759
  %v3761 = vpop.f32.mrf.mxu0
  %3762 = vmatprep.mubr.bf16.mxu0 0
  %3763 = vmatmul.mubr.bf16.gmra.mxu0 %v2977
  %v3764 = vpop.f32.mrf.mxu0
  %v3765 = vadd.f32 0.0, %v3764
  %v3766 = vpop.f32.mrf.mxu0
  %v3767 = vpop.f32.mrf.mxu0
  %v3768 = vadd.f32 0.0, %v3767
  %v3769 = vpop.f32.mrf.mxu0
  %3770 = vmatprep.mubr.bf16.mxu0 0
  %3771 = vmatmul.mubr.bf16.gmra.mxu0 %v2978
  %v3772 = vpop.f32.mrf.mxu0
  %v3773 = vadd.f32 0.0, %v3772
  %v3774 = vpop.f32.mrf.mxu0
  %v3775 = vpop.f32.mrf.mxu0
  %v3776 = vadd.f32 0.0, %v3775
  %v3777 = vpop.f32.mrf.mxu0
  %3778 = vmatprep.mubr.bf16.mxu0 0
  %3779 = vmatmul.mubr.bf16.gmra.mxu0 %v2979
  %v3780 = vpop.f32.mrf.mxu0
  %v3781 = vadd.f32 0.0, %v3780
  %v3782 = vpop.f32.mrf.mxu0
  %v3783 = vpop.f32.mrf.mxu0
  %v3784 = vadd.f32 0.0, %v3783
  %v3785 = vpop.f32.mrf.mxu0
  %3786 = vmatprep.mubr.bf16.mxu0 0
  %3787 = vmatmul.mubr.bf16.gmra.mxu0 %v2980
  %v3788 = vpop.f32.mrf.mxu0
  %v3789 = vadd.f32 0.0, %v3788
  %v3790 = vpop.f32.mrf.mxu0
  %v3791 = vpop.f32.mrf.mxu0
  %v3792 = vadd.f32 0.0, %v3791
  %v3793 = vpop.f32.mrf.mxu0
  %3794 = vmatprep.mubr.bf16.mxu0 0
  %3795 = vmatmul.mubr.bf16.gmra.mxu0 %v2981
  %v3796 = vpop.f32.mrf.mxu0
  %v3797 = vadd.f32 0.0, %v3796
  %v3798 = vpop.f32.mrf.mxu0
  %v3799 = vpop.f32.mrf.mxu0
  %v3800 = vadd.f32 0.0, %v3799
  %v3801 = vpop.f32.mrf.mxu0
  %3802 = vmatprep.mubr.bf16.mxu0 0
  %3803 = vmatmul.mubr.bf16.gmra.mxu0 %v2982
  %v3804 = vpop.f32.mrf.mxu0
  %v3805 = vadd.f32 0.0, %v3804
  %v3806 = vpop.f32.mrf.mxu0
  %v3807 = vpop.f32.mrf.mxu0
  %v3808 = vadd.f32 0.0, %v3807
  %v3809 = vpop.f32.mrf.mxu0
  %3810 = vmatprep.mubr.bf16.mxu0 0
  %3811 = vmatmul.mubr.bf16.gmra.mxu0 %v2983
  %v3812 = vpop.f32.mrf.mxu0
  %v3813 = vadd.f32 0.0, %v3812
  %v3814 = vpop.f32.mrf.mxu0
  %v3815 = vpop.f32.mrf.mxu0
  %v3816 = vadd.f32 0.0, %v3815
  %v3817 = vpop.f32.mrf.mxu0
  %3818 = vmatprep.mubr.bf16.mxu0 0
  %3819 = vmatmul.mubr.bf16.gmra.mxu0 %v2984
  %v3820 = vpop.f32.mrf.mxu0
  %v3821 = vadd.f32 0.0, %v3820
  %v3822 = vpop.f32.mrf.mxu0
  %v3823 = vpop.f32.mrf.mxu0
  %v3824 = vadd.f32 0.0, %v3823
  %v3825 = vpop.f32.mrf.mxu0
  %3826 = vmatprep.mubr.bf16.mxu0 0
  %3827 = vmatmul.mubr.bf16.gmra.mxu0 %v2985
  %v3828 = vpop.f32.mrf.mxu0
  %v3829 = vadd.f32 0.0, %v3828
  %v3830 = vpop.f32.mrf.mxu0
  %v3831 = vpop.f32.mrf.mxu0
  %v3832 = vadd.f32 0.0, %v3831
  %v3833 = vpop.f32.mrf.mxu0
  %3834 = vmatprep.mubr.bf16.mxu0 0
  %3835 = vmatmul.mubr.bf16.gmra.mxu0 %v2986
  %v3836 = vpop.f32.mrf.mxu0
  %v3837 = vadd.f32 0.0, %v3836
  %v3838 = vpop.f32.mrf.mxu0
  %v3839 = vpop.f32.mrf.mxu0
  %v3840 = vadd.f32 0.0, %v3839
  %v3841 = vpop.f32.mrf.mxu0
  %3842 = vmatprep.mubr.bf16.mxu0 0
  %3843 = vmatmul.mubr.bf16.gmra.mxu0 %v2987
  %v3844 = vpop.f32.mrf.mxu0
  %v3845 = vadd.f32 0.0, %v3844
  %v3846 = vpop.f32.mrf.mxu0
  %v3847 = vpop.f32.mrf.mxu0
  %v3848 = vadd.f32 0.0, %v3847
  %v3849 = vpop.f32.mrf.mxu0
  %3850 = vmatprep.mubr.bf16.mxu0 0
  %3851 = vmatmul.mubr.bf16.gmra.mxu0 %v2988
  %v3852 = vpop.f32.mrf.mxu0
  %v3853 = vadd.f32 0.0, %v3852
  %v3854 = vpop.f32.mrf.mxu0
  %v3855 = vpop.f32.mrf.mxu0
  %v3856 = vadd.f32 0.0, %v3855
  %v3857 = vpop.f32.mrf.mxu0
  %3858 = vmatprep.mubr.bf16.mxu0 0
  %3859 = vmatmul.mubr.bf16.gmra.mxu0 %v2989
  %v3860 = vpop.f32.mrf.mxu0
  %v3861 = vadd.f32 0.0, %v3860
  %v3862 = vpop.f32.mrf.mxu0
  %v3863 = vpop.f32.mrf.mxu0
  %v3864 = vadd.f32 0.0, %v3863
  %v3865 = vpop.f32.mrf.mxu0
  %3866 = vmatprep.mubr.bf16.mxu0 0
  %3867 = vmatmul.mubr.bf16.gmra.mxu0 %v2990
  %v3868 = vpop.f32.mrf.mxu0
  %v3869 = vadd.f32 0.0, %v3868
  %v3870 = vpop.f32.mrf.mxu0
  %v3871 = vpop.f32.mrf.mxu0
  %v3872 = vadd.f32 0.0, %v3871
  %v3873 = vpop.f32.mrf.mxu0
  %3874 = vmatprep.mubr.bf16.mxu0 0
  %3875 = vmatmul.mubr.bf16.gmra.mxu0 %v2991
  %v3876 = vpop.f32.mrf.mxu0
  %v3877 = vadd.f32 0.0, %v3876
  %v3878 = vpop.f32.mrf.mxu0
  %v3879 = vpop.f32.mrf.mxu0
  %v3880 = vadd.f32 0.0, %v3879
  %v3881 = vpop.f32.mrf.mxu0
  %3882 = vmatprep.mubr.bf16.mxu0 0
  %3883 = vmatmul.mubr.bf16.gmra.mxu0 %v2992
  %v3884 = vpop.f32.mrf.mxu0
  %v3885 = vadd.f32 0.0, %v3884
  %v3886 = vpop.f32.mrf.mxu0
  %v3887 = vpop.f32.mrf.mxu0
  %v3888 = vadd.f32 0.0, %v3887
  %v3889 = vpop.f32.mrf.mxu0
  %3890 = vmatprep.mubr.bf16.mxu0 0
  %3891 = vmatmul.mubr.bf16.gmra.mxu0 %v2993
  %v3892 = vpop.f32.mrf.mxu0
  %v3893 = vadd.f32 0.0, %v3892
  %v3894 = vpop.f32.mrf.mxu0
  %v3895 = vpop.f32.mrf.mxu0
  %v3896 = vadd.f32 0.0, %v3895
  %v3897 = vpop.f32.mrf.mxu0
  %3898 = vmatprep.mubr.bf16.mxu0 0
  %3899 = vmatmul.mubr.bf16.gmra.mxu0 %v2994
  %v3900 = vpop.f32.mrf.mxu0
  %v3901 = vadd.f32 0.0, %v3900
  %v3902 = vpop.f32.mrf.mxu0
  %v3903 = vpop.f32.mrf.mxu0
  %v3904 = vadd.f32 0.0, %v3903
  %v3905 = vpop.f32.mrf.mxu0
  %3906 = vmatprep.mubr.bf16.mxu0 0
  %3907 = vmatmul.mubr.bf16.gmra.mxu0 %v2995
  %v3908 = vpop.f32.mrf.mxu0
  %v3909 = vadd.f32 0.0, %v3908
  %v3910 = vpop.f32.mrf.mxu0
  %v3911 = vpop.f32.mrf.mxu0
  %v3912 = vadd.f32 0.0, %v3911
  %v3913 = vpop.f32.mrf.mxu0
  %3914 = vmatprep.mubr.bf16.mxu0 0
  %3915 = vmatmul.mubr.bf16.gmra.mxu0 %v3503
  %v3916 = vpop.f32.mrf.mxu0
  %v3917 = vadd.f32 0.0, %v3916
  %v3918 = vpop.f32.mrf.mxu0
  %v3919 = vpop.f32.mrf.mxu0
  %v3920 = vadd.f32 0.0, %v3919
  %v3921 = vpop.f32.mrf.mxu0
  %3922 = vmatprep.mubr.bf16.mxu0 0
  %3923 = vmatmul.mubr.bf16.gmra.mxu0 %v3504
  %v3924 = vpop.f32.mrf.mxu0
  %v3925 = vadd.f32 0.0, %v3924
  %v3926 = vpop.f32.mrf.mxu0
  %v3927 = vpop.f32.mrf.mxu0
  %v3928 = vpop.f32.mrf.mxu0
  %3929 = vdwg.mxu0
  %v3930 = vadd.f32 %v3422, %v3605
  %v3931 = vadd.f32 %v3423, %v3608
  %v3932 = vadd.f32 %v3424, %v3613
  %v3933 = vadd.f32 %v3425, %v3616
  %v3934 = vadd.f32 %v3426, %v3621
  %v3935 = vadd.f32 %v3427, %v3624
  %v3936 = vadd.f32 %v3428, %v3629
  %v3937 = vadd.f32 %v3429, %v3632
  %v3938 = vadd.f32 %v3430, %v3637
  %v3939 = vadd.f32 %v3431, %v3640
  %v3940 = vadd.f32 %v3432, %v3645
  %v3941 = vadd.f32 %v3433, %v3648
  %v3942 = vadd.f32 %v3434, %v3653
  %v3943 = vadd.f32 %v3435, %v3656
  %v3944 = vadd.f32 %v3436, %v3661
  %v3945 = vadd.f32 %v3437, %v3664
  %v3946 = vadd.f32 %v3438, %v3669
  %v3947 = vadd.f32 %v3439, %v3672
  %v3948 = vadd.f32 %v3440, %v3677
  %v3949 = vadd.f32 %v3441, %v3680
  %v3950 = vadd.f32 %v3442, %v3685
  %v3951 = vadd.f32 %v3443, %v3688
  %v3952 = vadd.f32 %v3444, %v3693
  %v3953 = vadd.f32 %v3445, %v3696
  %v3954 = vadd.f32 %v3446, %v3701
  %v3955 = vadd.f32 %v3447, %v3704
  %v3956 = vadd.f32 %v3448, %v3709
  %v3957 = vadd.f32 %v3449, %v3712
  %v3958 = vadd.f32 %v3450, %v3717
  %v3959 = vadd.f32 %v3451, %v3720
  %v3960 = vadd.f32 %v3452, %v3725
  %v3961 = vadd.f32 %v3453, %v3728
  %v3962 = vadd.f32 %v3454, %v3733
  %v3963 = vadd.f32 %v3455, %v3736
  %v3964 = vadd.f32 %v3456, %v3741
  %v3965 = vadd.f32 %v3457, %v3744
  %v3966 = vadd.f32 %v3458, %v3749
  %v3967 = vadd.f32 %v3459, %v3752
  %v3968 = vadd.f32 %v3460, %v3757
  %v3969 = vadd.f32 %v3461, %v3760
  %v3970 = vadd.f32 %v3462, %v3765
  %v3971 = vadd.f32 %v3463, %v3768
  %v3972 = vadd.f32 %v3464, %v3773
  %v3973 = vadd.f32 %v3465, %v3776
  %v3974 = vadd.f32 %v3466, %v3781
  %v3975 = vadd.f32 %v3467, %v3784
  %v3976 = vadd.f32 %v3468, %v3789
  %v3977 = vadd.f32 %v3469, %v3792
  %v3978 = vadd.f32 %v3470, %v3797
  %v3979 = vadd.f32 %v3471, %v3800
  %v3980 = vadd.f32 %v3472, %v3805
  %v3981 = vadd.f32 %v3473, %v3808
  %v3982 = vadd.f32 %v3474, %v3813
  %v3983 = vadd.f32 %v3475, %v3816
  %v3984 = vadd.f32 %v3476, %v3821
  %v3985 = vadd.f32 %v3477, %v3824
  %v3986 = vadd.f32 %v3478, %v3829
  %v3987 = vadd.f32 %v3479, %v3832
  %v3988 = vadd.f32 %v3480, %v3837
  %v3989 = vadd.f32 %v3481, %v3840
  %v3990 = vadd.f32 %v3482, %v3845
  %v3991 = vadd.f32 %v3483, %v3848
  %v3992 = vadd.f32 %v3484, %v3853
  %v3993 = vadd.f32 %v3485, %v3856
  %v3994 = vadd.f32 %v3486, %v3861
  %v3995 = vadd.f32 %v3487, %v3864
  %v3996 = vadd.f32 %v3488, %v3869
  %v3997 = vadd.f32 %v3489, %v3872
  %v3998 = vadd.f32 %v3490, %v3877
  %v3999 = vadd.f32 %v3491, %v3880
  %v4000 = vadd.f32 %v3492, %v3885
  %v4001 = vadd.f32 %v3493, %v3888
  %v4002 = vadd.f32 %v3494, %v3893
  %v4003 = vadd.f32 %v3495, %v3896
  %v4004 = vadd.f32 %v3496, %v3901
  %v4005 = vadd.f32 %v3497, %v3904
  %v4006 = vadd.f32 %v3498, %v3909
  %v4007 = vadd.f32 %v3499, %v3912
  %v4008 = vadd.f32 %v3500, %v3917
  %v4009 = vadd.f32 %v3501, %v3920
  %v4010 = vadd.f32 %v3502, %v3925
  %v4011 = vpack.c.bf16 %v1454, %v1453
  %v4012 = vpack.c.bf16 %v1456, %v1455
  %v4013 = vpack.c.bf16 %v1458, %v1457
  %v4014 = vpack.c.bf16 %v1460, %v1459
  %v4015 = vpack.c.bf16 %v1462, %v1461
  %v4016 = vpack.c.bf16 %v1464, %v1463
  %v4017 = vpack.c.bf16 %v1466, %v1465
  %v4018 = vpack.c.bf16 %v1468, %v1467
  %v4019 = vpack.c.bf16 %v1470, %v1469
  %v4020 = vpack.c.bf16 %v1472, %v1471
  %v4021 = vpack.c.bf16 %v1474, %v1473
  %v4022 = vpack.c.bf16 %v1476, %v1475
  %v4023 = vpack.c.bf16 %v1478, %v1477
  %v4024 = vpack.c.bf16 %v1480, %v1479
  %v4025 = vpack.c.bf16 %v1482, %v1481
  %v4026 = vpack.c.bf16 %v1484, %v1483
  %v4027 = vpack.c.bf16 %v1486, %v1485
  %v4028 = vpack.c.bf16 %v1488, %v1487
  %v4029 = vpack.c.bf16 %v1490, %v1489
  %v4030 = vpack.c.bf16 %v1492, %v1491
  %v4031 = vpack.c.bf16 %v1494, %v1493
  %v4032 = vpack.c.bf16 %v1496, %v1495
  %v4033 = vpack.c.bf16 %v1498, %v1497
  %v4034 = vpack.c.bf16 %v1500, %v1499
  %v4035 = vpack.c.bf16 %v1502, %v1501
  %v4036 = vpack.c.bf16 %v1504, %v1503
  %v4037 = vpack.c.bf16 %v1506, %v1505
  %v4038 = vpack.c.bf16 %v1508, %v1507
  %v4039 = vpack.c.bf16 %v1510, %v1509
  %v4040 = vpack.c.bf16 %v1512, %v1511
  %v4041 = vpack.c.bf16 %v1514, %v1513
  %v4042 = vpack.c.bf16 %v1516, %v1515
  %v4043 = vpack.c.bf16 %v1518, %v1517
  %v4044 = vpack.c.bf16 %v1520, %v1519
  %v4045 = vpack.c.bf16 %v1522, %v1521
  %v4046 = vpack.c.bf16 %v1524, %v1523
  %v4047 = vpack.c.bf16 %v1526, %v1525
  %v4048 = vpack.c.bf16 %v1528, %v1527
  %v4049 = vpack.c.bf16 %v1530, %v1529
  %v4050 = vpack.c.bf16 %v1532, %v1531
  %v4051 = vpack.c.bf16 %v1533, %v1533
  %s4052 = scalar_lea.vmem %s6, 256
  %v4053 = vld [vmem:[%s4052] sm:$0xf]
  %v4054 = vld [vmem:[%s4052 + $0x4] sm:$0xf]
  %v4055 = vld [vmem:[%s4052 + $0x8] sm:$0xf]
  %v4056 = vld [vmem:[%s4052 + $0xc] sm:$0xf]
  %v4057 = vld [vmem:[%s4052 + $0x10] sm:$0xf]
  %v4058 = vld [vmem:[%s4052 + $0x14] sm:$0xf]
  %v4059 = vld [vmem:[%s4052 + $0x18] sm:$0xf]
  %v4060 = vld [vmem:[%s4052 + $0x1c] sm:$0xf]
  %v4061 = vld [vmem:[%s4052 + $0x20] sm:$0xf]
  %v4062 = vld [vmem:[%s4052 + $0x24] sm:$0xf]
  %v4063 = vld [vmem:[%s4052 + $0x28] sm:$0xf]
  %v4064 = vld [vmem:[%s4052 + $0x2c] sm:$0xf]
  %v4065 = vld [vmem:[%s4052 + $0x30] sm:$0xf]
  %v4066 = vld [vmem:[%s4052 + $0x34] sm:$0xf]
  %v4067 = vld [vmem:[%s4052 + $0x38] sm:$0xf]
  %v4068 = vld [vmem:[%s4052 + $0x3c] sm:$0xf]
  %v4085 = vunpack.c.l.b16 %v4053
  %v4086 = vunpack.c.l.b16 %v4054
  %v4087 = vunpack.c.l.b16 %v4055
  %v4088 = vunpack.c.l.b16 %v4056
  %v4089 = vunpack.c.l.b16 %v4057
  %v4090 = vunpack.c.l.b16 %v4058
  %v4091 = vunpack.c.l.b16 %v4059
  %v4092 = vunpack.c.l.b16 %v4060
  %v4093 = vunpack.c.l.b16 %v4061
  %v4094 = vunpack.c.l.b16 %v4062
  %v4095 = vunpack.c.l.b16 %v4063
  %v4096 = vunpack.c.l.b16 %v4064
  %v4097 = vunpack.c.l.b16 %v4065
  %v4098 = vunpack.c.l.b16 %v4066
  %v4099 = vunpack.c.l.b16 %v4067
  %v4100 = vunpack.c.l.b16 %v4068
  %v4101 = vpack.c.b16 %v4086, %v4085
  %v4102 = vpack.c.b16 %v4088, %v4087
  %v4103 = vpack.c.b16 %v4090, %v4089
  %v4104 = vpack.c.b16 %v4092, %v4091
  %v4105 = vpack.c.b16 %v4094, %v4093
  %v4106 = vpack.c.b16 %v4096, %v4095
  %v4107 = vpack.c.b16 %v4098, %v4097
  %v4108 = vpack.c.b16 %v4100, %v4099
  %4117 = vmatprep.subr.bf16.mxu0 0
  %4118 = vmatpush1.bf16.msra.mxu0 %v4108
  %4119 = vmatprep.subr.bf16.mxu0 0
  %4120 = vmatpush1.bf16.msra.mxu0 %v4107
  %4121 = vmatprep.subr.bf16.mxu0 0
  %4122 = vmatpush1.bf16.msra.mxu0 %v4106
  %4123 = vmatprep.subr.bf16.mxu0 0
  %4124 = vmatpush1.bf16.msra.mxu0 %v4105
  %4125 = vmatprep.subr.bf16.mxu0 0
  %4126 = vmatpush1.bf16.msra.mxu0 %v4104
  %4127 = vmatprep.subr.bf16.mxu0 0
  %4128 = vmatpush1.bf16.msra.mxu0 %v4103
  %4129 = vmatprep.subr.bf16.mxu0 0
  %4130 = vmatpush1.bf16.msra.mxu0 %v4102
  %4131 = vmatprep.subr.bf16.mxu0 0
  %4132 = vmatpush1.bf16.msra.mxu0 %v4101
  %4133 = vmatprep.subr.bf16.mxu0 0
  %4134 = vmatpush2.bf16.msra.mxu0 0
  %4135 = vmatprep.subr.bf16.mxu0 0
  %4136 = vmatpush2.bf16.msra.mxu0 0
  %4137 = vmatprep.subr.bf16.mxu0 0
  %4138 = vmatpush2.bf16.msra.mxu0 0
  %4139 = vmatprep.subr.bf16.mxu0 0
  %4140 = vmatpush2.bf16.msra.mxu0 0
  %4141 = vmatprep.subr.bf16.mxu0 0
  %4142 = vmatpush2.bf16.msra.mxu0 0
  %4143 = vmatprep.subr.bf16.mxu0 0
  %4144 = vmatpush2.bf16.msra.mxu0 0
  %4145 = vmatprep.subr.bf16.mxu0 0
  %4146 = vmatpush2.bf16.msra.mxu0 0
  %4147 = vmatprep.subr.bf16.mxu0 0
  %4148 = vmatpush2.bf16.msra.mxu0 0
  %4149 = vmatprep.mubr.bf16.mxu0 0
  %4150 = vmatmul.mubr.bf16.gmra.mxu0 %v4011
  %v4151 = vpop.f32.mrf.mxu0
  %v4152 = vadd.f32 0.0, %v4151
  %v4153 = vpop.f32.mrf.mxu0
  %v4154 = vpop.f32.mrf.mxu0
  %v4155 = vadd.f32 0.0, %v4154
  %v4156 = vpop.f32.mrf.mxu0
  %4157 = vmatprep.mubr.bf16.mxu0 0
  %4158 = vmatmul.mubr.bf16.gmra.mxu0 %v4012
  %v4159 = vpop.f32.mrf.mxu0
  %v4160 = vadd.f32 0.0, %v4159
  %v4161 = vpop.f32.mrf.mxu0
  %v4162 = vpop.f32.mrf.mxu0
  %v4163 = vadd.f32 0.0, %v4162
  %v4164 = vpop.f32.mrf.mxu0
  %4165 = vmatprep.mubr.bf16.mxu0 0
  %4166 = vmatmul.mubr.bf16.gmra.mxu0 %v4013
  %v4167 = vpop.f32.mrf.mxu0
  %v4168 = vadd.f32 0.0, %v4167
  %v4169 = vpop.f32.mrf.mxu0
  %v4170 = vpop.f32.mrf.mxu0
  %v4171 = vadd.f32 0.0, %v4170
  %v4172 = vpop.f32.mrf.mxu0
  %4173 = vmatprep.mubr.bf16.mxu0 0
  %4174 = vmatmul.mubr.bf16.gmra.mxu0 %v4014
  %v4175 = vpop.f32.mrf.mxu0
  %v4176 = vadd.f32 0.0, %v4175
  %v4177 = vpop.f32.mrf.mxu0
  %v4178 = vpop.f32.mrf.mxu0
  %v4179 = vadd.f32 0.0, %v4178
  %v4180 = vpop.f32.mrf.mxu0
  %4181 = vmatprep.mubr.bf16.mxu0 0
  %4182 = vmatmul.mubr.bf16.gmra.mxu0 %v4015
  %v4183 = vpop.f32.mrf.mxu0
  %v4184 = vadd.f32 0.0, %v4183
  %v4185 = vpop.f32.mrf.mxu0
  %v4186 = vpop.f32.mrf.mxu0
  %v4187 = vadd.f32 0.0, %v4186
  %v4188 = vpop.f32.mrf.mxu0
  %4189 = vmatprep.mubr.bf16.mxu0 0
  %4190 = vmatmul.mubr.bf16.gmra.mxu0 %v4016
  %v4191 = vpop.f32.mrf.mxu0
  %v4192 = vadd.f32 0.0, %v4191
  %v4193 = vpop.f32.mrf.mxu0
  %v4194 = vpop.f32.mrf.mxu0
  %v4195 = vadd.f32 0.0, %v4194
  %v4196 = vpop.f32.mrf.mxu0
  %4197 = vmatprep.mubr.bf16.mxu0 0
  %4198 = vmatmul.mubr.bf16.gmra.mxu0 %v4017
  %v4199 = vpop.f32.mrf.mxu0
  %v4200 = vadd.f32 0.0, %v4199
  %v4201 = vpop.f32.mrf.mxu0
  %v4202 = vpop.f32.mrf.mxu0
  %v4203 = vadd.f32 0.0, %v4202
  %v4204 = vpop.f32.mrf.mxu0
  %4205 = vmatprep.mubr.bf16.mxu0 0
  %4206 = vmatmul.mubr.bf16.gmra.mxu0 %v4018
  %v4207 = vpop.f32.mrf.mxu0
  %v4208 = vadd.f32 0.0, %v4207
  %v4209 = vpop.f32.mrf.mxu0
  %v4210 = vpop.f32.mrf.mxu0
  %v4211 = vadd.f32 0.0, %v4210
  %v4212 = vpop.f32.mrf.mxu0
  %4213 = vmatprep.mubr.bf16.mxu0 0
  %4214 = vmatmul.mubr.bf16.gmra.mxu0 %v4019
  %v4215 = vpop.f32.mrf.mxu0
  %v4216 = vadd.f32 0.0, %v4215
  %v4217 = vpop.f32.mrf.mxu0
  %v4218 = vpop.f32.mrf.mxu0
  %v4219 = vadd.f32 0.0, %v4218
  %v4220 = vpop.f32.mrf.mxu0
  %4221 = vmatprep.mubr.bf16.mxu0 0
  %4222 = vmatmul.mubr.bf16.gmra.mxu0 %v4020
  %v4223 = vpop.f32.mrf.mxu0
  %v4224 = vadd.f32 0.0, %v4223
  %v4225 = vpop.f32.mrf.mxu0
  %v4226 = vpop.f32.mrf.mxu0
  %v4227 = vadd.f32 0.0, %v4226
  %v4228 = vpop.f32.mrf.mxu0
  %4229 = vmatprep.mubr.bf16.mxu0 0
  %4230 = vmatmul.mubr.bf16.gmra.mxu0 %v4021
  %v4231 = vpop.f32.mrf.mxu0
  %v4232 = vadd.f32 0.0, %v4231
  %v4233 = vpop.f32.mrf.mxu0
  %v4234 = vpop.f32.mrf.mxu0
  %v4235 = vadd.f32 0.0, %v4234
  %v4236 = vpop.f32.mrf.mxu0
  %4237 = vmatprep.mubr.bf16.mxu0 0
  %4238 = vmatmul.mubr.bf16.gmra.mxu0 %v4022
  %v4239 = vpop.f32.mrf.mxu0
  %v4240 = vadd.f32 0.0, %v4239
  %v4241 = vpop.f32.mrf.mxu0
  %v4242 = vpop.f32.mrf.mxu0
  %v4243 = vadd.f32 0.0, %v4242
  %v4244 = vpop.f32.mrf.mxu0
  %4245 = vmatprep.mubr.bf16.mxu0 0
  %4246 = vmatmul.mubr.bf16.gmra.mxu0 %v4023
  %v4247 = vpop.f32.mrf.mxu0
  %v4248 = vadd.f32 0.0, %v4247
  %v4249 = vpop.f32.mrf.mxu0
  %v4250 = vpop.f32.mrf.mxu0
  %v4251 = vadd.f32 0.0, %v4250
  %v4252 = vpop.f32.mrf.mxu0
  %4253 = vmatprep.mubr.bf16.mxu0 0
  %4254 = vmatmul.mubr.bf16.gmra.mxu0 %v4024
  %v4255 = vpop.f32.mrf.mxu0
  %v4256 = vadd.f32 0.0, %v4255
  %v4257 = vpop.f32.mrf.mxu0
  %v4258 = vpop.f32.mrf.mxu0
  %v4259 = vadd.f32 0.0, %v4258
  %v4260 = vpop.f32.mrf.mxu0
  %4261 = vmatprep.mubr.bf16.mxu0 0
  %4262 = vmatmul.mubr.bf16.gmra.mxu0 %v4025
  %v4263 = vpop.f32.mrf.mxu0
  %v4264 = vadd.f32 0.0, %v4263
  %v4265 = vpop.f32.mrf.mxu0
  %v4266 = vpop.f32.mrf.mxu0
  %v4267 = vadd.f32 0.0, %v4266
  %v4268 = vpop.f32.mrf.mxu0
  %4269 = vmatprep.mubr.bf16.mxu0 0
  %4270 = vmatmul.mubr.bf16.gmra.mxu0 %v4026
  %v4271 = vpop.f32.mrf.mxu0
  %v4272 = vadd.f32 0.0, %v4271
  %v4273 = vpop.f32.mrf.mxu0
  %v4274 = vpop.f32.mrf.mxu0
  %v4275 = vadd.f32 0.0, %v4274
  %v4276 = vpop.f32.mrf.mxu0
  %4277 = vmatprep.mubr.bf16.mxu0 0
  %4278 = vmatmul.mubr.bf16.gmra.mxu0 %v4027
  %v4279 = vpop.f32.mrf.mxu0
  %v4280 = vadd.f32 0.0, %v4279
  %v4281 = vpop.f32.mrf.mxu0
  %v4282 = vpop.f32.mrf.mxu0
  %v4283 = vadd.f32 0.0, %v4282
  %v4284 = vpop.f32.mrf.mxu0
  %4285 = vmatprep.mubr.bf16.mxu0 0
  %4286 = vmatmul.mubr.bf16.gmra.mxu0 %v4028
  %v4287 = vpop.f32.mrf.mxu0
  %v4288 = vadd.f32 0.0, %v4287
  %v4289 = vpop.f32.mrf.mxu0
  %v4290 = vpop.f32.mrf.mxu0
  %v4291 = vadd.f32 0.0, %v4290
  %v4292 = vpop.f32.mrf.mxu0
  %4293 = vmatprep.mubr.bf16.mxu0 0
  %4294 = vmatmul.mubr.bf16.gmra.mxu0 %v4029
  %v4295 = vpop.f32.mrf.mxu0
  %v4296 = vadd.f32 0.0, %v4295
  %v4297 = vpop.f32.mrf.mxu0
  %v4298 = vpop.f32.mrf.mxu0
  %v4299 = vadd.f32 0.0, %v4298
  %v4300 = vpop.f32.mrf.mxu0
  %4301 = vmatprep.mubr.bf16.mxu0 0
  %4302 = vmatmul.mubr.bf16.gmra.mxu0 %v4030
  %v4303 = vpop.f32.mrf.mxu0
  %v4304 = vadd.f32 0.0, %v4303
  %v4305 = vpop.f32.mrf.mxu0
  %v4306 = vpop.f32.mrf.mxu0
  %v4307 = vadd.f32 0.0, %v4306
  %v4308 = vpop.f32.mrf.mxu0
  %4309 = vmatprep.mubr.bf16.mxu0 0
  %4310 = vmatmul.mubr.bf16.gmra.mxu0 %v4031
  %v4311 = vpop.f32.mrf.mxu0
  %v4312 = vadd.f32 0.0, %v4311
  %v4313 = vpop.f32.mrf.mxu0
  %v4314 = vpop.f32.mrf.mxu0
  %v4315 = vadd.f32 0.0, %v4314
  %v4316 = vpop.f32.mrf.mxu0
  %4317 = vmatprep.mubr.bf16.mxu0 0
  %4318 = vmatmul.mubr.bf16.gmra.mxu0 %v4032
  %v4319 = vpop.f32.mrf.mxu0
  %v4320 = vadd.f32 0.0, %v4319
  %v4321 = vpop.f32.mrf.mxu0
  %v4322 = vpop.f32.mrf.mxu0
  %v4323 = vadd.f32 0.0, %v4322
  %v4324 = vpop.f32.mrf.mxu0
  %4325 = vmatprep.mubr.bf16.mxu0 0
  %4326 = vmatmul.mubr.bf16.gmra.mxu0 %v4033
  %v4327 = vpop.f32.mrf.mxu0
  %v4328 = vadd.f32 0.0, %v4327
  %v4329 = vpop.f32.mrf.mxu0
  %v4330 = vpop.f32.mrf.mxu0
  %v4331 = vadd.f32 0.0, %v4330
  %v4332 = vpop.f32.mrf.mxu0
  %4333 = vmatprep.mubr.bf16.mxu0 0
  %4334 = vmatmul.mubr.bf16.gmra.mxu0 %v4034
  %v4335 = vpop.f32.mrf.mxu0
  %v4336 = vadd.f32 0.0, %v4335
  %v4337 = vpop.f32.mrf.mxu0
  %v4338 = vpop.f32.mrf.mxu0
  %v4339 = vadd.f32 0.0, %v4338
  %v4340 = vpop.f32.mrf.mxu0
  %4341 = vmatprep.mubr.bf16.mxu0 0
  %4342 = vmatmul.mubr.bf16.gmra.mxu0 %v4035
  %v4343 = vpop.f32.mrf.mxu0
  %v4344 = vadd.f32 0.0, %v4343
  %v4345 = vpop.f32.mrf.mxu0
  %v4346 = vpop.f32.mrf.mxu0
  %v4347 = vadd.f32 0.0, %v4346
  %v4348 = vpop.f32.mrf.mxu0
  %4349 = vmatprep.mubr.bf16.mxu0 0
  %4350 = vmatmul.mubr.bf16.gmra.mxu0 %v4036
  %v4351 = vpop.f32.mrf.mxu0
  %v4352 = vadd.f32 0.0, %v4351
  %v4353 = vpop.f32.mrf.mxu0
  %v4354 = vpop.f32.mrf.mxu0
  %v4355 = vadd.f32 0.0, %v4354
  %v4356 = vpop.f32.mrf.mxu0
  %4357 = vmatprep.mubr.bf16.mxu0 0
  %4358 = vmatmul.mubr.bf16.gmra.mxu0 %v4037
  %v4359 = vpop.f32.mrf.mxu0
  %v4360 = vadd.f32 0.0, %v4359
  %v4361 = vpop.f32.mrf.mxu0
  %v4362 = vpop.f32.mrf.mxu0
  %v4363 = vadd.f32 0.0, %v4362
  %v4364 = vpop.f32.mrf.mxu0
  %4365 = vmatprep.mubr.bf16.mxu0 0
  %4366 = vmatmul.mubr.bf16.gmra.mxu0 %v4038
  %v4367 = vpop.f32.mrf.mxu0
  %v4368 = vadd.f32 0.0, %v4367
  %v4369 = vpop.f32.mrf.mxu0
  %v4370 = vpop.f32.mrf.mxu0
  %v4371 = vadd.f32 0.0, %v4370
  %v4372 = vpop.f32.mrf.mxu0
  %4373 = vmatprep.mubr.bf16.mxu0 0
  %4374 = vmatmul.mubr.bf16.gmra.mxu0 %v4039
  %v4375 = vpop.f32.mrf.mxu0
  %v4376 = vadd.f32 0.0, %v4375
  %v4377 = vpop.f32.mrf.mxu0
  %v4378 = vpop.f32.mrf.mxu0
  %v4379 = vadd.f32 0.0, %v4378
  %v4380 = vpop.f32.mrf.mxu0
  %4381 = vmatprep.mubr.bf16.mxu0 0
  %4382 = vmatmul.mubr.bf16.gmra.mxu0 %v4040
  %v4383 = vpop.f32.mrf.mxu0
  %v4384 = vadd.f32 0.0, %v4383
  %v4385 = vpop.f32.mrf.mxu0
  %v4386 = vpop.f32.mrf.mxu0
  %v4387 = vadd.f32 0.0, %v4386
  %v4388 = vpop.f32.mrf.mxu0
  %4389 = vmatprep.mubr.bf16.mxu0 0
  %4390 = vmatmul.mubr.bf16.gmra.mxu0 %v4041
  %v4391 = vpop.f32.mrf.mxu0
  %v4392 = vadd.f32 0.0, %v4391
  %v4393 = vpop.f32.mrf.mxu0
  %v4394 = vpop.f32.mrf.mxu0
  %v4395 = vadd.f32 0.0, %v4394
  %v4396 = vpop.f32.mrf.mxu0
  %4397 = vmatprep.mubr.bf16.mxu0 0
  %4398 = vmatmul.mubr.bf16.gmra.mxu0 %v4042
  %v4399 = vpop.f32.mrf.mxu0
  %v4400 = vadd.f32 0.0, %v4399
  %v4401 = vpop.f32.mrf.mxu0
  %v4402 = vpop.f32.mrf.mxu0
  %v4403 = vadd.f32 0.0, %v4402
  %v4404 = vpop.f32.mrf.mxu0
  %4405 = vmatprep.mubr.bf16.mxu0 0
  %4406 = vmatmul.mubr.bf16.gmra.mxu0 %v4043
  %v4407 = vpop.f32.mrf.mxu0
  %v4408 = vadd.f32 0.0, %v4407
  %v4409 = vpop.f32.mrf.mxu0
  %v4410 = vpop.f32.mrf.mxu0
  %v4411 = vadd.f32 0.0, %v4410
  %v4412 = vpop.f32.mrf.mxu0
  %4413 = vmatprep.mubr.bf16.mxu0 0
  %4414 = vmatmul.mubr.bf16.gmra.mxu0 %v4044
  %v4415 = vpop.f32.mrf.mxu0
  %v4416 = vadd.f32 0.0, %v4415
  %v4417 = vpop.f32.mrf.mxu0
  %v4418 = vpop.f32.mrf.mxu0
  %v4419 = vadd.f32 0.0, %v4418
  %v4420 = vpop.f32.mrf.mxu0
  %4421 = vmatprep.mubr.bf16.mxu0 0
  %4422 = vmatmul.mubr.bf16.gmra.mxu0 %v4045
  %v4423 = vpop.f32.mrf.mxu0
  %v4424 = vadd.f32 0.0, %v4423
  %v4425 = vpop.f32.mrf.mxu0
  %v4426 = vpop.f32.mrf.mxu0
  %v4427 = vadd.f32 0.0, %v4426
  %v4428 = vpop.f32.mrf.mxu0
  %4429 = vmatprep.mubr.bf16.mxu0 0
  %4430 = vmatmul.mubr.bf16.gmra.mxu0 %v4046
  %v4431 = vpop.f32.mrf.mxu0
  %v4432 = vadd.f32 0.0, %v4431
  %v4433 = vpop.f32.mrf.mxu0
  %v4434 = vpop.f32.mrf.mxu0
  %v4435 = vadd.f32 0.0, %v4434
  %v4436 = vpop.f32.mrf.mxu0
  %4437 = vmatprep.mubr.bf16.mxu0 0
  %4438 = vmatmul.mubr.bf16.gmra.mxu0 %v4047
  %v4439 = vpop.f32.mrf.mxu0
  %v4440 = vadd.f32 0.0, %v4439
  %v4441 = vpop.f32.mrf.mxu0
  %v4442 = vpop.f32.mrf.mxu0
  %v4443 = vadd.f32 0.0, %v4442
  %v4444 = vpop.f32.mrf.mxu0
  %4445 = vmatprep.mubr.bf16.mxu0 0
  %4446 = vmatmul.mubr.bf16.gmra.mxu0 %v4048
  %v4447 = vpop.f32.mrf.mxu0
  %v4448 = vadd.f32 0.0, %v4447
  %v4449 = vpop.f32.mrf.mxu0
  %v4450 = vpop.f32.mrf.mxu0
  %v4451 = vadd.f32 0.0, %v4450
  %v4452 = vpop.f32.mrf.mxu0
  %4453 = vmatprep.mubr.bf16.mxu0 0
  %4454 = vmatmul.mubr.bf16.gmra.mxu0 %v4049
  %v4455 = vpop.f32.mrf.mxu0
  %v4456 = vadd.f32 0.0, %v4455
  %v4457 = vpop.f32.mrf.mxu0
  %v4458 = vpop.f32.mrf.mxu0
  %v4459 = vadd.f32 0.0, %v4458
  %v4460 = vpop.f32.mrf.mxu0
  %4461 = vmatprep.mubr.bf16.mxu0 0
  %4462 = vmatmul.mubr.bf16.gmra.mxu0 %v4050
  %v4463 = vpop.f32.mrf.mxu0
  %v4464 = vadd.f32 0.0, %v4463
  %v4465 = vpop.f32.mrf.mxu0
  %v4466 = vpop.f32.mrf.mxu0
  %v4467 = vadd.f32 0.0, %v4466
  %v4468 = vpop.f32.mrf.mxu0
  %4469 = vmatprep.mubr.bf16.mxu0 0
  %4470 = vmatmul.mubr.bf16.gmra.mxu0 %v4051
  %v4471 = vpop.f32.mrf.mxu0
  %v4472 = vadd.f32 0.0, %v4471
  %v4473 = vpop.f32.mrf.mxu0
  %v4474 = vpop.f32.mrf.mxu0
  %v4475 = vpop.f32.mrf.mxu0
  %4476 = vdwg.mxu0
  %v4477 = vadd.f32 %v3930, %v4152
  %v4478 = vadd.f32 %v3931, %v4155
  %v4479 = vadd.f32 %v3932, %v4160
  %v4480 = vadd.f32 %v3933, %v4163
  %v4481 = vadd.f32 %v3934, %v4168
  %v4482 = vadd.f32 %v3935, %v4171
  %v4483 = vadd.f32 %v3936, %v4176
  %v4484 = vadd.f32 %v3937, %v4179
  %v4485 = vadd.f32 %v3938, %v4184
  %v4486 = vadd.f32 %v3939, %v4187
  %v4487 = vadd.f32 %v3940, %v4192
  %v4488 = vadd.f32 %v3941, %v4195
  %v4489 = vadd.f32 %v3942, %v4200
  %v4490 = vadd.f32 %v3943, %v4203
  %v4491 = vadd.f32 %v3944, %v4208
  %v4492 = vadd.f32 %v3945, %v4211
  %v4493 = vadd.f32 %v3946, %v4216
  %v4494 = vadd.f32 %v3947, %v4219
  %v4495 = vadd.f32 %v3948, %v4224
  %v4496 = vadd.f32 %v3949, %v4227
  %v4497 = vadd.f32 %v3950, %v4232
  %v4498 = vadd.f32 %v3951, %v4235
  %v4499 = vadd.f32 %v3952, %v4240
  %v4500 = vadd.f32 %v3953, %v4243
  %v4501 = vadd.f32 %v3954, %v4248
  %v4502 = vadd.f32 %v3955, %v4251
  %v4503 = vadd.f32 %v3956, %v4256
  %v4504 = vadd.f32 %v3957, %v4259
  %v4505 = vadd.f32 %v3958, %v4264
  %v4506 = vadd.f32 %v3959, %v4267
  %v4507 = vadd.f32 %v3960, %v4272
  %v4508 = vadd.f32 %v3961, %v4275
  %v4509 = vadd.f32 %v3962, %v4280
  %v4510 = vadd.f32 %v3963, %v4283
  %v4511 = vadd.f32 %v3964, %v4288
  %v4512 = vadd.f32 %v3965, %v4291
  %v4513 = vadd.f32 %v3966, %v4296
  %v4514 = vadd.f32 %v3967, %v4299
  %v4515 = vadd.f32 %v3968, %v4304
  %v4516 = vadd.f32 %v3969, %v4307
  %v4517 = vadd.f32 %v3970, %v4312
  %v4518 = vadd.f32 %v3971, %v4315
  %v4519 = vadd.f32 %v3972, %v4320
  %v4520 = vadd.f32 %v3973, %v4323
  %v4521 = vadd.f32 %v3974, %v4328
  %v4522 = vadd.f32 %v3975, %v4331
  %v4523 = vadd.f32 %v3976, %v4336
  %v4524 = vadd.f32 %v3977, %v4339
  %v4525 = vadd.f32 %v3978, %v4344
  %v4526 = vadd.f32 %v3979, %v4347
  %v4527 = vadd.f32 %v3980, %v4352
  %v4528 = vadd.f32 %v3981, %v4355
  %v4529 = vadd.f32 %v3982, %v4360
  %v4530 = vadd.f32 %v3983, %v4363
  %v4531 = vadd.f32 %v3984, %v4368
  %v4532 = vadd.f32 %v3985, %v4371
  %v4533 = vadd.f32 %v3986, %v4376
  %v4534 = vadd.f32 %v3987, %v4379
  %v4535 = vadd.f32 %v3988, %v4384
  %v4536 = vadd.f32 %v3989, %v4387
  %v4537 = vadd.f32 %v3990, %v4392
  %v4538 = vadd.f32 %v3991, %v4395
  %v4539 = vadd.f32 %v3992, %v4400
  %v4540 = vadd.f32 %v3993, %v4403
  %v4541 = vadd.f32 %v3994, %v4408
  %v4542 = vadd.f32 %v3995, %v4411
  %v4543 = vadd.f32 %v3996, %v4416
  %v4544 = vadd.f32 %v3997, %v4419
  %v4545 = vadd.f32 %v3998, %v4424
  %v4546 = vadd.f32 %v3999, %v4427
  %v4547 = vadd.f32 %v4000, %v4432
  %v4548 = vadd.f32 %v4001, %v4435
  %v4549 = vadd.f32 %v4002, %v4440
  %v4550 = vadd.f32 %v4003, %v4443
  %v4551 = vadd.f32 %v4004, %v4448
  %v4552 = vadd.f32 %v4005, %v4451
  %v4553 = vadd.f32 %v4006, %v4456
  %v4554 = vadd.f32 %v4007, %v4459
  %v4555 = vadd.f32 %v4008, %v4464
  %v4556 = vadd.f32 %v4009, %v4467
  %v4557 = vadd.f32 %v4010, %v4472
  %v4558 = vrot.slane %v1453, 1
  %v4559 = vrot.slane %v1454, 1
  %v4560 = vrot.slane %v1455, 1
  %v4561 = vrot.slane %v1456, 1
  %v4562 = vrot.slane %v1457, 1
  %v4563 = vrot.slane %v1458, 1
  %v4564 = vrot.slane %v1459, 1
  %v4565 = vrot.slane %v1460, 1
  %v4566 = vrot.slane %v1461, 1
  %v4567 = vrot.slane %v1462, 1
  %v4568 = vrot.slane %v1463, 1
  %v4569 = vrot.slane %v1464, 1
  %v4570 = vrot.slane %v1465, 1
  %v4571 = vrot.slane %v1466, 1
  %v4572 = vrot.slane %v1467, 1
  %v4573 = vrot.slane %v1468, 1
  %v4574 = vrot.slane %v1469, 1
  %v4575 = vrot.slane %v1470, 1
  %v4576 = vrot.slane %v1471, 1
  %v4577 = vrot.slane %v1472, 1
  %v4578 = vrot.slane %v1473, 1
  %v4579 = vrot.slane %v1474, 1
  %v4580 = vrot.slane %v1475, 1
  %v4581 = vrot.slane %v1476, 1
  %v4582 = vrot.slane %v1477, 1
  %v4583 = vrot.slane %v1478, 1
  %v4584 = vrot.slane %v1479, 1
  %v4585 = vrot.slane %v1480, 1
  %v4586 = vrot.slane %v1481, 1
  %v4587 = vrot.slane %v1482, 1
  %v4588 = vrot.slane %v1483, 1
  %v4589 = vrot.slane %v1484, 1
  %v4590 = vrot.slane %v1485, 1
  %v4591 = vrot.slane %v1486, 1
  %v4592 = vrot.slane %v1487, 1
  %v4593 = vrot.slane %v1488, 1
  %v4594 = vrot.slane %v1489, 1
  %v4595 = vrot.slane %v1490, 1
  %v4596 = vrot.slane %v1491, 1
  %v4597 = vrot.slane %v1492, 1
  %v4598 = vrot.slane %v1493, 1
  %v4599 = vrot.slane %v1494, 1
  %v4600 = vrot.slane %v1495, 1
  %v4601 = vrot.slane %v1496, 1
  %v4602 = vrot.slane %v1497, 1
  %v4603 = vrot.slane %v1498, 1
  %v4604 = vrot.slane %v1499, 1
  %v4605 = vrot.slane %v1500, 1
  %v4606 = vrot.slane %v1501, 1
  %v4607 = vrot.slane %v1502, 1
  %v4608 = vrot.slane %v1503, 1
  %v4609 = vrot.slane %v1504, 1
  %v4610 = vrot.slane %v1505, 1
  %v4611 = vrot.slane %v1506, 1
  %v4612 = vrot.slane %v1507, 1
  %v4613 = vrot.slane %v1508, 1
  %v4614 = vrot.slane %v1509, 1
  %v4615 = vrot.slane %v1510, 1
  %v4616 = vrot.slane %v1511, 1
  %v4617 = vrot.slane %v1512, 1
  %v4618 = vrot.slane %v1513, 1
  %v4619 = vrot.slane %v1514, 1
  %v4620 = vrot.slane %v1515, 1
  %v4621 = vrot.slane %v1516, 1
  %v4622 = vrot.slane %v1517, 1
  %v4623 = vrot.slane %v1518, 1
  %v4624 = vrot.slane %v1519, 1
  %v4625 = vrot.slane %v1520, 1
  %v4626 = vrot.slane %v1521, 1
  %v4627 = vrot.slane %v1522, 1
  %v4628 = vrot.slane %v1523, 1
  %v4629 = vrot.slane %v1524, 1
  %v4630 = vrot.slane %v1525, 1
  %v4631 = vrot.slane %v1526, 1
  %v4632 = vrot.slane %v1527, 1
  %v4633 = vrot.slane %v1528, 1
  %v4634 = vrot.slane %v1529, 1
  %v4635 = vrot.slane %v1530, 1
  %v4636 = vrot.slane %v1531, 1
  %v4637 = vrot.slane %v1532, 1
  %v4638 = vrot.slane %v1533, 1
  %vm4639 = vcmp.lt.s32.totalorder %v1616, 7
  %v4640 = vsel %vm4639, %v4637, %v4638
  %v4641 = vsel %vm4639, %v4636, %v4637
  %v4642 = vsel %vm4639, %v4635, %v4636
  %v4643 = vsel %vm4639, %v4634, %v4635
  %v4644 = vsel %vm4639, %v4633, %v4634
  %v4645 = vsel %vm4639, %v4632, %v4633
  %v4646 = vsel %vm4639, %v4631, %v4632
  %v4647 = vsel %vm4639, %v4630, %v4631
  %v4648 = vsel %vm4639, %v4629, %v4630
  %v4649 = vsel %vm4639, %v4628, %v4629
  %v4650 = vsel %vm4639, %v4627, %v4628
  %v4651 = vsel %vm4639, %v4626, %v4627
  %v4652 = vsel %vm4639, %v4625, %v4626
  %v4653 = vsel %vm4639, %v4624, %v4625
  %v4654 = vsel %vm4639, %v4623, %v4624
  %v4655 = vsel %vm4639, %v4622, %v4623
  %v4656 = vsel %vm4639, %v4621, %v4622
  %v4657 = vsel %vm4639, %v4620, %v4621
  %v4658 = vsel %vm4639, %v4619, %v4620
  %v4659 = vsel %vm4639, %v4618, %v4619
  %v4660 = vsel %vm4639, %v4617, %v4618
  %v4661 = vsel %vm4639, %v4616, %v4617
  %v4662 = vsel %vm4639, %v4615, %v4616
  %v4663 = vsel %vm4639, %v4614, %v4615
  %v4664 = vsel %vm4639, %v4613, %v4614
  %v4665 = vsel %vm4639, %v4612, %v4613
  %v4666 = vsel %vm4639, %v4611, %v4612
  %v4667 = vsel %vm4639, %v4610, %v4611
  %v4668 = vsel %vm4639, %v4609, %v4610
  %v4669 = vsel %vm4639, %v4608, %v4609
  %v4670 = vsel %vm4639, %v4607, %v4608
  %v4671 = vsel %vm4639, %v4606, %v4607
  %v4672 = vsel %vm4639, %v4605, %v4606
  %v4673 = vsel %vm4639, %v4604, %v4605
  %v4674 = vsel %vm4639, %v4603, %v4604
  %v4675 = vsel %vm4639, %v4602, %v4603
  %v4676 = vsel %vm4639, %v4601, %v4602
  %v4677 = vsel %vm4639, %v4600, %v4601
  %v4678 = vsel %vm4639, %v4599, %v4600
  %v4679 = vsel %vm4639, %v4598, %v4599
  %v4680 = vsel %vm4639, %v4597, %v4598
  %v4681 = vsel %vm4639, %v4596, %v4597
  %v4682 = vsel %vm4639, %v4595, %v4596
  %v4683 = vsel %vm4639, %v4594, %v4595
  %v4684 = vsel %vm4639, %v4593, %v4594
  %v4685 = vsel %vm4639, %v4592, %v4593
  %v4686 = vsel %vm4639, %v4591, %v4592
  %v4687 = vsel %vm4639, %v4590, %v4591
  %v4688 = vsel %vm4639, %v4589, %v4590
  %v4689 = vsel %vm4639, %v4588, %v4589
  %v4690 = vsel %vm4639, %v4587, %v4588
  %v4691 = vsel %vm4639, %v4586, %v4587
  %v4692 = vsel %vm4639, %v4585, %v4586
  %v4693 = vsel %vm4639, %v4584, %v4585
  %v4694 = vsel %vm4639, %v4583, %v4584
  %v4695 = vsel %vm4639, %v4582, %v4583
  %v4696 = vsel %vm4639, %v4581, %v4582
  %v4697 = vsel %vm4639, %v4580, %v4581
  %v4698 = vsel %vm4639, %v4579, %v4580
  %v4699 = vsel %vm4639, %v4578, %v4579
  %v4700 = vsel %vm4639, %v4577, %v4578
  %v4701 = vsel %vm4639, %v4576, %v4577
  %v4702 = vsel %vm4639, %v4575, %v4576
  %v4703 = vsel %vm4639, %v4574, %v4575
  %v4704 = vsel %vm4639, %v4573, %v4574
  %v4705 = vsel %vm4639, %v4572, %v4573
  %v4706 = vsel %vm4639, %v4571, %v4572
  %v4707 = vsel %vm4639, %v4570, %v4571
  %v4708 = vsel %vm4639, %v4569, %v4570
  %v4709 = vsel %vm4639, %v4568, %v4569
  %v4710 = vsel %vm4639, %v4567, %v4568
  %v4711 = vsel %vm4639, %v4566, %v4567
  %v4712 = vsel %vm4639, %v4565, %v4566
  %v4713 = vsel %vm4639, %v4564, %v4565
  %v4714 = vsel %vm4639, %v4563, %v4564
  %v4715 = vsel %vm4639, %v4562, %v4563
  %v4716 = vsel %vm4639, %v4561, %v4562
  %v4717 = vsel %vm4639, %v4560, %v4561
  %v4718 = vsel %vm4639, %v4559, %v4560
  %v4719 = vsel %vm4639, %v4558, %v4559
  %v4720 = vsel %vm4639, %v4638, %v4558
  %v4721 = vpack.c.bf16 %v4718, %v4719
  %v4722 = vpack.c.bf16 %v4716, %v4717
  %v4723 = vpack.c.bf16 %v4714, %v4715
  %v4724 = vpack.c.bf16 %v4712, %v4713
  %v4725 = vpack.c.bf16 %v4710, %v4711
  %v4726 = vpack.c.bf16 %v4708, %v4709
  %v4727 = vpack.c.bf16 %v4706, %v4707
  %v4728 = vpack.c.bf16 %v4704, %v4705
  %v4729 = vpack.c.bf16 %v4702, %v4703
  %v4730 = vpack.c.bf16 %v4700, %v4701
  %v4731 = vpack.c.bf16 %v4698, %v4699
  %v4732 = vpack.c.bf16 %v4696, %v4697
  %v4733 = vpack.c.bf16 %v4694, %v4695
  %v4734 = vpack.c.bf16 %v4692, %v4693
  %v4735 = vpack.c.bf16 %v4690, %v4691
  %v4736 = vpack.c.bf16 %v4688, %v4689
  %v4737 = vpack.c.bf16 %v4686, %v4687
  %v4738 = vpack.c.bf16 %v4684, %v4685
  %v4739 = vpack.c.bf16 %v4682, %v4683
  %v4740 = vpack.c.bf16 %v4680, %v4681
  %v4741 = vpack.c.bf16 %v4678, %v4679
  %v4742 = vpack.c.bf16 %v4676, %v4677
  %v4743 = vpack.c.bf16 %v4674, %v4675
  %v4744 = vpack.c.bf16 %v4672, %v4673
  %v4745 = vpack.c.bf16 %v4670, %v4671
  %v4746 = vpack.c.bf16 %v4668, %v4669
  %v4747 = vpack.c.bf16 %v4666, %v4667
  %v4748 = vpack.c.bf16 %v4664, %v4665
  %v4749 = vpack.c.bf16 %v4662, %v4663
  %v4750 = vpack.c.bf16 %v4660, %v4661
  %v4751 = vpack.c.bf16 %v4658, %v4659
  %v4752 = vpack.c.bf16 %v4656, %v4657
  %v4753 = vpack.c.bf16 %v4654, %v4655
  %v4754 = vpack.c.bf16 %v4652, %v4653
  %v4755 = vpack.c.bf16 %v4650, %v4651
  %v4756 = vpack.c.bf16 %v4648, %v4649
  %v4757 = vpack.c.bf16 %v4646, %v4647
  %v4758 = vpack.c.bf16 %v4644, %v4645
  %v4759 = vpack.c.bf16 %v4642, %v4643
  %v4760 = vpack.c.bf16 %v4640, %v4641
  %v4761 = vpack.c.bf16 %v4720, %v4720
  %s4762 = scalar_lea.vmem %s6, 320
  %v4763 = vld [vmem:[%s4762] sm:$0xf]
  %v4764 = vld [vmem:[%s4762 + $0x4] sm:$0xf]
  %v4765 = vld [vmem:[%s4762 + $0x8] sm:$0xf]
  %v4766 = vld [vmem:[%s4762 + $0xc] sm:$0xf]
  %v4767 = vld [vmem:[%s4762 + $0x10] sm:$0xf]
  %v4768 = vld [vmem:[%s4762 + $0x14] sm:$0xf]
  %v4769 = vld [vmem:[%s4762 + $0x18] sm:$0xf]
  %v4770 = vld [vmem:[%s4762 + $0x1c] sm:$0xf]
  %v4771 = vld [vmem:[%s4762 + $0x20] sm:$0xf]
  %v4772 = vld [vmem:[%s4762 + $0x24] sm:$0xf]
  %v4773 = vld [vmem:[%s4762 + $0x28] sm:$0xf]
  %v4774 = vld [vmem:[%s4762 + $0x2c] sm:$0xf]
  %v4775 = vld [vmem:[%s4762 + $0x30] sm:$0xf]
  %v4776 = vld [vmem:[%s4762 + $0x34] sm:$0xf]
  %v4777 = vld [vmem:[%s4762 + $0x38] sm:$0xf]
  %v4778 = vld [vmem:[%s4762 + $0x3c] sm:$0xf]
  %v4795 = vunpack.c.l.b16 %v4763
  %v4796 = vunpack.c.l.b16 %v4764
  %v4797 = vunpack.c.l.b16 %v4765
  %v4798 = vunpack.c.l.b16 %v4766
  %v4799 = vunpack.c.l.b16 %v4767
  %v4800 = vunpack.c.l.b16 %v4768
  %v4801 = vunpack.c.l.b16 %v4769
  %v4802 = vunpack.c.l.b16 %v4770
  %v4803 = vunpack.c.l.b16 %v4771
  %v4804 = vunpack.c.l.b16 %v4772
  %v4805 = vunpack.c.l.b16 %v4773
  %v4806 = vunpack.c.l.b16 %v4774
  %v4807 = vunpack.c.l.b16 %v4775
  %v4808 = vunpack.c.l.b16 %v4776
  %v4809 = vunpack.c.l.b16 %v4777
  %v4810 = vunpack.c.l.b16 %v4778
  %v4811 = vpack.c.b16 %v4796, %v4795
  %v4812 = vpack.c.b16 %v4798, %v4797
  %v4813 = vpack.c.b16 %v4800, %v4799
  %v4814 = vpack.c.b16 %v4802, %v4801
  %v4815 = vpack.c.b16 %v4804, %v4803
  %v4816 = vpack.c.b16 %v4806, %v4805
  %v4817 = vpack.c.b16 %v4808, %v4807
  %v4818 = vpack.c.b16 %v4810, %v4809
  %4827 = vmatprep.subr.bf16.mxu0 0
  %4828 = vmatpush1.bf16.msra.mxu0 %v4818
  %4829 = vmatprep.subr.bf16.mxu0 0
  %4830 = vmatpush1.bf16.msra.mxu0 %v4817
  %4831 = vmatprep.subr.bf16.mxu0 0
  %4832 = vmatpush1.bf16.msra.mxu0 %v4816
  %4833 = vmatprep.subr.bf16.mxu0 0
  %4834 = vmatpush1.bf16.msra.mxu0 %v4815
  %4835 = vmatprep.subr.bf16.mxu0 0
  %4836 = vmatpush1.bf16.msra.mxu0 %v4814
  %4837 = vmatprep.subr.bf16.mxu0 0
  %4838 = vmatpush1.bf16.msra.mxu0 %v4813
  %4839 = vmatprep.subr.bf16.mxu0 0
  %4840 = vmatpush1.bf16.msra.mxu0 %v4812
  %4841 = vmatprep.subr.bf16.mxu0 0
  %4842 = vmatpush1.bf16.msra.mxu0 %v4811
  %4843 = vmatprep.subr.bf16.mxu0 0
  %4844 = vmatpush2.bf16.msra.mxu0 0
  %4845 = vmatprep.subr.bf16.mxu0 0
  %4846 = vmatpush2.bf16.msra.mxu0 0
  %4847 = vmatprep.subr.bf16.mxu0 0
  %4848 = vmatpush2.bf16.msra.mxu0 0
  %4849 = vmatprep.subr.bf16.mxu0 0
  %4850 = vmatpush2.bf16.msra.mxu0 0
  %4851 = vmatprep.subr.bf16.mxu0 0
  %4852 = vmatpush2.bf16.msra.mxu0 0
  %4853 = vmatprep.subr.bf16.mxu0 0
  %4854 = vmatpush2.bf16.msra.mxu0 0
  %4855 = vmatprep.subr.bf16.mxu0 0
  %4856 = vmatpush2.bf16.msra.mxu0 0
  %4857 = vmatprep.subr.bf16.mxu0 0
  %4858 = vmatpush2.bf16.msra.mxu0 0
  %4859 = vmatprep.mubr.bf16.mxu0 0
  %4860 = vmatmul.mubr.bf16.gmra.mxu0 %v4721
  %v4861 = vpop.f32.mrf.mxu0
  %v4862 = vadd.f32 0.0, %v4861
  %v4863 = vpop.f32.mrf.mxu0
  %v4864 = vpop.f32.mrf.mxu0
  %v4865 = vadd.f32 0.0, %v4864
  %v4866 = vpop.f32.mrf.mxu0
  %4867 = vmatprep.mubr.bf16.mxu0 0
  %4868 = vmatmul.mubr.bf16.gmra.mxu0 %v4722
  %v4869 = vpop.f32.mrf.mxu0
  %v4870 = vadd.f32 0.0, %v4869
  %v4871 = vpop.f32.mrf.mxu0
  %v4872 = vpop.f32.mrf.mxu0
  %v4873 = vadd.f32 0.0, %v4872
  %v4874 = vpop.f32.mrf.mxu0
  %4875 = vmatprep.mubr.bf16.mxu0 0
  %4876 = vmatmul.mubr.bf16.gmra.mxu0 %v4723
  %v4877 = vpop.f32.mrf.mxu0
  %v4878 = vadd.f32 0.0, %v4877
  %v4879 = vpop.f32.mrf.mxu0
  %v4880 = vpop.f32.mrf.mxu0
  %v4881 = vadd.f32 0.0, %v4880
  %v4882 = vpop.f32.mrf.mxu0
  %4883 = vmatprep.mubr.bf16.mxu0 0
  %4884 = vmatmul.mubr.bf16.gmra.mxu0 %v4724
  %v4885 = vpop.f32.mrf.mxu0
  %v4886 = vadd.f32 0.0, %v4885
  %v4887 = vpop.f32.mrf.mxu0
  %v4888 = vpop.f32.mrf.mxu0
  %v4889 = vadd.f32 0.0, %v4888
  %v4890 = vpop.f32.mrf.mxu0
  %4891 = vmatprep.mubr.bf16.mxu0 0
  %4892 = vmatmul.mubr.bf16.gmra.mxu0 %v4725
  %v4893 = vpop.f32.mrf.mxu0
  %v4894 = vadd.f32 0.0, %v4893
  %v4895 = vpop.f32.mrf.mxu0
  %v4896 = vpop.f32.mrf.mxu0
  %v4897 = vadd.f32 0.0, %v4896
  %v4898 = vpop.f32.mrf.mxu0
  %4899 = vmatprep.mubr.bf16.mxu0 0
  %4900 = vmatmul.mubr.bf16.gmra.mxu0 %v4726
  %v4901 = vpop.f32.mrf.mxu0
  %v4902 = vadd.f32 0.0, %v4901
  %v4903 = vpop.f32.mrf.mxu0
  %v4904 = vpop.f32.mrf.mxu0
  %v4905 = vadd.f32 0.0, %v4904
  %v4906 = vpop.f32.mrf.mxu0
  %4907 = vmatprep.mubr.bf16.mxu0 0
  %4908 = vmatmul.mubr.bf16.gmra.mxu0 %v4727
  %v4909 = vpop.f32.mrf.mxu0
  %v4910 = vadd.f32 0.0, %v4909
  %v4911 = vpop.f32.mrf.mxu0
  %v4912 = vpop.f32.mrf.mxu0
  %v4913 = vadd.f32 0.0, %v4912
  %v4914 = vpop.f32.mrf.mxu0
  %4915 = vmatprep.mubr.bf16.mxu0 0
  %4916 = vmatmul.mubr.bf16.gmra.mxu0 %v4728
  %v4917 = vpop.f32.mrf.mxu0
  %v4918 = vadd.f32 0.0, %v4917
  %v4919 = vpop.f32.mrf.mxu0
  %v4920 = vpop.f32.mrf.mxu0
  %v4921 = vadd.f32 0.0, %v4920
  %v4922 = vpop.f32.mrf.mxu0
  %4923 = vmatprep.mubr.bf16.mxu0 0
  %4924 = vmatmul.mubr.bf16.gmra.mxu0 %v4729
  %v4925 = vpop.f32.mrf.mxu0
  %v4926 = vadd.f32 0.0, %v4925
  %v4927 = vpop.f32.mrf.mxu0
  %v4928 = vpop.f32.mrf.mxu0
  %v4929 = vadd.f32 0.0, %v4928
  %v4930 = vpop.f32.mrf.mxu0
  %4931 = vmatprep.mubr.bf16.mxu0 0
  %4932 = vmatmul.mubr.bf16.gmra.mxu0 %v4730
  %v4933 = vpop.f32.mrf.mxu0
  %v4934 = vadd.f32 0.0, %v4933
  %v4935 = vpop.f32.mrf.mxu0
  %v4936 = vpop.f32.mrf.mxu0
  %v4937 = vadd.f32 0.0, %v4936
  %v4938 = vpop.f32.mrf.mxu0
  %4939 = vmatprep.mubr.bf16.mxu0 0
  %4940 = vmatmul.mubr.bf16.gmra.mxu0 %v4731
  %v4941 = vpop.f32.mrf.mxu0
  %v4942 = vadd.f32 0.0, %v4941
  %v4943 = vpop.f32.mrf.mxu0
  %v4944 = vpop.f32.mrf.mxu0
  %v4945 = vadd.f32 0.0, %v4944
  %v4946 = vpop.f32.mrf.mxu0
  %4947 = vmatprep.mubr.bf16.mxu0 0
  %4948 = vmatmul.mubr.bf16.gmra.mxu0 %v4732
  %v4949 = vpop.f32.mrf.mxu0
  %v4950 = vadd.f32 0.0, %v4949
  %v4951 = vpop.f32.mrf.mxu0
  %v4952 = vpop.f32.mrf.mxu0
  %v4953 = vadd.f32 0.0, %v4952
  %v4954 = vpop.f32.mrf.mxu0
  %4955 = vmatprep.mubr.bf16.mxu0 0
  %4956 = vmatmul.mubr.bf16.gmra.mxu0 %v4733
  %v4957 = vpop.f32.mrf.mxu0
  %v4958 = vadd.f32 0.0, %v4957
  %v4959 = vpop.f32.mrf.mxu0
  %v4960 = vpop.f32.mrf.mxu0
  %v4961 = vadd.f32 0.0, %v4960
  %v4962 = vpop.f32.mrf.mxu0
  %4963 = vmatprep.mubr.bf16.mxu0 0
  %4964 = vmatmul.mubr.bf16.gmra.mxu0 %v4734
  %v4965 = vpop.f32.mrf.mxu0
  %v4966 = vadd.f32 0.0, %v4965
  %v4967 = vpop.f32.mrf.mxu0
  %v4968 = vpop.f32.mrf.mxu0
  %v4969 = vadd.f32 0.0, %v4968
  %v4970 = vpop.f32.mrf.mxu0
  %4971 = vmatprep.mubr.bf16.mxu0 0
  %4972 = vmatmul.mubr.bf16.gmra.mxu0 %v4735
  %v4973 = vpop.f32.mrf.mxu0
  %v4974 = vadd.f32 0.0, %v4973
  %v4975 = vpop.f32.mrf.mxu0
  %v4976 = vpop.f32.mrf.mxu0
  %v4977 = vadd.f32 0.0, %v4976
  %v4978 = vpop.f32.mrf.mxu0
  %4979 = vmatprep.mubr.bf16.mxu0 0
  %4980 = vmatmul.mubr.bf16.gmra.mxu0 %v4736
  %v4981 = vpop.f32.mrf.mxu0
  %v4982 = vadd.f32 0.0, %v4981
  %v4983 = vpop.f32.mrf.mxu0
  %v4984 = vpop.f32.mrf.mxu0
  %v4985 = vadd.f32 0.0, %v4984
  %v4986 = vpop.f32.mrf.mxu0
  %4987 = vmatprep.mubr.bf16.mxu0 0
  %4988 = vmatmul.mubr.bf16.gmra.mxu0 %v4737
  %v4989 = vpop.f32.mrf.mxu0
  %v4990 = vadd.f32 0.0, %v4989
  %v4991 = vpop.f32.mrf.mxu0
  %v4992 = vpop.f32.mrf.mxu0
  %v4993 = vadd.f32 0.0, %v4992
  %v4994 = vpop.f32.mrf.mxu0
  %4995 = vmatprep.mubr.bf16.mxu0 0
  %4996 = vmatmul.mubr.bf16.gmra.mxu0 %v4738
  %v4997 = vpop.f32.mrf.mxu0
  %v4998 = vadd.f32 0.0, %v4997
  %v4999 = vpop.f32.mrf.mxu0
  %v5000 = vpop.f32.mrf.mxu0
  %v5001 = vadd.f32 0.0, %v5000
  %v5002 = vpop.f32.mrf.mxu0
  %5003 = vmatprep.mubr.bf16.mxu0 0
  %5004 = vmatmul.mubr.bf16.gmra.mxu0 %v4739
  %v5005 = vpop.f32.mrf.mxu0
  %v5006 = vadd.f32 0.0, %v5005
  %v5007 = vpop.f32.mrf.mxu0
  %v5008 = vpop.f32.mrf.mxu0
  %v5009 = vadd.f32 0.0, %v5008
  %v5010 = vpop.f32.mrf.mxu0
  %5011 = vmatprep.mubr.bf16.mxu0 0
  %5012 = vmatmul.mubr.bf16.gmra.mxu0 %v4740
  %v5013 = vpop.f32.mrf.mxu0
  %v5014 = vadd.f32 0.0, %v5013
  %v5015 = vpop.f32.mrf.mxu0
  %v5016 = vpop.f32.mrf.mxu0
  %v5017 = vadd.f32 0.0, %v5016
  %v5018 = vpop.f32.mrf.mxu0
  %5019 = vmatprep.mubr.bf16.mxu0 0
  %5020 = vmatmul.mubr.bf16.gmra.mxu0 %v4741
  %v5021 = vpop.f32.mrf.mxu0
  %v5022 = vadd.f32 0.0, %v5021
  %v5023 = vpop.f32.mrf.mxu0
  %v5024 = vpop.f32.mrf.mxu0
  %v5025 = vadd.f32 0.0, %v5024
  %v5026 = vpop.f32.mrf.mxu0
  %5027 = vmatprep.mubr.bf16.mxu0 0
  %5028 = vmatmul.mubr.bf16.gmra.mxu0 %v4742
  %v5029 = vpop.f32.mrf.mxu0
  %v5030 = vadd.f32 0.0, %v5029
  %v5031 = vpop.f32.mrf.mxu0
  %v5032 = vpop.f32.mrf.mxu0
  %v5033 = vadd.f32 0.0, %v5032
  %v5034 = vpop.f32.mrf.mxu0
  %5035 = vmatprep.mubr.bf16.mxu0 0
  %5036 = vmatmul.mubr.bf16.gmra.mxu0 %v4743
  %v5037 = vpop.f32.mrf.mxu0
  %v5038 = vadd.f32 0.0, %v5037
  %v5039 = vpop.f32.mrf.mxu0
  %v5040 = vpop.f32.mrf.mxu0
  %v5041 = vadd.f32 0.0, %v5040
  %v5042 = vpop.f32.mrf.mxu0
  %5043 = vmatprep.mubr.bf16.mxu0 0
  %5044 = vmatmul.mubr.bf16.gmra.mxu0 %v4744
  %v5045 = vpop.f32.mrf.mxu0
  %v5046 = vadd.f32 0.0, %v5045
  %v5047 = vpop.f32.mrf.mxu0
  %v5048 = vpop.f32.mrf.mxu0
  %v5049 = vadd.f32 0.0, %v5048
  %v5050 = vpop.f32.mrf.mxu0
  %5051 = vmatprep.mubr.bf16.mxu0 0
  %5052 = vmatmul.mubr.bf16.gmra.mxu0 %v4745
  %v5053 = vpop.f32.mrf.mxu0
  %v5054 = vadd.f32 0.0, %v5053
  %v5055 = vpop.f32.mrf.mxu0
  %v5056 = vpop.f32.mrf.mxu0
  %v5057 = vadd.f32 0.0, %v5056
  %v5058 = vpop.f32.mrf.mxu0
  %5059 = vmatprep.mubr.bf16.mxu0 0
  %5060 = vmatmul.mubr.bf16.gmra.mxu0 %v4746
  %v5061 = vpop.f32.mrf.mxu0
  %v5062 = vadd.f32 0.0, %v5061
  %v5063 = vpop.f32.mrf.mxu0
  %v5064 = vpop.f32.mrf.mxu0
  %v5065 = vadd.f32 0.0, %v5064
  %v5066 = vpop.f32.mrf.mxu0
  %5067 = vmatprep.mubr.bf16.mxu0 0
  %5068 = vmatmul.mubr.bf16.gmra.mxu0 %v4747
  %v5069 = vpop.f32.mrf.mxu0
  %v5070 = vadd.f32 0.0, %v5069
  %v5071 = vpop.f32.mrf.mxu0
  %v5072 = vpop.f32.mrf.mxu0
  %v5073 = vadd.f32 0.0, %v5072
  %v5074 = vpop.f32.mrf.mxu0
  %5075 = vmatprep.mubr.bf16.mxu0 0
  %5076 = vmatmul.mubr.bf16.gmra.mxu0 %v4748
  %v5077 = vpop.f32.mrf.mxu0
  %v5078 = vadd.f32 0.0, %v5077
  %v5079 = vpop.f32.mrf.mxu0
  %v5080 = vpop.f32.mrf.mxu0
  %v5081 = vadd.f32 0.0, %v5080
  %v5082 = vpop.f32.mrf.mxu0
  %5083 = vmatprep.mubr.bf16.mxu0 0
  %5084 = vmatmul.mubr.bf16.gmra.mxu0 %v4749
  %v5085 = vpop.f32.mrf.mxu0
  %v5086 = vadd.f32 0.0, %v5085
  %v5087 = vpop.f32.mrf.mxu0
  %v5088 = vpop.f32.mrf.mxu0
  %v5089 = vadd.f32 0.0, %v5088
  %v5090 = vpop.f32.mrf.mxu0
  %5091 = vmatprep.mubr.bf16.mxu0 0
  %5092 = vmatmul.mubr.bf16.gmra.mxu0 %v4750
  %v5093 = vpop.f32.mrf.mxu0
  %v5094 = vadd.f32 0.0, %v5093
  %v5095 = vpop.f32.mrf.mxu0
  %v5096 = vpop.f32.mrf.mxu0
  %v5097 = vadd.f32 0.0, %v5096
  %v5098 = vpop.f32.mrf.mxu0
  %5099 = vmatprep.mubr.bf16.mxu0 0
  %5100 = vmatmul.mubr.bf16.gmra.mxu0 %v4751
  %v5101 = vpop.f32.mrf.mxu0
  %v5102 = vadd.f32 0.0, %v5101
  %v5103 = vpop.f32.mrf.mxu0
  %v5104 = vpop.f32.mrf.mxu0
  %v5105 = vadd.f32 0.0, %v5104
  %v5106 = vpop.f32.mrf.mxu0
  %5107 = vmatprep.mubr.bf16.mxu0 0
  %5108 = vmatmul.mubr.bf16.gmra.mxu0 %v4752
  %v5109 = vpop.f32.mrf.mxu0
  %v5110 = vadd.f32 0.0, %v5109
  %v5111 = vpop.f32.mrf.mxu0
  %v5112 = vpop.f32.mrf.mxu0
  %v5113 = vadd.f32 0.0, %v5112
  %v5114 = vpop.f32.mrf.mxu0
  %5115 = vmatprep.mubr.bf16.mxu0 0
  %5116 = vmatmul.mubr.bf16.gmra.mxu0 %v4753
  %v5117 = vpop.f32.mrf.mxu0
  %v5118 = vadd.f32 0.0, %v5117
  %v5119 = vpop.f32.mrf.mxu0
  %v5120 = vpop.f32.mrf.mxu0
  %v5121 = vadd.f32 0.0, %v5120
  %v5122 = vpop.f32.mrf.mxu0
  %5123 = vmatprep.mubr.bf16.mxu0 0
  %5124 = vmatmul.mubr.bf16.gmra.mxu0 %v4754
  %v5125 = vpop.f32.mrf.mxu0
  %v5126 = vadd.f32 0.0, %v5125
  %v5127 = vpop.f32.mrf.mxu0
  %v5128 = vpop.f32.mrf.mxu0
  %v5129 = vadd.f32 0.0, %v5128
  %v5130 = vpop.f32.mrf.mxu0
  %5131 = vmatprep.mubr.bf16.mxu0 0
  %5132 = vmatmul.mubr.bf16.gmra.mxu0 %v4755
  %v5133 = vpop.f32.mrf.mxu0
  %v5134 = vadd.f32 0.0, %v5133
  %v5135 = vpop.f32.mrf.mxu0
  %v5136 = vpop.f32.mrf.mxu0
  %v5137 = vadd.f32 0.0, %v5136
  %v5138 = vpop.f32.mrf.mxu0
  %5139 = vmatprep.mubr.bf16.mxu0 0
  %5140 = vmatmul.mubr.bf16.gmra.mxu0 %v4756
  %v5141 = vpop.f32.mrf.mxu0
  %v5142 = vadd.f32 0.0, %v5141
  %v5143 = vpop.f32.mrf.mxu0
  %v5144 = vpop.f32.mrf.mxu0
  %v5145 = vadd.f32 0.0, %v5144
  %v5146 = vpop.f32.mrf.mxu0
  %5147 = vmatprep.mubr.bf16.mxu0 0
  %5148 = vmatmul.mubr.bf16.gmra.mxu0 %v4757
  %v5149 = vpop.f32.mrf.mxu0
  %v5150 = vadd.f32 0.0, %v5149
  %v5151 = vpop.f32.mrf.mxu0
  %v5152 = vpop.f32.mrf.mxu0
  %v5153 = vadd.f32 0.0, %v5152
  %v5154 = vpop.f32.mrf.mxu0
  %5155 = vmatprep.mubr.bf16.mxu0 0
  %5156 = vmatmul.mubr.bf16.gmra.mxu0 %v4758
  %v5157 = vpop.f32.mrf.mxu0
  %v5158 = vadd.f32 0.0, %v5157
  %v5159 = vpop.f32.mrf.mxu0
  %v5160 = vpop.f32.mrf.mxu0
  %v5161 = vadd.f32 0.0, %v5160
  %v5162 = vpop.f32.mrf.mxu0
  %5163 = vmatprep.mubr.bf16.mxu0 0
  %5164 = vmatmul.mubr.bf16.gmra.mxu0 %v4759
  %v5165 = vpop.f32.mrf.mxu0
  %v5166 = vadd.f32 0.0, %v5165
  %v5167 = vpop.f32.mrf.mxu0
  %v5168 = vpop.f32.mrf.mxu0
  %v5169 = vadd.f32 0.0, %v5168
  %v5170 = vpop.f32.mrf.mxu0
  %5171 = vmatprep.mubr.bf16.mxu0 0
  %5172 = vmatmul.mubr.bf16.gmra.mxu0 %v4760
  %v5173 = vpop.f32.mrf.mxu0
  %v5174 = vadd.f32 0.0, %v5173
  %v5175 = vpop.f32.mrf.mxu0
  %v5176 = vpop.f32.mrf.mxu0
  %v5177 = vadd.f32 0.0, %v5176
  %v5178 = vpop.f32.mrf.mxu0
  %5179 = vmatprep.mubr.bf16.mxu0 0
  %5180 = vmatmul.mubr.bf16.gmra.mxu0 %v4761
  %v5181 = vpop.f32.mrf.mxu0
  %v5182 = vadd.f32 0.0, %v5181
  %v5183 = vpop.f32.mrf.mxu0
  %v5184 = vpop.f32.mrf.mxu0
  %v5185 = vpop.f32.mrf.mxu0
  %5186 = vdwg.mxu0
  %v5187 = vadd.f32 %v4477, %v4862
  %v5188 = vadd.f32 %v4478, %v4865
  %v5189 = vadd.f32 %v4479, %v4870
  %v5190 = vadd.f32 %v4480, %v4873
  %v5191 = vadd.f32 %v4481, %v4878
  %v5192 = vadd.f32 %v4482, %v4881
  %v5193 = vadd.f32 %v4483, %v4886
  %v5194 = vadd.f32 %v4484, %v4889
  %v5195 = vadd.f32 %v4485, %v4894
  %v5196 = vadd.f32 %v4486, %v4897
  %v5197 = vadd.f32 %v4487, %v4902
  %v5198 = vadd.f32 %v4488, %v4905
  %v5199 = vadd.f32 %v4489, %v4910
  %v5200 = vadd.f32 %v4490, %v4913
  %v5201 = vadd.f32 %v4491, %v4918
  %v5202 = vadd.f32 %v4492, %v4921
  %v5203 = vadd.f32 %v4493, %v4926
  %v5204 = vadd.f32 %v4494, %v4929
  %v5205 = vadd.f32 %v4495, %v4934
  %v5206 = vadd.f32 %v4496, %v4937
  %v5207 = vadd.f32 %v4497, %v4942
  %v5208 = vadd.f32 %v4498, %v4945
  %v5209 = vadd.f32 %v4499, %v4950
  %v5210 = vadd.f32 %v4500, %v4953
  %v5211 = vadd.f32 %v4501, %v4958
  %v5212 = vadd.f32 %v4502, %v4961
  %v5213 = vadd.f32 %v4503, %v4966
  %v5214 = vadd.f32 %v4504, %v4969
  %v5215 = vadd.f32 %v4505, %v4974
  %v5216 = vadd.f32 %v4506, %v4977
  %v5217 = vadd.f32 %v4507, %v4982
  %v5218 = vadd.f32 %v4508, %v4985
  %v5219 = vadd.f32 %v4509, %v4990
  %v5220 = vadd.f32 %v4510, %v4993
  %v5221 = vadd.f32 %v4511, %v4998
  %v5222 = vadd.f32 %v4512, %v5001
  %v5223 = vadd.f32 %v4513, %v5006
  %v5224 = vadd.f32 %v4514, %v5009
  %v5225 = vadd.f32 %v4515, %v5014
  %v5226 = vadd.f32 %v4516, %v5017
  %v5227 = vadd.f32 %v4517, %v5022
  %v5228 = vadd.f32 %v4518, %v5025
  %v5229 = vadd.f32 %v4519, %v5030
  %v5230 = vadd.f32 %v4520, %v5033
  %v5231 = vadd.f32 %v4521, %v5038
  %v5232 = vadd.f32 %v4522, %v5041
  %v5233 = vadd.f32 %v4523, %v5046
  %v5234 = vadd.f32 %v4524, %v5049
  %v5235 = vadd.f32 %v4525, %v5054
  %v5236 = vadd.f32 %v4526, %v5057
  %v5237 = vadd.f32 %v4527, %v5062
  %v5238 = vadd.f32 %v4528, %v5065
  %v5239 = vadd.f32 %v4529, %v5070
  %v5240 = vadd.f32 %v4530, %v5073
  %v5241 = vadd.f32 %v4531, %v5078
  %v5242 = vadd.f32 %v4532, %v5081
  %v5243 = vadd.f32 %v4533, %v5086
  %v5244 = vadd.f32 %v4534, %v5089
  %v5245 = vadd.f32 %v4535, %v5094
  %v5246 = vadd.f32 %v4536, %v5097
  %v5247 = vadd.f32 %v4537, %v5102
  %v5248 = vadd.f32 %v4538, %v5105
  %v5249 = vadd.f32 %v4539, %v5110
  %v5250 = vadd.f32 %v4540, %v5113
  %v5251 = vadd.f32 %v4541, %v5118
  %v5252 = vadd.f32 %v4542, %v5121
  %v5253 = vadd.f32 %v4543, %v5126
  %v5254 = vadd.f32 %v4544, %v5129
  %v5255 = vadd.f32 %v4545, %v5134
  %v5256 = vadd.f32 %v4546, %v5137
  %v5257 = vadd.f32 %v4547, %v5142
  %v5258 = vadd.f32 %v4548, %v5145
  %v5259 = vadd.f32 %v4549, %v5150
  %v5260 = vadd.f32 %v4550, %v5153
  %v5261 = vadd.f32 %v4551, %v5158
  %v5262 = vadd.f32 %v4552, %v5161
  %v5263 = vadd.f32 %v4553, %v5166
  %v5264 = vadd.f32 %v4554, %v5169
  %v5265 = vadd.f32 %v4555, %v5174
  %v5266 = vadd.f32 %v4556, %v5177
  %v5267 = vadd.f32 %v4557, %v5182
  %v5268 = vpack.c.bf16 %v4719, %v4720
  %v5269 = vpack.c.bf16 %v4718, %v4718
  %s5270 = scalar_lea.vmem %s6, 384
  %v5271 = vld [vmem:[%s5270] sm:$0xf]
  %v5272 = vld [vmem:[%s5270 + $0x4] sm:$0xf]
  %v5273 = vld [vmem:[%s5270 + $0x8] sm:$0xf]
  %v5274 = vld [vmem:[%s5270 + $0xc] sm:$0xf]
  %v5275 = vld [vmem:[%s5270 + $0x10] sm:$0xf]
  %v5276 = vld [vmem:[%s5270 + $0x14] sm:$0xf]
  %v5277 = vld [vmem:[%s5270 + $0x18] sm:$0xf]
  %v5278 = vld [vmem:[%s5270 + $0x1c] sm:$0xf]
  %v5279 = vld [vmem:[%s5270 + $0x20] sm:$0xf]
  %v5280 = vld [vmem:[%s5270 + $0x24] sm:$0xf]
  %v5281 = vld [vmem:[%s5270 + $0x28] sm:$0xf]
  %v5282 = vld [vmem:[%s5270 + $0x2c] sm:$0xf]
  %v5283 = vld [vmem:[%s5270 + $0x30] sm:$0xf]
  %v5284 = vld [vmem:[%s5270 + $0x34] sm:$0xf]
  %v5285 = vld [vmem:[%s5270 + $0x38] sm:$0xf]
  %v5286 = vld [vmem:[%s5270 + $0x3c] sm:$0xf]
  %v5303 = vunpack.c.l.b16 %v5271
  %v5304 = vunpack.c.l.b16 %v5272
  %v5305 = vunpack.c.l.b16 %v5273
  %v5306 = vunpack.c.l.b16 %v5274
  %v5307 = vunpack.c.l.b16 %v5275
  %v5308 = vunpack.c.l.b16 %v5276
  %v5309 = vunpack.c.l.b16 %v5277
  %v5310 = vunpack.c.l.b16 %v5278
  %v5311 = vunpack.c.l.b16 %v5279
  %v5312 = vunpack.c.l.b16 %v5280
  %v5313 = vunpack.c.l.b16 %v5281
  %v5314 = vunpack.c.l.b16 %v5282
  %v5315 = vunpack.c.l.b16 %v5283
  %v5316 = vunpack.c.l.b16 %v5284
  %v5317 = vunpack.c.l.b16 %v5285
  %v5318 = vunpack.c.l.b16 %v5286
  %v5319 = vpack.c.b16 %v5304, %v5303
  %v5320 = vpack.c.b16 %v5306, %v5305
  %v5321 = vpack.c.b16 %v5308, %v5307
  %v5322 = vpack.c.b16 %v5310, %v5309
  %v5323 = vpack.c.b16 %v5312, %v5311
  %v5324 = vpack.c.b16 %v5314, %v5313
  %v5325 = vpack.c.b16 %v5316, %v5315
  %v5326 = vpack.c.b16 %v5318, %v5317
  %5335 = vmatprep.subr.bf16.mxu0 0
  %5336 = vmatpush1.bf16.msra.mxu0 %v5326
  %5337 = vmatprep.subr.bf16.mxu0 0
  %5338 = vmatpush1.bf16.msra.mxu0 %v5325
  %5339 = vmatprep.subr.bf16.mxu0 0
  %5340 = vmatpush1.bf16.msra.mxu0 %v5324
  %5341 = vmatprep.subr.bf16.mxu0 0
  %5342 = vmatpush1.bf16.msra.mxu0 %v5323
  %5343 = vmatprep.subr.bf16.mxu0 0
  %5344 = vmatpush1.bf16.msra.mxu0 %v5322
  %5345 = vmatprep.subr.bf16.mxu0 0
  %5346 = vmatpush1.bf16.msra.mxu0 %v5321
  %5347 = vmatprep.subr.bf16.mxu0 0
  %5348 = vmatpush1.bf16.msra.mxu0 %v5320
  %5349 = vmatprep.subr.bf16.mxu0 0
  %5350 = vmatpush1.bf16.msra.mxu0 %v5319
  %5351 = vmatprep.subr.bf16.mxu0 0
  %5352 = vmatpush2.bf16.msra.mxu0 0
  %5353 = vmatprep.subr.bf16.mxu0 0
  %5354 = vmatpush2.bf16.msra.mxu0 0
  %5355 = vmatprep.subr.bf16.mxu0 0
  %5356 = vmatpush2.bf16.msra.mxu0 0
  %5357 = vmatprep.subr.bf16.mxu0 0
  %5358 = vmatpush2.bf16.msra.mxu0 0
  %5359 = vmatprep.subr.bf16.mxu0 0
  %5360 = vmatpush2.bf16.msra.mxu0 0
  %5361 = vmatprep.subr.bf16.mxu0 0
  %5362 = vmatpush2.bf16.msra.mxu0 0
  %5363 = vmatprep.subr.bf16.mxu0 0
  %5364 = vmatpush2.bf16.msra.mxu0 0
  %5365 = vmatprep.subr.bf16.mxu0 0
  %5366 = vmatpush2.bf16.msra.mxu0 0
  %5367 = vmatprep.mubr.bf16.mxu0 0
  %5368 = vmatmul.mubr.bf16.gmra.mxu0 %v4722
  %v5369 = vpop.f32.mrf.mxu0
  %v5370 = vadd.f32 0.0, %v5369
  %v5371 = vpop.f32.mrf.mxu0
  %v5372 = vpop.f32.mrf.mxu0
  %v5373 = vadd.f32 0.0, %v5372
  %v5374 = vpop.f32.mrf.mxu0
  %5375 = vmatprep.mubr.bf16.mxu0 0
  %5376 = vmatmul.mubr.bf16.gmra.mxu0 %v4723
  %v5377 = vpop.f32.mrf.mxu0
  %v5378 = vadd.f32 0.0, %v5377
  %v5379 = vpop.f32.mrf.mxu0
  %v5380 = vpop.f32.mrf.mxu0
  %v5381 = vadd.f32 0.0, %v5380
  %v5382 = vpop.f32.mrf.mxu0
  %5383 = vmatprep.mubr.bf16.mxu0 0
  %5384 = vmatmul.mubr.bf16.gmra.mxu0 %v4724
  %v5385 = vpop.f32.mrf.mxu0
  %v5386 = vadd.f32 0.0, %v5385
  %v5387 = vpop.f32.mrf.mxu0
  %v5388 = vpop.f32.mrf.mxu0
  %v5389 = vadd.f32 0.0, %v5388
  %v5390 = vpop.f32.mrf.mxu0
  %5391 = vmatprep.mubr.bf16.mxu0 0
  %5392 = vmatmul.mubr.bf16.gmra.mxu0 %v4725
  %v5393 = vpop.f32.mrf.mxu0
  %v5394 = vadd.f32 0.0, %v5393
  %v5395 = vpop.f32.mrf.mxu0
  %v5396 = vpop.f32.mrf.mxu0
  %v5397 = vadd.f32 0.0, %v5396
  %v5398 = vpop.f32.mrf.mxu0
  %5399 = vmatprep.mubr.bf16.mxu0 0
  %5400 = vmatmul.mubr.bf16.gmra.mxu0 %v4726
  %v5401 = vpop.f32.mrf.mxu0
  %v5402 = vadd.f32 0.0, %v5401
  %v5403 = vpop.f32.mrf.mxu0
  %v5404 = vpop.f32.mrf.mxu0
  %v5405 = vadd.f32 0.0, %v5404
  %v5406 = vpop.f32.mrf.mxu0
  %5407 = vmatprep.mubr.bf16.mxu0 0
  %5408 = vmatmul.mubr.bf16.gmra.mxu0 %v4727
  %v5409 = vpop.f32.mrf.mxu0
  %v5410 = vadd.f32 0.0, %v5409
  %v5411 = vpop.f32.mrf.mxu0
  %v5412 = vpop.f32.mrf.mxu0
  %v5413 = vadd.f32 0.0, %v5412
  %v5414 = vpop.f32.mrf.mxu0
  %5415 = vmatprep.mubr.bf16.mxu0 0
  %5416 = vmatmul.mubr.bf16.gmra.mxu0 %v4728
  %v5417 = vpop.f32.mrf.mxu0
  %v5418 = vadd.f32 0.0, %v5417
  %v5419 = vpop.f32.mrf.mxu0
  %v5420 = vpop.f32.mrf.mxu0
  %v5421 = vadd.f32 0.0, %v5420
  %v5422 = vpop.f32.mrf.mxu0
  %5423 = vmatprep.mubr.bf16.mxu0 0
  %5424 = vmatmul.mubr.bf16.gmra.mxu0 %v4729
  %v5425 = vpop.f32.mrf.mxu0
  %v5426 = vadd.f32 0.0, %v5425
  %v5427 = vpop.f32.mrf.mxu0
  %v5428 = vpop.f32.mrf.mxu0
  %v5429 = vadd.f32 0.0, %v5428
  %v5430 = vpop.f32.mrf.mxu0
  %5431 = vmatprep.mubr.bf16.mxu0 0
  %5432 = vmatmul.mubr.bf16.gmra.mxu0 %v4730
  %v5433 = vpop.f32.mrf.mxu0
  %v5434 = vadd.f32 0.0, %v5433
  %v5435 = vpop.f32.mrf.mxu0
  %v5436 = vpop.f32.mrf.mxu0
  %v5437 = vadd.f32 0.0, %v5436
  %v5438 = vpop.f32.mrf.mxu0
  %5439 = vmatprep.mubr.bf16.mxu0 0
  %5440 = vmatmul.mubr.bf16.gmra.mxu0 %v4731
  %v5441 = vpop.f32.mrf.mxu0
  %v5442 = vadd.f32 0.0, %v5441
  %v5443 = vpop.f32.mrf.mxu0
  %v5444 = vpop.f32.mrf.mxu0
  %v5445 = vadd.f32 0.0, %v5444
  %v5446 = vpop.f32.mrf.mxu0
  %5447 = vmatprep.mubr.bf16.mxu0 0
  %5448 = vmatmul.mubr.bf16.gmra.mxu0 %v4732
  %v5449 = vpop.f32.mrf.mxu0
  %v5450 = vadd.f32 0.0, %v5449
  %v5451 = vpop.f32.mrf.mxu0
  %v5452 = vpop.f32.mrf.mxu0
  %v5453 = vadd.f32 0.0, %v5452
  %v5454 = vpop.f32.mrf.mxu0
  %5455 = vmatprep.mubr.bf16.mxu0 0
  %5456 = vmatmul.mubr.bf16.gmra.mxu0 %v4733
  %v5457 = vpop.f32.mrf.mxu0
  %v5458 = vadd.f32 0.0, %v5457
  %v5459 = vpop.f32.mrf.mxu0
  %v5460 = vpop.f32.mrf.mxu0
  %v5461 = vadd.f32 0.0, %v5460
  %v5462 = vpop.f32.mrf.mxu0
  %5463 = vmatprep.mubr.bf16.mxu0 0
  %5464 = vmatmul.mubr.bf16.gmra.mxu0 %v4734
  %v5465 = vpop.f32.mrf.mxu0
  %v5466 = vadd.f32 0.0, %v5465
  %v5467 = vpop.f32.mrf.mxu0
  %v5468 = vpop.f32.mrf.mxu0
  %v5469 = vadd.f32 0.0, %v5468
  %v5470 = vpop.f32.mrf.mxu0
  %5471 = vmatprep.mubr.bf16.mxu0 0
  %5472 = vmatmul.mubr.bf16.gmra.mxu0 %v4735
  %v5473 = vpop.f32.mrf.mxu0
  %v5474 = vadd.f32 0.0, %v5473
  %v5475 = vpop.f32.mrf.mxu0
  %v5476 = vpop.f32.mrf.mxu0
  %v5477 = vadd.f32 0.0, %v5476
  %v5478 = vpop.f32.mrf.mxu0
  %5479 = vmatprep.mubr.bf16.mxu0 0
  %5480 = vmatmul.mubr.bf16.gmra.mxu0 %v4736
  %v5481 = vpop.f32.mrf.mxu0
  %v5482 = vadd.f32 0.0, %v5481
  %v5483 = vpop.f32.mrf.mxu0
  %v5484 = vpop.f32.mrf.mxu0
  %v5485 = vadd.f32 0.0, %v5484
  %v5486 = vpop.f32.mrf.mxu0
  %5487 = vmatprep.mubr.bf16.mxu0 0
  %5488 = vmatmul.mubr.bf16.gmra.mxu0 %v4737
  %v5489 = vpop.f32.mrf.mxu0
  %v5490 = vadd.f32 0.0, %v5489
  %v5491 = vpop.f32.mrf.mxu0
  %v5492 = vpop.f32.mrf.mxu0
  %v5493 = vadd.f32 0.0, %v5492
  %v5494 = vpop.f32.mrf.mxu0
  %5495 = vmatprep.mubr.bf16.mxu0 0
  %5496 = vmatmul.mubr.bf16.gmra.mxu0 %v4738
  %v5497 = vpop.f32.mrf.mxu0
  %v5498 = vadd.f32 0.0, %v5497
  %v5499 = vpop.f32.mrf.mxu0
  %v5500 = vpop.f32.mrf.mxu0
  %v5501 = vadd.f32 0.0, %v5500
  %v5502 = vpop.f32.mrf.mxu0
  %5503 = vmatprep.mubr.bf16.mxu0 0
  %5504 = vmatmul.mubr.bf16.gmra.mxu0 %v4739
  %v5505 = vpop.f32.mrf.mxu0
  %v5506 = vadd.f32 0.0, %v5505
  %v5507 = vpop.f32.mrf.mxu0
  %v5508 = vpop.f32.mrf.mxu0
  %v5509 = vadd.f32 0.0, %v5508
  %v5510 = vpop.f32.mrf.mxu0
  %5511 = vmatprep.mubr.bf16.mxu0 0
  %5512 = vmatmul.mubr.bf16.gmra.mxu0 %v4740
  %v5513 = vpop.f32.mrf.mxu0
  %v5514 = vadd.f32 0.0, %v5513
  %v5515 = vpop.f32.mrf.mxu0
  %v5516 = vpop.f32.mrf.mxu0
  %v5517 = vadd.f32 0.0, %v5516
  %v5518 = vpop.f32.mrf.mxu0
  %5519 = vmatprep.mubr.bf16.mxu0 0
  %5520 = vmatmul.mubr.bf16.gmra.mxu0 %v4741
  %v5521 = vpop.f32.mrf.mxu0
  %v5522 = vadd.f32 0.0, %v5521
  %v5523 = vpop.f32.mrf.mxu0
  %v5524 = vpop.f32.mrf.mxu0
  %v5525 = vadd.f32 0.0, %v5524
  %v5526 = vpop.f32.mrf.mxu0
  %5527 = vmatprep.mubr.bf16.mxu0 0
  %5528 = vmatmul.mubr.bf16.gmra.mxu0 %v4742
  %v5529 = vpop.f32.mrf.mxu0
  %v5530 = vadd.f32 0.0, %v5529
  %v5531 = vpop.f32.mrf.mxu0
  %v5532 = vpop.f32.mrf.mxu0
  %v5533 = vadd.f32 0.0, %v5532
  %v5534 = vpop.f32.mrf.mxu0
  %5535 = vmatprep.mubr.bf16.mxu0 0
  %5536 = vmatmul.mubr.bf16.gmra.mxu0 %v4743
  %v5537 = vpop.f32.mrf.mxu0
  %v5538 = vadd.f32 0.0, %v5537
  %v5539 = vpop.f32.mrf.mxu0
  %v5540 = vpop.f32.mrf.mxu0
  %v5541 = vadd.f32 0.0, %v5540
  %v5542 = vpop.f32.mrf.mxu0
  %5543 = vmatprep.mubr.bf16.mxu0 0
  %5544 = vmatmul.mubr.bf16.gmra.mxu0 %v4744
  %v5545 = vpop.f32.mrf.mxu0
  %v5546 = vadd.f32 0.0, %v5545
  %v5547 = vpop.f32.mrf.mxu0
  %v5548 = vpop.f32.mrf.mxu0
  %v5549 = vadd.f32 0.0, %v5548
  %v5550 = vpop.f32.mrf.mxu0
  %5551 = vmatprep.mubr.bf16.mxu0 0
  %5552 = vmatmul.mubr.bf16.gmra.mxu0 %v4745
  %v5553 = vpop.f32.mrf.mxu0
  %v5554 = vadd.f32 0.0, %v5553
  %v5555 = vpop.f32.mrf.mxu0
  %v5556 = vpop.f32.mrf.mxu0
  %v5557 = vadd.f32 0.0, %v5556
  %v5558 = vpop.f32.mrf.mxu0
  %5559 = vmatprep.mubr.bf16.mxu0 0
  %5560 = vmatmul.mubr.bf16.gmra.mxu0 %v4746
  %v5561 = vpop.f32.mrf.mxu0
  %v5562 = vadd.f32 0.0, %v5561
  %v5563 = vpop.f32.mrf.mxu0
  %v5564 = vpop.f32.mrf.mxu0
  %v5565 = vadd.f32 0.0, %v5564
  %v5566 = vpop.f32.mrf.mxu0
  %5567 = vmatprep.mubr.bf16.mxu0 0
  %5568 = vmatmul.mubr.bf16.gmra.mxu0 %v4747
  %v5569 = vpop.f32.mrf.mxu0
  %v5570 = vadd.f32 0.0, %v5569
  %v5571 = vpop.f32.mrf.mxu0
  %v5572 = vpop.f32.mrf.mxu0
  %v5573 = vadd.f32 0.0, %v5572
  %v5574 = vpop.f32.mrf.mxu0
  %5575 = vmatprep.mubr.bf16.mxu0 0
  %5576 = vmatmul.mubr.bf16.gmra.mxu0 %v4748
  %v5577 = vpop.f32.mrf.mxu0
  %v5578 = vadd.f32 0.0, %v5577
  %v5579 = vpop.f32.mrf.mxu0
  %v5580 = vpop.f32.mrf.mxu0
  %v5581 = vadd.f32 0.0, %v5580
  %v5582 = vpop.f32.mrf.mxu0
  %5583 = vmatprep.mubr.bf16.mxu0 0
  %5584 = vmatmul.mubr.bf16.gmra.mxu0 %v4749
  %v5585 = vpop.f32.mrf.mxu0
  %v5586 = vadd.f32 0.0, %v5585
  %v5587 = vpop.f32.mrf.mxu0
  %v5588 = vpop.f32.mrf.mxu0
  %v5589 = vadd.f32 0.0, %v5588
  %v5590 = vpop.f32.mrf.mxu0
  %5591 = vmatprep.mubr.bf16.mxu0 0
  %5592 = vmatmul.mubr.bf16.gmra.mxu0 %v4750
  %v5593 = vpop.f32.mrf.mxu0
  %v5594 = vadd.f32 0.0, %v5593
  %v5595 = vpop.f32.mrf.mxu0
  %v5596 = vpop.f32.mrf.mxu0
  %v5597 = vadd.f32 0.0, %v5596
  %v5598 = vpop.f32.mrf.mxu0
  %5599 = vmatprep.mubr.bf16.mxu0 0
  %5600 = vmatmul.mubr.bf16.gmra.mxu0 %v4751
  %v5601 = vpop.f32.mrf.mxu0
  %v5602 = vadd.f32 0.0, %v5601
  %v5603 = vpop.f32.mrf.mxu0
  %v5604 = vpop.f32.mrf.mxu0
  %v5605 = vadd.f32 0.0, %v5604
  %v5606 = vpop.f32.mrf.mxu0
  %5607 = vmatprep.mubr.bf16.mxu0 0
  %5608 = vmatmul.mubr.bf16.gmra.mxu0 %v4752
  %v5609 = vpop.f32.mrf.mxu0
  %v5610 = vadd.f32 0.0, %v5609
  %v5611 = vpop.f32.mrf.mxu0
  %v5612 = vpop.f32.mrf.mxu0
  %v5613 = vadd.f32 0.0, %v5612
  %v5614 = vpop.f32.mrf.mxu0
  %5615 = vmatprep.mubr.bf16.mxu0 0
  %5616 = vmatmul.mubr.bf16.gmra.mxu0 %v4753
  %v5617 = vpop.f32.mrf.mxu0
  %v5618 = vadd.f32 0.0, %v5617
  %v5619 = vpop.f32.mrf.mxu0
  %v5620 = vpop.f32.mrf.mxu0
  %v5621 = vadd.f32 0.0, %v5620
  %v5622 = vpop.f32.mrf.mxu0
  %5623 = vmatprep.mubr.bf16.mxu0 0
  %5624 = vmatmul.mubr.bf16.gmra.mxu0 %v4754
  %v5625 = vpop.f32.mrf.mxu0
  %v5626 = vadd.f32 0.0, %v5625
  %v5627 = vpop.f32.mrf.mxu0
  %v5628 = vpop.f32.mrf.mxu0
  %v5629 = vadd.f32 0.0, %v5628
  %v5630 = vpop.f32.mrf.mxu0
  %5631 = vmatprep.mubr.bf16.mxu0 0
  %5632 = vmatmul.mubr.bf16.gmra.mxu0 %v4755
  %v5633 = vpop.f32.mrf.mxu0
  %v5634 = vadd.f32 0.0, %v5633
  %v5635 = vpop.f32.mrf.mxu0
  %v5636 = vpop.f32.mrf.mxu0
  %v5637 = vadd.f32 0.0, %v5636
  %v5638 = vpop.f32.mrf.mxu0
  %5639 = vmatprep.mubr.bf16.mxu0 0
  %5640 = vmatmul.mubr.bf16.gmra.mxu0 %v4756
  %v5641 = vpop.f32.mrf.mxu0
  %v5642 = vadd.f32 0.0, %v5641
  %v5643 = vpop.f32.mrf.mxu0
  %v5644 = vpop.f32.mrf.mxu0
  %v5645 = vadd.f32 0.0, %v5644
  %v5646 = vpop.f32.mrf.mxu0
  %5647 = vmatprep.mubr.bf16.mxu0 0
  %5648 = vmatmul.mubr.bf16.gmra.mxu0 %v4757
  %v5649 = vpop.f32.mrf.mxu0
  %v5650 = vadd.f32 0.0, %v5649
  %v5651 = vpop.f32.mrf.mxu0
  %v5652 = vpop.f32.mrf.mxu0
  %v5653 = vadd.f32 0.0, %v5652
  %v5654 = vpop.f32.mrf.mxu0
  %5655 = vmatprep.mubr.bf16.mxu0 0
  %5656 = vmatmul.mubr.bf16.gmra.mxu0 %v4758
  %v5657 = vpop.f32.mrf.mxu0
  %v5658 = vadd.f32 0.0, %v5657
  %v5659 = vpop.f32.mrf.mxu0
  %v5660 = vpop.f32.mrf.mxu0
  %v5661 = vadd.f32 0.0, %v5660
  %v5662 = vpop.f32.mrf.mxu0
  %5663 = vmatprep.mubr.bf16.mxu0 0
  %5664 = vmatmul.mubr.bf16.gmra.mxu0 %v4759
  %v5665 = vpop.f32.mrf.mxu0
  %v5666 = vadd.f32 0.0, %v5665
  %v5667 = vpop.f32.mrf.mxu0
  %v5668 = vpop.f32.mrf.mxu0
  %v5669 = vadd.f32 0.0, %v5668
  %v5670 = vpop.f32.mrf.mxu0
  %5671 = vmatprep.mubr.bf16.mxu0 0
  %5672 = vmatmul.mubr.bf16.gmra.mxu0 %v4760
  %v5673 = vpop.f32.mrf.mxu0
  %v5674 = vadd.f32 0.0, %v5673
  %v5675 = vpop.f32.mrf.mxu0
  %v5676 = vpop.f32.mrf.mxu0
  %v5677 = vadd.f32 0.0, %v5676
  %v5678 = vpop.f32.mrf.mxu0
  %5679 = vmatprep.mubr.bf16.mxu0 0
  %5680 = vmatmul.mubr.bf16.gmra.mxu0 %v5268
  %v5681 = vpop.f32.mrf.mxu0
  %v5682 = vadd.f32 0.0, %v5681
  %v5683 = vpop.f32.mrf.mxu0
  %v5684 = vpop.f32.mrf.mxu0
  %v5685 = vadd.f32 0.0, %v5684
  %v5686 = vpop.f32.mrf.mxu0
  %5687 = vmatprep.mubr.bf16.mxu0 0
  %5688 = vmatmul.mubr.bf16.gmra.mxu0 %v5269
  %v5689 = vpop.f32.mrf.mxu0
  %v5690 = vadd.f32 0.0, %v5689
  %v5691 = vpop.f32.mrf.mxu0
  %v5692 = vpop.f32.mrf.mxu0
  %v5693 = vpop.f32.mrf.mxu0
  %5694 = vdwg.mxu0
  %v5695 = vadd.f32 %v5187, %v5370
  %v5696 = vadd.f32 %v5188, %v5373
  %v5697 = vadd.f32 %v5189, %v5378
  %v5698 = vadd.f32 %v5190, %v5381
  %v5699 = vadd.f32 %v5191, %v5386
  %v5700 = vadd.f32 %v5192, %v5389
  %v5701 = vadd.f32 %v5193, %v5394
  %v5702 = vadd.f32 %v5194, %v5397
  %v5703 = vadd.f32 %v5195, %v5402
  %v5704 = vadd.f32 %v5196, %v5405
  %v5705 = vadd.f32 %v5197, %v5410
  %v5706 = vadd.f32 %v5198, %v5413
  %v5707 = vadd.f32 %v5199, %v5418
  %v5708 = vadd.f32 %v5200, %v5421
  %v5709 = vadd.f32 %v5201, %v5426
  %v5710 = vadd.f32 %v5202, %v5429
  %v5711 = vadd.f32 %v5203, %v5434
  %v5712 = vadd.f32 %v5204, %v5437
  %v5713 = vadd.f32 %v5205, %v5442
  %v5714 = vadd.f32 %v5206, %v5445
  %v5715 = vadd.f32 %v5207, %v5450
  %v5716 = vadd.f32 %v5208, %v5453
  %v5717 = vadd.f32 %v5209, %v5458
  %v5718 = vadd.f32 %v5210, %v5461
  %v5719 = vadd.f32 %v5211, %v5466
  %v5720 = vadd.f32 %v5212, %v5469
  %v5721 = vadd.f32 %v5213, %v5474
  %v5722 = vadd.f32 %v5214, %v5477
  %v5723 = vadd.f32 %v5215, %v5482
  %v5724 = vadd.f32 %v5216, %v5485
  %v5725 = vadd.f32 %v5217, %v5490
  %v5726 = vadd.f32 %v5218, %v5493
  %v5727 = vadd.f32 %v5219, %v5498
  %v5728 = vadd.f32 %v5220, %v5501
  %v5729 = vadd.f32 %v5221, %v5506
  %v5730 = vadd.f32 %v5222, %v5509
  %v5731 = vadd.f32 %v5223, %v5514
  %v5732 = vadd.f32 %v5224, %v5517
  %v5733 = vadd.f32 %v5225, %v5522
  %v5734 = vadd.f32 %v5226, %v5525
  %v5735 = vadd.f32 %v5227, %v5530
  %v5736 = vadd.f32 %v5228, %v5533
  %v5737 = vadd.f32 %v5229, %v5538
  %v5738 = vadd.f32 %v5230, %v5541
  %v5739 = vadd.f32 %v5231, %v5546
  %v5740 = vadd.f32 %v5232, %v5549
  %v5741 = vadd.f32 %v5233, %v5554
  %v5742 = vadd.f32 %v5234, %v5557
  %v5743 = vadd.f32 %v5235, %v5562
  %v5744 = vadd.f32 %v5236, %v5565
  %v5745 = vadd.f32 %v5237, %v5570
  %v5746 = vadd.f32 %v5238, %v5573
  %v5747 = vadd.f32 %v5239, %v5578
  %v5748 = vadd.f32 %v5240, %v5581
  %v5749 = vadd.f32 %v5241, %v5586
  %v5750 = vadd.f32 %v5242, %v5589
  %v5751 = vadd.f32 %v5243, %v5594
  %v5752 = vadd.f32 %v5244, %v5597
  %v5753 = vadd.f32 %v5245, %v5602
  %v5754 = vadd.f32 %v5246, %v5605
  %v5755 = vadd.f32 %v5247, %v5610
  %v5756 = vadd.f32 %v5248, %v5613
  %v5757 = vadd.f32 %v5249, %v5618
  %v5758 = vadd.f32 %v5250, %v5621
  %v5759 = vadd.f32 %v5251, %v5626
  %v5760 = vadd.f32 %v5252, %v5629
  %v5761 = vadd.f32 %v5253, %v5634
  %v5762 = vadd.f32 %v5254, %v5637
  %v5763 = vadd.f32 %v5255, %v5642
  %v5764 = vadd.f32 %v5256, %v5645
  %v5765 = vadd.f32 %v5257, %v5650
  %v5766 = vadd.f32 %v5258, %v5653
  %v5767 = vadd.f32 %v5259, %v5658
  %v5768 = vadd.f32 %v5260, %v5661
  %v5769 = vadd.f32 %v5261, %v5666
  %v5770 = vadd.f32 %v5262, %v5669
  %v5771 = vadd.f32 %v5263, %v5674
  %v5772 = vadd.f32 %v5264, %v5677
  %v5773 = vadd.f32 %v5265, %v5682
  %v5774 = vadd.f32 %v5266, %v5685
  %v5775 = vadd.f32 %v5267, %v5690
  %v5776 = vrot.slane %v1453, 2
  %v5777 = vrot.slane %v1454, 2
  %v5778 = vrot.slane %v1455, 2
  %v5779 = vrot.slane %v1456, 2
  %v5780 = vrot.slane %v1457, 2
  %v5781 = vrot.slane %v1458, 2
  %v5782 = vrot.slane %v1459, 2
  %v5783 = vrot.slane %v1460, 2
  %v5784 = vrot.slane %v1461, 2
  %v5785 = vrot.slane %v1462, 2
  %v5786 = vrot.slane %v1463, 2
  %v5787 = vrot.slane %v1464, 2
  %v5788 = vrot.slane %v1465, 2
  %v5789 = vrot.slane %v1466, 2
  %v5790 = vrot.slane %v1467, 2
  %v5791 = vrot.slane %v1468, 2
  %v5792 = vrot.slane %v1469, 2
  %v5793 = vrot.slane %v1470, 2
  %v5794 = vrot.slane %v1471, 2
  %v5795 = vrot.slane %v1472, 2
  %v5796 = vrot.slane %v1473, 2
  %v5797 = vrot.slane %v1474, 2
  %v5798 = vrot.slane %v1475, 2
  %v5799 = vrot.slane %v1476, 2
  %v5800 = vrot.slane %v1477, 2
  %v5801 = vrot.slane %v1478, 2
  %v5802 = vrot.slane %v1479, 2
  %v5803 = vrot.slane %v1480, 2
  %v5804 = vrot.slane %v1481, 2
  %v5805 = vrot.slane %v1482, 2
  %v5806 = vrot.slane %v1483, 2
  %v5807 = vrot.slane %v1484, 2
  %v5808 = vrot.slane %v1485, 2
  %v5809 = vrot.slane %v1486, 2
  %v5810 = vrot.slane %v1487, 2
  %v5811 = vrot.slane %v1488, 2
  %v5812 = vrot.slane %v1489, 2
  %v5813 = vrot.slane %v1490, 2
  %v5814 = vrot.slane %v1491, 2
  %v5815 = vrot.slane %v1492, 2
  %v5816 = vrot.slane %v1493, 2
  %v5817 = vrot.slane %v1494, 2
  %v5818 = vrot.slane %v1495, 2
  %v5819 = vrot.slane %v1496, 2
  %v5820 = vrot.slane %v1497, 2
  %v5821 = vrot.slane %v1498, 2
  %v5822 = vrot.slane %v1499, 2
  %v5823 = vrot.slane %v1500, 2
  %v5824 = vrot.slane %v1501, 2
  %v5825 = vrot.slane %v1502, 2
  %v5826 = vrot.slane %v1503, 2
  %v5827 = vrot.slane %v1504, 2
  %v5828 = vrot.slane %v1505, 2
  %v5829 = vrot.slane %v1506, 2
  %v5830 = vrot.slane %v1507, 2
  %v5831 = vrot.slane %v1508, 2
  %v5832 = vrot.slane %v1509, 2
  %v5833 = vrot.slane %v1510, 2
  %v5834 = vrot.slane %v1511, 2
  %v5835 = vrot.slane %v1512, 2
  %v5836 = vrot.slane %v1513, 2
  %v5837 = vrot.slane %v1514, 2
  %v5838 = vrot.slane %v1515, 2
  %v5839 = vrot.slane %v1516, 2
  %v5840 = vrot.slane %v1517, 2
  %v5841 = vrot.slane %v1518, 2
  %v5842 = vrot.slane %v1519, 2
  %v5843 = vrot.slane %v1520, 2
  %v5844 = vrot.slane %v1521, 2
  %v5845 = vrot.slane %v1522, 2
  %v5846 = vrot.slane %v1523, 2
  %v5847 = vrot.slane %v1524, 2
  %v5848 = vrot.slane %v1525, 2
  %v5849 = vrot.slane %v1526, 2
  %v5850 = vrot.slane %v1527, 2
  %v5851 = vrot.slane %v1528, 2
  %v5852 = vrot.slane %v1529, 2
  %v5853 = vrot.slane %v1530, 2
  %v5854 = vrot.slane %v1531, 2
  %v5855 = vrot.slane %v1532, 2
  %v5856 = vrot.slane %v1533, 2
  %vm5857 = vcmp.lt.s32.totalorder %v1616, 6
  %v5858 = vsel %vm5857, %v5855, %v5856
  %v5859 = vsel %vm5857, %v5854, %v5855
  %v5860 = vsel %vm5857, %v5853, %v5854
  %v5861 = vsel %vm5857, %v5852, %v5853
  %v5862 = vsel %vm5857, %v5851, %v5852
  %v5863 = vsel %vm5857, %v5850, %v5851
  %v5864 = vsel %vm5857, %v5849, %v5850
  %v5865 = vsel %vm5857, %v5848, %v5849
  %v5866 = vsel %vm5857, %v5847, %v5848
  %v5867 = vsel %vm5857, %v5846, %v5847
  %v5868 = vsel %vm5857, %v5845, %v5846
  %v5869 = vsel %vm5857, %v5844, %v5845
  %v5870 = vsel %vm5857, %v5843, %v5844
  %v5871 = vsel %vm5857, %v5842, %v5843
  %v5872 = vsel %vm5857, %v5841, %v5842
  %v5873 = vsel %vm5857, %v5840, %v5841
  %v5874 = vsel %vm5857, %v5839, %v5840
  %v5875 = vsel %vm5857, %v5838, %v5839
  %v5876 = vsel %vm5857, %v5837, %v5838
  %v5877 = vsel %vm5857, %v5836, %v5837
  %v5878 = vsel %vm5857, %v5835, %v5836
  %v5879 = vsel %vm5857, %v5834, %v5835
  %v5880 = vsel %vm5857, %v5833, %v5834
  %v5881 = vsel %vm5857, %v5832, %v5833
  %v5882 = vsel %vm5857, %v5831, %v5832
  %v5883 = vsel %vm5857, %v5830, %v5831
  %v5884 = vsel %vm5857, %v5829, %v5830
  %v5885 = vsel %vm5857, %v5828, %v5829
  %v5886 = vsel %vm5857, %v5827, %v5828
  %v5887 = vsel %vm5857, %v5826, %v5827
  %v5888 = vsel %vm5857, %v5825, %v5826
  %v5889 = vsel %vm5857, %v5824, %v5825
  %v5890 = vsel %vm5857, %v5823, %v5824
  %v5891 = vsel %vm5857, %v5822, %v5823
  %v5892 = vsel %vm5857, %v5821, %v5822
  %v5893 = vsel %vm5857, %v5820, %v5821
  %v5894 = vsel %vm5857, %v5819, %v5820
  %v5895 = vsel %vm5857, %v5818, %v5819
  %v5896 = vsel %vm5857, %v5817, %v5818
  %v5897 = vsel %vm5857, %v5816, %v5817
  %v5898 = vsel %vm5857, %v5815, %v5816
  %v5899 = vsel %vm5857, %v5814, %v5815
  %v5900 = vsel %vm5857, %v5813, %v5814
  %v5901 = vsel %vm5857, %v5812, %v5813
  %v5902 = vsel %vm5857, %v5811, %v5812
  %v5903 = vsel %vm5857, %v5810, %v5811
  %v5904 = vsel %vm5857, %v5809, %v5810
  %v5905 = vsel %vm5857, %v5808, %v5809
  %v5906 = vsel %vm5857, %v5807, %v5808
  %v5907 = vsel %vm5857, %v5806, %v5807
  %v5908 = vsel %vm5857, %v5805, %v5806
  %v5909 = vsel %vm5857, %v5804, %v5805
  %v5910 = vsel %vm5857, %v5803, %v5804
  %v5911 = vsel %vm5857, %v5802, %v5803
  %v5912 = vsel %vm5857, %v5801, %v5802
  %v5913 = vsel %vm5857, %v5800, %v5801
  %v5914 = vsel %vm5857, %v5799, %v5800
  %v5915 = vsel %vm5857, %v5798, %v5799
  %v5916 = vsel %vm5857, %v5797, %v5798
  %v5917 = vsel %vm5857, %v5796, %v5797
  %v5918 = vsel %vm5857, %v5795, %v5796
  %v5919 = vsel %vm5857, %v5794, %v5795
  %v5920 = vsel %vm5857, %v5793, %v5794
  %v5921 = vsel %vm5857, %v5792, %v5793
  %v5922 = vsel %vm5857, %v5791, %v5792
  %v5923 = vsel %vm5857, %v5790, %v5791
  %v5924 = vsel %vm5857, %v5789, %v5790
  %v5925 = vsel %vm5857, %v5788, %v5789
  %v5926 = vsel %vm5857, %v5787, %v5788
  %v5927 = vsel %vm5857, %v5786, %v5787
  %v5928 = vsel %vm5857, %v5785, %v5786
  %v5929 = vsel %vm5857, %v5784, %v5785
  %v5930 = vsel %vm5857, %v5783, %v5784
  %v5931 = vsel %vm5857, %v5782, %v5783
  %v5932 = vsel %vm5857, %v5781, %v5782
  %v5933 = vsel %vm5857, %v5780, %v5781
  %v5934 = vsel %vm5857, %v5779, %v5780
  %v5935 = vsel %vm5857, %v5778, %v5779
  %v5936 = vsel %vm5857, %v5777, %v5778
  %v5937 = vsel %vm5857, %v5776, %v5777
  %v5938 = vsel %vm5857, %v5856, %v5776
  %v5939 = vpack.c.bf16 %v5934, %v5935
  %v5940 = vpack.c.bf16 %v5932, %v5933
  %v5941 = vpack.c.bf16 %v5930, %v5931
  %v5942 = vpack.c.bf16 %v5928, %v5929
  %v5943 = vpack.c.bf16 %v5926, %v5927
  %v5944 = vpack.c.bf16 %v5924, %v5925
  %v5945 = vpack.c.bf16 %v5922, %v5923
  %v5946 = vpack.c.bf16 %v5920, %v5921
  %v5947 = vpack.c.bf16 %v5918, %v5919
  %v5948 = vpack.c.bf16 %v5916, %v5917
  %v5949 = vpack.c.bf16 %v5914, %v5915
  %v5950 = vpack.c.bf16 %v5912, %v5913
  %v5951 = vpack.c.bf16 %v5910, %v5911
  %v5952 = vpack.c.bf16 %v5908, %v5909
  %v5953 = vpack.c.bf16 %v5906, %v5907
  %v5954 = vpack.c.bf16 %v5904, %v5905
  %v5955 = vpack.c.bf16 %v5902, %v5903
  %v5956 = vpack.c.bf16 %v5900, %v5901
  %v5957 = vpack.c.bf16 %v5898, %v5899
  %v5958 = vpack.c.bf16 %v5896, %v5897
  %v5959 = vpack.c.bf16 %v5894, %v5895
  %v5960 = vpack.c.bf16 %v5892, %v5893
  %v5961 = vpack.c.bf16 %v5890, %v5891
  %v5962 = vpack.c.bf16 %v5888, %v5889
  %v5963 = vpack.c.bf16 %v5886, %v5887
  %v5964 = vpack.c.bf16 %v5884, %v5885
  %v5965 = vpack.c.bf16 %v5882, %v5883
  %v5966 = vpack.c.bf16 %v5880, %v5881
  %v5967 = vpack.c.bf16 %v5878, %v5879
  %v5968 = vpack.c.bf16 %v5876, %v5877
  %v5969 = vpack.c.bf16 %v5874, %v5875
  %v5970 = vpack.c.bf16 %v5872, %v5873
  %v5971 = vpack.c.bf16 %v5870, %v5871
  %v5972 = vpack.c.bf16 %v5868, %v5869
  %v5973 = vpack.c.bf16 %v5866, %v5867
  %v5974 = vpack.c.bf16 %v5864, %v5865
  %v5975 = vpack.c.bf16 %v5862, %v5863
  %v5976 = vpack.c.bf16 %v5860, %v5861
  %v5977 = vpack.c.bf16 %v5858, %v5859
  %v5978 = vpack.c.bf16 %v5937, %v5938
  %v5979 = vpack.c.bf16 %v5936, %v5936
  %s5980 = scalar_lea.vmem %s6, 448
  %v5981 = vld [vmem:[%s5980] sm:$0xf]
  %v5982 = vld [vmem:[%s5980 + $0x4] sm:$0xf]
  %v5983 = vld [vmem:[%s5980 + $0x8] sm:$0xf]
  %v5984 = vld [vmem:[%s5980 + $0xc] sm:$0xf]
  %v5985 = vld [vmem:[%s5980 + $0x10] sm:$0xf]
  %v5986 = vld [vmem:[%s5980 + $0x14] sm:$0xf]
  %v5987 = vld [vmem:[%s5980 + $0x18] sm:$0xf]
  %v5988 = vld [vmem:[%s5980 + $0x1c] sm:$0xf]
  %v5989 = vld [vmem:[%s5980 + $0x20] sm:$0xf]
  %v5990 = vld [vmem:[%s5980 + $0x24] sm:$0xf]
  %v5991 = vld [vmem:[%s5980 + $0x28] sm:$0xf]
  %v5992 = vld [vmem:[%s5980 + $0x2c] sm:$0xf]
  %v5993 = vld [vmem:[%s5980 + $0x30] sm:$0xf]
  %v5994 = vld [vmem:[%s5980 + $0x34] sm:$0xf]
  %v5995 = vld [vmem:[%s5980 + $0x38] sm:$0xf]
  %v5996 = vld [vmem:[%s5980 + $0x3c] sm:$0xf]
  %v6013 = vunpack.c.l.b16 %v5981
  %v6014 = vunpack.c.l.b16 %v5982
  %v6015 = vunpack.c.l.b16 %v5983
  %v6016 = vunpack.c.l.b16 %v5984
  %v6017 = vunpack.c.l.b16 %v5985
  %v6018 = vunpack.c.l.b16 %v5986
  %v6019 = vunpack.c.l.b16 %v5987
  %v6020 = vunpack.c.l.b16 %v5988
  %v6021 = vunpack.c.l.b16 %v5989
  %v6022 = vunpack.c.l.b16 %v5990
  %v6023 = vunpack.c.l.b16 %v5991
  %v6024 = vunpack.c.l.b16 %v5992
  %v6025 = vunpack.c.l.b16 %v5993
  %v6026 = vunpack.c.l.b16 %v5994
  %v6027 = vunpack.c.l.b16 %v5995
  %v6028 = vunpack.c.l.b16 %v5996
  %v6029 = vpack.c.b16 %v6014, %v6013
  %v6030 = vpack.c.b16 %v6016, %v6015
  %v6031 = vpack.c.b16 %v6018, %v6017
  %v6032 = vpack.c.b16 %v6020, %v6019
  %v6033 = vpack.c.b16 %v6022, %v6021
  %v6034 = vpack.c.b16 %v6024, %v6023
  %v6035 = vpack.c.b16 %v6026, %v6025
  %v6036 = vpack.c.b16 %v6028, %v6027
  %6045 = vmatprep.subr.bf16.mxu0 0
  %6046 = vmatpush1.bf16.msra.mxu0 %v6036
  %6047 = vmatprep.subr.bf16.mxu0 0
  %6048 = vmatpush1.bf16.msra.mxu0 %v6035
  %6049 = vmatprep.subr.bf16.mxu0 0
  %6050 = vmatpush1.bf16.msra.mxu0 %v6034
  %6051 = vmatprep.subr.bf16.mxu0 0
  %6052 = vmatpush1.bf16.msra.mxu0 %v6033
  %6053 = vmatprep.subr.bf16.mxu0 0
  %6054 = vmatpush1.bf16.msra.mxu0 %v6032
  %6055 = vmatprep.subr.bf16.mxu0 0
  %6056 = vmatpush1.bf16.msra.mxu0 %v6031
  %6057 = vmatprep.subr.bf16.mxu0 0
  %6058 = vmatpush1.bf16.msra.mxu0 %v6030
  %6059 = vmatprep.subr.bf16.mxu0 0
  %6060 = vmatpush1.bf16.msra.mxu0 %v6029
  %6061 = vmatprep.subr.bf16.mxu0 0
  %6062 = vmatpush2.bf16.msra.mxu0 0
  %6063 = vmatprep.subr.bf16.mxu0 0
  %6064 = vmatpush2.bf16.msra.mxu0 0
  %6065 = vmatprep.subr.bf16.mxu0 0
  %6066 = vmatpush2.bf16.msra.mxu0 0
  %6067 = vmatprep.subr.bf16.mxu0 0
  %6068 = vmatpush2.bf16.msra.mxu0 0
  %6069 = vmatprep.subr.bf16.mxu0 0
  %6070 = vmatpush2.bf16.msra.mxu0 0
  %6071 = vmatprep.subr.bf16.mxu0 0
  %6072 = vmatpush2.bf16.msra.mxu0 0
  %6073 = vmatprep.subr.bf16.mxu0 0
  %6074 = vmatpush2.bf16.msra.mxu0 0
  %6075 = vmatprep.subr.bf16.mxu0 0
  %6076 = vmatpush2.bf16.msra.mxu0 0
  %6077 = vmatprep.mubr.bf16.mxu0 0
  %6078 = vmatmul.mubr.bf16.gmra.mxu0 %v5939
  %v6079 = vpop.f32.mrf.mxu0
  %v6080 = vadd.f32 0.0, %v6079
  %v6081 = vpop.f32.mrf.mxu0
  %v6082 = vpop.f32.mrf.mxu0
  %v6083 = vadd.f32 0.0, %v6082
  %v6084 = vpop.f32.mrf.mxu0
  %6085 = vmatprep.mubr.bf16.mxu0 0
  %6086 = vmatmul.mubr.bf16.gmra.mxu0 %v5940
  %v6087 = vpop.f32.mrf.mxu0
  %v6088 = vadd.f32 0.0, %v6087
  %v6089 = vpop.f32.mrf.mxu0
  %v6090 = vpop.f32.mrf.mxu0
  %v6091 = vadd.f32 0.0, %v6090
  %v6092 = vpop.f32.mrf.mxu0
  %6093 = vmatprep.mubr.bf16.mxu0 0
  %6094 = vmatmul.mubr.bf16.gmra.mxu0 %v5941
  %v6095 = vpop.f32.mrf.mxu0
  %v6096 = vadd.f32 0.0, %v6095
  %v6097 = vpop.f32.mrf.mxu0
  %v6098 = vpop.f32.mrf.mxu0
  %v6099 = vadd.f32 0.0, %v6098
  %v6100 = vpop.f32.mrf.mxu0
  %6101 = vmatprep.mubr.bf16.mxu0 0
  %6102 = vmatmul.mubr.bf16.gmra.mxu0 %v5942
  %v6103 = vpop.f32.mrf.mxu0
  %v6104 = vadd.f32 0.0, %v6103
  %v6105 = vpop.f32.mrf.mxu0
  %v6106 = vpop.f32.mrf.mxu0
  %v6107 = vadd.f32 0.0, %v6106
  %v6108 = vpop.f32.mrf.mxu0
  %6109 = vmatprep.mubr.bf16.mxu0 0
  %6110 = vmatmul.mubr.bf16.gmra.mxu0 %v5943
  %v6111 = vpop.f32.mrf.mxu0
  %v6112 = vadd.f32 0.0, %v6111
  %v6113 = vpop.f32.mrf.mxu0
  %v6114 = vpop.f32.mrf.mxu0
  %v6115 = vadd.f32 0.0, %v6114
  %v6116 = vpop.f32.mrf.mxu0
  %6117 = vmatprep.mubr.bf16.mxu0 0
  %6118 = vmatmul.mubr.bf16.gmra.mxu0 %v5944
  %v6119 = vpop.f32.mrf.mxu0
  %v6120 = vadd.f32 0.0, %v6119
  %v6121 = vpop.f32.mrf.mxu0
  %v6122 = vpop.f32.mrf.mxu0
  %v6123 = vadd.f32 0.0, %v6122
  %v6124 = vpop.f32.mrf.mxu0
  %6125 = vmatprep.mubr.bf16.mxu0 0
  %6126 = vmatmul.mubr.bf16.gmra.mxu0 %v5945
  %v6127 = vpop.f32.mrf.mxu0
  %v6128 = vadd.f32 0.0, %v6127
  %v6129 = vpop.f32.mrf.mxu0
  %v6130 = vpop.f32.mrf.mxu0
  %v6131 = vadd.f32 0.0, %v6130
  %v6132 = vpop.f32.mrf.mxu0
  %6133 = vmatprep.mubr.bf16.mxu0 0
  %6134 = vmatmul.mubr.bf16.gmra.mxu0 %v5946
  %v6135 = vpop.f32.mrf.mxu0
  %v6136 = vadd.f32 0.0, %v6135
  %v6137 = vpop.f32.mrf.mxu0
  %v6138 = vpop.f32.mrf.mxu0
  %v6139 = vadd.f32 0.0, %v6138
  %v6140 = vpop.f32.mrf.mxu0
  %6141 = vmatprep.mubr.bf16.mxu0 0
  %6142 = vmatmul.mubr.bf16.gmra.mxu0 %v5947
  %v6143 = vpop.f32.mrf.mxu0
  %v6144 = vadd.f32 0.0, %v6143
  %v6145 = vpop.f32.mrf.mxu0
  %v6146 = vpop.f32.mrf.mxu0
  %v6147 = vadd.f32 0.0, %v6146
  %v6148 = vpop.f32.mrf.mxu0
  %6149 = vmatprep.mubr.bf16.mxu0 0
  %6150 = vmatmul.mubr.bf16.gmra.mxu0 %v5948
  %v6151 = vpop.f32.mrf.mxu0
  %v6152 = vadd.f32 0.0, %v6151
  %v6153 = vpop.f32.mrf.mxu0
  %v6154 = vpop.f32.mrf.mxu0
  %v6155 = vadd.f32 0.0, %v6154
  %v6156 = vpop.f32.mrf.mxu0
  %6157 = vmatprep.mubr.bf16.mxu0 0
  %6158 = vmatmul.mubr.bf16.gmra.mxu0 %v5949
  %v6159 = vpop.f32.mrf.mxu0
  %v6160 = vadd.f32 0.0, %v6159
  %v6161 = vpop.f32.mrf.mxu0
  %v6162 = vpop.f32.mrf.mxu0
  %v6163 = vadd.f32 0.0, %v6162
  %v6164 = vpop.f32.mrf.mxu0
  %6165 = vmatprep.mubr.bf16.mxu0 0
  %6166 = vmatmul.mubr.bf16.gmra.mxu0 %v5950
  %v6167 = vpop.f32.mrf.mxu0
  %v6168 = vadd.f32 0.0, %v6167
  %v6169 = vpop.f32.mrf.mxu0
  %v6170 = vpop.f32.mrf.mxu0
  %v6171 = vadd.f32 0.0, %v6170
  %v6172 = vpop.f32.mrf.mxu0
  %6173 = vmatprep.mubr.bf16.mxu0 0
  %6174 = vmatmul.mubr.bf16.gmra.mxu0 %v5951
  %v6175 = vpop.f32.mrf.mxu0
  %v6176 = vadd.f32 0.0, %v6175
  %v6177 = vpop.f32.mrf.mxu0
  %v6178 = vpop.f32.mrf.mxu0
  %v6179 = vadd.f32 0.0, %v6178
  %v6180 = vpop.f32.mrf.mxu0
  %6181 = vmatprep.mubr.bf16.mxu0 0
  %6182 = vmatmul.mubr.bf16.gmra.mxu0 %v5952
  %v6183 = vpop.f32.mrf.mxu0
  %v6184 = vadd.f32 0.0, %v6183
  %v6185 = vpop.f32.mrf.mxu0
  %v6186 = vpop.f32.mrf.mxu0
  %v6187 = vadd.f32 0.0, %v6186
  %v6188 = vpop.f32.mrf.mxu0
  %6189 = vmatprep.mubr.bf16.mxu0 0
  %6190 = vmatmul.mubr.bf16.gmra.mxu0 %v5953
  %v6191 = vpop.f32.mrf.mxu0
  %v6192 = vadd.f32 0.0, %v6191
  %v6193 = vpop.f32.mrf.mxu0
  %v6194 = vpop.f32.mrf.mxu0
  %v6195 = vadd.f32 0.0, %v6194
  %v6196 = vpop.f32.mrf.mxu0
  %6197 = vmatprep.mubr.bf16.mxu0 0
  %6198 = vmatmul.mubr.bf16.gmra.mxu0 %v5954
  %v6199 = vpop.f32.mrf.mxu0
  %v6200 = vadd.f32 0.0, %v6199
  %v6201 = vpop.f32.mrf.mxu0
  %v6202 = vpop.f32.mrf.mxu0
  %v6203 = vadd.f32 0.0, %v6202
  %v6204 = vpop.f32.mrf.mxu0
  %6205 = vmatprep.mubr.bf16.mxu0 0
  %6206 = vmatmul.mubr.bf16.gmra.mxu0 %v5955
  %v6207 = vpop.f32.mrf.mxu0
  %v6208 = vadd.f32 0.0, %v6207
  %v6209 = vpop.f32.mrf.mxu0
  %v6210 = vpop.f32.mrf.mxu0
  %v6211 = vadd.f32 0.0, %v6210
  %v6212 = vpop.f32.mrf.mxu0
  %6213 = vmatprep.mubr.bf16.mxu0 0
  %6214 = vmatmul.mubr.bf16.gmra.mxu0 %v5956
  %v6215 = vpop.f32.mrf.mxu0
  %v6216 = vadd.f32 0.0, %v6215
  %v6217 = vpop.f32.mrf.mxu0
  %v6218 = vpop.f32.mrf.mxu0
  %v6219 = vadd.f32 0.0, %v6218
  %v6220 = vpop.f32.mrf.mxu0
  %6221 = vmatprep.mubr.bf16.mxu0 0
  %6222 = vmatmul.mubr.bf16.gmra.mxu0 %v5957
  %v6223 = vpop.f32.mrf.mxu0
  %v6224 = vadd.f32 0.0, %v6223
  %v6225 = vpop.f32.mrf.mxu0
  %v6226 = vpop.f32.mrf.mxu0
  %v6227 = vadd.f32 0.0, %v6226
  %v6228 = vpop.f32.mrf.mxu0
  %6229 = vmatprep.mubr.bf16.mxu0 0
  %6230 = vmatmul.mubr.bf16.gmra.mxu0 %v5958
  %v6231 = vpop.f32.mrf.mxu0
  %v6232 = vadd.f32 0.0, %v6231
  %v6233 = vpop.f32.mrf.mxu0
  %v6234 = vpop.f32.mrf.mxu0
  %v6235 = vadd.f32 0.0, %v6234
  %v6236 = vpop.f32.mrf.mxu0
  %6237 = vmatprep.mubr.bf16.mxu0 0
  %6238 = vmatmul.mubr.bf16.gmra.mxu0 %v5959
  %v6239 = vpop.f32.mrf.mxu0
  %v6240 = vadd.f32 0.0, %v6239
  %v6241 = vpop.f32.mrf.mxu0
  %v6242 = vpop.f32.mrf.mxu0
  %v6243 = vadd.f32 0.0, %v6242
  %v6244 = vpop.f32.mrf.mxu0
  %6245 = vmatprep.mubr.bf16.mxu0 0
  %6246 = vmatmul.mubr.bf16.gmra.mxu0 %v5960
  %v6247 = vpop.f32.mrf.mxu0
  %v6248 = vadd.f32 0.0, %v6247
  %v6249 = vpop.f32.mrf.mxu0
  %v6250 = vpop.f32.mrf.mxu0
  %v6251 = vadd.f32 0.0, %v6250
  %v6252 = vpop.f32.mrf.mxu0
  %6253 = vmatprep.mubr.bf16.mxu0 0
  %6254 = vmatmul.mubr.bf16.gmra.mxu0 %v5961
  %v6255 = vpop.f32.mrf.mxu0
  %v6256 = vadd.f32 0.0, %v6255
  %v6257 = vpop.f32.mrf.mxu0
  %v6258 = vpop.f32.mrf.mxu0
  %v6259 = vadd.f32 0.0, %v6258
  %v6260 = vpop.f32.mrf.mxu0
  %6261 = vmatprep.mubr.bf16.mxu0 0
  %6262 = vmatmul.mubr.bf16.gmra.mxu0 %v5962
  %v6263 = vpop.f32.mrf.mxu0
  %v6264 = vadd.f32 0.0, %v6263
  %v6265 = vpop.f32.mrf.mxu0
  %v6266 = vpop.f32.mrf.mxu0
  %v6267 = vadd.f32 0.0, %v6266
  %v6268 = vpop.f32.mrf.mxu0
  %6269 = vmatprep.mubr.bf16.mxu0 0
  %6270 = vmatmul.mubr.bf16.gmra.mxu0 %v5963
  %v6271 = vpop.f32.mrf.mxu0
  %v6272 = vadd.f32 0.0, %v6271
  %v6273 = vpop.f32.mrf.mxu0
  %v6274 = vpop.f32.mrf.mxu0
  %v6275 = vadd.f32 0.0, %v6274
  %v6276 = vpop.f32.mrf.mxu0
  %6277 = vmatprep.mubr.bf16.mxu0 0
  %6278 = vmatmul.mubr.bf16.gmra.mxu0 %v5964
  %v6279 = vpop.f32.mrf.mxu0
  %v6280 = vadd.f32 0.0, %v6279
  %v6281 = vpop.f32.mrf.mxu0
  %v6282 = vpop.f32.mrf.mxu0
  %v6283 = vadd.f32 0.0, %v6282
  %v6284 = vpop.f32.mrf.mxu0
  %6285 = vmatprep.mubr.bf16.mxu0 0
  %6286 = vmatmul.mubr.bf16.gmra.mxu0 %v5965
  %v6287 = vpop.f32.mrf.mxu0
  %v6288 = vadd.f32 0.0, %v6287
  %v6289 = vpop.f32.mrf.mxu0
  %v6290 = vpop.f32.mrf.mxu0
  %v6291 = vadd.f32 0.0, %v6290
  %v6292 = vpop.f32.mrf.mxu0
  %6293 = vmatprep.mubr.bf16.mxu0 0
  %6294 = vmatmul.mubr.bf16.gmra.mxu0 %v5966
  %v6295 = vpop.f32.mrf.mxu0
  %v6296 = vadd.f32 0.0, %v6295
  %v6297 = vpop.f32.mrf.mxu0
  %v6298 = vpop.f32.mrf.mxu0
  %v6299 = vadd.f32 0.0, %v6298
  %v6300 = vpop.f32.mrf.mxu0
  %6301 = vmatprep.mubr.bf16.mxu0 0
  %6302 = vmatmul.mubr.bf16.gmra.mxu0 %v5967
  %v6303 = vpop.f32.mrf.mxu0
  %v6304 = vadd.f32 0.0, %v6303
  %v6305 = vpop.f32.mrf.mxu0
  %v6306 = vpop.f32.mrf.mxu0
  %v6307 = vadd.f32 0.0, %v6306
  %v6308 = vpop.f32.mrf.mxu0
  %6309 = vmatprep.mubr.bf16.mxu0 0
  %6310 = vmatmul.mubr.bf16.gmra.mxu0 %v5968
  %v6311 = vpop.f32.mrf.mxu0
  %v6312 = vadd.f32 0.0, %v6311
  %v6313 = vpop.f32.mrf.mxu0
  %v6314 = vpop.f32.mrf.mxu0
  %v6315 = vadd.f32 0.0, %v6314
  %v6316 = vpop.f32.mrf.mxu0
  %6317 = vmatprep.mubr.bf16.mxu0 0
  %6318 = vmatmul.mubr.bf16.gmra.mxu0 %v5969
  %v6319 = vpop.f32.mrf.mxu0
  %v6320 = vadd.f32 0.0, %v6319
  %v6321 = vpop.f32.mrf.mxu0
  %v6322 = vpop.f32.mrf.mxu0
  %v6323 = vadd.f32 0.0, %v6322
  %v6324 = vpop.f32.mrf.mxu0
  %6325 = vmatprep.mubr.bf16.mxu0 0
  %6326 = vmatmul.mubr.bf16.gmra.mxu0 %v5970
  %v6327 = vpop.f32.mrf.mxu0
  %v6328 = vadd.f32 0.0, %v6327
  %v6329 = vpop.f32.mrf.mxu0
  %v6330 = vpop.f32.mrf.mxu0
  %v6331 = vadd.f32 0.0, %v6330
  %v6332 = vpop.f32.mrf.mxu0
  %6333 = vmatprep.mubr.bf16.mxu0 0
  %6334 = vmatmul.mubr.bf16.gmra.mxu0 %v5971
  %v6335 = vpop.f32.mrf.mxu0
  %v6336 = vadd.f32 0.0, %v6335
  %v6337 = vpop.f32.mrf.mxu0
  %v6338 = vpop.f32.mrf.mxu0
  %v6339 = vadd.f32 0.0, %v6338
  %v6340 = vpop.f32.mrf.mxu0
  %6341 = vmatprep.mubr.bf16.mxu0 0
  %6342 = vmatmul.mubr.bf16.gmra.mxu0 %v5972
  %v6343 = vpop.f32.mrf.mxu0
  %v6344 = vadd.f32 0.0, %v6343
  %v6345 = vpop.f32.mrf.mxu0
  %v6346 = vpop.f32.mrf.mxu0
  %v6347 = vadd.f32 0.0, %v6346
  %v6348 = vpop.f32.mrf.mxu0
  %6349 = vmatprep.mubr.bf16.mxu0 0
  %6350 = vmatmul.mubr.bf16.gmra.mxu0 %v5973
  %v6351 = vpop.f32.mrf.mxu0
  %v6352 = vadd.f32 0.0, %v6351
  %v6353 = vpop.f32.mrf.mxu0
  %v6354 = vpop.f32.mrf.mxu0
  %v6355 = vadd.f32 0.0, %v6354
  %v6356 = vpop.f32.mrf.mxu0
  %6357 = vmatprep.mubr.bf16.mxu0 0
  %6358 = vmatmul.mubr.bf16.gmra.mxu0 %v5974
  %v6359 = vpop.f32.mrf.mxu0
  %v6360 = vadd.f32 0.0, %v6359
  %v6361 = vpop.f32.mrf.mxu0
  %v6362 = vpop.f32.mrf.mxu0
  %v6363 = vadd.f32 0.0, %v6362
  %v6364 = vpop.f32.mrf.mxu0
  %6365 = vmatprep.mubr.bf16.mxu0 0
  %6366 = vmatmul.mubr.bf16.gmra.mxu0 %v5975
  %v6367 = vpop.f32.mrf.mxu0
  %v6368 = vadd.f32 0.0, %v6367
  %v6369 = vpop.f32.mrf.mxu0
  %v6370 = vpop.f32.mrf.mxu0
  %v6371 = vadd.f32 0.0, %v6370
  %v6372 = vpop.f32.mrf.mxu0
  %6373 = vmatprep.mubr.bf16.mxu0 0
  %6374 = vmatmul.mubr.bf16.gmra.mxu0 %v5976
  %v6375 = vpop.f32.mrf.mxu0
  %v6376 = vadd.f32 0.0, %v6375
  %v6377 = vpop.f32.mrf.mxu0
  %v6378 = vpop.f32.mrf.mxu0
  %v6379 = vadd.f32 0.0, %v6378
  %v6380 = vpop.f32.mrf.mxu0
  %6381 = vmatprep.mubr.bf16.mxu0 0
  %6382 = vmatmul.mubr.bf16.gmra.mxu0 %v5977
  %v6383 = vpop.f32.mrf.mxu0
  %v6384 = vadd.f32 0.0, %v6383
  %v6385 = vpop.f32.mrf.mxu0
  %v6386 = vpop.f32.mrf.mxu0
  %v6387 = vadd.f32 0.0, %v6386
  %v6388 = vpop.f32.mrf.mxu0
  %6389 = vmatprep.mubr.bf16.mxu0 0
  %6390 = vmatmul.mubr.bf16.gmra.mxu0 %v5978
  %v6391 = vpop.f32.mrf.mxu0
  %v6392 = vadd.f32 0.0, %v6391
  %v6393 = vpop.f32.mrf.mxu0
  %v6394 = vpop.f32.mrf.mxu0
  %v6395 = vadd.f32 0.0, %v6394
  %v6396 = vpop.f32.mrf.mxu0
  %6397 = vmatprep.mubr.bf16.mxu0 0
  %6398 = vmatmul.mubr.bf16.gmra.mxu0 %v5979
  %v6399 = vpop.f32.mrf.mxu0
  %v6400 = vadd.f32 0.0, %v6399
  %v6401 = vpop.f32.mrf.mxu0
  %v6402 = vpop.f32.mrf.mxu0
  %v6403 = vpop.f32.mrf.mxu0
  %6404 = vdwg.mxu0
  %v6405 = vadd.f32 %v5695, %v6080
  %v6406 = vadd.f32 %v5696, %v6083
  %v6407 = vadd.f32 %v5697, %v6088
  %v6408 = vadd.f32 %v5698, %v6091
  %v6409 = vadd.f32 %v5699, %v6096
  %v6410 = vadd.f32 %v5700, %v6099
  %v6411 = vadd.f32 %v5701, %v6104
  %v6412 = vadd.f32 %v5702, %v6107
  %v6413 = vadd.f32 %v5703, %v6112
  %v6414 = vadd.f32 %v5704, %v6115
  %v6415 = vadd.f32 %v5705, %v6120
  %v6416 = vadd.f32 %v5706, %v6123
  %v6417 = vadd.f32 %v5707, %v6128
  %v6418 = vadd.f32 %v5708, %v6131
  %v6419 = vadd.f32 %v5709, %v6136
  %v6420 = vadd.f32 %v5710, %v6139
  %v6421 = vadd.f32 %v5711, %v6144
  %v6422 = vadd.f32 %v5712, %v6147
  %v6423 = vadd.f32 %v5713, %v6152
  %v6424 = vadd.f32 %v5714, %v6155
  %v6425 = vadd.f32 %v5715, %v6160
  %v6426 = vadd.f32 %v5716, %v6163
  %v6427 = vadd.f32 %v5717, %v6168
  %v6428 = vadd.f32 %v5718, %v6171
  %v6429 = vadd.f32 %v5719, %v6176
  %v6430 = vadd.f32 %v5720, %v6179
  %v6431 = vadd.f32 %v5721, %v6184
  %v6432 = vadd.f32 %v5722, %v6187
  %v6433 = vadd.f32 %v5723, %v6192
  %v6434 = vadd.f32 %v5724, %v6195
  %v6435 = vadd.f32 %v5725, %v6200
  %v6436 = vadd.f32 %v5726, %v6203
  %v6437 = vadd.f32 %v5727, %v6208
  %v6438 = vadd.f32 %v5728, %v6211
  %v6439 = vadd.f32 %v5729, %v6216
  %v6440 = vadd.f32 %v5730, %v6219
  %v6441 = vadd.f32 %v5731, %v6224
  %v6442 = vadd.f32 %v5732, %v6227
  %v6443 = vadd.f32 %v5733, %v6232
  %v6444 = vadd.f32 %v5734, %v6235
  %v6445 = vadd.f32 %v5735, %v6240
  %v6446 = vadd.f32 %v5736, %v6243
  %v6447 = vadd.f32 %v5737, %v6248
  %v6448 = vadd.f32 %v5738, %v6251
  %v6449 = vadd.f32 %v5739, %v6256
  %v6450 = vadd.f32 %v5740, %v6259
  %v6451 = vadd.f32 %v5741, %v6264
  %v6452 = vadd.f32 %v5742, %v6267
  %v6453 = vadd.f32 %v5743, %v6272
  %v6454 = vadd.f32 %v5744, %v6275
  %v6455 = vadd.f32 %v5745, %v6280
  %v6456 = vadd.f32 %v5746, %v6283
  %v6457 = vadd.f32 %v5747, %v6288
  %v6458 = vadd.f32 %v5748, %v6291
  %v6459 = vadd.f32 %v5749, %v6296
  %v6460 = vadd.f32 %v5750, %v6299
  %v6461 = vadd.f32 %v5751, %v6304
  %v6462 = vadd.f32 %v5752, %v6307
  %v6463 = vadd.f32 %v5753, %v6312
  %v6464 = vadd.f32 %v5754, %v6315
  %v6465 = vadd.f32 %v5755, %v6320
  %v6466 = vadd.f32 %v5756, %v6323
  %v6467 = vadd.f32 %v5757, %v6328
  %v6468 = vadd.f32 %v5758, %v6331
  %v6469 = vadd.f32 %v5759, %v6336
  %v6470 = vadd.f32 %v5760, %v6339
  %v6471 = vadd.f32 %v5761, %v6344
  %v6472 = vadd.f32 %v5762, %v6347
  %v6473 = vadd.f32 %v5763, %v6352
  %v6474 = vadd.f32 %v5764, %v6355
  %v6475 = vadd.f32 %v5765, %v6360
  %v6476 = vadd.f32 %v5766, %v6363
  %v6477 = vadd.f32 %v5767, %v6368
  %v6478 = vadd.f32 %v5768, %v6371
  %v6479 = vadd.f32 %v5769, %v6376
  %v6480 = vadd.f32 %v5770, %v6379
  %v6481 = vadd.f32 %v5771, %v6384
  %v6482 = vadd.f32 %v5772, %v6387
  %v6483 = vadd.f32 %v5773, %v6392
  %v6484 = vadd.f32 %v5774, %v6395
  %v6485 = vadd.f32 %v5775, %v6400
  %v6486 = vrot.slane %v1453, 3
  %v6487 = vrot.slane %v1454, 3
  %v6488 = vrot.slane %v1455, 3
  %v6489 = vrot.slane %v1456, 3
  %v6490 = vrot.slane %v1457, 3
  %v6491 = vrot.slane %v1458, 3
  %v6492 = vrot.slane %v1459, 3
  %v6493 = vrot.slane %v1460, 3
  %v6494 = vrot.slane %v1461, 3
  %v6495 = vrot.slane %v1462, 3
  %v6496 = vrot.slane %v1463, 3
  %v6497 = vrot.slane %v1464, 3
  %v6498 = vrot.slane %v1465, 3
  %v6499 = vrot.slane %v1466, 3
  %v6500 = vrot.slane %v1467, 3
  %v6501 = vrot.slane %v1468, 3
  %v6502 = vrot.slane %v1469, 3
  %v6503 = vrot.slane %v1470, 3
  %v6504 = vrot.slane %v1471, 3
  %v6505 = vrot.slane %v1472, 3
  %v6506 = vrot.slane %v1473, 3
  %v6507 = vrot.slane %v1474, 3
  %v6508 = vrot.slane %v1475, 3
  %v6509 = vrot.slane %v1476, 3
  %v6510 = vrot.slane %v1477, 3
  %v6511 = vrot.slane %v1478, 3
  %v6512 = vrot.slane %v1479, 3
  %v6513 = vrot.slane %v1480, 3
  %v6514 = vrot.slane %v1481, 3
  %v6515 = vrot.slane %v1482, 3
  %v6516 = vrot.slane %v1483, 3
  %v6517 = vrot.slane %v1484, 3
  %v6518 = vrot.slane %v1485, 3
  %v6519 = vrot.slane %v1486, 3
  %v6520 = vrot.slane %v1487, 3
  %v6521 = vrot.slane %v1488, 3
  %v6522 = vrot.slane %v1489, 3
  %v6523 = vrot.slane %v1490, 3
  %v6524 = vrot.slane %v1491, 3
  %v6525 = vrot.slane %v1492, 3
  %v6526 = vrot.slane %v1493, 3
  %v6527 = vrot.slane %v1494, 3
  %v6528 = vrot.slane %v1495, 3
  %v6529 = vrot.slane %v1496, 3
  %v6530 = vrot.slane %v1497, 3
  %v6531 = vrot.slane %v1498, 3
  %v6532 = vrot.slane %v1499, 3
  %v6533 = vrot.slane %v1500, 3
  %v6534 = vrot.slane %v1501, 3
  %v6535 = vrot.slane %v1502, 3
  %v6536 = vrot.slane %v1503, 3
  %v6537 = vrot.slane %v1504, 3
  %v6538 = vrot.slane %v1505, 3
  %v6539 = vrot.slane %v1506, 3
  %v6540 = vrot.slane %v1507, 3
  %v6541 = vrot.slane %v1508, 3
  %v6542 = vrot.slane %v1509, 3
  %v6543 = vrot.slane %v1510, 3
  %v6544 = vrot.slane %v1511, 3
  %v6545 = vrot.slane %v1512, 3
  %v6546 = vrot.slane %v1513, 3
  %v6547 = vrot.slane %v1514, 3
  %v6548 = vrot.slane %v1515, 3
  %v6549 = vrot.slane %v1516, 3
  %v6550 = vrot.slane %v1517, 3
  %v6551 = vrot.slane %v1518, 3
  %v6552 = vrot.slane %v1519, 3
  %v6553 = vrot.slane %v1520, 3
  %v6554 = vrot.slane %v1521, 3
  %v6555 = vrot.slane %v1522, 3
  %v6556 = vrot.slane %v1523, 3
  %v6557 = vrot.slane %v1524, 3
  %v6558 = vrot.slane %v1525, 3
  %v6559 = vrot.slane %v1526, 3
  %v6560 = vrot.slane %v1527, 3
  %v6561 = vrot.slane %v1528, 3
  %v6562 = vrot.slane %v1529, 3
  %v6563 = vrot.slane %v1530, 3
  %v6564 = vrot.slane %v1531, 3
  %v6565 = vrot.slane %v1532, 3
  %v6566 = vrot.slane %v1533, 3
  %vm6567 = vcmp.lt.s32.totalorder %v1616, 5
  %v6568 = vsel %vm6567, %v6565, %v6566
  %v6569 = vsel %vm6567, %v6564, %v6565
  %v6570 = vsel %vm6567, %v6563, %v6564
  %v6571 = vsel %vm6567, %v6562, %v6563
  %v6572 = vsel %vm6567, %v6561, %v6562
  %v6573 = vsel %vm6567, %v6560, %v6561
  %v6574 = vsel %vm6567, %v6559, %v6560
  %v6575 = vsel %vm6567, %v6558, %v6559
  %v6576 = vsel %vm6567, %v6557, %v6558
  %v6577 = vsel %vm6567, %v6556, %v6557
  %v6578 = vsel %vm6567, %v6555, %v6556
  %v6579 = vsel %vm6567, %v6554, %v6555
  %v6580 = vsel %vm6567, %v6553, %v6554
  %v6581 = vsel %vm6567, %v6552, %v6553
  %v6582 = vsel %vm6567, %v6551, %v6552
  %v6583 = vsel %vm6567, %v6550, %v6551
  %v6584 = vsel %vm6567, %v6549, %v6550
  %v6585 = vsel %vm6567, %v6548, %v6549
  %v6586 = vsel %vm6567, %v6547, %v6548
  %v6587 = vsel %vm6567, %v6546, %v6547
  %v6588 = vsel %vm6567, %v6545, %v6546
  %v6589 = vsel %vm6567, %v6544, %v6545
  %v6590 = vsel %vm6567, %v6543, %v6544
  %v6591 = vsel %vm6567, %v6542, %v6543
  %v6592 = vsel %vm6567, %v6541, %v6542
  %v6593 = vsel %vm6567, %v6540, %v6541
  %v6594 = vsel %vm6567, %v6539, %v6540
  %v6595 = vsel %vm6567, %v6538, %v6539
  %v6596 = vsel %vm6567, %v6537, %v6538
  %v6597 = vsel %vm6567, %v6536, %v6537
  %v6598 = vsel %vm6567, %v6535, %v6536
  %v6599 = vsel %vm6567, %v6534, %v6535
  %v6600 = vsel %vm6567, %v6533, %v6534
  %v6601 = vsel %vm6567, %v6532, %v6533
  %v6602 = vsel %vm6567, %v6531, %v6532
  %v6603 = vsel %vm6567, %v6530, %v6531
  %v6604 = vsel %vm6567, %v6529, %v6530
  %v6605 = vsel %vm6567, %v6528, %v6529
  %v6606 = vsel %vm6567, %v6527, %v6528
  %v6607 = vsel %vm6567, %v6526, %v6527
  %v6608 = vsel %vm6567, %v6525, %v6526
  %v6609 = vsel %vm6567, %v6524, %v6525
  %v6610 = vsel %vm6567, %v6523, %v6524
  %v6611 = vsel %vm6567, %v6522, %v6523
  %v6612 = vsel %vm6567, %v6521, %v6522
  %v6613 = vsel %vm6567, %v6520, %v6521
  %v6614 = vsel %vm6567, %v6519, %v6520
  %v6615 = vsel %vm6567, %v6518, %v6519
  %v6616 = vsel %vm6567, %v6517, %v6518
  %v6617 = vsel %vm6567, %v6516, %v6517
  %v6618 = vsel %vm6567, %v6515, %v6516
  %v6619 = vsel %vm6567, %v6514, %v6515
  %v6620 = vsel %vm6567, %v6513, %v6514
  %v6621 = vsel %vm6567, %v6512, %v6513
  %v6622 = vsel %vm6567, %v6511, %v6512
  %v6623 = vsel %vm6567, %v6510, %v6511
  %v6624 = vsel %vm6567, %v6509, %v6510
  %v6625 = vsel %vm6567, %v6508, %v6509
  %v6626 = vsel %vm6567, %v6507, %v6508
  %v6627 = vsel %vm6567, %v6506, %v6507
  %v6628 = vsel %vm6567, %v6505, %v6506
  %v6629 = vsel %vm6567, %v6504, %v6505
  %v6630 = vsel %vm6567, %v6503, %v6504
  %v6631 = vsel %vm6567, %v6502, %v6503
  %v6632 = vsel %vm6567, %v6501, %v6502
  %v6633 = vsel %vm6567, %v6500, %v6501
  %v6634 = vsel %vm6567, %v6499, %v6500
  %v6635 = vsel %vm6567, %v6498, %v6499
  %v6636 = vsel %vm6567, %v6497, %v6498
  %v6637 = vsel %vm6567, %v6496, %v6497
  %v6638 = vsel %vm6567, %v6495, %v6496
  %v6639 = vsel %vm6567, %v6494, %v6495
  %v6640 = vsel %vm6567, %v6493, %v6494
  %v6641 = vsel %vm6567, %v6492, %v6493
  %v6642 = vsel %vm6567, %v6491, %v6492
  %v6643 = vsel %vm6567, %v6490, %v6491
  %v6644 = vsel %vm6567, %v6489, %v6490
  %v6645 = vsel %vm6567, %v6488, %v6489
  %v6646 = vsel %vm6567, %v6487, %v6488
  %v6647 = vsel %vm6567, %v6486, %v6487
  %v6648 = vsel %vm6567, %v6566, %v6486
  %v6649 = vpack.c.bf16 %v6644, %v6645
  %v6650 = vpack.c.bf16 %v6642, %v6643
  %v6651 = vpack.c.bf16 %v6640, %v6641
  %v6652 = vpack.c.bf16 %v6638, %v6639
  %v6653 = vpack.c.bf16 %v6636, %v6637
  %v6654 = vpack.c.bf16 %v6634, %v6635
  %v6655 = vpack.c.bf16 %v6632, %v6633
  %v6656 = vpack.c.bf16 %v6630, %v6631
  %v6657 = vpack.c.bf16 %v6628, %v6629
  %v6658 = vpack.c.bf16 %v6626, %v6627
  %v6659 = vpack.c.bf16 %v6624, %v6625
  %v6660 = vpack.c.bf16 %v6622, %v6623
  %v6661 = vpack.c.bf16 %v6620, %v6621
  %v6662 = vpack.c.bf16 %v6618, %v6619
  %v6663 = vpack.c.bf16 %v6616, %v6617
  %v6664 = vpack.c.bf16 %v6614, %v6615
  %v6665 = vpack.c.bf16 %v6612, %v6613
  %v6666 = vpack.c.bf16 %v6610, %v6611
  %v6667 = vpack.c.bf16 %v6608, %v6609
  %v6668 = vpack.c.bf16 %v6606, %v6607
  %v6669 = vpack.c.bf16 %v6604, %v6605
  %v6670 = vpack.c.bf16 %v6602, %v6603
  %v6671 = vpack.c.bf16 %v6600, %v6601
  %v6672 = vpack.c.bf16 %v6598, %v6599
  %v6673 = vpack.c.bf16 %v6596, %v6597
  %v6674 = vpack.c.bf16 %v6594, %v6595
  %v6675 = vpack.c.bf16 %v6592, %v6593
  %v6676 = vpack.c.bf16 %v6590, %v6591
  %v6677 = vpack.c.bf16 %v6588, %v6589
  %v6678 = vpack.c.bf16 %v6586, %v6587
  %v6679 = vpack.c.bf16 %v6584, %v6585
  %v6680 = vpack.c.bf16 %v6582, %v6583
  %v6681 = vpack.c.bf16 %v6580, %v6581
  %v6682 = vpack.c.bf16 %v6578, %v6579
  %v6683 = vpack.c.bf16 %v6576, %v6577
  %v6684 = vpack.c.bf16 %v6574, %v6575
  %v6685 = vpack.c.bf16 %v6572, %v6573
  %v6686 = vpack.c.bf16 %v6570, %v6571
  %v6687 = vpack.c.bf16 %v6568, %v6569
  %v6688 = vpack.c.bf16 %v6647, %v6648
  %v6689 = vpack.c.bf16 %v6646, %v6646
  %s6690 = scalar_lea.vmem %s6, 512
  %v6691 = vld [vmem:[%s6690] sm:$0xf]
  %v6692 = vld [vmem:[%s6690 + $0x4] sm:$0xf]
  %v6693 = vld [vmem:[%s6690 + $0x8] sm:$0xf]
  %v6694 = vld [vmem:[%s6690 + $0xc] sm:$0xf]
  %v6695 = vld [vmem:[%s6690 + $0x10] sm:$0xf]
  %v6696 = vld [vmem:[%s6690 + $0x14] sm:$0xf]
  %v6697 = vld [vmem:[%s6690 + $0x18] sm:$0xf]
  %v6698 = vld [vmem:[%s6690 + $0x1c] sm:$0xf]
  %v6699 = vld [vmem:[%s6690 + $0x20] sm:$0xf]
  %v6700 = vld [vmem:[%s6690 + $0x24] sm:$0xf]
  %v6701 = vld [vmem:[%s6690 + $0x28] sm:$0xf]
  %v6702 = vld [vmem:[%s6690 + $0x2c] sm:$0xf]
  %v6703 = vld [vmem:[%s6690 + $0x30] sm:$0xf]
  %v6704 = vld [vmem:[%s6690 + $0x34] sm:$0xf]
  %v6705 = vld [vmem:[%s6690 + $0x38] sm:$0xf]
  %v6706 = vld [vmem:[%s6690 + $0x3c] sm:$0xf]
  %v6723 = vunpack.c.l.b16 %v6691
  %v6724 = vunpack.c.l.b16 %v6692
  %v6725 = vunpack.c.l.b16 %v6693
  %v6726 = vunpack.c.l.b16 %v6694
  %v6727 = vunpack.c.l.b16 %v6695
  %v6728 = vunpack.c.l.b16 %v6696
  %v6729 = vunpack.c.l.b16 %v6697
  %v6730 = vunpack.c.l.b16 %v6698
  %v6731 = vunpack.c.l.b16 %v6699
  %v6732 = vunpack.c.l.b16 %v6700
  %v6733 = vunpack.c.l.b16 %v6701
  %v6734 = vunpack.c.l.b16 %v6702
  %v6735 = vunpack.c.l.b16 %v6703
  %v6736 = vunpack.c.l.b16 %v6704
  %v6737 = vunpack.c.l.b16 %v6705
  %v6738 = vunpack.c.l.b16 %v6706
  %v6739 = vpack.c.b16 %v6724, %v6723
  %v6740 = vpack.c.b16 %v6726, %v6725
  %v6741 = vpack.c.b16 %v6728, %v6727
  %v6742 = vpack.c.b16 %v6730, %v6729
  %v6743 = vpack.c.b16 %v6732, %v6731
  %v6744 = vpack.c.b16 %v6734, %v6733
  %v6745 = vpack.c.b16 %v6736, %v6735
  %v6746 = vpack.c.b16 %v6738, %v6737
  %6755 = vmatprep.subr.bf16.mxu0 0
  %6756 = vmatpush1.bf16.msra.mxu0 %v6746
  %6757 = vmatprep.subr.bf16.mxu0 0
  %6758 = vmatpush1.bf16.msra.mxu0 %v6745
  %6759 = vmatprep.subr.bf16.mxu0 0
  %6760 = vmatpush1.bf16.msra.mxu0 %v6744
  %6761 = vmatprep.subr.bf16.mxu0 0
  %6762 = vmatpush1.bf16.msra.mxu0 %v6743
  %6763 = vmatprep.subr.bf16.mxu0 0
  %6764 = vmatpush1.bf16.msra.mxu0 %v6742
  %6765 = vmatprep.subr.bf16.mxu0 0
  %6766 = vmatpush1.bf16.msra.mxu0 %v6741
  %6767 = vmatprep.subr.bf16.mxu0 0
  %6768 = vmatpush1.bf16.msra.mxu0 %v6740
  %6769 = vmatprep.subr.bf16.mxu0 0
  %6770 = vmatpush1.bf16.msra.mxu0 %v6739
  %6771 = vmatprep.subr.bf16.mxu0 0
  %6772 = vmatpush2.bf16.msra.mxu0 0
  %6773 = vmatprep.subr.bf16.mxu0 0
  %6774 = vmatpush2.bf16.msra.mxu0 0
  %6775 = vmatprep.subr.bf16.mxu0 0
  %6776 = vmatpush2.bf16.msra.mxu0 0
  %6777 = vmatprep.subr.bf16.mxu0 0
  %6778 = vmatpush2.bf16.msra.mxu0 0
  %6779 = vmatprep.subr.bf16.mxu0 0
  %6780 = vmatpush2.bf16.msra.mxu0 0
  %6781 = vmatprep.subr.bf16.mxu0 0
  %6782 = vmatpush2.bf16.msra.mxu0 0
  %6783 = vmatprep.subr.bf16.mxu0 0
  %6784 = vmatpush2.bf16.msra.mxu0 0
  %6785 = vmatprep.subr.bf16.mxu0 0
  %6786 = vmatpush2.bf16.msra.mxu0 0
  %6787 = vmatprep.mubr.bf16.mxu0 0
  %6788 = vmatmul.mubr.bf16.gmra.mxu0 %v6649
  %v6789 = vpop.f32.mrf.mxu0
  %v6790 = vadd.f32 0.0, %v6789
  %v6791 = vpop.f32.mrf.mxu0
  %v6792 = vpop.f32.mrf.mxu0
  %v6793 = vadd.f32 0.0, %v6792
  %v6794 = vpop.f32.mrf.mxu0
  %6795 = vmatprep.mubr.bf16.mxu0 0
  %6796 = vmatmul.mubr.bf16.gmra.mxu0 %v6650
  %v6797 = vpop.f32.mrf.mxu0
  %v6798 = vadd.f32 0.0, %v6797
  %v6799 = vpop.f32.mrf.mxu0
  %v6800 = vpop.f32.mrf.mxu0
  %v6801 = vadd.f32 0.0, %v6800
  %v6802 = vpop.f32.mrf.mxu0
  %6803 = vmatprep.mubr.bf16.mxu0 0
  %6804 = vmatmul.mubr.bf16.gmra.mxu0 %v6651
  %v6805 = vpop.f32.mrf.mxu0
  %v6806 = vadd.f32 0.0, %v6805
  %v6807 = vpop.f32.mrf.mxu0
  %v6808 = vpop.f32.mrf.mxu0
  %v6809 = vadd.f32 0.0, %v6808
  %v6810 = vpop.f32.mrf.mxu0
  %6811 = vmatprep.mubr.bf16.mxu0 0
  %6812 = vmatmul.mubr.bf16.gmra.mxu0 %v6652
  %v6813 = vpop.f32.mrf.mxu0
  %v6814 = vadd.f32 0.0, %v6813
  %v6815 = vpop.f32.mrf.mxu0
  %v6816 = vpop.f32.mrf.mxu0
  %v6817 = vadd.f32 0.0, %v6816
  %v6818 = vpop.f32.mrf.mxu0
  %6819 = vmatprep.mubr.bf16.mxu0 0
  %6820 = vmatmul.mubr.bf16.gmra.mxu0 %v6653
  %v6821 = vpop.f32.mrf.mxu0
  %v6822 = vadd.f32 0.0, %v6821
  %v6823 = vpop.f32.mrf.mxu0
  %v6824 = vpop.f32.mrf.mxu0
  %v6825 = vadd.f32 0.0, %v6824
  %v6826 = vpop.f32.mrf.mxu0
  %6827 = vmatprep.mubr.bf16.mxu0 0
  %6828 = vmatmul.mubr.bf16.gmra.mxu0 %v6654
  %v6829 = vpop.f32.mrf.mxu0
  %v6830 = vadd.f32 0.0, %v6829
  %v6831 = vpop.f32.mrf.mxu0
  %v6832 = vpop.f32.mrf.mxu0
  %v6833 = vadd.f32 0.0, %v6832
  %v6834 = vpop.f32.mrf.mxu0
  %6835 = vmatprep.mubr.bf16.mxu0 0
  %6836 = vmatmul.mubr.bf16.gmra.mxu0 %v6655
  %v6837 = vpop.f32.mrf.mxu0
  %v6838 = vadd.f32 0.0, %v6837
  %v6839 = vpop.f32.mrf.mxu0
  %v6840 = vpop.f32.mrf.mxu0
  %v6841 = vadd.f32 0.0, %v6840
  %v6842 = vpop.f32.mrf.mxu0
  %6843 = vmatprep.mubr.bf16.mxu0 0
  %6844 = vmatmul.mubr.bf16.gmra.mxu0 %v6656
  %v6845 = vpop.f32.mrf.mxu0
  %v6846 = vadd.f32 0.0, %v6845
  %v6847 = vpop.f32.mrf.mxu0
  %v6848 = vpop.f32.mrf.mxu0
  %v6849 = vadd.f32 0.0, %v6848
  %v6850 = vpop.f32.mrf.mxu0
  %6851 = vmatprep.mubr.bf16.mxu0 0
  %6852 = vmatmul.mubr.bf16.gmra.mxu0 %v6657
  %v6853 = vpop.f32.mrf.mxu0
  %v6854 = vadd.f32 0.0, %v6853
  %v6855 = vpop.f32.mrf.mxu0
  %v6856 = vpop.f32.mrf.mxu0
  %v6857 = vadd.f32 0.0, %v6856
  %v6858 = vpop.f32.mrf.mxu0
  %6859 = vmatprep.mubr.bf16.mxu0 0
  %6860 = vmatmul.mubr.bf16.gmra.mxu0 %v6658
  %v6861 = vpop.f32.mrf.mxu0
  %v6862 = vadd.f32 0.0, %v6861
  %v6863 = vpop.f32.mrf.mxu0
  %v6864 = vpop.f32.mrf.mxu0
  %v6865 = vadd.f32 0.0, %v6864
  %v6866 = vpop.f32.mrf.mxu0
  %6867 = vmatprep.mubr.bf16.mxu0 0
  %6868 = vmatmul.mubr.bf16.gmra.mxu0 %v6659
  %v6869 = vpop.f32.mrf.mxu0
  %v6870 = vadd.f32 0.0, %v6869
  %v6871 = vpop.f32.mrf.mxu0
  %v6872 = vpop.f32.mrf.mxu0
  %v6873 = vadd.f32 0.0, %v6872
  %v6874 = vpop.f32.mrf.mxu0
  %6875 = vmatprep.mubr.bf16.mxu0 0
  %6876 = vmatmul.mubr.bf16.gmra.mxu0 %v6660
  %v6877 = vpop.f32.mrf.mxu0
  %v6878 = vadd.f32 0.0, %v6877
  %v6879 = vpop.f32.mrf.mxu0
  %v6880 = vpop.f32.mrf.mxu0
  %v6881 = vadd.f32 0.0, %v6880
  %v6882 = vpop.f32.mrf.mxu0
  %6883 = vmatprep.mubr.bf16.mxu0 0
  %6884 = vmatmul.mubr.bf16.gmra.mxu0 %v6661
  %v6885 = vpop.f32.mrf.mxu0
  %v6886 = vadd.f32 0.0, %v6885
  %v6887 = vpop.f32.mrf.mxu0
  %v6888 = vpop.f32.mrf.mxu0
  %v6889 = vadd.f32 0.0, %v6888
  %v6890 = vpop.f32.mrf.mxu0
  %6891 = vmatprep.mubr.bf16.mxu0 0
  %6892 = vmatmul.mubr.bf16.gmra.mxu0 %v6662
  %v6893 = vpop.f32.mrf.mxu0
  %v6894 = vadd.f32 0.0, %v6893
  %v6895 = vpop.f32.mrf.mxu0
  %v6896 = vpop.f32.mrf.mxu0
  %v6897 = vadd.f32 0.0, %v6896
  %v6898 = vpop.f32.mrf.mxu0
  %6899 = vmatprep.mubr.bf16.mxu0 0
  %6900 = vmatmul.mubr.bf16.gmra.mxu0 %v6663
  %v6901 = vpop.f32.mrf.mxu0
  %v6902 = vadd.f32 0.0, %v6901
  %v6903 = vpop.f32.mrf.mxu0
  %v6904 = vpop.f32.mrf.mxu0
  %v6905 = vadd.f32 0.0, %v6904
  %v6906 = vpop.f32.mrf.mxu0
  %6907 = vmatprep.mubr.bf16.mxu0 0
  %6908 = vmatmul.mubr.bf16.gmra.mxu0 %v6664
  %v6909 = vpop.f32.mrf.mxu0
  %v6910 = vadd.f32 0.0, %v6909
  %v6911 = vpop.f32.mrf.mxu0
  %v6912 = vpop.f32.mrf.mxu0
  %v6913 = vadd.f32 0.0, %v6912
  %v6914 = vpop.f32.mrf.mxu0
  %6915 = vmatprep.mubr.bf16.mxu0 0
  %6916 = vmatmul.mubr.bf16.gmra.mxu0 %v6665
  %v6917 = vpop.f32.mrf.mxu0
  %v6918 = vadd.f32 0.0, %v6917
  %v6919 = vpop.f32.mrf.mxu0
  %v6920 = vpop.f32.mrf.mxu0
  %v6921 = vadd.f32 0.0, %v6920
  %v6922 = vpop.f32.mrf.mxu0
  %6923 = vmatprep.mubr.bf16.mxu0 0
  %6924 = vmatmul.mubr.bf16.gmra.mxu0 %v6666
  %v6925 = vpop.f32.mrf.mxu0
  %v6926 = vadd.f32 0.0, %v6925
  %v6927 = vpop.f32.mrf.mxu0
  %v6928 = vpop.f32.mrf.mxu0
  %v6929 = vadd.f32 0.0, %v6928
  %v6930 = vpop.f32.mrf.mxu0
  %6931 = vmatprep.mubr.bf16.mxu0 0
  %6932 = vmatmul.mubr.bf16.gmra.mxu0 %v6667
  %v6933 = vpop.f32.mrf.mxu0
  %v6934 = vadd.f32 0.0, %v6933
  %v6935 = vpop.f32.mrf.mxu0
  %v6936 = vpop.f32.mrf.mxu0
  %v6937 = vadd.f32 0.0, %v6936
  %v6938 = vpop.f32.mrf.mxu0
  %6939 = vmatprep.mubr.bf16.mxu0 0
  %6940 = vmatmul.mubr.bf16.gmra.mxu0 %v6668
  %v6941 = vpop.f32.mrf.mxu0
  %v6942 = vadd.f32 0.0, %v6941
  %v6943 = vpop.f32.mrf.mxu0
  %v6944 = vpop.f32.mrf.mxu0
  %v6945 = vadd.f32 0.0, %v6944
  %v6946 = vpop.f32.mrf.mxu0
  %6947 = vmatprep.mubr.bf16.mxu0 0
  %6948 = vmatmul.mubr.bf16.gmra.mxu0 %v6669
  %v6949 = vpop.f32.mrf.mxu0
  %v6950 = vadd.f32 0.0, %v6949
  %v6951 = vpop.f32.mrf.mxu0
  %v6952 = vpop.f32.mrf.mxu0
  %v6953 = vadd.f32 0.0, %v6952
  %v6954 = vpop.f32.mrf.mxu0
  %6955 = vmatprep.mubr.bf16.mxu0 0
  %6956 = vmatmul.mubr.bf16.gmra.mxu0 %v6670
  %v6957 = vpop.f32.mrf.mxu0
  %v6958 = vadd.f32 0.0, %v6957
  %v6959 = vpop.f32.mrf.mxu0
  %v6960 = vpop.f32.mrf.mxu0
  %v6961 = vadd.f32 0.0, %v6960
  %v6962 = vpop.f32.mrf.mxu0
  %6963 = vmatprep.mubr.bf16.mxu0 0
  %6964 = vmatmul.mubr.bf16.gmra.mxu0 %v6671
  %v6965 = vpop.f32.mrf.mxu0
  %v6966 = vadd.f32 0.0, %v6965
  %v6967 = vpop.f32.mrf.mxu0
  %v6968 = vpop.f32.mrf.mxu0
  %v6969 = vadd.f32 0.0, %v6968
  %v6970 = vpop.f32.mrf.mxu0
  %6971 = vmatprep.mubr.bf16.mxu0 0
  %6972 = vmatmul.mubr.bf16.gmra.mxu0 %v6672
  %v6973 = vpop.f32.mrf.mxu0
  %v6974 = vadd.f32 0.0, %v6973
  %v6975 = vpop.f32.mrf.mxu0
  %v6976 = vpop.f32.mrf.mxu0
  %v6977 = vadd.f32 0.0, %v6976
  %v6978 = vpop.f32.mrf.mxu0
  %6979 = vmatprep.mubr.bf16.mxu0 0
  %6980 = vmatmul.mubr.bf16.gmra.mxu0 %v6673
  %v6981 = vpop.f32.mrf.mxu0
  %v6982 = vadd.f32 0.0, %v6981
  %v6983 = vpop.f32.mrf.mxu0
  %v6984 = vpop.f32.mrf.mxu0
  %v6985 = vadd.f32 0.0, %v6984
  %v6986 = vpop.f32.mrf.mxu0
  %6987 = vmatprep.mubr.bf16.mxu0 0
  %6988 = vmatmul.mubr.bf16.gmra.mxu0 %v6674
  %v6989 = vpop.f32.mrf.mxu0
  %v6990 = vadd.f32 0.0, %v6989
  %v6991 = vpop.f32.mrf.mxu0
  %v6992 = vpop.f32.mrf.mxu0
  %v6993 = vadd.f32 0.0, %v6992
  %v6994 = vpop.f32.mrf.mxu0
  %6995 = vmatprep.mubr.bf16.mxu0 0
  %6996 = vmatmul.mubr.bf16.gmra.mxu0 %v6675
  %v6997 = vpop.f32.mrf.mxu0
  %v6998 = vadd.f32 0.0, %v6997
  %v6999 = vpop.f32.mrf.mxu0
  %v7000 = vpop.f32.mrf.mxu0
  %v7001 = vadd.f32 0.0, %v7000
  %v7002 = vpop.f32.mrf.mxu0
  %7003 = vmatprep.mubr.bf16.mxu0 0
  %7004 = vmatmul.mubr.bf16.gmra.mxu0 %v6676
  %v7005 = vpop.f32.mrf.mxu0
  %v7006 = vadd.f32 0.0, %v7005
  %v7007 = vpop.f32.mrf.mxu0
  %v7008 = vpop.f32.mrf.mxu0
  %v7009 = vadd.f32 0.0, %v7008
  %v7010 = vpop.f32.mrf.mxu0
  %7011 = vmatprep.mubr.bf16.mxu0 0
  %7012 = vmatmul.mubr.bf16.gmra.mxu0 %v6677
  %v7013 = vpop.f32.mrf.mxu0
  %v7014 = vadd.f32 0.0, %v7013
  %v7015 = vpop.f32.mrf.mxu0
  %v7016 = vpop.f32.mrf.mxu0
  %v7017 = vadd.f32 0.0, %v7016
  %v7018 = vpop.f32.mrf.mxu0
  %7019 = vmatprep.mubr.bf16.mxu0 0
  %7020 = vmatmul.mubr.bf16.gmra.mxu0 %v6678
  %v7021 = vpop.f32.mrf.mxu0
  %v7022 = vadd.f32 0.0, %v7021
  %v7023 = vpop.f32.mrf.mxu0
  %v7024 = vpop.f32.mrf.mxu0
  %v7025 = vadd.f32 0.0, %v7024
  %v7026 = vpop.f32.mrf.mxu0
  %7027 = vmatprep.mubr.bf16.mxu0 0
  %7028 = vmatmul.mubr.bf16.gmra.mxu0 %v6679
  %v7029 = vpop.f32.mrf.mxu0
  %v7030 = vadd.f32 0.0, %v7029
  %v7031 = vpop.f32.mrf.mxu0
  %v7032 = vpop.f32.mrf.mxu0
  %v7033 = vadd.f32 0.0, %v7032
  %v7034 = vpop.f32.mrf.mxu0
  %7035 = vmatprep.mubr.bf16.mxu0 0
  %7036 = vmatmul.mubr.bf16.gmra.mxu0 %v6680
  %v7037 = vpop.f32.mrf.mxu0
  %v7038 = vadd.f32 0.0, %v7037
  %v7039 = vpop.f32.mrf.mxu0
  %v7040 = vpop.f32.mrf.mxu0
  %v7041 = vadd.f32 0.0, %v7040
  %v7042 = vpop.f32.mrf.mxu0
  %7043 = vmatprep.mubr.bf16.mxu0 0
  %7044 = vmatmul.mubr.bf16.gmra.mxu0 %v6681
  %v7045 = vpop.f32.mrf.mxu0
  %v7046 = vadd.f32 0.0, %v7045
  %v7047 = vpop.f32.mrf.mxu0
  %v7048 = vpop.f32.mrf.mxu0
  %v7049 = vadd.f32 0.0, %v7048
  %v7050 = vpop.f32.mrf.mxu0
  %7051 = vmatprep.mubr.bf16.mxu0 0
  %7052 = vmatmul.mubr.bf16.gmra.mxu0 %v6682
  %v7053 = vpop.f32.mrf.mxu0
  %v7054 = vadd.f32 0.0, %v7053
  %v7055 = vpop.f32.mrf.mxu0
  %v7056 = vpop.f32.mrf.mxu0
  %v7057 = vadd.f32 0.0, %v7056
  %v7058 = vpop.f32.mrf.mxu0
  %7059 = vmatprep.mubr.bf16.mxu0 0
  %7060 = vmatmul.mubr.bf16.gmra.mxu0 %v6683
  %v7061 = vpop.f32.mrf.mxu0
  %v7062 = vadd.f32 0.0, %v7061
  %v7063 = vpop.f32.mrf.mxu0
  %v7064 = vpop.f32.mrf.mxu0
  %v7065 = vadd.f32 0.0, %v7064
  %v7066 = vpop.f32.mrf.mxu0
  %7067 = vmatprep.mubr.bf16.mxu0 0
  %7068 = vmatmul.mubr.bf16.gmra.mxu0 %v6684
  %v7069 = vpop.f32.mrf.mxu0
  %v7070 = vadd.f32 0.0, %v7069
  %v7071 = vpop.f32.mrf.mxu0
  %v7072 = vpop.f32.mrf.mxu0
  %v7073 = vadd.f32 0.0, %v7072
  %v7074 = vpop.f32.mrf.mxu0
  %7075 = vmatprep.mubr.bf16.mxu0 0
  %7076 = vmatmul.mubr.bf16.gmra.mxu0 %v6685
  %v7077 = vpop.f32.mrf.mxu0
  %v7078 = vadd.f32 0.0, %v7077
  %v7079 = vpop.f32.mrf.mxu0
  %v7080 = vpop.f32.mrf.mxu0
  %v7081 = vadd.f32 0.0, %v7080
  %v7082 = vpop.f32.mrf.mxu0
  %7083 = vmatprep.mubr.bf16.mxu0 0
  %7084 = vmatmul.mubr.bf16.gmra.mxu0 %v6686
  %v7085 = vpop.f32.mrf.mxu0
  %v7086 = vadd.f32 0.0, %v7085
  %v7087 = vpop.f32.mrf.mxu0
  %v7088 = vpop.f32.mrf.mxu0
  %v7089 = vadd.f32 0.0, %v7088
  %v7090 = vpop.f32.mrf.mxu0
  %7091 = vmatprep.mubr.bf16.mxu0 0
  %7092 = vmatmul.mubr.bf16.gmra.mxu0 %v6687
  %v7093 = vpop.f32.mrf.mxu0
  %v7094 = vadd.f32 0.0, %v7093
  %v7095 = vpop.f32.mrf.mxu0
  %v7096 = vpop.f32.mrf.mxu0
  %v7097 = vadd.f32 0.0, %v7096
  %v7098 = vpop.f32.mrf.mxu0
  %7099 = vmatprep.mubr.bf16.mxu0 0
  %7100 = vmatmul.mubr.bf16.gmra.mxu0 %v6688
  %v7101 = vpop.f32.mrf.mxu0
  %v7102 = vadd.f32 0.0, %v7101
  %v7103 = vpop.f32.mrf.mxu0
  %v7104 = vpop.f32.mrf.mxu0
  %v7105 = vadd.f32 0.0, %v7104
  %v7106 = vpop.f32.mrf.mxu0
  %7107 = vmatprep.mubr.bf16.mxu0 0
  %7108 = vmatmul.mubr.bf16.gmra.mxu0 %v6689
  %v7109 = vpop.f32.mrf.mxu0
  %v7110 = vadd.f32 0.0, %v7109
  %v7111 = vpop.f32.mrf.mxu0
  %v7112 = vpop.f32.mrf.mxu0
  %v7113 = vpop.f32.mrf.mxu0
  %7114 = vdwg.mxu0
  %v7115 = vadd.f32 %v6405, %v6790
  %v7116 = vadd.f32 %v6406, %v6793
  %v7117 = vadd.f32 %v6407, %v6798
  %v7118 = vadd.f32 %v6408, %v6801
  %v7119 = vadd.f32 %v6409, %v6806
  %v7120 = vadd.f32 %v6410, %v6809
  %v7121 = vadd.f32 %v6411, %v6814
  %v7122 = vadd.f32 %v6412, %v6817
  %v7123 = vadd.f32 %v6413, %v6822
  %v7124 = vadd.f32 %v6414, %v6825
  %v7125 = vadd.f32 %v6415, %v6830
  %v7126 = vadd.f32 %v6416, %v6833
  %v7127 = vadd.f32 %v6417, %v6838
  %v7128 = vadd.f32 %v6418, %v6841
  %v7129 = vadd.f32 %v6419, %v6846
  %v7130 = vadd.f32 %v6420, %v6849
  %v7131 = vadd.f32 %v6421, %v6854
  %v7132 = vadd.f32 %v6422, %v6857
  %v7133 = vadd.f32 %v6423, %v6862
  %v7134 = vadd.f32 %v6424, %v6865
  %v7135 = vadd.f32 %v6425, %v6870
  %v7136 = vadd.f32 %v6426, %v6873
  %v7137 = vadd.f32 %v6427, %v6878
  %v7138 = vadd.f32 %v6428, %v6881
  %v7139 = vadd.f32 %v6429, %v6886
  %v7140 = vadd.f32 %v6430, %v6889
  %v7141 = vadd.f32 %v6431, %v6894
  %v7142 = vadd.f32 %v6432, %v6897
  %v7143 = vadd.f32 %v6433, %v6902
  %v7144 = vadd.f32 %v6434, %v6905
  %v7145 = vadd.f32 %v6435, %v6910
  %v7146 = vadd.f32 %v6436, %v6913
  %v7147 = vadd.f32 %v6437, %v6918
  %v7148 = vadd.f32 %v6438, %v6921
  %v7149 = vadd.f32 %v6439, %v6926
  %v7150 = vadd.f32 %v6440, %v6929
  %v7151 = vadd.f32 %v6441, %v6934
  %v7152 = vadd.f32 %v6442, %v6937
  %v7153 = vadd.f32 %v6443, %v6942
  %v7154 = vadd.f32 %v6444, %v6945
  %v7155 = vadd.f32 %v6445, %v6950
  %v7156 = vadd.f32 %v6446, %v6953
  %v7157 = vadd.f32 %v6447, %v6958
  %v7158 = vadd.f32 %v6448, %v6961
  %v7159 = vadd.f32 %v6449, %v6966
  %v7160 = vadd.f32 %v6450, %v6969
  %v7161 = vadd.f32 %v6451, %v6974
  %v7162 = vadd.f32 %v6452, %v6977
  %v7163 = vadd.f32 %v6453, %v6982
  %v7164 = vadd.f32 %v6454, %v6985
  %v7165 = vadd.f32 %v6455, %v6990
  %v7166 = vadd.f32 %v6456, %v6993
  %v7167 = vadd.f32 %v6457, %v6998
  %v7168 = vadd.f32 %v6458, %v7001
  %v7169 = vadd.f32 %v6459, %v7006
  %v7170 = vadd.f32 %v6460, %v7009
  %v7171 = vadd.f32 %v6461, %v7014
  %v7172 = vadd.f32 %v6462, %v7017
  %v7173 = vadd.f32 %v6463, %v7022
  %v7174 = vadd.f32 %v6464, %v7025
  %v7175 = vadd.f32 %v6465, %v7030
  %v7176 = vadd.f32 %v6466, %v7033
  %v7177 = vadd.f32 %v6467, %v7038
  %v7178 = vadd.f32 %v6468, %v7041
  %v7179 = vadd.f32 %v6469, %v7046
  %v7180 = vadd.f32 %v6470, %v7049
  %v7181 = vadd.f32 %v6471, %v7054
  %v7182 = vadd.f32 %v6472, %v7057
  %v7183 = vadd.f32 %v6473, %v7062
  %v7184 = vadd.f32 %v6474, %v7065
  %v7185 = vadd.f32 %v6475, %v7070
  %v7186 = vadd.f32 %v6476, %v7073
  %v7187 = vadd.f32 %v6477, %v7078
  %v7188 = vadd.f32 %v6478, %v7081
  %v7189 = vadd.f32 %v6479, %v7086
  %v7190 = vadd.f32 %v6480, %v7089
  %v7191 = vadd.f32 %v6481, %v7094
  %v7192 = vadd.f32 %v6482, %v7097
  %v7193 = vadd.f32 %v6483, %v7102
  %v7194 = vadd.f32 %v6484, %v7105
  %v7195 = vadd.f32 %v6485, %v7110
  %v7196 = vld [vmem:[%s7] sm:$0x1]
  %v7198 = vlaneseq
  %v7199 = vshrl.u32 %v7198, 7
  %v7200 = vsub.s32 0, %v7199
  %v7201 = vrot.slane %v7196, %v7200
  %v7203 = vadd.f32 %v7115, %v7201
  %v7204 = vadd.f32 %v7116, %v7201
  %v7205 = vadd.f32 %v7117, %v7201
  %v7206 = vadd.f32 %v7118, %v7201
  %v7207 = vadd.f32 %v7119, %v7201
  %v7208 = vadd.f32 %v7120, %v7201
  %v7209 = vadd.f32 %v7121, %v7201
  %v7210 = vadd.f32 %v7122, %v7201
  %v7211 = vadd.f32 %v7123, %v7201
  %v7212 = vadd.f32 %v7124, %v7201
  %v7213 = vadd.f32 %v7125, %v7201
  %v7214 = vadd.f32 %v7126, %v7201
  %v7215 = vadd.f32 %v7127, %v7201
  %v7216 = vadd.f32 %v7128, %v7201
  %v7217 = vadd.f32 %v7129, %v7201
  %v7218 = vadd.f32 %v7130, %v7201
  %v7219 = vadd.f32 %v7131, %v7201
  %v7220 = vadd.f32 %v7132, %v7201
  %v7221 = vadd.f32 %v7133, %v7201
  %v7222 = vadd.f32 %v7134, %v7201
  %v7223 = vadd.f32 %v7135, %v7201
  %v7224 = vadd.f32 %v7136, %v7201
  %v7225 = vadd.f32 %v7137, %v7201
  %v7226 = vadd.f32 %v7138, %v7201
  %v7227 = vadd.f32 %v7139, %v7201
  %v7228 = vadd.f32 %v7140, %v7201
  %v7229 = vadd.f32 %v7141, %v7201
  %v7230 = vadd.f32 %v7142, %v7201
  %v7231 = vadd.f32 %v7143, %v7201
  %v7232 = vadd.f32 %v7144, %v7201
  %v7233 = vadd.f32 %v7145, %v7201
  %v7234 = vadd.f32 %v7146, %v7201
  %v7235 = vadd.f32 %v7147, %v7201
  %v7236 = vadd.f32 %v7148, %v7201
  %v7237 = vadd.f32 %v7149, %v7201
  %v7238 = vadd.f32 %v7150, %v7201
  %v7239 = vadd.f32 %v7151, %v7201
  %v7240 = vadd.f32 %v7152, %v7201
  %v7241 = vadd.f32 %v7153, %v7201
  %v7242 = vadd.f32 %v7154, %v7201
  %v7243 = vadd.f32 %v7155, %v7201
  %v7244 = vadd.f32 %v7156, %v7201
  %v7245 = vadd.f32 %v7157, %v7201
  %v7246 = vadd.f32 %v7158, %v7201
  %v7247 = vadd.f32 %v7159, %v7201
  %v7248 = vadd.f32 %v7160, %v7201
  %v7249 = vadd.f32 %v7161, %v7201
  %v7250 = vadd.f32 %v7162, %v7201
  %v7251 = vadd.f32 %v7163, %v7201
  %v7252 = vadd.f32 %v7164, %v7201
  %v7253 = vadd.f32 %v7165, %v7201
  %v7254 = vadd.f32 %v7166, %v7201
  %v7255 = vadd.f32 %v7167, %v7201
  %v7256 = vadd.f32 %v7168, %v7201
  %v7257 = vadd.f32 %v7169, %v7201
  %v7258 = vadd.f32 %v7170, %v7201
  %v7259 = vadd.f32 %v7171, %v7201
  %v7260 = vadd.f32 %v7172, %v7201
  %v7261 = vadd.f32 %v7173, %v7201
  %v7262 = vadd.f32 %v7174, %v7201
  %v7263 = vadd.f32 %v7175, %v7201
  %v7264 = vadd.f32 %v7176, %v7201
  %v7265 = vadd.f32 %v7177, %v7201
  %v7266 = vadd.f32 %v7178, %v7201
  %v7267 = vadd.f32 %v7179, %v7201
  %v7268 = vadd.f32 %v7180, %v7201
  %v7269 = vadd.f32 %v7181, %v7201
  %v7270 = vadd.f32 %v7182, %v7201
  %v7271 = vadd.f32 %v7183, %v7201
  %v7272 = vadd.f32 %v7184, %v7201
  %v7273 = vadd.f32 %v7185, %v7201
  %v7274 = vadd.f32 %v7186, %v7201
  %v7275 = vadd.f32 %v7187, %v7201
  %v7276 = vadd.f32 %v7188, %v7201
  %v7277 = vadd.f32 %v7189, %v7201
  %v7278 = vadd.f32 %v7190, %v7201
  %v7279 = vadd.f32 %v7191, %v7201
  %v7280 = vadd.f32 %v7192, %v7201
  %v7281 = vadd.f32 %v7193, %v7201
  %v7282 = vadd.f32 %v7194, %v7201
  %v7283 = vadd.f32 %v7195, %v7201
  %v7284 = vmax.f32 %v7203, 0.0
  %v7285 = vmax.f32 %v7204, 0.0
  %v7286 = vmax.f32 %v7205, 0.0
  %v7287 = vmax.f32 %v7206, 0.0
  %v7288 = vmax.f32 %v7207, 0.0
  %v7289 = vmax.f32 %v7208, 0.0
  %v7290 = vmax.f32 %v7209, 0.0
  %v7291 = vmax.f32 %v7210, 0.0
  %v7292 = vmax.f32 %v7211, 0.0
  %v7293 = vmax.f32 %v7212, 0.0
  %v7294 = vmax.f32 %v7213, 0.0
  %v7295 = vmax.f32 %v7214, 0.0
  %v7296 = vmax.f32 %v7215, 0.0
  %v7297 = vmax.f32 %v7216, 0.0
  %v7298 = vmax.f32 %v7217, 0.0
  %v7299 = vmax.f32 %v7218, 0.0
  %v7300 = vmax.f32 %v7219, 0.0
  %v7301 = vmax.f32 %v7220, 0.0
  %v7302 = vmax.f32 %v7221, 0.0
  %v7303 = vmax.f32 %v7222, 0.0
  %v7304 = vmax.f32 %v7223, 0.0
  %v7305 = vmax.f32 %v7224, 0.0
  %v7306 = vmax.f32 %v7225, 0.0
  %v7307 = vmax.f32 %v7226, 0.0
  %v7308 = vmax.f32 %v7227, 0.0
  %v7309 = vmax.f32 %v7228, 0.0
  %v7310 = vmax.f32 %v7229, 0.0
  %v7311 = vmax.f32 %v7230, 0.0
  %v7312 = vmax.f32 %v7231, 0.0
  %v7313 = vmax.f32 %v7232, 0.0
  %v7314 = vmax.f32 %v7233, 0.0
  %v7315 = vmax.f32 %v7234, 0.0
  %v7316 = vmax.f32 %v7235, 0.0
  %v7317 = vmax.f32 %v7236, 0.0
  %v7318 = vmax.f32 %v7237, 0.0
  %v7319 = vmax.f32 %v7238, 0.0
  %v7320 = vmax.f32 %v7239, 0.0
  %v7321 = vmax.f32 %v7240, 0.0
  %v7322 = vmax.f32 %v7241, 0.0
  %v7323 = vmax.f32 %v7242, 0.0
  %v7324 = vmax.f32 %v7243, 0.0
  %v7325 = vmax.f32 %v7244, 0.0
  %v7326 = vmax.f32 %v7245, 0.0
  %v7327 = vmax.f32 %v7246, 0.0
  %v7328 = vmax.f32 %v7247, 0.0
  %v7329 = vmax.f32 %v7248, 0.0
  %v7330 = vmax.f32 %v7249, 0.0
  %v7331 = vmax.f32 %v7250, 0.0
  %v7332 = vmax.f32 %v7251, 0.0
  %v7333 = vmax.f32 %v7252, 0.0
  %v7334 = vmax.f32 %v7253, 0.0
  %v7335 = vmax.f32 %v7254, 0.0
  %v7336 = vmax.f32 %v7255, 0.0
  %v7337 = vmax.f32 %v7256, 0.0
  %v7338 = vmax.f32 %v7257, 0.0
  %v7339 = vmax.f32 %v7258, 0.0
  %v7340 = vmax.f32 %v7259, 0.0
  %v7341 = vmax.f32 %v7260, 0.0
  %v7342 = vmax.f32 %v7261, 0.0
  %v7343 = vmax.f32 %v7262, 0.0
  %v7344 = vmax.f32 %v7263, 0.0
  %v7345 = vmax.f32 %v7264, 0.0
  %v7346 = vmax.f32 %v7265, 0.0
  %v7347 = vmax.f32 %v7266, 0.0
  %v7348 = vmax.f32 %v7267, 0.0
  %v7349 = vmax.f32 %v7268, 0.0
  %v7350 = vmax.f32 %v7269, 0.0
  %v7351 = vmax.f32 %v7270, 0.0
  %v7352 = vmax.f32 %v7271, 0.0
  %v7353 = vmax.f32 %v7272, 0.0
  %v7354 = vmax.f32 %v7273, 0.0
  %v7355 = vmax.f32 %v7274, 0.0
  %v7356 = vmax.f32 %v7275, 0.0
  %v7357 = vmax.f32 %v7276, 0.0
  %v7358 = vmax.f32 %v7277, 0.0
  %v7359 = vmax.f32 %v7278, 0.0
  %v7360 = vmax.f32 %v7279, 0.0
  %v7361 = vmax.f32 %v7280, 0.0
  %v7362 = vmax.f32 %v7281, 0.0
  %v7363 = vmax.f32 %v7282, 0.0
  %v7364 = vmax.f32 %v7283, 0.0
  %v7365 = vld [vmem:[%s8] sm:$0xff]
  %v7366 = vld [vmem:[%s8 + $0x8] sm:$0xff]
  %v7367 = vld [vmem:[%s8 + $0x10] sm:$0xff]
  %v7368 = vld [vmem:[%s8 + $0x18] sm:$0xff]
  %v7369 = vld [vmem:[%s8 + $0x20] sm:$0xff]
  %v7370 = vld [vmem:[%s8 + $0x28] sm:$0xff]
  %vm7371 = vcmask 64512
  %v7373 = vsel %vm7371, %v7370, 0
  %7375 = vmatprep.subr.mxu0 0.0
  %7376 = vmatpush1.msra.mxu0 %v7299
  %7377 = vmatprep.subr.mxu0 0.0
  %7378 = vmatpush1.msra.mxu0 %v7298
  %7379 = vmatprep.subr.mxu0 0.0
  %7380 = vmatpush1.msra.mxu0 %v7297
  %7381 = vmatprep.subr.mxu0 0.0
  %7382 = vmatpush1.msra.mxu0 %v7296
  %7383 = vmatprep.subr.mxu0 0.0
  %7384 = vmatpush1.msra.mxu0 %v7295
  %7385 = vmatprep.subr.mxu0 0.0
  %7386 = vmatpush1.msra.mxu0 %v7294
  %7387 = vmatprep.subr.mxu0 0.0
  %7388 = vmatpush1.msra.mxu0 %v7293
  %7389 = vmatprep.subr.mxu0 0.0
  %7390 = vmatpush1.msra.mxu0 %v7292
  %7391 = vmatprep.subr.mxu0 0.0
  %7392 = vmatpush1.msra.mxu0 %v7291
  %7393 = vmatprep.subr.mxu0 0.0
  %7394 = vmatpush1.msra.mxu0 %v7290
  %7395 = vmatprep.subr.mxu0 0.0
  %7396 = vmatpush1.msra.mxu0 %v7289
  %7397 = vmatprep.subr.mxu0 0.0
  %7398 = vmatpush1.msra.mxu0 %v7288
  %7399 = vmatprep.subr.mxu0 0.0
  %7400 = vmatpush1.msra.mxu0 %v7287
  %7401 = vmatprep.subr.mxu0 0.0
  %7402 = vmatpush1.msra.mxu0 %v7286
  %7403 = vmatprep.subr.mxu0 0.0
  %7404 = vmatpush1.msra.mxu0 %v7285
  %7405 = vmatprep.subr.mxu0 0.0
  %7406 = vmatpush1.msra.mxu0 %v7284
  %7407 = vmatprep.subr.mxu0 0.0
  %7408 = vmatpush2.msra.mxu0 %v7315
  %7409 = vmatprep.subr.mxu0 0.0
  %7410 = vmatpush2.msra.mxu0 %v7314
  %7411 = vmatprep.subr.mxu0 0.0
  %7412 = vmatpush2.msra.mxu0 %v7313
  %7413 = vmatprep.subr.mxu0 0.0
  %7414 = vmatpush2.msra.mxu0 %v7312
  %7415 = vmatprep.subr.mxu0 0.0
  %7416 = vmatpush2.msra.mxu0 %v7311
  %7417 = vmatprep.subr.mxu0 0.0
  %7418 = vmatpush2.msra.mxu0 %v7310
  %7419 = vmatprep.subr.mxu0 0.0
  %7420 = vmatpush2.msra.mxu0 %v7309
  %7421 = vmatprep.subr.mxu0 0.0
  %7422 = vmatpush2.msra.mxu0 %v7308
  %7423 = vmatprep.subr.mxu0 0.0
  %7424 = vmatpush2.msra.mxu0 %v7307
  %7425 = vmatprep.subr.mxu0 0.0
  %7426 = vmatpush2.msra.mxu0 %v7306
  %7427 = vmatprep.subr.mxu0 0.0
  %7428 = vmatpush2.msra.mxu0 %v7305
  %7429 = vmatprep.subr.mxu0 0.0
  %7430 = vmatpush2.msra.mxu0 %v7304
  %7431 = vmatprep.subr.mxu0 0.0
  %7432 = vmatpush2.msra.mxu0 %v7303
  %7433 = vmatprep.subr.mxu0 0.0
  %7434 = vmatpush2.msra.mxu0 %v7302
  %7435 = vmatprep.subr.mxu0 0.0
  %7436 = vmatpush2.msra.mxu0 %v7301
  %7437 = vmatprep.subr.mxu0 0.0
  %7438 = vmatpush2.msra.mxu0 %v7300
  %7439 = vmatprep.mubr.f32.mxu0 %v7366
  %7440 = vmatmul.mubr.f32.gmra.mxu0 %v7365
  %v7441 = vpop.f32.mrf.mxu0
  %v7442 = vadd.f32 0.0, %v7441
  %v7443 = vpop.f32.mrf.mxu0
  %7444 = vdwg.mxu0
  %7445 = vmatprep.subr.mxu0 0.0
  %7446 = vmatpush1.msra.mxu0 %v7331
  %7447 = vmatprep.subr.mxu0 0.0
  %7448 = vmatpush1.msra.mxu0 %v7330
  %7449 = vmatprep.subr.mxu0 0.0
  %7450 = vmatpush1.msra.mxu0 %v7329
  %7451 = vmatprep.subr.mxu0 0.0
  %7452 = vmatpush1.msra.mxu0 %v7328
  %7453 = vmatprep.subr.mxu0 0.0
  %7454 = vmatpush1.msra.mxu0 %v7327
  %7455 = vmatprep.subr.mxu0 0.0
  %7456 = vmatpush1.msra.mxu0 %v7326
  %7457 = vmatprep.subr.mxu0 0.0
  %7458 = vmatpush1.msra.mxu0 %v7325
  %7459 = vmatprep.subr.mxu0 0.0
  %7460 = vmatpush1.msra.mxu0 %v7324
  %7461 = vmatprep.subr.mxu0 0.0
  %7462 = vmatpush1.msra.mxu0 %v7323
  %7463 = vmatprep.subr.mxu0 0.0
  %7464 = vmatpush1.msra.mxu0 %v7322
  %7465 = vmatprep.subr.mxu0 0.0
  %7466 = vmatpush1.msra.mxu0 %v7321
  %7467 = vmatprep.subr.mxu0 0.0
  %7468 = vmatpush1.msra.mxu0 %v7320
  %7469 = vmatprep.subr.mxu0 0.0
  %7470 = vmatpush1.msra.mxu0 %v7319
  %7471 = vmatprep.subr.mxu0 0.0
  %7472 = vmatpush1.msra.mxu0 %v7318
  %7473 = vmatprep.subr.mxu0 0.0
  %7474 = vmatpush1.msra.mxu0 %v7317
  %7475 = vmatprep.subr.mxu0 0.0
  %7476 = vmatpush1.msra.mxu0 %v7316
  %7477 = vmatprep.subr.mxu0 0.0
  %7478 = vmatpush2.msra.mxu0 %v7347
  %7479 = vmatprep.subr.mxu0 0.0
  %7480 = vmatpush2.msra.mxu0 %v7346
  %7481 = vmatprep.subr.mxu0 0.0
  %7482 = vmatpush2.msra.mxu0 %v7345
  %7483 = vmatprep.subr.mxu0 0.0
  %7484 = vmatpush2.msra.mxu0 %v7344
  %7485 = vmatprep.subr.mxu0 0.0
  %7486 = vmatpush2.msra.mxu0 %v7343
  %7487 = vmatprep.subr.mxu0 0.0
  %7488 = vmatpush2.msra.mxu0 %v7342
  %7489 = vmatprep.subr.mxu0 0.0
  %7490 = vmatpush2.msra.mxu0 %v7341
  %7491 = vmatprep.subr.mxu0 0.0
  %7492 = vmatpush2.msra.mxu0 %v7340
  %7493 = vmatprep.subr.mxu0 0.0
  %7494 = vmatpush2.msra.mxu0 %v7339
  %7495 = vmatprep.subr.mxu0 0.0
  %7496 = vmatpush2.msra.mxu0 %v7338
  %7497 = vmatprep.subr.mxu0 0.0
  %7498 = vmatpush2.msra.mxu0 %v7337
  %7499 = vmatprep.subr.mxu0 0.0
  %7500 = vmatpush2.msra.mxu0 %v7336
  %7501 = vmatprep.subr.mxu0 0.0
  %7502 = vmatpush2.msra.mxu0 %v7335
  %7503 = vmatprep.subr.mxu0 0.0
  %7504 = vmatpush2.msra.mxu0 %v7334
  %7505 = vmatprep.subr.mxu0 0.0
  %7506 = vmatpush2.msra.mxu0 %v7333
  %7507 = vmatprep.subr.mxu0 0.0
  %7508 = vmatpush2.msra.mxu0 %v7332
  %7509 = vmatprep.mubr.f32.mxu0 %v7368
  %7510 = vmatmul.mubr.f32.gmra.mxu0 %v7367
  %v7511 = vpop.f32.mrf.mxu0
  %v7512 = vadd.f32 %v7442, %v7511
  %v7513 = vpop.f32.mrf.mxu0
  %7514 = vdwg.mxu0
  %7515 = vmatprep.subr.mxu0 0.0
  %7516 = vmatpush1.msra.mxu0 %v7363
  %7517 = vmatprep.subr.mxu0 0.0
  %7518 = vmatpush1.msra.mxu0 %v7362
  %7519 = vmatprep.subr.mxu0 0.0
  %7520 = vmatpush1.msra.mxu0 %v7361
  %7521 = vmatprep.subr.mxu0 0.0
  %7522 = vmatpush1.msra.mxu0 %v7360
  %7523 = vmatprep.subr.mxu0 0.0
  %7524 = vmatpush1.msra.mxu0 %v7359
  %7525 = vmatprep.subr.mxu0 0.0
  %7526 = vmatpush1.msra.mxu0 %v7358
  %7527 = vmatprep.subr.mxu0 0.0
  %7528 = vmatpush1.msra.mxu0 %v7357
  %7529 = vmatprep.subr.mxu0 0.0
  %7530 = vmatpush1.msra.mxu0 %v7356
  %7531 = vmatprep.subr.mxu0 0.0
  %7532 = vmatpush1.msra.mxu0 %v7355
  %7533 = vmatprep.subr.mxu0 0.0
  %7534 = vmatpush1.msra.mxu0 %v7354
  %7535 = vmatprep.subr.mxu0 0.0
  %7536 = vmatpush1.msra.mxu0 %v7353
  %7537 = vmatprep.subr.mxu0 0.0
  %7538 = vmatpush1.msra.mxu0 %v7352
  %7539 = vmatprep.subr.mxu0 0.0
  %7540 = vmatpush1.msra.mxu0 %v7351
  %7541 = vmatprep.subr.mxu0 0.0
  %7542 = vmatpush1.msra.mxu0 %v7350
  %7543 = vmatprep.subr.mxu0 0.0
  %7544 = vmatpush1.msra.mxu0 %v7349
  %7545 = vmatprep.subr.mxu0 0.0
  %7546 = vmatpush1.msra.mxu0 %v7348
  %7547 = vmatprep.subr.mxu0 0.0
  %7548 = vmatpush2.msra.mxu0 0.0
  %7549 = vmatprep.subr.mxu0 0.0
  %7550 = vmatpush2.msra.mxu0 0.0
  %7551 = vmatprep.subr.mxu0 0.0
  %7552 = vmatpush2.msra.mxu0 0.0
  %7553 = vmatprep.subr.mxu0 0.0
  %7554 = vmatpush2.msra.mxu0 0.0
  %7555 = vmatprep.subr.mxu0 0.0
  %7556 = vmatpush2.msra.mxu0 0.0
  %7557 = vmatprep.subr.mxu0 0.0
  %7558 = vmatpush2.msra.mxu0 0.0
  %7559 = vmatprep.subr.mxu0 0.0
  %7560 = vmatpush2.msra.mxu0 0.0
  %7561 = vmatprep.subr.mxu0 0.0
  %7562 = vmatpush2.msra.mxu0 0.0
  %7563 = vmatprep.subr.mxu0 0.0
  %7564 = vmatpush2.msra.mxu0 0.0
  %7565 = vmatprep.subr.mxu0 0.0
  %7566 = vmatpush2.msra.mxu0 0.0
  %7567 = vmatprep.subr.mxu0 0.0
  %7568 = vmatpush2.msra.mxu0 0.0
  %7569 = vmatprep.subr.mxu0 0.0
  %7570 = vmatpush2.msra.mxu0 0.0
  %7571 = vmatprep.subr.mxu0 0.0
  %7572 = vmatpush2.msra.mxu0 0.0
  %7573 = vmatprep.subr.mxu0 0.0
  %7574 = vmatpush2.msra.mxu0 0.0
  %7575 = vmatprep.subr.mxu0 0.0
  %7576 = vmatpush2.msra.mxu0 0.0
  %7577 = vmatprep.subr.mxu0 0.0
  %7578 = vmatpush2.msra.mxu0 %v7364
  %7579 = vmatprep.mubr.f32.mxu0 %v7373
  %7580 = vmatmul.mubr.f32.gmra.mxu0 %v7369
  %v7581 = vpop.f32.mrf.mxu0
  %v7582 = vadd.f32 %v7512, %v7581
  %v7583 = vpop.f32.mrf.mxu0
  %7584 = vdwg.mxu0
  %v7585 = vld [vmem:[%s9] sm:$0xff]
  %v7586 = vld [vmem:[%s9 + $0x8] sm:$0xff]
  %v7587 = vld [vmem:[%s9 + $0x10] sm:$0xff]
  %v7588 = vld [vmem:[%s9 + $0x18] sm:$0xff]
  %v7589 = vld [vmem:[%s9 + $0x20] sm:$0xff]
  %v7590 = vld [vmem:[%s9 + $0x28] sm:$0xff]
  %v7591 = vld [vmem:[%s9 + $0x30] sm:$0xff]
  %v7592 = vld [vmem:[%s9 + $0x38] sm:$0xff]
  %v7593 = vld [vmem:[%s9 + $0x40] sm:$0xff]
  %v7594 = vld [vmem:[%s9 + $0x48] sm:$0xff]
  %v7595 = vld [vmem:[%s9 + $0x50] sm:$0xff]
  %v7596 = vld [vmem:[%s9 + $0x58] sm:$0xff]
  %v7597 = vld [vmem:[%s9 + $0x60] sm:$0xff]
  %v7598 = vld [vmem:[%s9 + $0x68] sm:$0xff]
  %v7599 = vld [vmem:[%s9 + $0x70] sm:$0xff]
  %v7600 = vld [vmem:[%s9 + $0x78] sm:$0xff]
  %v7601 = vld [vmem:[%s10] sm:$0x1]
  %v7603 = vlaneseq
  %v7604 = vshrl.u32 %v7603, 7
  %v7605 = vsub.s32 0, %v7604
  %v7606 = vrot.slane %v7601, %v7605
  %7608 = vmatprep.subr.mxu0 0.0
  %7609 = vmatpush1.msra.mxu0 %v7600
  %7610 = vmatprep.subr.mxu0 0.0
  %7611 = vmatpush1.msra.mxu0 %v7599
  %7612 = vmatprep.subr.mxu0 0.0
  %7613 = vmatpush1.msra.mxu0 %v7598
  %7614 = vmatprep.subr.mxu0 0.0
  %7615 = vmatpush1.msra.mxu0 %v7597
  %7616 = vmatprep.subr.mxu0 0.0
  %7617 = vmatpush1.msra.mxu0 %v7596
  %7618 = vmatprep.subr.mxu0 0.0
  %7619 = vmatpush1.msra.mxu0 %v7595
  %7620 = vmatprep.subr.mxu0 0.0
  %7621 = vmatpush1.msra.mxu0 %v7594
  %7622 = vmatprep.subr.mxu0 0.0
  %7623 = vmatpush1.msra.mxu0 %v7593
  %7624 = vmatprep.subr.mxu0 0.0
  %7625 = vmatpush1.msra.mxu0 %v7592
  %7626 = vmatprep.subr.mxu0 0.0
  %7627 = vmatpush1.msra.mxu0 %v7591
  %7628 = vmatprep.subr.mxu0 0.0
  %7629 = vmatpush1.msra.mxu0 %v7590
  %7630 = vmatprep.subr.mxu0 0.0
  %7631 = vmatpush1.msra.mxu0 %v7589
  %7632 = vmatprep.subr.mxu0 0.0
  %7633 = vmatpush1.msra.mxu0 %v7588
  %7634 = vmatprep.subr.mxu0 0.0
  %7635 = vmatpush1.msra.mxu0 %v7587
  %7636 = vmatprep.subr.mxu0 0.0
  %7637 = vmatpush1.msra.mxu0 %v7586
  %7638 = vmatprep.subr.mxu0 0.0
  %7639 = vmatpush1.msra.mxu0 %v7585
  %7640 = vmatprep.subr.mxu0 0.0
  %7641 = vmatpush2.msra.mxu0 0.0
  %7642 = vmatprep.subr.mxu0 0.0
  %7643 = vmatpush2.msra.mxu0 0.0
  %7644 = vmatprep.subr.mxu0 0.0
  %7645 = vmatpush2.msra.mxu0 0.0
  %7646 = vmatprep.subr.mxu0 0.0
  %7647 = vmatpush2.msra.mxu0 0.0
  %7648 = vmatprep.subr.mxu0 0.0
  %7649 = vmatpush2.msra.mxu0 0.0
  %7650 = vmatprep.subr.mxu0 0.0
  %7651 = vmatpush2.msra.mxu0 0.0
  %7652 = vmatprep.subr.mxu0 0.0
  %7653 = vmatpush2.msra.mxu0 0.0
  %7654 = vmatprep.subr.mxu0 0.0
  %7655 = vmatpush2.msra.mxu0 0.0
  %7656 = vmatprep.subr.mxu0 0.0
  %7657 = vmatpush2.msra.mxu0 0.0
  %7658 = vmatprep.subr.mxu0 0.0
  %7659 = vmatpush2.msra.mxu0 0.0
  %7660 = vmatprep.subr.mxu0 0.0
  %7661 = vmatpush2.msra.mxu0 0.0
  %7662 = vmatprep.subr.mxu0 0.0
  %7663 = vmatpush2.msra.mxu0 0.0
  %7664 = vmatprep.subr.mxu0 0.0
  %7665 = vmatpush2.msra.mxu0 0.0
  %7666 = vmatprep.subr.mxu0 0.0
  %7667 = vmatpush2.msra.mxu0 0.0
  %7668 = vmatprep.subr.mxu0 0.0
  %7669 = vmatpush2.msra.mxu0 0.0
  %7670 = vmatprep.subr.mxu0 0.0
  %7671 = vmatpush2.msra.mxu0 0.0
  %7672 = vmatprep.mubr.f32.mxu0 0.0
  %7673 = vmatmul.mubr.f32.gmra.mxu0 %v7582
  %v7674 = vpop.f32.mrf.mxu0
  %v7675 = vadd.f32 %v7606, %v7674
  %v7676 = vpop.f32.mrf.mxu0
  %7677 = vdwg.mxu0
  %7678 = vst [vmem:[%s11] sm:$0xff] %v7675
  // Predicated region
  $region46: #{interp_nets_forward.1} parent=0 // pred_check
    _
  $region47: #{interp_nets_forward.1} parent=0 // pred_check_branch
    %7680 = sbr.rel (0) target = $region49
  $region48: #{interp_nets_forward.1} parent=0 // pred_region
    _
  $region49: #{interp_nets_forward.1} parent=0 // pred_fallthru
    _
  // Predicated region
  $region50: #{interp_nets_forward.1} parent=0 // pred_check
    _
  $region51: #{interp_nets_forward.1} parent=0 // pred_check_branch
    %7682 = sbr.rel (0) target = $region53
  $region52: #{interp_nets_forward.1} parent=0 // pred_region
    _
  $region53: #{interp_nets_forward.1} parent=0 // pred_fallthru
    _

</llo_original>
